<compile_context>
chip_gen: v6e
topology: v6e:2x2x1
jax: 0.10.0
libtpu: 0.0.40
codegen_flags: <defaults>
</compile_context>

<pallas_src>
import jax
import jax.numpy as jnp
from jax.experimental import pallas as pl
from jax.experimental.pallas import tpu as pltpu


# --------------------------------------------------------------------------
# small helpers
# --------------------------------------------------------------------------
def _round_up(x, m):
    return ((x + m - 1) // m) * m


def _fill_padded(scr, interior):
    """Write `interior` (TN,H,W,C) f32 into bf16 scr (TN,H+2,Wp,C) with a zero
    border.  Only border slabs are zeroed (cheap) every step, so correctness
    does not depend on grid-iteration order / megacore partitioning.  Columns
    W+2..Wp-1 (sublane-alignment padding) are zeroed too but never read."""
    TN, Hp2, Wp, C = scr.shape
    H = Hp2 - 2
    W = interior.shape[2]
    scr[:, 0:1, :, :] = jnp.zeros((TN, 1, Wp, C), scr.dtype)
    scr[:, H + 1:H + 2, :, :] = jnp.zeros((TN, 1, Wp, C), scr.dtype)
    scr[:, :, 0:1, :] = jnp.zeros((TN, Hp2, 1, C), scr.dtype)
    scr[:, :, W + 1:Wp, :] = jnp.zeros((TN, Hp2, Wp - W - 1, C), scr.dtype)
    scr[:, 1:H + 1, 1:W + 1, :] = interior.astype(scr.dtype)   # single f32->bf16 cast


def _conv3x3_taps(xp, w_ref, TN, H, W):
    """3x3 same-conv over a zero-padded bf16 (TN,H+2,Wp,C) tile.

    Returns an f32 (TN*H*W, Cout) accumulator.  MXU operands are bf16 (the
    scratch is already bf16, so no per-tap cast); accumulation stays f32.
    Weight ref is (9, Cin, Cout) with tap index dy*3+dx."""
    C = xp.shape[-1]
    Cout = w_ref.shape[-1]
    acc = jnp.zeros((TN * H * W, Cout), jnp.float32)
    for dy in range(3):
        for dx in range(3):
            patch = xp[:, dy:dy + H, dx:dx + W, :].reshape(TN * H * W, C)
            acc = acc + jnp.dot(patch, w_ref[dy * 3 + dx],
                                preferred_element_type=jnp.float32)
    return acc


# --------------------------------------------------------------------------
# kernels
# --------------------------------------------------------------------------
def _conv1_kernel(x_ref, w1_ref, h1_ref, st_ref, xp_scr):
    """conv1 (value+gate fused, Cout=2C) + per-tile BN1 partial sums."""
    TN, H, W, C = x_ref.shape
    _fill_padded(xp_scr, x_ref[...])
    acc = _conv3x3_taps(xp_scr[...], w1_ref, TN, H, W)       # (TN*H*W, 2C) f32
    h1_ref[...] = acc.reshape(TN, H, W, acc.shape[-1]).astype(h1_ref.dtype)
    # per-tile partial statistics from the exact f32 accumulator
    st_ref[:, 0:1, :] = jnp.sum(acc, axis=0)[None, None, :]
    st_ref[:, 1:2, :] = jnp.sum(acc * acc, axis=0)[None, None, :]


def _glu_conv2_kernel(h1_ref, sc1_ref, sh1_ref, w2_ref, h2_ref, st_ref, gp_scr):
    """BN1 affine + GLU + conv2 + per-tile BN2 partial sums."""
    TN, H, W, C2 = h1_ref.shape
    C = C2 // 2
    sc = sc1_ref[...].reshape(1, 1, 1, C2)
    sh = sh1_ref[...].reshape(1, 1, 1, C2)
    h = h1_ref[...].astype(jnp.float32) * sc + sh            # f32 VPU math
    glu = h[..., :C] * jax.nn.sigmoid(h[..., C:])            # f32 EUP sigmoid
    _fill_padded(gp_scr, glu)
    acc = _conv3x3_taps(gp_scr[...], w2_ref, TN, H, W)       # (TN*H*W, C) f32
    h2_ref[...] = acc.reshape(TN, H, W, C).astype(h2_ref.dtype)
    st_ref[:, 0:1, :] = jnp.sum(acc, axis=0)[None, None, :]
    st_ref[:, 1:2, :] = jnp.sum(acc * acc, axis=0)[None, None, :]


def _bn2_add_kernel(h2_ref, x_ref, sc_ref, sh_ref, o_ref):
    """BN2 affine + residual add on a lane-dense flattened view."""
    out = h2_ref[...].astype(jnp.float32) * sc_ref[...] + sh_ref[...] + x_ref[...]
    o_ref[...] = out.astype(o_ref.dtype)


# --------------------------------------------------------------------------
# wrapper-side policy helpers (all trace-time Python on static shapes)
# --------------------------------------------------------------------------
def _vmem_policy():
    """Generation-aware VMEM policy -> (tile budget, vmem_limit_bytes, min grid steps)."""
    try:
        cap = int(pltpu.get_tpu_info().vmem_capacity_bytes)
    except Exception:
        cap = None
    if cap is None:                                  # unknown -> conservative, runs everywhere
        return 24 * 2**20, 32 * 2**20, 2
    if cap <= 64 * 2**20:                            # v7x-class: 64 MiB VMEM, 2 TensorCores
        return int(cap * 0.60), int(cap * 0.85), 4   # smaller budget, want >=4 steps
    return int(cap * 0.65), int(cap * 0.80), 2       # v5e / v6e: 128 MiB VMEM


def _pick_batch_tile(N, H, W, C, budget_bytes, min_steps):
    """Largest batch tile (divisor of N) whose per-step footprint fits the budget.
    The estimate covers the heaviest pass: f32 input (x2 buf), bf16 2C output
    (x2 buf), bf16 halo scratch, live f32 accumulator, slack, plus the
    double-buffered bf16 conv1 weights.  Prefers tiles that leave >= min_steps
    grid steps (DMA/compute overlap + megacore sharding)."""
    w_bytes = 2 * 9 * C * (2 * C) * 2                # double-buffered bf16 conv1 weights
    per_px = 36 * C                                  # bytes per pixel per batch-tile (worst pass)
    est = lambda tn: tn * H * W * per_px + w_bytes
    fits = [t for t in range(1, N + 1) if N % t == 0 and est(t) <= budget_bytes]
    if not fits:
        return 1
    for steps in (min_steps, 2):
        pref = [t for t in fits if N // t >= steps]
        if pref:
            return max(pref)
    return max(fits)


def _pass3_layout(N, H, W, C):
    """Lane-dense flattening for the elementwise pass 3: returns (ld, rows, tr)
    where the tensors are viewed as (rows, ld) and tiled (tr, ld)."""
    tot = N * H * W * C
    if C % 128 == 0:
        ld = C                                       # already lane-dense
    elif 128 % C == 0 and tot % 128 == 0:
        ld = 128
        while ld < 1024 and tot % (ld * 2) == 0:
            ld *= 2
    else:
        # TODO(synk): lane-underutilized when C neither divides nor is a
        # multiple of 128; falls back to the natural (N*H*W, C) view.
        ld = C
    rows = tot // ld
    cap = max(8, (4 * 2**20) // (ld * 4))            # keep blocks around a few MiB
    tr = rows                                        # block == full rows if no nicer divisor
    for cand in range(min(rows, cap), 0, -1):
        if rows % cand == 0 and cand % 8 == 0:
            tr = cand
            break
    return ld, rows, tr


# --------------------------------------------------------------------------
# forward
# --------------------------------------------------------------------------
def resblock_forward_nhwc(x, w1, g1, b1, w2, g2, b2, *, eps=1e-5):
    """x: (N,H,W,C) f32.  w1: (9,C,2C), w2: (9,C,C); BN params: (1,2C)/(1,C)."""
    N, H, W, C = x.shape
    budget, vmem_limit, min_steps = _vmem_policy()
    TN = _pick_batch_tile(N, H, W, C, budget, min_steps)
    G = N // TN
    cnt = float(N * H * W)
    Wp = _round_up(W + 2, 16)                        # bf16 sublane packing = 16

    w1b = w1.astype(jnp.bfloat16)                    # (9, C, 2C) MXU operand
    w2b = w2.astype(jnp.bfloat16)                    # (9, C, C)

    cparams = pltpu.CompilerParams(
        dimension_semantics=("parallel",),
        vmem_limit_bytes=vmem_limit)

    tile_x = pl.BlockSpec((TN, H, W, C), lambda i: (i, 0, 0, 0))
    tile_h1 = pl.BlockSpec((TN, H, W, 2 * C), lambda i: (i, 0, 0, 0))
    tile_h2 = pl.BlockSpec((TN, H, W, C), lambda i: (i, 0, 0, 0))
    w1spec = pl.BlockSpec((9, C, 2 * C), lambda i: (0, 0, 0))
    w2spec = pl.BlockSpec((9, C, C), lambda i: (0, 0, 0))
    chan2 = pl.BlockSpec((1, 2 * C), lambda i: (0, 0))

    # ---- pass 1: conv1 (fused value|gate) + BN1 partial stats ---------------
    h1, st1 = pl.pallas_call(
        _conv1_kernel,
        grid=(G,),
        out_shape=(jax.ShapeDtypeStruct((N, H, W, 2 * C), jnp.bfloat16),
                   jax.ShapeDtypeStruct((G, 2, 2 * C), jnp.float32)),
        in_specs=[tile_x, w1spec],
        out_specs=(tile_h1, pl.BlockSpec((1, 2, 2 * C), lambda i: (i, 0, 0))),
        scratch_shapes=[pltpu.VMEM((TN, H + 2, Wp, C), jnp.bfloat16)],
        compiler_params=cparams,
    )(x, w1b)

    # ---- tiny glue: global BN1 statistics -> per-channel scale/shift --------
    s1 = jnp.sum(st1, axis=0)                        # (2, 2C)
    mean1 = s1[0] / cnt
    var1 = jnp.maximum(s1[1] / cnt - mean1 * mean1, 0.0)
    scale1 = g1 * jax.lax.rsqrt(var1 + eps)          # (1, 2C)
    shift1 = b1 - mean1 * scale1                     # (1, 2C)

    # ---- pass 2: BN1 affine + GLU + conv2 + BN2 partial stats ---------------
    h2, st2 = pl.pallas_call(
        _glu_conv2_kernel,
        grid=(G,),
        out_shape=(jax.ShapeDtypeStruct((N, H, W, C), jnp.bfloat16),
                   jax.ShapeDtypeStruct((G, 2, C), jnp.float32)),
        in_specs=[tile_h1, chan2, chan2, w2spec],
        out_specs=(tile_h2, pl.BlockSpec((1, 2, C), lambda i: (i, 0, 0))),
        scratch_shapes=[pltpu.VMEM((TN, H + 2, Wp, C), jnp.bfloat16)],
        compiler_params=cparams,
    )(h1, scale1, shift1, w2b)

    s2 = jnp.sum(st2, axis=0)                        # (2, C)
    mean2 = s2[0] / cnt
    var2 = jnp.maximum(s2[1] / cnt - mean2 * mean2, 0.0)
    scale2 = g2 * jax.lax.rsqrt(var2 + eps)          # (1, C)
    shift2 = b2 - mean2 * scale2                     # (1, C)

    # ---- pass 3: BN2 affine + residual, lane-dense flattened tiling ---------
    ld, rows, tr = _pass3_layout(N, H, W, C)
    rep = ld // C
    sc_t = jnp.tile(scale2.reshape(-1), rep).reshape(1, ld)
    sh_t = jnp.tile(shift2.reshape(-1), rep).reshape(1, ld)
    h2f = h2.reshape(rows, ld)                       # contiguous reshape: free
    xf = x.reshape(rows, ld)
    out = pl.pallas_call(
        _bn2_add_kernel,
        grid=(rows // tr,),
        out_shape=jax.ShapeDtypeStruct((rows, ld), x.dtype),
        in_specs=[pl.BlockSpec((tr, ld), lambda i: (i, 0)),
                  pl.BlockSpec((tr, ld), lambda i: (i, 0)),
                  pl.BlockSpec((1, ld), lambda i: (0, 0)),
                  pl.BlockSpec((1, ld), lambda i: (0, 0))],
        out_specs=pl.BlockSpec((tr, ld), lambda i: (i, 0)),
        compiler_params=cparams,
    )(h2f, xf, sc_t, sh_t)
    return out.reshape(N, H, W, C)


def resblock_forward_nchw(x_nchw, params):
    """PyTorch-convention entry point: x (N,C,H,W) -> (N,C,H,W).
    (In a real pipeline the model would be NHWC end-to-end; the transposes
    here are wrapper-side XLA copies kept for torch-spec parity.)"""
    x = jnp.transpose(x_nchw, (0, 2, 3, 1))          # NCHW -> NHWC
    out = resblock_forward_nhwc(x, *params)
    return jnp.transpose(out, (0, 3, 1, 2))          # NHWC -> NCHW


def init_params(key, channel_num):
    C = channel_num
    k = jax.random.split(key, 6)
    # conv weights stored as (kh*kw, Cin, Cout)  (equiv. of torch (Cout,Cin,3,3))
    w1 = 0.1 * jax.random.normal(k[0], (9, C, 2 * C), jnp.float32)
    w2 = 0.1 * jax.random.normal(k[1], (9, C, C), jnp.float32)
    g1 = 1.0 + 0.1 * jax.random.normal(k[2], (1, 2 * C), jnp.float32)
    b1 = 0.1 * jax.random.normal(k[3], (1, 2 * C), jnp.float32)
    g2 = 1.0 + 0.1 * jax.random.normal(k[4], (1, C), jnp.float32)
    b2 = 0.1 * jax.random.normal(k[5], (1, C), jnp.float32)
    return (w1, g1, b1, w2, g2, b2)


# ---------------- pure-JAX reference (sanity check) --------------------------
def _ref_conv3x3_bf16(x, w):
    """Reference conv mirroring the kernel's bf16-operand / f32-accumulate MXU."""
    N, H, W, Cin = x.shape
    Cout = w.shape[-1]
    xp = jnp.pad(x, ((0, 0), (1, 1), (1, 1), (0, 0))).astype(jnp.bfloat16)
    wb = w.astype(jnp.bfloat16)
    acc = jnp.zeros((N, H, W, Cout), jnp.float32)
    for dy in range(3):
        for dx in range(3):
            acc = acc + jnp.einsum(
                "nhwc,co->nhwo", xp[:, dy:dy + H, dx:dx + W, :],
                wb[dy * 3 + dx], preferred_element_type=jnp.float32)
    return acc


def _ref_bn(h, gamma, beta, eps=1e-5):
    """Stats in f32 (matches the in-kernel f32 accumulators); affine applied to
    the bf16-rounded activation (matches the bf16 HBM intermediates)."""
    mean = jnp.mean(h, axis=(0, 1, 2), keepdims=True)
    var = jnp.mean((h - mean) ** 2, axis=(0, 1, 2), keepdims=True)
    hq = h.astype(jnp.bfloat16).astype(jnp.float32)
    return (hq - mean) * jax.lax.rsqrt(var + eps) * gamma[0] + beta[0]


def resblock_reference_nhwc(x, w1, g1, b1, w2, g2, b2):
    C = x.shape[-1]
    h = _ref_bn(_ref_conv3x3_bf16(x, w1), g1, b1)
    h = h[..., :C] * jax.nn.sigmoid(h[..., C:])
    h = _ref_bn(_ref_conv3x3_bf16(h, w2), g2, b2)
    return h + x


if __name__ == "__main__":
    key = jax.random.PRNGKey(0)
    k_x, k_p = jax.random.split(key)

    N, C, H, W = 2, 4, 16, 16                      # small NCHW input, torch-style
    x_nchw = jax.random.normal(k_x, (N, C, H, W), jnp.float32)
    params = init_params(k_p, C)

    fwd = jax.jit(resblock_forward_nchw)
    out = jax.block_until_ready(fwd(x_nchw, params))

    # sanity check vs a pure-JAX reference (bf16 MXU operands + bf16 HBM
    # intermediates, both mirrored in the reference -> ~2e-2 tolerance)
    x_nhwc = jnp.transpose(x_nchw, (0, 2, 3, 1))
    ref = jnp.transpose(resblock_reference_nhwc(x_nhwc, *params), (0, 3, 1, 2))
    assert out.shape == (N, C, H, W)
    max_err = float(jnp.max(jnp.abs(out - ref)))
    assert jnp.allclose(out, ref, atol=2e-2, rtol=2e-2), max_err

    print("KERNEL_OK")
</pallas_src>

<mosaic_0001>
module attributes {stable_mosaic.version = 11 : i64} {
  func.func @_conv1_kernel(%arg0: i32, %arg1: memref<1x16x16x4xf32, #tpu.memory_space<vmem>>, %arg2: memref<9x4x8xbf16, #tpu.memory_space<vmem>>, %arg3: memref<1x16x16x8xbf16, #tpu.memory_space<vmem>>, %arg4: memref<1x2x8xf32, #tpu.memory_space<vmem>>, %arg5: memref<1x18x32x4xbf16, #tpu.memory_space<vmem>>) attributes {dimension_semantics = [#tpu.dimension_semantics<parallel>], iteration_bounds = array<i64: 2>, scalar_prefetch = 0 : i64, scratch_operands = 1 : i64, tpu.core_type = #tpu.core_type<tc>, window_params = [{transform_indices = @transform_0, window_bounds = array<i64: 1, 16, 16, 4>}, {pipeline_mode = #tpu.pipeline_mode<synchronous>, transform_indices = @transform_1, window_bounds = array<i64: 9, 4, 8>}, {transform_indices = @transform_2, window_bounds = array<i64: 1, 16, 16, 8>}, {transform_indices = @transform_3, window_bounds = array<i64: 1, 2, 8>}]} {
    %c0 = arith.constant 0 : index
    %c0_0 = arith.constant 0 : index
    %c0_1 = arith.constant 0 : index
    %c0_2 = arith.constant 0 : index
    %0 = vector.load %arg1[%c0, %c0_0, %c0_1, %c0_2] : memref<1x16x16x4xf32, #tpu.memory_space<vmem>>, vector<1x16x16x4xf32>
    %cst = arith.constant 0.000000e+00 : bf16
    %1 = vector.broadcast %cst : bf16 to vector<1x1x32x4xbf16>
    %c0_3 = arith.constant 0 : index
    %c0_4 = arith.constant 0 : index
    %c0_5 = arith.constant 0 : index
    %c0_6 = arith.constant 0 : index
    %2 = vector.load %arg5[%c0_3, %c0_4, %c0_5, %c0_6] : memref<1x18x32x4xbf16, #tpu.memory_space<vmem>>, vector<1x1x32x4xbf16>
    tpu.vector_store %arg5[%c0_3, %c0_4, %c0_5, %c0_6], %1 {strides = array<i32>} : memref<1x18x32x4xbf16, #tpu.memory_space<vmem>>, vector<1x1x32x4xbf16>,
    %cst_7 = arith.constant 0.000000e+00 : bf16
    %3 = vector.broadcast %cst_7 : bf16 to vector<1x1x32x4xbf16>
    %c0_8 = arith.constant 0 : index
    %c17 = arith.constant 17 : index
    %c0_9 = arith.constant 0 : index
    %c0_10 = arith.constant 0 : index
    %4 = vector.load %arg5[%c0_8, %c17, %c0_9, %c0_10] : memref<1x18x32x4xbf16, #tpu.memory_space<vmem>>, vector<1x1x32x4xbf16>
    tpu.vector_store %arg5[%c0_8, %c17, %c0_9, %c0_10], %3 {strides = array<i32>} : memref<1x18x32x4xbf16, #tpu.memory_space<vmem>>, vector<1x1x32x4xbf16>,
    %cst_11 = arith.constant 0.000000e+00 : bf16
    %5 = vector.broadcast %cst_11 : bf16 to vector<1x18x1x4xbf16>
    %c0_12 = arith.constant 0 : index
    %c0_13 = arith.constant 0 : index
    %c0_14 = arith.constant 0 : index
    %c0_15 = arith.constant 0 : index
    %6 = vector.load %arg5[%c0_12, %c0_13, %c0_14, %c0_15] : memref<1x18x32x4xbf16, #tpu.memory_space<vmem>>, vector<1x18x1x4xbf16>
    tpu.vector_store %arg5[%c0_12, %c0_13, %c0_14, %c0_15], %5 {strides = array<i32>} : memref<1x18x32x4xbf16, #tpu.memory_space<vmem>>, vector<1x18x1x4xbf16>,
    %cst_16 = arith.constant 0.000000e+00 : bf16
    %7 = vector.broadcast %cst_16 : bf16 to vector<1x18x15x4xbf16>
    %c0_17 = arith.constant 0 : index
    %c0_18 = arith.constant 0 : index
    %c17_19 = arith.constant 17 : index
    %c0_20 = arith.constant 0 : index
    %8 = vector.load %arg5[%c0_17, %c0_18, %c17_19, %c0_20] : memref<1x18x32x4xbf16, #tpu.memory_space<vmem>>, vector<1x18x15x4xbf16>
    tpu.vector_store %arg5[%c0_17, %c0_18, %c17_19, %c0_20], %7 {strides = array<i32>} : memref<1x18x32x4xbf16, #tpu.memory_space<vmem>>, vector<1x18x15x4xbf16>,
    %9 = arith.truncf %0 : vector<1x16x16x4xf32> to vector<1x16x16x4xbf16>
    %c0_21 = arith.constant 0 : index
    %c1 = arith.constant 1 : index
    %c1_22 = arith.constant 1 : index
    %c0_23 = arith.constant 0 : index
    %10 = vector.load %arg5[%c0_21, %c1, %c1_22, %c0_23] : memref<1x18x32x4xbf16, #tpu.memory_space<vmem>>, vector<1x16x16x4xbf16>
    tpu.vector_store %arg5[%c0_21, %c1, %c1_22, %c0_23], %9 {strides = array<i32>} : memref<1x18x32x4xbf16, #tpu.memory_space<vmem>>, vector<1x16x16x4xbf16>,
    %c0_24 = arith.constant 0 : index
    %c0_25 = arith.constant 0 : index
    %c0_26 = arith.constant 0 : index
    %c0_27 = arith.constant 0 : index
    %11 = vector.load %arg5[%c0_24, %c0_25, %c0_26, %c0_27] : memref<1x18x32x4xbf16, #tpu.memory_space<vmem>>, vector<1x18x32x4xbf16>
    %cst_28 = arith.constant 0.000000e+00 : f32
    %12 = vector.broadcast %cst_28 : f32 to vector<256x8xf32>
    %13 = vector.extract_strided_slice %11 {offsets = [0, 0, 0, 0], sizes = [1, 16, 16, 4], strides = [1, 1, 1, 1]} : vector<1x18x32x4xbf16> to vector<1x16x16x4xbf16>
    %14 = vector.shape_cast %13 : vector<1x16x16x4xbf16> to vector<256x4xbf16>
    %c0_29 = arith.constant 0 : index
    %c0_30 = arith.constant 0 : index
    %c0_31 = arith.constant 0 : index
    %15 = vector.load %arg2[%c0_29, %c0_30, %c0_31] : memref<9x4x8xbf16, #tpu.memory_space<vmem>>, vector<1x4x8xbf16>
    %16 = vector.shape_cast %15 : vector<1x4x8xbf16> to vector<4x8xbf16>
    %cst_32 = arith.constant dense<0.000000e+00> : vector<256x8xf32>
    %17 = tpu.matmul %14, %16, %cst_32 {dimension_numbers = #tpu.dot_dimension_numbers<[1], [0], [0], [1], [0, 0, 1, 1], [], []>} : vector<256x4xbf16>, vector<4x8xbf16>, vector<256x8xf32> -> vector<256x8xf32>
    %18 = arith.addf %12, %17 : vector<256x8xf32>
    %19 = vector.extract_strided_slice %11 {offsets = [0, 0, 1, 0], sizes = [1, 16, 16, 4], strides = [1, 1, 1, 1]} : vector<1x18x32x4xbf16> to vector<1x16x16x4xbf16>
    %20 = vector.shape_cast %19 : vector<1x16x16x4xbf16> to vector<256x4xbf16>
    %c1_33 = arith.constant 1 : index
    %c0_34 = arith.constant 0 : index
    %c0_35 = arith.constant 0 : index
    %21 = vector.load %arg2[%c1_33, %c0_34, %c0_35] : memref<9x4x8xbf16, #tpu.memory_space<vmem>>, vector<1x4x8xbf16>
    %22 = vector.shape_cast %21 : vector<1x4x8xbf16> to vector<4x8xbf16>
    %cst_36 = arith.constant dense<0.000000e+00> : vector<256x8xf32>
    %23 = tpu.matmul %20, %22, %cst_36 {dimension_numbers = #tpu.dot_dimension_numbers<[1], [0], [0], [1], [0, 0, 1, 1], [], []>} : vector<256x4xbf16>, vector<4x8xbf16>, vector<256x8xf32> -> vector<256x8xf32>
    %24 = arith.addf %18, %23 : vector<256x8xf32>
    %25 = vector.extract_strided_slice %11 {offsets = [0, 0, 2, 0], sizes = [1, 16, 16, 4], strides = [1, 1, 1, 1]} : vector<1x18x32x4xbf16> to vector<1x16x16x4xbf16>
    %26 = vector.shape_cast %25 : vector<1x16x16x4xbf16> to vector<256x4xbf16>
    %c2 = arith.constant 2 : index
    %c0_37 = arith.constant 0 : index
    %c0_38 = arith.constant 0 : index
    %27 = vector.load %arg2[%c2, %c0_37, %c0_38] : memref<9x4x8xbf16, #tpu.memory_space<vmem>>, vector<1x4x8xbf16>
    %28 = vector.shape_cast %27 : vector<1x4x8xbf16> to vector<4x8xbf16>
    %cst_39 = arith.constant dense<0.000000e+00> : vector<256x8xf32>
    %29 = tpu.matmul %26, %28, %cst_39 {dimension_numbers = #tpu.dot_dimension_numbers<[1], [0], [0], [1], [0, 0, 1, 1], [], []>} : vector<256x4xbf16>, vector<4x8xbf16>, vector<256x8xf32> -> vector<256x8xf32>
    %30 = arith.addf %24, %29 : vector<256x8xf32>
    %31 = vector.extract_strided_slice %11 {offsets = [0, 1, 0, 0], sizes = [1, 16, 16, 4], strides = [1, 1, 1, 1]} : vector<1x18x32x4xbf16> to vector<1x16x16x4xbf16>
    %32 = vector.shape_cast %31 : vector<1x16x16x4xbf16> to vector<256x4xbf16>
    %c3 = arith.constant 3 : index
    %c0_40 = arith.constant 0 : index
    %c0_41 = arith.constant 0 : index
    %33 = vector.load %arg2[%c3, %c0_40, %c0_41] : memref<9x4x8xbf16, #tpu.memory_space<vmem>>, vector<1x4x8xbf16>
    %34 = vector.shape_cast %33 : vector<1x4x8xbf16> to vector<4x8xbf16>
    %cst_42 = arith.constant dense<0.000000e+00> : vector<256x8xf32>
    %35 = tpu.matmul %32, %34, %cst_42 {dimension_numbers = #tpu.dot_dimension_numbers<[1], [0], [0], [1], [0, 0, 1, 1], [], []>} : vector<256x4xbf16>, vector<4x8xbf16>, vector<256x8xf32> -> vector<256x8xf32>
    %36 = arith.addf %30, %35 : vector<256x8xf32>
    %37 = vector.extract_strided_slice %11 {offsets = [0, 1, 1, 0], sizes = [1, 16, 16, 4], strides = [1, 1, 1, 1]} : vector<1x18x32x4xbf16> to vector<1x16x16x4xbf16>
    %38 = vector.shape_cast %37 : vector<1x16x16x4xbf16> to vector<256x4xbf16>
    %c4 = arith.constant 4 : index
    %c0_43 = arith.constant 0 : index
    %c0_44 = arith.constant 0 : index
    %39 = vector.load %arg2[%c4, %c0_43, %c0_44] : memref<9x4x8xbf16, #tpu.memory_space<vmem>>, vector<1x4x8xbf16>
    %40 = vector.shape_cast %39 : vector<1x4x8xbf16> to vector<4x8xbf16>
    %cst_45 = arith.constant dense<0.000000e+00> : vector<256x8xf32>
    %41 = tpu.matmul %38, %40, %cst_45 {dimension_numbers = #tpu.dot_dimension_numbers<[1], [0], [0], [1], [0, 0, 1, 1], [], []>} : vector<256x4xbf16>, vector<4x8xbf16>, vector<256x8xf32> -> vector<256x8xf32>
    %42 = arith.addf %36, %41 : vector<256x8xf32>
    %43 = vector.extract_strided_slice %11 {offsets = [0, 1, 2, 0], sizes = [1, 16, 16, 4], strides = [1, 1, 1, 1]} : vector<1x18x32x4xbf16> to vector<1x16x16x4xbf16>
    %44 = vector.shape_cast %43 : vector<1x16x16x4xbf16> to vector<256x4xbf16>
    %c5 = arith.constant 5 : index
    %c0_46 = arith.constant 0 : index
    %c0_47 = arith.constant 0 : index
    %45 = vector.load %arg2[%c5, %c0_46, %c0_47] : memref<9x4x8xbf16, #tpu.memory_space<vmem>>, vector<1x4x8xbf16>
    %46 = vector.shape_cast %45 : vector<1x4x8xbf16> to vector<4x8xbf16>
    %cst_48 = arith.constant dense<0.000000e+00> : vector<256x8xf32>
    %47 = tpu.matmul %44, %46, %cst_48 {dimension_numbers = #tpu.dot_dimension_numbers<[1], [0], [0], [1], [0, 0, 1, 1], [], []>} : vector<256x4xbf16>, vector<4x8xbf16>, vector<256x8xf32> -> vector<256x8xf32>
    %48 = arith.addf %42, %47 : vector<256x8xf32>
    %49 = vector.extract_strided_slice %11 {offsets = [0, 2, 0, 0], sizes = [1, 16, 16, 4], strides = [1, 1, 1, 1]} : vector<1x18x32x4xbf16> to vector<1x16x16x4xbf16>
    %50 = vector.shape_cast %49 : vector<1x16x16x4xbf16> to vector<256x4xbf16>
    %c6 = arith.constant 6 : index
    %c0_49 = arith.constant 0 : index
    %c0_50 = arith.constant 0 : index
    %51 = vector.load %arg2[%c6, %c0_49, %c0_50] : memref<9x4x8xbf16, #tpu.memory_space<vmem>>, vector<1x4x8xbf16>
    %52 = vector.shape_cast %51 : vector<1x4x8xbf16> to vector<4x8xbf16>
    %cst_51 = arith.constant dense<0.000000e+00> : vector<256x8xf32>
    %53 = tpu.matmul %50, %52, %cst_51 {dimension_numbers = #tpu.dot_dimension_numbers<[1], [0], [0], [1], [0, 0, 1, 1], [], []>} : vector<256x4xbf16>, vector<4x8xbf16>, vector<256x8xf32> -> vector<256x8xf32>
    %54 = arith.addf %48, %53 : vector<256x8xf32>
    %55 = vector.extract_strided_slice %11 {offsets = [0, 2, 1, 0], sizes = [1, 16, 16, 4], strides = [1, 1, 1, 1]} : vector<1x18x32x4xbf16> to vector<1x16x16x4xbf16>
    %56 = vector.shape_cast %55 : vector<1x16x16x4xbf16> to vector<256x4xbf16>
    %c7 = arith.constant 7 : index
    %c0_52 = arith.constant 0 : index
    %c0_53 = arith.constant 0 : index
    %57 = vector.load %arg2[%c7, %c0_52, %c0_53] : memref<9x4x8xbf16, #tpu.memory_space<vmem>>, vector<1x4x8xbf16>
    %58 = vector.shape_cast %57 : vector<1x4x8xbf16> to vector<4x8xbf16>
    %cst_54 = arith.constant dense<0.000000e+00> : vector<256x8xf32>
    %59 = tpu.matmul %56, %58, %cst_54 {dimension_numbers = #tpu.dot_dimension_numbers<[1], [0], [0], [1], [0, 0, 1, 1], [], []>} : vector<256x4xbf16>, vector<4x8xbf16>, vector<256x8xf32> -> vector<256x8xf32>
    %60 = arith.addf %54, %59 : vector<256x8xf32>
    %61 = vector.extract_strided_slice %11 {offsets = [0, 2, 2, 0], sizes = [1, 16, 16, 4], strides = [1, 1, 1, 1]} : vector<1x18x32x4xbf16> to vector<1x16x16x4xbf16>
    %62 = vector.shape_cast %61 : vector<1x16x16x4xbf16> to vector<256x4xbf16>
    %c8 = arith.constant 8 : index
    %c0_55 = arith.constant 0 : index
    %c0_56 = arith.constant 0 : index
    %63 = vector.load %arg2[%c8, %c0_55, %c0_56] : memref<9x4x8xbf16, #tpu.memory_space<vmem>>, vector<1x4x8xbf16>
    %64 = vector.shape_cast %63 : vector<1x4x8xbf16> to vector<4x8xbf16>
    %cst_57 = arith.constant dense<0.000000e+00> : vector<256x8xf32>
    %65 = tpu.matmul %62, %64, %cst_57 {dimension_numbers = #tpu.dot_dimension_numbers<[1], [0], [0], [1], [0, 0, 1, 1], [], []>} : vector<256x4xbf16>, vector<4x8xbf16>, vector<256x8xf32> -> vector<256x8xf32>
    %66 = arith.addf %60, %65 : vector<256x8xf32>
    %67 = vector.shape_cast %66 : vector<256x8xf32> to vector<1x16x16x8xf32>
    %68 = arith.truncf %67 : vector<1x16x16x8xf32> to vector<1x16x16x8xbf16>
    %c0_58 = arith.constant 0 : index
    %c0_59 = arith.constant 0 : index
    %c0_60 = arith.constant 0 : index
    %c0_61 = arith.constant 0 : index
    %69 = vector.load %arg3[%c0_58, %c0_59, %c0_60, %c0_61] : memref<1x16x16x8xbf16, #tpu.memory_space<vmem>>, vector<1x16x16x8xbf16>
    tpu.vector_store %arg3[%c0_58, %c0_59, %c0_60, %c0_61], %68 {strides = array<i32>} : memref<1x16x16x8xbf16, #tpu.memory_space<vmem>>, vector<1x16x16x8xbf16>,
    %cst_62 = arith.constant dense<0.000000e+00> : vector<8xf32>
    %70 = vector.multi_reduction <add>, %66, %cst_62 [0] : vector<256x8xf32> to vector<8xf32>
    %71 = vector.shape_cast %70 : vector<8xf32> to vector<1x1x8xf32>
    %c0_63 = arith.constant 0 : index
    %c0_64 = arith.constant 0 : index
    %c0_65 = arith.constant 0 : index
    %72 = vector.load %arg4[%c0_63, %c0_64, %c0_65] : memref<1x2x8xf32, #tpu.memory_space<vmem>>, vector<1x1x8xf32>
    tpu.vector_store %arg4[%c0_63, %c0_64, %c0_65], %71 {strides = array<i32>} : memref<1x2x8xf32, #tpu.memory_space<vmem>>, vector<1x1x8xf32>,
    %73 = arith.mulf %66, %66 : vector<256x8xf32>
    %cst_66 = arith.constant dense<0.000000e+00> : vector<8xf32>
    %74 = vector.multi_reduction <add>, %73, %cst_66 [0] : vector<256x8xf32> to vector<8xf32>
    %75 = vector.shape_cast %74 : vector<8xf32> to vector<1x1x8xf32>
    %c0_67 = arith.constant 0 : index
    %c1_68 = arith.constant 1 : index
    %c0_69 = arith.constant 0 : index
    %76 = vector.load %arg4[%c0_67, %c1_68, %c0_69] : memref<1x2x8xf32, #tpu.memory_space<vmem>>, vector<1x1x8xf32>
    tpu.vector_store %arg4[%c0_67, %c1_68, %c0_69], %75 {strides = array<i32>} : memref<1x2x8xf32, #tpu.memory_space<vmem>>, vector<1x1x8xf32>,
    return
  }
  func.func @transform_0(%arg0: i32) -> (i32, i32, i32, i32) {
    %c0_i32 = arith.constant 0 : i32
    %c0_i32_0 = arith.constant 0 : i32
    %c0_i32_1 = arith.constant 0 : i32
    %c0_i32_2 = arith.constant 0 : i32
    return %arg0, %c0_i32, %c0_i32_0, %c0_i32_1 : i32, i32, i32, i32
  }
  func.func @transform_1(%arg0: i32) -> (i32, i32, i32) {
    %c0_i32 = arith.constant 0 : i32
    %c0_i32_0 = arith.constant 0 : i32
    %c0_i32_1 = arith.constant 0 : i32
    %c0_i32_2 = arith.constant 0 : i32
    return %c0_i32, %c0_i32_0, %c0_i32_1 : i32, i32, i32
  }
  func.func @transform_2(%arg0: i32) -> (i32, i32, i32, i32) {
    %c0_i32 = arith.constant 0 : i32
    %c0_i32_0 = arith.constant 0 : i32
    %c0_i32_1 = arith.constant 0 : i32
    %c0_i32_2 = arith.constant 0 : i32
    return %arg0, %c0_i32, %c0_i32_0, %c0_i32_1 : i32, i32, i32, i32
  }
  func.func @transform_3(%arg0: i32) -> (i32, i32, i32) {
    %c0_i32 = arith.constant 0 : i32
    %c0_i32_0 = arith.constant 0 : i32
    %c0_i32_1 = arith.constant 0 : i32
    return %arg0, %c0_i32, %c0_i32_0 : i32, i32, i32
  }
}

module attributes {stable_mosaic.version = 11 : i64} {
  func.func @_glu_conv2_kernel(%arg0: i32, %arg1: memref<1x16x16x8xbf16, #tpu.memory_space<vmem>>, %arg2: memref<1x8xf32, #tpu.memory_space<vmem>>, %arg3: memref<1x8xf32, #tpu.memory_space<vmem>>, %arg4: memref<9x4x4xbf16, #tpu.memory_space<vmem>>, %arg5: memref<1x16x16x4xbf16, #tpu.memory_space<vmem>>, %arg6: memref<1x2x4xf32, #tpu.memory_space<vmem>>, %arg7: memref<1x18x32x4xbf16, #tpu.memory_space<vmem>>) attributes {dimension_semantics = [#tpu.dimension_semantics<parallel>], iteration_bounds = array<i64: 2>, scalar_prefetch = 0 : i64, scratch_operands = 1 : i64, tpu.core_type = #tpu.core_type<tc>, window_params = [{transform_indices = @transform_0, window_bounds = array<i64: 1, 16, 16, 8>}, {pipeline_mode = #tpu.pipeline_mode<synchronous>, transform_indices = @transform_1, window_bounds = array<i64: 1, 8>}, {pipeline_mode = #tpu.pipeline_mode<synchronous>, transform_indices = @transform_2, window_bounds = array<i64: 1, 8>}, {pipeline_mode = #tpu.pipeline_mode<synchronous>, transform_indices = @transform_3, window_bounds = array<i64: 9, 4, 4>}, {transform_indices = @transform_4, window_bounds = array<i64: 1, 16, 16, 4>}, {transform_indices = @transform_5, window_bounds = array<i64: 1, 2, 4>}]} {
    %c0 = arith.constant 0 : index
    %c0_0 = arith.constant 0 : index
    %0 = vector.load %arg2[%c0, %c0_0] : memref<1x8xf32, #tpu.memory_space<vmem>>, vector<1x8xf32>
    %1 = vector.shape_cast %0 : vector<1x8xf32> to vector<1x1x1x8xf32>
    %c0_1 = arith.constant 0 : index
    %c0_2 = arith.constant 0 : index
    %2 = vector.load %arg3[%c0_1, %c0_2] : memref<1x8xf32, #tpu.memory_space<vmem>>, vector<1x8xf32>
    %3 = vector.shape_cast %2 : vector<1x8xf32> to vector<1x1x1x8xf32>
    %c0_3 = arith.constant 0 : index
    %c0_4 = arith.constant 0 : index
    %c0_5 = arith.constant 0 : index
    %c0_6 = arith.constant 0 : index
    %4 = vector.load %arg1[%c0_3, %c0_4, %c0_5, %c0_6] : memref<1x16x16x8xbf16, #tpu.memory_space<vmem>>, vector<1x16x16x8xbf16>
    %5 = arith.extf %4 : vector<1x16x16x8xbf16> to vector<1x16x16x8xf32>
    %6 = vector.broadcast %1 : vector<1x1x1x8xf32> to vector<1x16x16x8xf32>
    %7 = arith.mulf %5, %6 : vector<1x16x16x8xf32>
    %8 = vector.broadcast %3 : vector<1x1x1x8xf32> to vector<1x16x16x8xf32>
    %9 = arith.addf %7, %8 : vector<1x16x16x8xf32>
    %10 = vector.extract_strided_slice %9 {offsets = [0, 0, 0, 0], sizes = [1, 16, 16, 4], strides = [1, 1, 1, 1]} : vector<1x16x16x8xf32> to vector<1x16x16x4xf32>
    %11 = vector.extract_strided_slice %9 {offsets = [0, 0, 0, 4], sizes = [1, 16, 16, 4], strides = [1, 1, 1, 1]} : vector<1x16x16x8xf32> to vector<1x16x16x4xf32>
    %12 = arith.negf %11 : vector<1x16x16x4xf32>
    %13 = math.exp %12 : vector<1x16x16x4xf32>
    %cst = arith.constant 1.000000e+00 : f32
    %14 = vector.broadcast %cst : f32 to vector<1x16x16x4xf32>
    %15 = arith.addf %14, %13 : vector<1x16x16x4xf32>
    %16 = arith.divf %14, %15 : vector<1x16x16x4xf32>
    %17 = arith.mulf %10, %16 : vector<1x16x16x4xf32>
    %cst_7 = arith.constant 0.000000e+00 : bf16
    %18 = vector.broadcast %cst_7 : bf16 to vector<1x1x32x4xbf16>
    %c0_8 = arith.constant 0 : index
    %c0_9 = arith.constant 0 : index
    %c0_10 = arith.constant 0 : index
    %c0_11 = arith.constant 0 : index
    %19 = vector.load %arg7[%c0_8, %c0_9, %c0_10, %c0_11] : memref<1x18x32x4xbf16, #tpu.memory_space<vmem>>, vector<1x1x32x4xbf16>
    tpu.vector_store %arg7[%c0_8, %c0_9, %c0_10, %c0_11], %18 {strides = array<i32>} : memref<1x18x32x4xbf16, #tpu.memory_space<vmem>>, vector<1x1x32x4xbf16>,
    %cst_12 = arith.constant 0.000000e+00 : bf16
    %20 = vector.broadcast %cst_12 : bf16 to vector<1x1x32x4xbf16>
    %c0_13 = arith.constant 0 : index
    %c17 = arith.constant 17 : index
    %c0_14 = arith.constant 0 : index
    %c0_15 = arith.constant 0 : index
    %21 = vector.load %arg7[%c0_13, %c17, %c0_14, %c0_15] : memref<1x18x32x4xbf16, #tpu.memory_space<vmem>>, vector<1x1x32x4xbf16>
    tpu.vector_store %arg7[%c0_13, %c17, %c0_14, %c0_15], %20 {strides = array<i32>} : memref<1x18x32x4xbf16, #tpu.memory_space<vmem>>, vector<1x1x32x4xbf16>,
    %cst_16 = arith.constant 0.000000e+00 : bf16
    %22 = vector.broadcast %cst_16 : bf16 to vector<1x18x1x4xbf16>
    %c0_17 = arith.constant 0 : index
    %c0_18 = arith.constant 0 : index
    %c0_19 = arith.constant 0 : index
    %c0_20 = arith.constant 0 : index
    %23 = vector.load %arg7[%c0_17, %c0_18, %c0_19, %c0_20] : memref<1x18x32x4xbf16, #tpu.memory_space<vmem>>, vector<1x18x1x4xbf16>
    tpu.vector_store %arg7[%c0_17, %c0_18, %c0_19, %c0_20], %22 {strides = array<i32>} : memref<1x18x32x4xbf16, #tpu.memory_space<vmem>>, vector<1x18x1x4xbf16>,
    %cst_21 = arith.constant 0.000000e+00 : bf16
    %24 = vector.broadcast %cst_21 : bf16 to vector<1x18x15x4xbf16>
    %c0_22 = arith.constant 0 : index
    %c0_23 = arith.constant 0 : index
    %c17_24 = arith.constant 17 : index
    %c0_25 = arith.constant 0 : index
    %25 = vector.load %arg7[%c0_22, %c0_23, %c17_24, %c0_25] : memref<1x18x32x4xbf16, #tpu.memory_space<vmem>>, vector<1x18x15x4xbf16>
    tpu.vector_store %arg7[%c0_22, %c0_23, %c17_24, %c0_25], %24 {strides = array<i32>} : memref<1x18x32x4xbf16, #tpu.memory_space<vmem>>, vector<1x18x15x4xbf16>,
    %26 = arith.truncf %17 : vector<1x16x16x4xf32> to vector<1x16x16x4xbf16>
    %c0_26 = arith.constant 0 : index
    %c1 = arith.constant 1 : index
    %c1_27 = arith.constant 1 : index
    %c0_28 = arith.constant 0 : index
    %27 = vector.load %arg7[%c0_26, %c1, %c1_27, %c0_28] : memref<1x18x32x4xbf16, #tpu.memory_space<vmem>>, vector<1x16x16x4xbf16>
    tpu.vector_store %arg7[%c0_26, %c1, %c1_27, %c0_28], %26 {strides = array<i32>} : memref<1x18x32x4xbf16, #tpu.memory_space<vmem>>, vector<1x16x16x4xbf16>,
    %c0_29 = arith.constant 0 : index
    %c0_30 = arith.constant 0 : index
    %c0_31 = arith.constant 0 : index
    %c0_32 = arith.constant 0 : index
    %28 = vector.load %arg7[%c0_29, %c0_30, %c0_31, %c0_32] : memref<1x18x32x4xbf16, #tpu.memory_space<vmem>>, vector<1x18x32x4xbf16>
    %cst_33 = arith.constant 0.000000e+00 : f32
    %29 = vector.broadcast %cst_33 : f32 to vector<256x4xf32>
    %30 = vector.extract_strided_slice %28 {offsets = [0, 0, 0, 0], sizes = [1, 16, 16, 4], strides = [1, 1, 1, 1]} : vector<1x18x32x4xbf16> to vector<1x16x16x4xbf16>
    %31 = vector.shape_cast %30 : vector<1x16x16x4xbf16> to vector<256x4xbf16>
    %c0_34 = arith.constant 0 : index
    %c0_35 = arith.constant 0 : index
    %c0_36 = arith.constant 0 : index
    %32 = vector.load %arg4[%c0_34, %c0_35, %c0_36] : memref<9x4x4xbf16, #tpu.memory_space<vmem>>, vector<1x4x4xbf16>
    %33 = vector.shape_cast %32 : vector<1x4x4xbf16> to vector<4x4xbf16>
    %cst_37 = arith.constant dense<0.000000e+00> : vector<256x4xf32>
    %34 = tpu.matmul %31, %33, %cst_37 {dimension_numbers = #tpu.dot_dimension_numbers<[1], [0], [0], [1], [0, 0, 1, 1], [], []>} : vector<256x4xbf16>, vector<4x4xbf16>, vector<256x4xf32> -> vector<256x4xf32>
    %35 = arith.addf %29, %34 : vector<256x4xf32>
    %36 = vector.extract_strided_slice %28 {offsets = [0, 0, 1, 0], sizes = [1, 16, 16, 4], strides = [1, 1, 1, 1]} : vector<1x18x32x4xbf16> to vector<1x16x16x4xbf16>
    %37 = vector.shape_cast %36 : vector<1x16x16x4xbf16> to vector<256x4xbf16>
    %c1_38 = arith.constant 1 : index
    %c0_39 = arith.constant 0 : index
    %c0_40 = arith.constant 0 : index
    %38 = vector.load %arg4[%c1_38, %c0_39, %c0_40] : memref<9x4x4xbf16, #tpu.memory_space<vmem>>, vector<1x4x4xbf16>
    %39 = vector.shape_cast %38 : vector<1x4x4xbf16> to vector<4x4xbf16>
    %cst_41 = arith.constant dense<0.000000e+00> : vector<256x4xf32>
    %40 = tpu.matmul %37, %39, %cst_41 {dimension_numbers = #tpu.dot_dimension_numbers<[1], [0], [0], [1], [0, 0, 1, 1], [], []>} : vector<256x4xbf16>, vector<4x4xbf16>, vector<256x4xf32> -> vector<256x4xf32>
    %41 = arith.addf %35, %40 : vector<256x4xf32>
    %42 = vector.extract_strided_slice %28 {offsets = [0, 0, 2, 0], sizes = [1, 16, 16, 4], strides = [1, 1, 1, 1]} : vector<1x18x32x4xbf16> to vector<1x16x16x4xbf16>
    %43 = vector.shape_cast %42 : vector<1x16x16x4xbf16> to vector<256x4xbf16>
    %c2 = arith.constant 2 : index
    %c0_42 = arith.constant 0 : index
    %c0_43 = arith.constant 0 : index
    %44 = vector.load %arg4[%c2, %c0_42, %c0_43] : memref<9x4x4xbf16, #tpu.memory_space<vmem>>, vector<1x4x4xbf16>
    %45 = vector.shape_cast %44 : vector<1x4x4xbf16> to vector<4x4xbf16>
    %cst_44 = arith.constant dense<0.000000e+00> : vector<256x4xf32>
    %46 = tpu.matmul %43, %45, %cst_44 {dimension_numbers = #tpu.dot_dimension_numbers<[1], [0], [0], [1], [0, 0, 1, 1], [], []>} : vector<256x4xbf16>, vector<4x4xbf16>, vector<256x4xf32> -> vector<256x4xf32>
    %47 = arith.addf %41, %46 : vector<256x4xf32>
    %48 = vector.extract_strided_slice %28 {offsets = [0, 1, 0, 0], sizes = [1, 16, 16, 4], strides = [1, 1, 1, 1]} : vector<1x18x32x4xbf16> to vector<1x16x16x4xbf16>
    %49 = vector.shape_cast %48 : vector<1x16x16x4xbf16> to vector<256x4xbf16>
    %c3 = arith.constant 3 : index
    %c0_45 = arith.constant 0 : index
    %c0_46 = arith.constant 0 : index
    %50 = vector.load %arg4[%c3, %c0_45, %c0_46] : memref<9x4x4xbf16, #tpu.memory_space<vmem>>, vector<1x4x4xbf16>
    %51 = vector.shape_cast %50 : vector<1x4x4xbf16> to vector<4x4xbf16>
    %cst_47 = arith.constant dense<0.000000e+00> : vector<256x4xf32>
    %52 = tpu.matmul %49, %51, %cst_47 {dimension_numbers = #tpu.dot_dimension_numbers<[1], [0], [0], [1], [0, 0, 1, 1], [], []>} : vector<256x4xbf16>, vector<4x4xbf16>, vector<256x4xf32> -> vector<256x4xf32>
    %53 = arith.addf %47, %52 : vector<256x4xf32>
    %54 = vector.extract_strided_slice %28 {offsets = [0, 1, 1, 0], sizes = [1, 16, 16, 4], strides = [1, 1, 1, 1]} : vector<1x18x32x4xbf16> to vector<1x16x16x4xbf16>
    %55 = vector.shape_cast %54 : vector<1x16x16x4xbf16> to vector<256x4xbf16>
    %c4 = arith.constant 4 : index
    %c0_48 = arith.constant 0 : index
    %c0_49 = arith.constant 0 : index
    %56 = vector.load %arg4[%c4, %c0_48, %c0_49] : memref<9x4x4xbf16, #tpu.memory_space<vmem>>, vector<1x4x4xbf16>
    %57 = vector.shape_cast %56 : vector<1x4x4xbf16> to vector<4x4xbf16>
    %cst_50 = arith.constant dense<0.000000e+00> : vector<256x4xf32>
    %58 = tpu.matmul %55, %57, %cst_50 {dimension_numbers = #tpu.dot_dimension_numbers<[1], [0], [0], [1], [0, 0, 1, 1], [], []>} : vector<256x4xbf16>, vector<4x4xbf16>, vector<256x4xf32> -> vector<256x4xf32>
    %59 = arith.addf %53, %58 : vector<256x4xf32>
    %60 = vector.extract_strided_slice %28 {offsets = [0, 1, 2, 0], sizes = [1, 16, 16, 4], strides = [1, 1, 1, 1]} : vector<1x18x32x4xbf16> to vector<1x16x16x4xbf16>
    %61 = vector.shape_cast %60 : vector<1x16x16x4xbf16> to vector<256x4xbf16>
    %c5 = arith.constant 5 : index
    %c0_51 = arith.constant 0 : index
    %c0_52 = arith.constant 0 : index
    %62 = vector.load %arg4[%c5, %c0_51, %c0_52] : memref<9x4x4xbf16, #tpu.memory_space<vmem>>, vector<1x4x4xbf16>
    %63 = vector.shape_cast %62 : vector<1x4x4xbf16> to vector<4x4xbf16>
    %cst_53 = arith.constant dense<0.000000e+00> : vector<256x4xf32>
    %64 = tpu.matmul %61, %63, %cst_53 {dimension_numbers = #tpu.dot_dimension_numbers<[1], [0], [0], [1], [0, 0, 1, 1], [], []>} : vector<256x4xbf16>, vector<4x4xbf16>, vector<256x4xf32> -> vector<256x4xf32>
    %65 = arith.addf %59, %64 : vector<256x4xf32>
    %66 = vector.extract_strided_slice %28 {offsets = [0, 2, 0, 0], sizes = [1, 16, 16, 4], strides = [1, 1, 1, 1]} : vector<1x18x32x4xbf16> to vector<1x16x16x4xbf16>
    %67 = vector.shape_cast %66 : vector<1x16x16x4xbf16> to vector<256x4xbf16>
    %c6 = arith.constant 6 : index
    %c0_54 = arith.constant 0 : index
    %c0_55 = arith.constant 0 : index
    %68 = vector.load %arg4[%c6, %c0_54, %c0_55] : memref<9x4x4xbf16, #tpu.memory_space<vmem>>, vector<1x4x4xbf16>
    %69 = vector.shape_cast %68 : vector<1x4x4xbf16> to vector<4x4xbf16>
    %cst_56 = arith.constant dense<0.000000e+00> : vector<256x4xf32>
    %70 = tpu.matmul %67, %69, %cst_56 {dimension_numbers = #tpu.dot_dimension_numbers<[1], [0], [0], [1], [0, 0, 1, 1], [], []>} : vector<256x4xbf16>, vector<4x4xbf16>, vector<256x4xf32> -> vector<256x4xf32>
    %71 = arith.addf %65, %70 : vector<256x4xf32>
    %72 = vector.extract_strided_slice %28 {offsets = [0, 2, 1, 0], sizes = [1, 16, 16, 4], strides = [1, 1, 1, 1]} : vector<1x18x32x4xbf16> to vector<1x16x16x4xbf16>
    %73 = vector.shape_cast %72 : vector<1x16x16x4xbf16> to vector<256x4xbf16>
    %c7 = arith.constant 7 : index
    %c0_57 = arith.constant 0 : index
    %c0_58 = arith.constant 0 : index
    %74 = vector.load %arg4[%c7, %c0_57, %c0_58] : memref<9x4x4xbf16, #tpu.memory_space<vmem>>, vector<1x4x4xbf16>
    %75 = vector.shape_cast %74 : vector<1x4x4xbf16> to vector<4x4xbf16>
    %cst_59 = arith.constant dense<0.000000e+00> : vector<256x4xf32>
    %76 = tpu.matmul %73, %75, %cst_59 {dimension_numbers = #tpu.dot_dimension_numbers<[1], [0], [0], [1], [0, 0, 1, 1], [], []>} : vector<256x4xbf16>, vector<4x4xbf16>, vector<256x4xf32> -> vector<256x4xf32>
    %77 = arith.addf %71, %76 : vector<256x4xf32>
    %78 = vector.extract_strided_slice %28 {offsets = [0, 2, 2, 0], sizes = [1, 16, 16, 4], strides = [1, 1, 1, 1]} : vector<1x18x32x4xbf16> to vector<1x16x16x4xbf16>
    %79 = vector.shape_cast %78 : vector<1x16x16x4xbf16> to vector<256x4xbf16>
    %c8 = arith.constant 8 : index
    %c0_60 = arith.constant 0 : index
    %c0_61 = arith.constant 0 : index
    %80 = vector.load %arg4[%c8, %c0_60, %c0_61] : memref<9x4x4xbf16, #tpu.memory_space<vmem>>, vector<1x4x4xbf16>
    %81 = vector.shape_cast %80 : vector<1x4x4xbf16> to vector<4x4xbf16>
    %cst_62 = arith.constant dense<0.000000e+00> : vector<256x4xf32>
    %82 = tpu.matmul %79, %81, %cst_62 {dimension_numbers = #tpu.dot_dimension_numbers<[1], [0], [0], [1], [0, 0, 1, 1], [], []>} : vector<256x4xbf16>, vector<4x4xbf16>, vector<256x4xf32> -> vector<256x4xf32>
    %83 = arith.addf %77, %82 : vector<256x4xf32>
    %84 = vector.shape_cast %83 : vector<256x4xf32> to vector<1x16x16x4xf32>
    %85 = arith.truncf %84 : vector<1x16x16x4xf32> to vector<1x16x16x4xbf16>
    %c0_63 = arith.constant 0 : index
    %c0_64 = arith.constant 0 : index
    %c0_65 = arith.constant 0 : index
    %c0_66 = arith.constant 0 : index
    %86 = vector.load %arg5[%c0_63, %c0_64, %c0_65, %c0_66] : memref<1x16x16x4xbf16, #tpu.memory_space<vmem>>, vector<1x16x16x4xbf16>
    tpu.vector_store %arg5[%c0_63, %c0_64, %c0_65, %c0_66], %85 {strides = array<i32>} : memref<1x16x16x4xbf16, #tpu.memory_space<vmem>>, vector<1x16x16x4xbf16>,
    %cst_67 = arith.constant dense<0.000000e+00> : vector<4xf32>
    %87 = vector.multi_reduction <add>, %83, %cst_67 [0] : vector<256x4xf32> to vector<4xf32>
    %88 = vector.shape_cast %87 : vector<4xf32> to vector<1x1x4xf32>
    %c0_68 = arith.constant 0 : index
    %c0_69 = arith.constant 0 : index
    %c0_70 = arith.constant 0 : index
    %89 = vector.load %arg6[%c0_68, %c0_69, %c0_70] : memref<1x2x4xf32, #tpu.memory_space<vmem>>, vector<1x1x4xf32>
    tpu.vector_store %arg6[%c0_68, %c0_69, %c0_70], %88 {strides = array<i32>} : memref<1x2x4xf32, #tpu.memory_space<vmem>>, vector<1x1x4xf32>,
    %90 = arith.mulf %83, %83 : vector<256x4xf32>
    %cst_71 = arith.constant dense<0.000000e+00> : vector<4xf32>
    %91 = vector.multi_reduction <add>, %90, %cst_71 [0] : vector<256x4xf32> to vector<4xf32>
    %92 = vector.shape_cast %91 : vector<4xf32> to vector<1x1x4xf32>
    %c0_72 = arith.constant 0 : index
    %c1_73 = arith.constant 1 : index
    %c0_74 = arith.constant 0 : index
    %93 = vector.load %arg6[%c0_72, %c1_73, %c0_74] : memref<1x2x4xf32, #tpu.memory_space<vmem>>, vector<1x1x4xf32>
    tpu.vector_store %arg6[%c0_72, %c1_73, %c0_74], %92 {strides = array<i32>} : memref<1x2x4xf32, #tpu.memory_space<vmem>>, vector<1x1x4xf32>,
    return
  }
  func.func @transform_0(%arg0: i32) -> (i32, i32, i32, i32) {
    %c0_i32 = arith.constant 0 : i32
    %c0_i32_0 = arith.constant 0 : i32
    %c0_i32_1 = arith.constant 0 : i32
    %c0_i32_2 = arith.constant 0 : i32
    return %arg0, %c0_i32, %c0_i32_0, %c0_i32_1 : i32, i32, i32, i32
  }
  func.func @transform_1(%arg0: i32) -> (i32, i32) {
    %c0_i32 = arith.constant 0 : i32
    %c0_i32_0 = arith.constant 0 : i32
    %c0_i32_1 = arith.constant 0 : i32
    return %c0_i32, %c0_i32_0 : i32, i32
  }
  func.func @transform_2(%arg0: i32) -> (i32, i32) {
    %c0_i32 = arith.constant 0 : i32
    %c0_i32_0 = arith.constant 0 : i32
    %c0_i32_1 = arith.constant 0 : i32
    return %c0_i32, %c0_i32_0 : i32, i32
  }
  func.func @transform_3(%arg0: i32) -> (i32, i32, i32) {
    %c0_i32 = arith.constant 0 : i32
    %c0_i32_0 = arith.constant 0 : i32
    %c0_i32_1 = arith.constant 0 : i32
    %c0_i32_2 = arith.constant 0 : i32
    return %c0_i32, %c0_i32_0, %c0_i32_1 : i32, i32, i32
  }
  func.func @transform_4(%arg0: i32) -> (i32, i32, i32, i32) {
    %c0_i32 = arith.constant 0 : i32
    %c0_i32_0 = arith.constant 0 : i32
    %c0_i32_1 = arith.constant 0 : i32
    %c0_i32_2 = arith.constant 0 : i32
    return %arg0, %c0_i32, %c0_i32_0, %c0_i32_1 : i32, i32, i32, i32
  }
  func.func @transform_5(%arg0: i32) -> (i32, i32, i32) {
    %c0_i32 = arith.constant 0 : i32
    %c0_i32_0 = arith.constant 0 : i32
    %c0_i32_1 = arith.constant 0 : i32
    return %arg0, %c0_i32, %c0_i32_0 : i32, i32, i32
  }
}

module attributes {stable_mosaic.version = 11 : i64} {
  func.func @_bn2_add_kernel(%arg0: i32, %arg1: memref<2x1024xbf16, #tpu.memory_space<vmem>>, %arg2: memref<2x1024xf32, #tpu.memory_space<vmem>>, %arg3: memref<1x1024xf32, #tpu.memory_space<vmem>>, %arg4: memref<1x1024xf32, #tpu.memory_space<vmem>>, %arg5: memref<2x1024xf32, #tpu.memory_space<vmem>>) attributes {dimension_semantics = [#tpu.dimension_semantics<parallel>], iteration_bounds = array<i64: 1>, scalar_prefetch = 0 : i64, scratch_operands = 0 : i64, tpu.core_type = #tpu.core_type<tc>, window_params = [{transform_indices = @transform_0, window_bounds = array<i64: 2, 1024>}, {transform_indices = @transform_1, window_bounds = array<i64: 2, 1024>}, {pipeline_mode = #tpu.pipeline_mode<synchronous>, transform_indices = @transform_2, window_bounds = array<i64: 1, 1024>}, {pipeline_mode = #tpu.pipeline_mode<synchronous>, transform_indices = @transform_3, window_bounds = array<i64: 1, 1024>}, {transform_indices = @transform_4, window_bounds = array<i64: 2, 1024>}]} {
    %c0 = arith.constant 0 : index
    %c0_0 = arith.constant 0 : index
    %0 = vector.load %arg1[%c0, %c0_0] : memref<2x1024xbf16, #tpu.memory_space<vmem>>, vector<2x1024xbf16>
    %1 = arith.extf %0 : vector<2x1024xbf16> to vector<2x1024xf32>
    %c0_1 = arith.constant 0 : index
    %c0_2 = arith.constant 0 : index
    %2 = vector.load %arg3[%c0_1, %c0_2] : memref<1x1024xf32, #tpu.memory_space<vmem>>, vector<1x1024xf32>
    %3 = vector.broadcast %2 : vector<1x1024xf32> to vector<2x1024xf32>
    %4 = arith.mulf %1, %3 : vector<2x1024xf32>
    %c0_3 = arith.constant 0 : index
    %c0_4 = arith.constant 0 : index
    %5 = vector.load %arg4[%c0_3, %c0_4] : memref<1x1024xf32, #tpu.memory_space<vmem>>, vector<1x1024xf32>
    %6 = vector.broadcast %5 : vector<1x1024xf32> to vector<2x1024xf32>
    %7 = arith.addf %4, %6 : vector<2x1024xf32>
    %c0_5 = arith.constant 0 : index
    %c0_6 = arith.constant 0 : index
    %8 = vector.load %arg2[%c0_5, %c0_6] : memref<2x1024xf32, #tpu.memory_space<vmem>>, vector<2x1024xf32>
    %9 = arith.addf %7, %8 : vector<2x1024xf32>
    %c0_7 = arith.constant 0 : index
    %c0_8 = arith.constant 0 : index
    %10 = vector.load %arg5[%c0_7, %c0_8] : memref<2x1024xf32, #tpu.memory_space<vmem>>, vector<2x1024xf32>
    tpu.vector_store %arg5[%c0_7, %c0_8], %9 {strides = array<i32>} : memref<2x1024xf32, #tpu.memory_space<vmem>>, vector<2x1024xf32>,
    return
  }
  func.func @transform_0(%arg0: i32) -> (i32, i32) {
    %c0_i32 = arith.constant 0 : i32
    %c0_i32_0 = arith.constant 0 : i32
    return %arg0, %c0_i32 : i32, i32
  }
  func.func @transform_1(%arg0: i32) -> (i32, i32) {
    %c0_i32 = arith.constant 0 : i32
    %c0_i32_0 = arith.constant 0 : i32
    return %arg0, %c0_i32 : i32, i32
  }
  func.func @transform_2(%arg0: i32) -> (i32, i32) {
    %c0_i32 = arith.constant 0 : i32
    %c0_i32_0 = arith.constant 0 : i32
    %c0_i32_1 = arith.constant 0 : i32
    return %c0_i32, %c0_i32_0 : i32, i32
  }
  func.func @transform_3(%arg0: i32) -> (i32, i32) {
    %c0_i32 = arith.constant 0 : i32
    %c0_i32_0 = arith.constant 0 : i32
    %c0_i32_1 = arith.constant 0 : i32
    return %c0_i32, %c0_i32_0 : i32, i32
  }
  func.func @transform_4(%arg0: i32) -> (i32, i32) {
    %c0_i32 = arith.constant 0 : i32
    %c0_i32_0 = arith.constant 0 : i32
    return %arg0, %c0_i32 : i32, i32
  }
}

</mosaic_0001>

<llo_original>
// kernel: tile.10
$region0: #{tile.10}
  #allocation0 [shape = 's32[1]{0}', space=sflag, size = 0x4, scoped, tag = 'scoped memory for tile.10']
  %s0 = inlined_call_operand.vmem [shape: f32[4], index: 0, kind: input, shape index: {}]
  %s1 = inlined_call_operand.vmem [shape: f32[256,4], index: 1, kind: output, shape index: {}]
  // Predicated region
  $region2: #{tile.10} parent=0 // pred_check
    _
  $region3: #{tile.10} parent=0 // pred_check_branch
    %3 = sbr.rel (0) target = $region5
  $region4: #{tile.10} parent=0 // pred_region
    _
  $region5: #{tile.10} parent=0 // pred_fallthru
    _
  %v4 = vld [vmem:[%s0] ss:$0 sm:$0xff]
  %5 = vst [vmem:[%s1] sm:$0xff] %v4
  %s6 = scalar_lea.vmem %s1, 8
  %7 = vst [vmem:[%s6] sm:$0xff] %v4
  %s8 = scalar_lea.vmem %s1, 16
  %9 = vst [vmem:[%s8] sm:$0xff] %v4
  %s10 = scalar_lea.vmem %s1, 24
  %11 = vst [vmem:[%s10] sm:$0xff] %v4
  %s12 = scalar_lea.vmem %s1, 32
  %13 = vst [vmem:[%s12] sm:$0xff] %v4
  %s14 = scalar_lea.vmem %s1, 40
  %15 = vst [vmem:[%s14] sm:$0xff] %v4
  %s16 = scalar_lea.vmem %s1, 48
  %17 = vst [vmem:[%s16] sm:$0xff] %v4
  %s18 = scalar_lea.vmem %s1, 56
  %19 = vst [vmem:[%s18] sm:$0xff] %v4
  %s20 = scalar_lea.vmem %s1, 64
  %21 = vst [vmem:[%s20] sm:$0xff] %v4
  %s22 = scalar_lea.vmem %s1, 72
  %23 = vst [vmem:[%s22] sm:$0xff] %v4
  %s24 = scalar_lea.vmem %s1, 80
  %25 = vst [vmem:[%s24] sm:$0xff] %v4
  %s26 = scalar_lea.vmem %s1, 88
  %27 = vst [vmem:[%s26] sm:$0xff] %v4
  %s28 = scalar_lea.vmem %s1, 96
  %29 = vst [vmem:[%s28] sm:$0xff] %v4
  %s30 = scalar_lea.vmem %s1, 104
  %31 = vst [vmem:[%s30] sm:$0xff] %v4
  %s32 = scalar_lea.vmem %s1, 112
  %33 = vst [vmem:[%s32] sm:$0xff] %v4
  %s34 = scalar_lea.vmem %s1, 120
  %35 = vst [vmem:[%s34] sm:$0xff] %v4
  %s36 = scalar_lea.vmem %s1, 128
  %37 = vst [vmem:[%s36] sm:$0xff] %v4
  %s38 = scalar_lea.vmem %s1, 136
  %39 = vst [vmem:[%s38] sm:$0xff] %v4
  %s40 = scalar_lea.vmem %s1, 144
  %41 = vst [vmem:[%s40] sm:$0xff] %v4
  %s42 = scalar_lea.vmem %s1, 152
  %43 = vst [vmem:[%s42] sm:$0xff] %v4
  %s44 = scalar_lea.vmem %s1, 160
  %45 = vst [vmem:[%s44] sm:$0xff] %v4
  %s46 = scalar_lea.vmem %s1, 168
  %47 = vst [vmem:[%s46] sm:$0xff] %v4
  %s48 = scalar_lea.vmem %s1, 176
  %49 = vst [vmem:[%s48] sm:$0xff] %v4
  %s50 = scalar_lea.vmem %s1, 184
  %51 = vst [vmem:[%s50] sm:$0xff] %v4
  %s52 = scalar_lea.vmem %s1, 192
  %53 = vst [vmem:[%s52] sm:$0xff] %v4
  %s54 = scalar_lea.vmem %s1, 200
  %55 = vst [vmem:[%s54] sm:$0xff] %v4
  %s56 = scalar_lea.vmem %s1, 208
  %57 = vst [vmem:[%s56] sm:$0xff] %v4
  %s58 = scalar_lea.vmem %s1, 216
  %59 = vst [vmem:[%s58] sm:$0xff] %v4
  %s60 = scalar_lea.vmem %s1, 224
  %61 = vst [vmem:[%s60] sm:$0xff] %v4
  %s62 = scalar_lea.vmem %s1, 232
  %63 = vst [vmem:[%s62] sm:$0xff] %v4
  %s64 = scalar_lea.vmem %s1, 240
  %65 = vst [vmem:[%s64] sm:$0xff] %v4
  %s66 = scalar_lea.vmem %s1, 248
  %67 = vst [vmem:[%s66] sm:$0xff] %v4

// kernel: tile.11
$region0: #{tile.11}
  %s0 = inlined_call_operand.vmem [shape: f32[256,4], index: 0, kind: input, shape index: {}]
  %s1 = inlined_call_operand.vmem [shape: f32[1,1024], index: 1, kind: output, shape index: {}]
  $region1: #{tile.11} parent=0
    #allocation0 [shape = 'u8[32768]{0}', space=vmem, size = 0x8000, scoped, tag = 'scoped mem for output reshape']
    %v2 = vld [vmem:[%s0] sm:$0x1]
    %s3 = scalar_lea.vmem %s0, 31
    %v4 = vld [vmem:[%s3] sm:$0x2]
    %vm5 = vcmask 1041409
    %v6 = vsel %vm5, %v4, %v2
    %s7 = scalar_lea.vmem %s0, 62
    %v8 = vld [vmem:[%s7] sm:$0x4]
    %vm9 = vcmask 1042434
    %v10 = vsel %vm9, %v8, %v6
    %s11 = scalar_lea.vmem %s0, 93
    %v12 = vld [vmem:[%s11] sm:$0x8]
    %vm13 = vcmask 1043459
    %v14 = vsel %vm13, %v12, %v10
    %s15 = scalar_lea.vmem %s0, 124
    %v16 = vld [vmem:[%s15] sm:$0x10]
    %vm17 = vcmask 1044484
    %v18 = vsel %vm17, %v16, %v14
    %s19 = scalar_lea.vmem %s0, 155
    %v20 = vld [vmem:[%s19] sm:$0x20]
    %vm21 = vcmask 1045509
    %v22 = vsel %vm21, %v20, %v18
    %s23 = scalar_lea.vmem %s0, 186
    %v24 = vld [vmem:[%s23] sm:$0x40]
    %vm25 = vcmask 1046534
    %v26 = vsel %vm25, %v24, %v22
    %s27 = scalar_lea.vmem %s0, 217
    %v28 = vld [vmem:[%s27] sm:$0x80]
    %vm29 = vcmask 1047559
    %v30 = vsel %vm29, %v28, %v26
    %vm31 = vcmask 31744
    %32 = vst.msk [vmem:[#allocation0] ss:$8 sm:$0xf] %vm31, %v30
    %33 = vst.msk [vmem:[#allocation0] ss:$8 sm:$0xf0] %vm31, %v30
    %s34 = scalar_lea.vmem %s0, 31
    %v35 = vld [vmem:[%s34] sm:$0x1]
    %s36 = scalar_lea.vmem %s0, 62
    %v37 = vld [vmem:[%s36] sm:$0x2]
    %vm38 = vcmask 1041409
    %v39 = vsel %vm38, %v37, %v35
    %s40 = scalar_lea.vmem %s0, 93
    %v41 = vld [vmem:[%s40] sm:$0x4]
    %vm42 = vcmask 1042434
    %v43 = vsel %vm42, %v41, %v39
    %s44 = scalar_lea.vmem %s0, 124
    %v45 = vld [vmem:[%s44] sm:$0x8]
    %vm46 = vcmask 1043459
    %v47 = vsel %vm46, %v45, %v43
    %s48 = scalar_lea.vmem %s0, 155
    %v49 = vld [vmem:[%s48] sm:$0x10]
    %vm50 = vcmask 1044484
    %v51 = vsel %vm50, %v49, %v47
    %s52 = scalar_lea.vmem %s0, 186
    %v53 = vld [vmem:[%s52] sm:$0x20]
    %vm54 = vcmask 1045509
    %v55 = vsel %vm54, %v53, %v51
    %s56 = scalar_lea.vmem %s0, 217
    %v57 = vld [vmem:[%s56] sm:$0x40]
    %vm58 = vcmask 1046534
    %v59 = vsel %vm58, %v57, %v55
    %s60 = scalar_lea.vmem %s0, 248
    %v61 = vld [vmem:[%s60] sm:$0x80]
    %vm62 = vcmask 1047559
    %v63 = vsel %vm62, %v61, %v59
    %64 = vrot.lane.b32.xlu0 %v63, 124
    %v65 = vpop.permute.xlu0 %64
    %vm66 = vcmask 1048544
    %67 = vst.msk [vmem:[#allocation0] ss:$8 sm:$0xf] %vm66, %v65
    %68 = vst.msk [vmem:[#allocation0] ss:$8 sm:$0xf0] %vm66, %v65
    %s69 = scalar_lea.vmem %s0, 30
    %v70 = vld [vmem:[%s69] sm:$0x1]
    %s71 = scalar_lea.vmem %s0, 61
    %v72 = vld [vmem:[%s71] sm:$0x2]
    %vm73 = vcmask 1041409
    %v74 = vsel %vm73, %v72, %v70
    %s75 = scalar_lea.vmem %s0, 92
    %v76 = vld [vmem:[%s75] sm:$0x4]
    %vm77 = vcmask 1042434
    %v78 = vsel %vm77, %v76, %v74
    %s79 = scalar_lea.vmem %s0, 123
    %v80 = vld [vmem:[%s79] sm:$0x8]
    %vm81 = vcmask 1043459
    %v82 = vsel %vm81, %v80, %v78
    %s83 = scalar_lea.vmem %s0, 154
    %v84 = vld [vmem:[%s83] sm:$0x10]
    %vm85 = vcmask 1044484
    %v86 = vsel %vm85, %v84, %v82
    %s87 = scalar_lea.vmem %s0, 185
    %v88 = vld [vmem:[%s87] sm:$0x20]
    %vm89 = vcmask 1045509
    %v90 = vsel %vm89, %v88, %v86
    %s91 = scalar_lea.vmem %s0, 216
    %v92 = vld [vmem:[%s91] sm:$0x40]
    %vm93 = vcmask 1046534
    %v94 = vsel %vm93, %v92, %v90
    %s95 = scalar_lea.vmem %s0, 247
    %v96 = vld [vmem:[%s95] sm:$0x80]
    %vm97 = vcmask 1047559
    %v98 = vsel %vm97, %v96, %v94
    %99 = vrot.lane.b32.xlu0 %v98, 120
    %v100 = vpop.permute.xlu0 %99
    %vm101 = vcmask 1015744
    %102 = vst.msk [vmem:[#allocation0] ss:$8 sm:$0xf] %vm101, %v100
    %103 = vst.msk [vmem:[#allocation0] ss:$8 sm:$0xf0] %vm101, %v100
    %s104 = scalar_lea.vmem %s0, 29
    %v105 = vld [vmem:[%s104] sm:$0x1]
    %s106 = scalar_lea.vmem %s0, 60
    %v107 = vld [vmem:[%s106] sm:$0x2]
    %vm108 = vcmask 1041409
    %v109 = vsel %vm108, %v107, %v105
    %s110 = scalar_lea.vmem %s0, 91
    %v111 = vld [vmem:[%s110] sm:$0x4]
    %vm112 = vcmask 1042434
    %v113 = vsel %vm112, %v111, %v109
    %s114 = scalar_lea.vmem %s0, 122
    %v115 = vld [vmem:[%s114] sm:$0x8]
    %vm116 = vcmask 1043459
    %v117 = vsel %vm116, %v115, %v113
    %s118 = scalar_lea.vmem %s0, 153
    %v119 = vld [vmem:[%s118] sm:$0x10]
    %vm120 = vcmask 1044484
    %v121 = vsel %vm120, %v119, %v117
    %s122 = scalar_lea.vmem %s0, 184
    %v123 = vld [vmem:[%s122] sm:$0x20]
    %vm124 = vcmask 1045509
    %v125 = vsel %vm124, %v123, %v121
    %s126 = scalar_lea.vmem %s0, 215
    %v127 = vld [vmem:[%s126] sm:$0x40]
    %vm128 = vcmask 1046534
    %v129 = vsel %vm128, %v127, %v125
    %s130 = scalar_lea.vmem %s0, 246
    %v131 = vld [vmem:[%s130] sm:$0x80]
    %vm132 = vcmask 1047559
    %v133 = vsel %vm132, %v131, %v129
    %134 = vrot.lane.b32.xlu0 %v133, 116
    %v135 = vpop.permute.xlu0 %134
    %vm136 = vcmask 982944
    %137 = vst.msk [vmem:[#allocation0] ss:$8 sm:$0xf] %vm136, %v135
    %138 = vst.msk [vmem:[#allocation0] ss:$8 sm:$0xf0] %vm136, %v135
    %s139 = scalar_lea.vmem %s0, 28
    %v140 = vld [vmem:[%s139] sm:$0x1]
    %s141 = scalar_lea.vmem %s0, 59
    %v142 = vld [vmem:[%s141] sm:$0x2]
    %vm143 = vcmask 1041409
    %v144 = vsel %vm143, %v142, %v140
    %s145 = scalar_lea.vmem %s0, 90
    %v146 = vld [vmem:[%s145] sm:$0x4]
    %vm147 = vcmask 1042434
    %v148 = vsel %vm147, %v146, %v144
    %s149 = scalar_lea.vmem %s0, 121
    %v150 = vld [vmem:[%s149] sm:$0x8]
    %vm151 = vcmask 1043459
    %v152 = vsel %vm151, %v150, %v148
    %s153 = scalar_lea.vmem %s0, 152
    %v154 = vld [vmem:[%s153] sm:$0x10]
    %vm155 = vcmask 1044484
    %v156 = vsel %vm155, %v154, %v152
    %s157 = scalar_lea.vmem %s0, 183
    %v158 = vld [vmem:[%s157] sm:$0x20]
    %vm159 = vcmask 1045509
    %v160 = vsel %vm159, %v158, %v156
    %s161 = scalar_lea.vmem %s0, 214
    %v162 = vld [vmem:[%s161] sm:$0x40]
    %vm163 = vcmask 1046534
    %v164 = vsel %vm163, %v162, %v160
    %s165 = scalar_lea.vmem %s0, 245
    %v166 = vld [vmem:[%s165] sm:$0x80]
    %vm167 = vcmask 1047559
    %v168 = vsel %vm167, %v166, %v164
    %169 = vrot.lane.b32.xlu0 %v168, 112
    %v170 = vpop.permute.xlu0 %169
    %vm171 = vcmask 950144
    %172 = vst.msk [vmem:[#allocation0] ss:$8 sm:$0xf] %vm171, %v170
    %173 = vst.msk [vmem:[#allocation0] ss:$8 sm:$0xf0] %vm171, %v170
    %s174 = scalar_lea.vmem %s0, 27
    %v175 = vld [vmem:[%s174] sm:$0x1]
    %s176 = scalar_lea.vmem %s0, 58
    %v177 = vld [vmem:[%s176] sm:$0x2]
    %vm178 = vcmask 1041409
    %v179 = vsel %vm178, %v177, %v175
    %s180 = scalar_lea.vmem %s0, 89
    %v181 = vld [vmem:[%s180] sm:$0x4]
    %vm182 = vcmask 1042434
    %v183 = vsel %vm182, %v181, %v179
    %s184 = scalar_lea.vmem %s0, 120
    %v185 = vld [vmem:[%s184] sm:$0x8]
    %vm186 = vcmask 1043459
    %v187 = vsel %vm186, %v185, %v183
    %s188 = scalar_lea.vmem %s0, 151
    %v189 = vld [vmem:[%s188] sm:$0x10]
    %vm190 = vcmask 1044484
    %v191 = vsel %vm190, %v189, %v187
    %s192 = scalar_lea.vmem %s0, 182
    %v193 = vld [vmem:[%s192] sm:$0x20]
    %vm194 = vcmask 1045509
    %v195 = vsel %vm194, %v193, %v191
    %s196 = scalar_lea.vmem %s0, 213
    %v197 = vld [vmem:[%s196] sm:$0x40]
    %vm198 = vcmask 1046534
    %v199 = vsel %vm198, %v197, %v195
    %s200 = scalar_lea.vmem %s0, 244
    %v201 = vld [vmem:[%s200] sm:$0x80]
    %vm202 = vcmask 1047559
    %v203 = vsel %vm202, %v201, %v199
    %204 = vrot.lane.b32.xlu0 %v203, 108
    %v205 = vpop.permute.xlu0 %204
    %vm206 = vcmask 917344
    %207 = vst.msk [vmem:[#allocation0] ss:$8 sm:$0xf] %vm206, %v205
    %208 = vst.msk [vmem:[#allocation0] ss:$8 sm:$0xf0] %vm206, %v205
    %s209 = scalar_lea.vmem %s0, 26
    %v210 = vld [vmem:[%s209] sm:$0x1]
    %s211 = scalar_lea.vmem %s0, 57
    %v212 = vld [vmem:[%s211] sm:$0x2]
    %vm213 = vcmask 1041409
    %v214 = vsel %vm213, %v212, %v210
    %s215 = scalar_lea.vmem %s0, 88
    %v216 = vld [vmem:[%s215] sm:$0x4]
    %vm217 = vcmask 1042434
    %v218 = vsel %vm217, %v216, %v214
    %s219 = scalar_lea.vmem %s0, 119
    %v220 = vld [vmem:[%s219] sm:$0x8]
    %vm221 = vcmask 1043459
    %v222 = vsel %vm221, %v220, %v218
    %s223 = scalar_lea.vmem %s0, 150
    %v224 = vld [vmem:[%s223] sm:$0x10]
    %vm225 = vcmask 1044484
    %v226 = vsel %vm225, %v224, %v222
    %s227 = scalar_lea.vmem %s0, 181
    %v228 = vld [vmem:[%s227] sm:$0x20]
    %vm229 = vcmask 1045509
    %v230 = vsel %vm229, %v228, %v226
    %s231 = scalar_lea.vmem %s0, 212
    %v232 = vld [vmem:[%s231] sm:$0x40]
    %vm233 = vcmask 1046534
    %v234 = vsel %vm233, %v232, %v230
    %s235 = scalar_lea.vmem %s0, 243
    %v236 = vld [vmem:[%s235] sm:$0x80]
    %vm237 = vcmask 1047559
    %v238 = vsel %vm237, %v236, %v234
    %239 = vrot.lane.b32.xlu0 %v238, 104
    %v240 = vpop.permute.xlu0 %239
    %vm241 = vcmask 884544
    %242 = vst.msk [vmem:[#allocation0] ss:$8 sm:$0xf] %vm241, %v240
    %243 = vst.msk [vmem:[#allocation0] ss:$8 sm:$0xf0] %vm241, %v240
    %s244 = scalar_lea.vmem %s0, 25
    %v245 = vld [vmem:[%s244] sm:$0x1]
    %s246 = scalar_lea.vmem %s0, 56
    %v247 = vld [vmem:[%s246] sm:$0x2]
    %vm248 = vcmask 1041409
    %v249 = vsel %vm248, %v247, %v245
    %s250 = scalar_lea.vmem %s0, 87
    %v251 = vld [vmem:[%s250] sm:$0x4]
    %vm252 = vcmask 1042434
    %v253 = vsel %vm252, %v251, %v249
    %s254 = scalar_lea.vmem %s0, 118
    %v255 = vld [vmem:[%s254] sm:$0x8]
    %vm256 = vcmask 1043459
    %v257 = vsel %vm256, %v255, %v253
    %s258 = scalar_lea.vmem %s0, 149
    %v259 = vld [vmem:[%s258] sm:$0x10]
    %vm260 = vcmask 1044484
    %v261 = vsel %vm260, %v259, %v257
    %s262 = scalar_lea.vmem %s0, 180
    %v263 = vld [vmem:[%s262] sm:$0x20]
    %vm264 = vcmask 1045509
    %v265 = vsel %vm264, %v263, %v261
    %s266 = scalar_lea.vmem %s0, 211
    %v267 = vld [vmem:[%s266] sm:$0x40]
    %vm268 = vcmask 1046534
    %v269 = vsel %vm268, %v267, %v265
    %s270 = scalar_lea.vmem %s0, 242
    %v271 = vld [vmem:[%s270] sm:$0x80]
    %vm272 = vcmask 1047559
    %v273 = vsel %vm272, %v271, %v269
    %274 = vrot.lane.b32.xlu0 %v273, 100
    %v275 = vpop.permute.xlu0 %274
    %vm276 = vcmask 851744
    %277 = vst.msk [vmem:[#allocation0] ss:$8 sm:$0xf] %vm276, %v275
    %278 = vst.msk [vmem:[#allocation0] ss:$8 sm:$0xf0] %vm276, %v275
    %s279 = scalar_lea.vmem %s0, 24
    %v280 = vld [vmem:[%s279] sm:$0x1]
    %s281 = scalar_lea.vmem %s0, 55
    %v282 = vld [vmem:[%s281] sm:$0x2]
    %vm283 = vcmask 1041409
    %v284 = vsel %vm283, %v282, %v280
    %s285 = scalar_lea.vmem %s0, 86
    %v286 = vld [vmem:[%s285] sm:$0x4]
    %vm287 = vcmask 1042434
    %v288 = vsel %vm287, %v286, %v284
    %s289 = scalar_lea.vmem %s0, 117
    %v290 = vld [vmem:[%s289] sm:$0x8]
    %vm291 = vcmask 1043459
    %v292 = vsel %vm291, %v290, %v288
    %s293 = scalar_lea.vmem %s0, 148
    %v294 = vld [vmem:[%s293] sm:$0x10]
    %vm295 = vcmask 1044484
    %v296 = vsel %vm295, %v294, %v292
    %s297 = scalar_lea.vmem %s0, 179
    %v298 = vld [vmem:[%s297] sm:$0x20]
    %vm299 = vcmask 1045509
    %v300 = vsel %vm299, %v298, %v296
    %s301 = scalar_lea.vmem %s0, 210
    %v302 = vld [vmem:[%s301] sm:$0x40]
    %vm303 = vcmask 1046534
    %v304 = vsel %vm303, %v302, %v300
    %s305 = scalar_lea.vmem %s0, 241
    %v306 = vld [vmem:[%s305] sm:$0x80]
    %vm307 = vcmask 1047559
    %v308 = vsel %vm307, %v306, %v304
    %309 = vrot.lane.b32.xlu0 %v308, 96
    %v310 = vpop.permute.xlu0 %309
    %vm311 = vcmask 818944
    %312 = vst.msk [vmem:[#allocation0] ss:$8 sm:$0xf] %vm311, %v310
    %313 = vst.msk [vmem:[#allocation0] ss:$8 sm:$0xf0] %vm311, %v310
    %s314 = scalar_lea.vmem %s0, 23
    %v315 = vld [vmem:[%s314] sm:$0x1]
    %s316 = scalar_lea.vmem %s0, 54
    %v317 = vld [vmem:[%s316] sm:$0x2]
    %vm318 = vcmask 1041409
    %v319 = vsel %vm318, %v317, %v315
    %s320 = scalar_lea.vmem %s0, 85
    %v321 = vld [vmem:[%s320] sm:$0x4]
    %vm322 = vcmask 1042434
    %v323 = vsel %vm322, %v321, %v319
    %s324 = scalar_lea.vmem %s0, 116
    %v325 = vld [vmem:[%s324] sm:$0x8]
    %vm326 = vcmask 1043459
    %v327 = vsel %vm326, %v325, %v323
    %s328 = scalar_lea.vmem %s0, 147
    %v329 = vld [vmem:[%s328] sm:$0x10]
    %vm330 = vcmask 1044484
    %v331 = vsel %vm330, %v329, %v327
    %s332 = scalar_lea.vmem %s0, 178
    %v333 = vld [vmem:[%s332] sm:$0x20]
    %vm334 = vcmask 1045509
    %v335 = vsel %vm334, %v333, %v331
    %s336 = scalar_lea.vmem %s0, 209
    %v337 = vld [vmem:[%s336] sm:$0x40]
    %vm338 = vcmask 1046534
    %v339 = vsel %vm338, %v337, %v335
    %s340 = scalar_lea.vmem %s0, 240
    %v341 = vld [vmem:[%s340] sm:$0x80]
    %vm342 = vcmask 1047559
    %v343 = vsel %vm342, %v341, %v339
    %344 = vrot.lane.b32.xlu0 %v343, 92
    %v345 = vpop.permute.xlu0 %344
    %vm346 = vcmask 786144
    %347 = vst.msk [vmem:[#allocation0] ss:$8 sm:$0xf] %vm346, %v345
    %348 = vst.msk [vmem:[#allocation0] ss:$8 sm:$0xf0] %vm346, %v345
    %s349 = scalar_lea.vmem %s0, 22
    %v350 = vld [vmem:[%s349] sm:$0x1]
    %s351 = scalar_lea.vmem %s0, 53
    %v352 = vld [vmem:[%s351] sm:$0x2]
    %vm353 = vcmask 1041409
    %v354 = vsel %vm353, %v352, %v350
    %s355 = scalar_lea.vmem %s0, 84
    %v356 = vld [vmem:[%s355] sm:$0x4]
    %vm357 = vcmask 1042434
    %v358 = vsel %vm357, %v356, %v354
    %s359 = scalar_lea.vmem %s0, 115
    %v360 = vld [vmem:[%s359] sm:$0x8]
    %vm361 = vcmask 1043459
    %v362 = vsel %vm361, %v360, %v358
    %s363 = scalar_lea.vmem %s0, 146
    %v364 = vld [vmem:[%s363] sm:$0x10]
    %vm365 = vcmask 1044484
    %v366 = vsel %vm365, %v364, %v362
    %s367 = scalar_lea.vmem %s0, 177
    %v368 = vld [vmem:[%s367] sm:$0x20]
    %vm369 = vcmask 1045509
    %v370 = vsel %vm369, %v368, %v366
    %s371 = scalar_lea.vmem %s0, 208
    %v372 = vld [vmem:[%s371] sm:$0x40]
    %vm373 = vcmask 1046534
    %v374 = vsel %vm373, %v372, %v370
    %s375 = scalar_lea.vmem %s0, 239
    %v376 = vld [vmem:[%s375] sm:$0x80]
    %vm377 = vcmask 1047559
    %v378 = vsel %vm377, %v376, %v374
    %379 = vrot.lane.b32.xlu0 %v378, 88
    %v380 = vpop.permute.xlu0 %379
    %vm381 = vcmask 753344
    %382 = vst.msk [vmem:[#allocation0] ss:$8 sm:$0xf] %vm381, %v380
    %383 = vst.msk [vmem:[#allocation0] ss:$8 sm:$0xf0] %vm381, %v380
    %s384 = scalar_lea.vmem %s0, 21
    %v385 = vld [vmem:[%s384] sm:$0x1]
    %s386 = scalar_lea.vmem %s0, 52
    %v387 = vld [vmem:[%s386] sm:$0x2]
    %vm388 = vcmask 1041409
    %v389 = vsel %vm388, %v387, %v385
    %s390 = scalar_lea.vmem %s0, 83
    %v391 = vld [vmem:[%s390] sm:$0x4]
    %vm392 = vcmask 1042434
    %v393 = vsel %vm392, %v391, %v389
    %s394 = scalar_lea.vmem %s0, 114
    %v395 = vld [vmem:[%s394] sm:$0x8]
    %vm396 = vcmask 1043459
    %v397 = vsel %vm396, %v395, %v393
    %s398 = scalar_lea.vmem %s0, 145
    %v399 = vld [vmem:[%s398] sm:$0x10]
    %vm400 = vcmask 1044484
    %v401 = vsel %vm400, %v399, %v397
    %s402 = scalar_lea.vmem %s0, 176
    %v403 = vld [vmem:[%s402] sm:$0x20]
    %vm404 = vcmask 1045509
    %v405 = vsel %vm404, %v403, %v401
    %s406 = scalar_lea.vmem %s0, 207
    %v407 = vld [vmem:[%s406] sm:$0x40]
    %vm408 = vcmask 1046534
    %v409 = vsel %vm408, %v407, %v405
    %s410 = scalar_lea.vmem %s0, 238
    %v411 = vld [vmem:[%s410] sm:$0x80]
    %vm412 = vcmask 1047559
    %v413 = vsel %vm412, %v411, %v409
    %414 = vrot.lane.b32.xlu0 %v413, 84
    %v415 = vpop.permute.xlu0 %414
    %vm416 = vcmask 720544
    %417 = vst.msk [vmem:[#allocation0] ss:$8 sm:$0xf] %vm416, %v415
    %418 = vst.msk [vmem:[#allocation0] ss:$8 sm:$0xf0] %vm416, %v415
    %s419 = scalar_lea.vmem %s0, 20
    %v420 = vld [vmem:[%s419] sm:$0x1]
    %s421 = scalar_lea.vmem %s0, 51
    %v422 = vld [vmem:[%s421] sm:$0x2]
    %vm423 = vcmask 1041409
    %v424 = vsel %vm423, %v422, %v420
    %s425 = scalar_lea.vmem %s0, 82
    %v426 = vld [vmem:[%s425] sm:$0x4]
    %vm427 = vcmask 1042434
    %v428 = vsel %vm427, %v426, %v424
    %s429 = scalar_lea.vmem %s0, 113
    %v430 = vld [vmem:[%s429] sm:$0x8]
    %vm431 = vcmask 1043459
    %v432 = vsel %vm431, %v430, %v428
    %s433 = scalar_lea.vmem %s0, 144
    %v434 = vld [vmem:[%s433] sm:$0x10]
    %vm435 = vcmask 1044484
    %v436 = vsel %vm435, %v434, %v432
    %s437 = scalar_lea.vmem %s0, 175
    %v438 = vld [vmem:[%s437] sm:$0x20]
    %vm439 = vcmask 1045509
    %v440 = vsel %vm439, %v438, %v436
    %s441 = scalar_lea.vmem %s0, 206
    %v442 = vld [vmem:[%s441] sm:$0x40]
    %vm443 = vcmask 1046534
    %v444 = vsel %vm443, %v442, %v440
    %s445 = scalar_lea.vmem %s0, 237
    %v446 = vld [vmem:[%s445] sm:$0x80]
    %vm447 = vcmask 1047559
    %v448 = vsel %vm447, %v446, %v444
    %449 = vrot.lane.b32.xlu0 %v448, 80
    %v450 = vpop.permute.xlu0 %449
    %vm451 = vcmask 687744
    %452 = vst.msk [vmem:[#allocation0] ss:$8 sm:$0xf] %vm451, %v450
    %453 = vst.msk [vmem:[#allocation0] ss:$8 sm:$0xf0] %vm451, %v450
    %s454 = scalar_lea.vmem %s0, 19
    %v455 = vld [vmem:[%s454] sm:$0x1]
    %s456 = scalar_lea.vmem %s0, 50
    %v457 = vld [vmem:[%s456] sm:$0x2]
    %vm458 = vcmask 1041409
    %v459 = vsel %vm458, %v457, %v455
    %s460 = scalar_lea.vmem %s0, 81
    %v461 = vld [vmem:[%s460] sm:$0x4]
    %vm462 = vcmask 1042434
    %v463 = vsel %vm462, %v461, %v459
    %s464 = scalar_lea.vmem %s0, 112
    %v465 = vld [vmem:[%s464] sm:$0x8]
    %vm466 = vcmask 1043459
    %v467 = vsel %vm466, %v465, %v463
    %s468 = scalar_lea.vmem %s0, 143
    %v469 = vld [vmem:[%s468] sm:$0x10]
    %vm470 = vcmask 1044484
    %v471 = vsel %vm470, %v469, %v467
    %s472 = scalar_lea.vmem %s0, 174
    %v473 = vld [vmem:[%s472] sm:$0x20]
    %vm474 = vcmask 1045509
    %v475 = vsel %vm474, %v473, %v471
    %s476 = scalar_lea.vmem %s0, 205
    %v477 = vld [vmem:[%s476] sm:$0x40]
    %vm478 = vcmask 1046534
    %v479 = vsel %vm478, %v477, %v475
    %s480 = scalar_lea.vmem %s0, 236
    %v481 = vld [vmem:[%s480] sm:$0x80]
    %vm482 = vcmask 1047559
    %v483 = vsel %vm482, %v481, %v479
    %484 = vrot.lane.b32.xlu0 %v483, 76
    %v485 = vpop.permute.xlu0 %484
    %vm486 = vcmask 654944
    %487 = vst.msk [vmem:[#allocation0] ss:$8 sm:$0xf] %vm486, %v485
    %488 = vst.msk [vmem:[#allocation0] ss:$8 sm:$0xf0] %vm486, %v485
    %s489 = scalar_lea.vmem %s0, 18
    %v490 = vld [vmem:[%s489] sm:$0x1]
    %s491 = scalar_lea.vmem %s0, 49
    %v492 = vld [vmem:[%s491] sm:$0x2]
    %vm493 = vcmask 1041409
    %v494 = vsel %vm493, %v492, %v490
    %s495 = scalar_lea.vmem %s0, 80
    %v496 = vld [vmem:[%s495] sm:$0x4]
    %vm497 = vcmask 1042434
    %v498 = vsel %vm497, %v496, %v494
    %s499 = scalar_lea.vmem %s0, 111
    %v500 = vld [vmem:[%s499] sm:$0x8]
    %vm501 = vcmask 1043459
    %v502 = vsel %vm501, %v500, %v498
    %s503 = scalar_lea.vmem %s0, 142
    %v504 = vld [vmem:[%s503] sm:$0x10]
    %vm505 = vcmask 1044484
    %v506 = vsel %vm505, %v504, %v502
    %s507 = scalar_lea.vmem %s0, 173
    %v508 = vld [vmem:[%s507] sm:$0x20]
    %vm509 = vcmask 1045509
    %v510 = vsel %vm509, %v508, %v506
    %s511 = scalar_lea.vmem %s0, 204
    %v512 = vld [vmem:[%s511] sm:$0x40]
    %vm513 = vcmask 1046534
    %v514 = vsel %vm513, %v512, %v510
    %s515 = scalar_lea.vmem %s0, 235
    %v516 = vld [vmem:[%s515] sm:$0x80]
    %vm517 = vcmask 1047559
    %v518 = vsel %vm517, %v516, %v514
    %519 = vrot.lane.b32.xlu0 %v518, 72
    %v520 = vpop.permute.xlu0 %519
    %vm521 = vcmask 622144
    %522 = vst.msk [vmem:[#allocation0] ss:$8 sm:$0xf] %vm521, %v520
    %523 = vst.msk [vmem:[#allocation0] ss:$8 sm:$0xf0] %vm521, %v520
    %s524 = scalar_lea.vmem %s0, 17
    %v525 = vld [vmem:[%s524] sm:$0x1]
    %s526 = scalar_lea.vmem %s0, 48
    %v527 = vld [vmem:[%s526] sm:$0x2]
    %vm528 = vcmask 1041409
    %v529 = vsel %vm528, %v527, %v525
    %s530 = scalar_lea.vmem %s0, 79
    %v531 = vld [vmem:[%s530] sm:$0x4]
    %vm532 = vcmask 1042434
    %v533 = vsel %vm532, %v531, %v529
    %s534 = scalar_lea.vmem %s0, 110
    %v535 = vld [vmem:[%s534] sm:$0x8]
    %vm536 = vcmask 1043459
    %v537 = vsel %vm536, %v535, %v533
    %s538 = scalar_lea.vmem %s0, 141
    %v539 = vld [vmem:[%s538] sm:$0x10]
    %vm540 = vcmask 1044484
    %v541 = vsel %vm540, %v539, %v537
    %s542 = scalar_lea.vmem %s0, 172
    %v543 = vld [vmem:[%s542] sm:$0x20]
    %vm544 = vcmask 1045509
    %v545 = vsel %vm544, %v543, %v541
    %s546 = scalar_lea.vmem %s0, 203
    %v547 = vld [vmem:[%s546] sm:$0x40]
    %vm548 = vcmask 1046534
    %v549 = vsel %vm548, %v547, %v545
    %s550 = scalar_lea.vmem %s0, 234
    %v551 = vld [vmem:[%s550] sm:$0x80]
    %vm552 = vcmask 1047559
    %v553 = vsel %vm552, %v551, %v549
    %554 = vrot.lane.b32.xlu0 %v553, 68
    %v555 = vpop.permute.xlu0 %554
    %vm556 = vcmask 589344
    %557 = vst.msk [vmem:[#allocation0] ss:$8 sm:$0xf] %vm556, %v555
    %558 = vst.msk [vmem:[#allocation0] ss:$8 sm:$0xf0] %vm556, %v555
    %s559 = scalar_lea.vmem %s0, 16
    %v560 = vld [vmem:[%s559] sm:$0x1]
    %s561 = scalar_lea.vmem %s0, 47
    %v562 = vld [vmem:[%s561] sm:$0x2]
    %vm563 = vcmask 1041409
    %v564 = vsel %vm563, %v562, %v560
    %s565 = scalar_lea.vmem %s0, 78
    %v566 = vld [vmem:[%s565] sm:$0x4]
    %vm567 = vcmask 1042434
    %v568 = vsel %vm567, %v566, %v564
    %s569 = scalar_lea.vmem %s0, 109
    %v570 = vld [vmem:[%s569] sm:$0x8]
    %vm571 = vcmask 1043459
    %v572 = vsel %vm571, %v570, %v568
    %s573 = scalar_lea.vmem %s0, 140
    %v574 = vld [vmem:[%s573] sm:$0x10]
    %vm575 = vcmask 1044484
    %v576 = vsel %vm575, %v574, %v572
    %s577 = scalar_lea.vmem %s0, 171
    %v578 = vld [vmem:[%s577] sm:$0x20]
    %vm579 = vcmask 1045509
    %v580 = vsel %vm579, %v578, %v576
    %s581 = scalar_lea.vmem %s0, 202
    %v582 = vld [vmem:[%s581] sm:$0x40]
    %vm583 = vcmask 1046534
    %v584 = vsel %vm583, %v582, %v580
    %s585 = scalar_lea.vmem %s0, 233
    %v586 = vld [vmem:[%s585] sm:$0x80]
    %vm587 = vcmask 1047559
    %v588 = vsel %vm587, %v586, %v584
    %589 = vrot.lane.b32.xlu0 %v588, 64
    %v590 = vpop.permute.xlu0 %589
    %vm591 = vcmask 556544
    %592 = vst.msk [vmem:[#allocation0] ss:$8 sm:$0xf] %vm591, %v590
    %593 = vst.msk [vmem:[#allocation0] ss:$8 sm:$0xf0] %vm591, %v590
    %s594 = scalar_lea.vmem %s0, 15
    %v595 = vld [vmem:[%s594] sm:$0x1]
    %s596 = scalar_lea.vmem %s0, 46
    %v597 = vld [vmem:[%s596] sm:$0x2]
    %vm598 = vcmask 1041409
    %v599 = vsel %vm598, %v597, %v595
    %s600 = scalar_lea.vmem %s0, 77
    %v601 = vld [vmem:[%s600] sm:$0x4]
    %vm602 = vcmask 1042434
    %v603 = vsel %vm602, %v601, %v599
    %s604 = scalar_lea.vmem %s0, 108
    %v605 = vld [vmem:[%s604] sm:$0x8]
    %vm606 = vcmask 1043459
    %v607 = vsel %vm606, %v605, %v603
    %s608 = scalar_lea.vmem %s0, 139
    %v609 = vld [vmem:[%s608] sm:$0x10]
    %vm610 = vcmask 1044484
    %v611 = vsel %vm610, %v609, %v607
    %s612 = scalar_lea.vmem %s0, 170
    %v613 = vld [vmem:[%s612] sm:$0x20]
    %vm614 = vcmask 1045509
    %v615 = vsel %vm614, %v613, %v611
    %s616 = scalar_lea.vmem %s0, 201
    %v617 = vld [vmem:[%s616] sm:$0x40]
    %vm618 = vcmask 1046534
    %v619 = vsel %vm618, %v617, %v615
    %s620 = scalar_lea.vmem %s0, 232
    %v621 = vld [vmem:[%s620] sm:$0x80]
    %vm622 = vcmask 1047559
    %v623 = vsel %vm622, %v621, %v619
    %624 = vrot.lane.b32.xlu0 %v623, 60
    %v625 = vpop.permute.xlu0 %624
    %vm626 = vcmask 523744
    %627 = vst.msk [vmem:[#allocation0] ss:$8 sm:$0xf] %vm626, %v625
    %628 = vst.msk [vmem:[#allocation0] ss:$8 sm:$0xf0] %vm626, %v625
    %s629 = scalar_lea.vmem %s0, 14
    %v630 = vld [vmem:[%s629] sm:$0x1]
    %s631 = scalar_lea.vmem %s0, 45
    %v632 = vld [vmem:[%s631] sm:$0x2]
    %vm633 = vcmask 1041409
    %v634 = vsel %vm633, %v632, %v630
    %s635 = scalar_lea.vmem %s0, 76
    %v636 = vld [vmem:[%s635] sm:$0x4]
    %vm637 = vcmask 1042434
    %v638 = vsel %vm637, %v636, %v634
    %s639 = scalar_lea.vmem %s0, 107
    %v640 = vld [vmem:[%s639] sm:$0x8]
    %vm641 = vcmask 1043459
    %v642 = vsel %vm641, %v640, %v638
    %s643 = scalar_lea.vmem %s0, 138
    %v644 = vld [vmem:[%s643] sm:$0x10]
    %vm645 = vcmask 1044484
    %v646 = vsel %vm645, %v644, %v642
    %s647 = scalar_lea.vmem %s0, 169
    %v648 = vld [vmem:[%s647] sm:$0x20]
    %vm649 = vcmask 1045509
    %v650 = vsel %vm649, %v648, %v646
    %s651 = scalar_lea.vmem %s0, 200
    %v652 = vld [vmem:[%s651] sm:$0x40]
    %vm653 = vcmask 1046534
    %v654 = vsel %vm653, %v652, %v650
    %s655 = scalar_lea.vmem %s0, 231
    %v656 = vld [vmem:[%s655] sm:$0x80]
    %vm657 = vcmask 1047559
    %v658 = vsel %vm657, %v656, %v654
    %659 = vrot.lane.b32.xlu0 %v658, 56
    %v660 = vpop.permute.xlu0 %659
    %vm661 = vcmask 490944
    %662 = vst.msk [vmem:[#allocation0] ss:$8 sm:$0xf] %vm661, %v660
    %663 = vst.msk [vmem:[#allocation0] ss:$8 sm:$0xf0] %vm661, %v660
    %s664 = scalar_lea.vmem %s0, 13
    %v665 = vld [vmem:[%s664] sm:$0x1]
    %s666 = scalar_lea.vmem %s0, 44
    %v667 = vld [vmem:[%s666] sm:$0x2]
    %vm668 = vcmask 1041409
    %v669 = vsel %vm668, %v667, %v665
    %s670 = scalar_lea.vmem %s0, 75
    %v671 = vld [vmem:[%s670] sm:$0x4]
    %vm672 = vcmask 1042434
    %v673 = vsel %vm672, %v671, %v669
    %s674 = scalar_lea.vmem %s0, 106
    %v675 = vld [vmem:[%s674] sm:$0x8]
    %vm676 = vcmask 1043459
    %v677 = vsel %vm676, %v675, %v673
    %s678 = scalar_lea.vmem %s0, 137
    %v679 = vld [vmem:[%s678] sm:$0x10]
    %vm680 = vcmask 1044484
    %v681 = vsel %vm680, %v679, %v677
    %s682 = scalar_lea.vmem %s0, 168
    %v683 = vld [vmem:[%s682] sm:$0x20]
    %vm684 = vcmask 1045509
    %v685 = vsel %vm684, %v683, %v681
    %s686 = scalar_lea.vmem %s0, 199
    %v687 = vld [vmem:[%s686] sm:$0x40]
    %vm688 = vcmask 1046534
    %v689 = vsel %vm688, %v687, %v685
    %s690 = scalar_lea.vmem %s0, 230
    %v691 = vld [vmem:[%s690] sm:$0x80]
    %vm692 = vcmask 1047559
    %v693 = vsel %vm692, %v691, %v689
    %694 = vrot.lane.b32.xlu0 %v693, 52
    %v695 = vpop.permute.xlu0 %694
    %vm696 = vcmask 458144
    %697 = vst.msk [vmem:[#allocation0] ss:$8 sm:$0xf] %vm696, %v695
    %698 = vst.msk [vmem:[#allocation0] ss:$8 sm:$0xf0] %vm696, %v695
    %s699 = scalar_lea.vmem %s0, 12
    %v700 = vld [vmem:[%s699] sm:$0x1]
    %s701 = scalar_lea.vmem %s0, 43
    %v702 = vld [vmem:[%s701] sm:$0x2]
    %vm703 = vcmask 1041409
    %v704 = vsel %vm703, %v702, %v700
    %s705 = scalar_lea.vmem %s0, 74
    %v706 = vld [vmem:[%s705] sm:$0x4]
    %vm707 = vcmask 1042434
    %v708 = vsel %vm707, %v706, %v704
    %s709 = scalar_lea.vmem %s0, 105
    %v710 = vld [vmem:[%s709] sm:$0x8]
    %vm711 = vcmask 1043459
    %v712 = vsel %vm711, %v710, %v708
    %s713 = scalar_lea.vmem %s0, 136
    %v714 = vld [vmem:[%s713] sm:$0x10]
    %vm715 = vcmask 1044484
    %v716 = vsel %vm715, %v714, %v712
    %s717 = scalar_lea.vmem %s0, 167
    %v718 = vld [vmem:[%s717] sm:$0x20]
    %vm719 = vcmask 1045509
    %v720 = vsel %vm719, %v718, %v716
    %s721 = scalar_lea.vmem %s0, 198
    %v722 = vld [vmem:[%s721] sm:$0x40]
    %vm723 = vcmask 1046534
    %v724 = vsel %vm723, %v722, %v720
    %s725 = scalar_lea.vmem %s0, 229
    %v726 = vld [vmem:[%s725] sm:$0x80]
    %vm727 = vcmask 1047559
    %v728 = vsel %vm727, %v726, %v724
    %729 = vrot.lane.b32.xlu0 %v728, 48
    %v730 = vpop.permute.xlu0 %729
    %vm731 = vcmask 425344
    %732 = vst.msk [vmem:[#allocation0] ss:$8 sm:$0xf] %vm731, %v730
    %733 = vst.msk [vmem:[#allocation0] ss:$8 sm:$0xf0] %vm731, %v730
    %s734 = scalar_lea.vmem %s0, 11
    %v735 = vld [vmem:[%s734] sm:$0x1]
    %s736 = scalar_lea.vmem %s0, 42
    %v737 = vld [vmem:[%s736] sm:$0x2]
    %vm738 = vcmask 1041409
    %v739 = vsel %vm738, %v737, %v735
    %s740 = scalar_lea.vmem %s0, 73
    %v741 = vld [vmem:[%s740] sm:$0x4]
    %vm742 = vcmask 1042434
    %v743 = vsel %vm742, %v741, %v739
    %s744 = scalar_lea.vmem %s0, 104
    %v745 = vld [vmem:[%s744] sm:$0x8]
    %vm746 = vcmask 1043459
    %v747 = vsel %vm746, %v745, %v743
    %s748 = scalar_lea.vmem %s0, 135
    %v749 = vld [vmem:[%s748] sm:$0x10]
    %vm750 = vcmask 1044484
    %v751 = vsel %vm750, %v749, %v747
    %s752 = scalar_lea.vmem %s0, 166
    %v753 = vld [vmem:[%s752] sm:$0x20]
    %vm754 = vcmask 1045509
    %v755 = vsel %vm754, %v753, %v751
    %s756 = scalar_lea.vmem %s0, 197
    %v757 = vld [vmem:[%s756] sm:$0x40]
    %vm758 = vcmask 1046534
    %v759 = vsel %vm758, %v757, %v755
    %s760 = scalar_lea.vmem %s0, 228
    %v761 = vld [vmem:[%s760] sm:$0x80]
    %vm762 = vcmask 1047559
    %v763 = vsel %vm762, %v761, %v759
    %764 = vrot.lane.b32.xlu0 %v763, 44
    %v765 = vpop.permute.xlu0 %764
    %vm766 = vcmask 392544
    %767 = vst.msk [vmem:[#allocation0] ss:$8 sm:$0xf] %vm766, %v765
    %768 = vst.msk [vmem:[#allocation0] ss:$8 sm:$0xf0] %vm766, %v765
    %s769 = scalar_lea.vmem %s0, 10
    %v770 = vld [vmem:[%s769] sm:$0x1]
    %s771 = scalar_lea.vmem %s0, 41
    %v772 = vld [vmem:[%s771] sm:$0x2]
    %vm773 = vcmask 1041409
    %v774 = vsel %vm773, %v772, %v770
    %s775 = scalar_lea.vmem %s0, 72
    %v776 = vld [vmem:[%s775] sm:$0x4]
    %vm777 = vcmask 1042434
    %v778 = vsel %vm777, %v776, %v774
    %s779 = scalar_lea.vmem %s0, 103
    %v780 = vld [vmem:[%s779] sm:$0x8]
    %vm781 = vcmask 1043459
    %v782 = vsel %vm781, %v780, %v778
    %s783 = scalar_lea.vmem %s0, 134
    %v784 = vld [vmem:[%s783] sm:$0x10]
    %vm785 = vcmask 1044484
    %v786 = vsel %vm785, %v784, %v782
    %s787 = scalar_lea.vmem %s0, 165
    %v788 = vld [vmem:[%s787] sm:$0x20]
    %vm789 = vcmask 1045509
    %v790 = vsel %vm789, %v788, %v786
    %s791 = scalar_lea.vmem %s0, 196
    %v792 = vld [vmem:[%s791] sm:$0x40]
    %vm793 = vcmask 1046534
    %v794 = vsel %vm793, %v792, %v790
    %s795 = scalar_lea.vmem %s0, 227
    %v796 = vld [vmem:[%s795] sm:$0x80]
    %vm797 = vcmask 1047559
    %v798 = vsel %vm797, %v796, %v794
    %799 = vrot.lane.b32.xlu0 %v798, 40
    %v800 = vpop.permute.xlu0 %799
    %vm801 = vcmask 359744
    %802 = vst.msk [vmem:[#allocation0] ss:$8 sm:$0xf] %vm801, %v800
    %803 = vst.msk [vmem:[#allocation0] ss:$8 sm:$0xf0] %vm801, %v800
    %s804 = scalar_lea.vmem %s0, 9
    %v805 = vld [vmem:[%s804] sm:$0x1]
    %s806 = scalar_lea.vmem %s0, 40
    %v807 = vld [vmem:[%s806] sm:$0x2]
    %vm808 = vcmask 1041409
    %v809 = vsel %vm808, %v807, %v805
    %s810 = scalar_lea.vmem %s0, 71
    %v811 = vld [vmem:[%s810] sm:$0x4]
    %vm812 = vcmask 1042434
    %v813 = vsel %vm812, %v811, %v809
    %s814 = scalar_lea.vmem %s0, 102
    %v815 = vld [vmem:[%s814] sm:$0x8]
    %vm816 = vcmask 1043459
    %v817 = vsel %vm816, %v815, %v813
    %s818 = scalar_lea.vmem %s0, 133
    %v819 = vld [vmem:[%s818] sm:$0x10]
    %vm820 = vcmask 1044484
    %v821 = vsel %vm820, %v819, %v817
    %s822 = scalar_lea.vmem %s0, 164
    %v823 = vld [vmem:[%s822] sm:$0x20]
    %vm824 = vcmask 1045509
    %v825 = vsel %vm824, %v823, %v821
    %s826 = scalar_lea.vmem %s0, 195
    %v827 = vld [vmem:[%s826] sm:$0x40]
    %vm828 = vcmask 1046534
    %v829 = vsel %vm828, %v827, %v825
    %s830 = scalar_lea.vmem %s0, 226
    %v831 = vld [vmem:[%s830] sm:$0x80]
    %vm832 = vcmask 1047559
    %v833 = vsel %vm832, %v831, %v829
    %834 = vrot.lane.b32.xlu0 %v833, 36
    %v835 = vpop.permute.xlu0 %834
    %vm836 = vcmask 326944
    %837 = vst.msk [vmem:[#allocation0] ss:$8 sm:$0xf] %vm836, %v835
    %838 = vst.msk [vmem:[#allocation0] ss:$8 sm:$0xf0] %vm836, %v835
    %s839 = scalar_lea.vmem %s0, 8
    %v840 = vld [vmem:[%s839] sm:$0x1]
    %s841 = scalar_lea.vmem %s0, 39
    %v842 = vld [vmem:[%s841] sm:$0x2]
    %vm843 = vcmask 1041409
    %v844 = vsel %vm843, %v842, %v840
    %s845 = scalar_lea.vmem %s0, 70
    %v846 = vld [vmem:[%s845] sm:$0x4]
    %vm847 = vcmask 1042434
    %v848 = vsel %vm847, %v846, %v844
    %s849 = scalar_lea.vmem %s0, 101
    %v850 = vld [vmem:[%s849] sm:$0x8]
    %vm851 = vcmask 1043459
    %v852 = vsel %vm851, %v850, %v848
    %s853 = scalar_lea.vmem %s0, 132
    %v854 = vld [vmem:[%s853] sm:$0x10]
    %vm855 = vcmask 1044484
    %v856 = vsel %vm855, %v854, %v852
    %s857 = scalar_lea.vmem %s0, 163
    %v858 = vld [vmem:[%s857] sm:$0x20]
    %vm859 = vcmask 1045509
    %v860 = vsel %vm859, %v858, %v856
    %s861 = scalar_lea.vmem %s0, 194
    %v862 = vld [vmem:[%s861] sm:$0x40]
    %vm863 = vcmask 1046534
    %v864 = vsel %vm863, %v862, %v860
    %s865 = scalar_lea.vmem %s0, 225
    %v866 = vld [vmem:[%s865] sm:$0x80]
    %vm867 = vcmask 1047559
    %v868 = vsel %vm867, %v866, %v864
    %869 = vrot.lane.b32.xlu0 %v868, 32
    %v870 = vpop.permute.xlu0 %869
    %vm871 = vcmask 294144
    %872 = vst.msk [vmem:[#allocation0] ss:$8 sm:$0xf] %vm871, %v870
    %873 = vst.msk [vmem:[#allocation0] ss:$8 sm:$0xf0] %vm871, %v870
    %s874 = scalar_lea.vmem %s0, 7
    %v875 = vld [vmem:[%s874] sm:$0x1]
    %s876 = scalar_lea.vmem %s0, 38
    %v877 = vld [vmem:[%s876] sm:$0x2]
    %vm878 = vcmask 1041409
    %v879 = vsel %vm878, %v877, %v875
    %s880 = scalar_lea.vmem %s0, 69
    %v881 = vld [vmem:[%s880] sm:$0x4]
    %vm882 = vcmask 1042434
    %v883 = vsel %vm882, %v881, %v879
    %s884 = scalar_lea.vmem %s0, 100
    %v885 = vld [vmem:[%s884] sm:$0x8]
    %vm886 = vcmask 1043459
    %v887 = vsel %vm886, %v885, %v883
    %s888 = scalar_lea.vmem %s0, 131
    %v889 = vld [vmem:[%s888] sm:$0x10]
    %vm890 = vcmask 1044484
    %v891 = vsel %vm890, %v889, %v887
    %s892 = scalar_lea.vmem %s0, 162
    %v893 = vld [vmem:[%s892] sm:$0x20]
    %vm894 = vcmask 1045509
    %v895 = vsel %vm894, %v893, %v891
    %s896 = scalar_lea.vmem %s0, 193
    %v897 = vld [vmem:[%s896] sm:$0x40]
    %vm898 = vcmask 1046534
    %v899 = vsel %vm898, %v897, %v895
    %s900 = scalar_lea.vmem %s0, 224
    %v901 = vld [vmem:[%s900] sm:$0x80]
    %vm902 = vcmask 1047559
    %v903 = vsel %vm902, %v901, %v899
    %904 = vrot.lane.b32.xlu0 %v903, 28
    %v905 = vpop.permute.xlu0 %904
    %vm906 = vcmask 261344
    %907 = vst.msk [vmem:[#allocation0] ss:$8 sm:$0xf] %vm906, %v905
    %908 = vst.msk [vmem:[#allocation0] ss:$8 sm:$0xf0] %vm906, %v905
    %s909 = scalar_lea.vmem %s0, 6
    %v910 = vld [vmem:[%s909] sm:$0x1]
    %s911 = scalar_lea.vmem %s0, 37
    %v912 = vld [vmem:[%s911] sm:$0x2]
    %vm913 = vcmask 1041409
    %v914 = vsel %vm913, %v912, %v910
    %s915 = scalar_lea.vmem %s0, 68
    %v916 = vld [vmem:[%s915] sm:$0x4]
    %vm917 = vcmask 1042434
    %v918 = vsel %vm917, %v916, %v914
    %s919 = scalar_lea.vmem %s0, 99
    %v920 = vld [vmem:[%s919] sm:$0x8]
    %vm921 = vcmask 1043459
    %v922 = vsel %vm921, %v920, %v918
    %s923 = scalar_lea.vmem %s0, 130
    %v924 = vld [vmem:[%s923] sm:$0x10]
    %vm925 = vcmask 1044484
    %v926 = vsel %vm925, %v924, %v922
    %s927 = scalar_lea.vmem %s0, 161
    %v928 = vld [vmem:[%s927] sm:$0x20]
    %vm929 = vcmask 1045509
    %v930 = vsel %vm929, %v928, %v926
    %s931 = scalar_lea.vmem %s0, 192
    %v932 = vld [vmem:[%s931] sm:$0x40]
    %vm933 = vcmask 1046534
    %v934 = vsel %vm933, %v932, %v930
    %s935 = scalar_lea.vmem %s0, 223
    %v936 = vld [vmem:[%s935] sm:$0x80]
    %vm937 = vcmask 1047559
    %v938 = vsel %vm937, %v936, %v934
    %939 = vrot.lane.b32.xlu0 %v938, 24
    %v940 = vpop.permute.xlu0 %939
    %vm941 = vcmask 228544
    %942 = vst.msk [vmem:[#allocation0] ss:$8 sm:$0xf] %vm941, %v940
    %943 = vst.msk [vmem:[#allocation0] ss:$8 sm:$0xf0] %vm941, %v940
    %s944 = scalar_lea.vmem %s0, 5
    %v945 = vld [vmem:[%s944] sm:$0x1]
    %s946 = scalar_lea.vmem %s0, 36
    %v947 = vld [vmem:[%s946] sm:$0x2]
    %vm948 = vcmask 1041409
    %v949 = vsel %vm948, %v947, %v945
    %s950 = scalar_lea.vmem %s0, 67
    %v951 = vld [vmem:[%s950] sm:$0x4]
    %vm952 = vcmask 1042434
    %v953 = vsel %vm952, %v951, %v949
    %s954 = scalar_lea.vmem %s0, 98
    %v955 = vld [vmem:[%s954] sm:$0x8]
    %vm956 = vcmask 1043459
    %v957 = vsel %vm956, %v955, %v953
    %s958 = scalar_lea.vmem %s0, 129
    %v959 = vld [vmem:[%s958] sm:$0x10]
    %vm960 = vcmask 1044484
    %v961 = vsel %vm960, %v959, %v957
    %s962 = scalar_lea.vmem %s0, 160
    %v963 = vld [vmem:[%s962] sm:$0x20]
    %vm964 = vcmask 1045509
    %v965 = vsel %vm964, %v963, %v961
    %s966 = scalar_lea.vmem %s0, 191
    %v967 = vld [vmem:[%s966] sm:$0x40]
    %vm968 = vcmask 1046534
    %v969 = vsel %vm968, %v967, %v965
    %s970 = scalar_lea.vmem %s0, 222
    %v971 = vld [vmem:[%s970] sm:$0x80]
    %vm972 = vcmask 1047559
    %v973 = vsel %vm972, %v971, %v969
    %974 = vrot.lane.b32.xlu0 %v973, 20
    %v975 = vpop.permute.xlu0 %974
    %vm976 = vcmask 195744
    %977 = vst.msk [vmem:[#allocation0] ss:$8 sm:$0xf] %vm976, %v975
    %978 = vst.msk [vmem:[#allocation0] ss:$8 sm:$0xf0] %vm976, %v975
    %s979 = scalar_lea.vmem %s0, 4
    %v980 = vld [vmem:[%s979] sm:$0x1]
    %s981 = scalar_lea.vmem %s0, 35
    %v982 = vld [vmem:[%s981] sm:$0x2]
    %vm983 = vcmask 1041409
    %v984 = vsel %vm983, %v982, %v980
    %s985 = scalar_lea.vmem %s0, 66
    %v986 = vld [vmem:[%s985] sm:$0x4]
    %vm987 = vcmask 1042434
    %v988 = vsel %vm987, %v986, %v984
    %s989 = scalar_lea.vmem %s0, 97
    %v990 = vld [vmem:[%s989] sm:$0x8]
    %vm991 = vcmask 1043459
    %v992 = vsel %vm991, %v990, %v988
    %s993 = scalar_lea.vmem %s0, 128
    %v994 = vld [vmem:[%s993] sm:$0x10]
    %vm995 = vcmask 1044484
    %v996 = vsel %vm995, %v994, %v992
    %s997 = scalar_lea.vmem %s0, 159
    %v998 = vld [vmem:[%s997] sm:$0x20]
    %vm999 = vcmask 1045509
    %v1000 = vsel %vm999, %v998, %v996
    %s1001 = scalar_lea.vmem %s0, 190
    %v1002 = vld [vmem:[%s1001] sm:$0x40]
    %vm1003 = vcmask 1046534
    %v1004 = vsel %vm1003, %v1002, %v1000
    %s1005 = scalar_lea.vmem %s0, 221
    %v1006 = vld [vmem:[%s1005] sm:$0x80]
    %vm1007 = vcmask 1047559
    %v1008 = vsel %vm1007, %v1006, %v1004
    %1009 = vrot.lane.b32.xlu0 %v1008, 16
    %v1010 = vpop.permute.xlu0 %1009
    %vm1011 = vcmask 162944
    %1012 = vst.msk [vmem:[#allocation0] ss:$8 sm:$0xf] %vm1011, %v1010
    %1013 = vst.msk [vmem:[#allocation0] ss:$8 sm:$0xf0] %vm1011, %v1010
    %s1014 = scalar_lea.vmem %s0, 3
    %v1015 = vld [vmem:[%s1014] sm:$0x1]
    %s1016 = scalar_lea.vmem %s0, 34
    %v1017 = vld [vmem:[%s1016] sm:$0x2]
    %vm1018 = vcmask 1041409
    %v1019 = vsel %vm1018, %v1017, %v1015
    %s1020 = scalar_lea.vmem %s0, 65
    %v1021 = vld [vmem:[%s1020] sm:$0x4]
    %vm1022 = vcmask 1042434
    %v1023 = vsel %vm1022, %v1021, %v1019
    %s1024 = scalar_lea.vmem %s0, 96
    %v1025 = vld [vmem:[%s1024] sm:$0x8]
    %vm1026 = vcmask 1043459
    %v1027 = vsel %vm1026, %v1025, %v1023
    %s1028 = scalar_lea.vmem %s0, 127
    %v1029 = vld [vmem:[%s1028] sm:$0x10]
    %vm1030 = vcmask 1044484
    %v1031 = vsel %vm1030, %v1029, %v1027
    %s1032 = scalar_lea.vmem %s0, 158
    %v1033 = vld [vmem:[%s1032] sm:$0x20]
    %vm1034 = vcmask 1045509
    %v1035 = vsel %vm1034, %v1033, %v1031
    %s1036 = scalar_lea.vmem %s0, 189
    %v1037 = vld [vmem:[%s1036] sm:$0x40]
    %vm1038 = vcmask 1046534
    %v1039 = vsel %vm1038, %v1037, %v1035
    %s1040 = scalar_lea.vmem %s0, 220
    %v1041 = vld [vmem:[%s1040] sm:$0x80]
    %vm1042 = vcmask 1047559
    %v1043 = vsel %vm1042, %v1041, %v1039
    %1044 = vrot.lane.b32.xlu0 %v1043, 12
    %v1045 = vpop.permute.xlu0 %1044
    %vm1046 = vcmask 130144
    %1047 = vst.msk [vmem:[#allocation0] ss:$8 sm:$0xf] %vm1046, %v1045
    %1048 = vst.msk [vmem:[#allocation0] ss:$8 sm:$0xf0] %vm1046, %v1045
    %s1049 = scalar_lea.vmem %s0, 2
    %v1050 = vld [vmem:[%s1049] sm:$0x1]
    %s1051 = scalar_lea.vmem %s0, 33
    %v1052 = vld [vmem:[%s1051] sm:$0x2]
    %vm1053 = vcmask 1041409
    %v1054 = vsel %vm1053, %v1052, %v1050
    %s1055 = scalar_lea.vmem %s0, 64
    %v1056 = vld [vmem:[%s1055] sm:$0x4]
    %vm1057 = vcmask 1042434
    %v1058 = vsel %vm1057, %v1056, %v1054
    %s1059 = scalar_lea.vmem %s0, 95
    %v1060 = vld [vmem:[%s1059] sm:$0x8]
    %vm1061 = vcmask 1043459
    %v1062 = vsel %vm1061, %v1060, %v1058
    %s1063 = scalar_lea.vmem %s0, 126
    %v1064 = vld [vmem:[%s1063] sm:$0x10]
    %vm1065 = vcmask 1044484
    %v1066 = vsel %vm1065, %v1064, %v1062
    %s1067 = scalar_lea.vmem %s0, 157
    %v1068 = vld [vmem:[%s1067] sm:$0x20]
    %vm1069 = vcmask 1045509
    %v1070 = vsel %vm1069, %v1068, %v1066
    %s1071 = scalar_lea.vmem %s0, 188
    %v1072 = vld [vmem:[%s1071] sm:$0x40]
    %vm1073 = vcmask 1046534
    %v1074 = vsel %vm1073, %v1072, %v1070
    %s1075 = scalar_lea.vmem %s0, 219
    %v1076 = vld [vmem:[%s1075] sm:$0x80]
    %vm1077 = vcmask 1047559
    %v1078 = vsel %vm1077, %v1076, %v1074
    %1079 = vrot.lane.b32.xlu0 %v1078, 8
    %v1080 = vpop.permute.xlu0 %1079
    %vm1081 = vcmask 97344
    %1082 = vst.msk [vmem:[#allocation0] ss:$8 sm:$0xf] %vm1081, %v1080
    %1083 = vst.msk [vmem:[#allocation0] ss:$8 sm:$0xf0] %vm1081, %v1080
    %s1084 = scalar_lea.vmem %s0, 1
    %v1085 = vld [vmem:[%s1084] sm:$0x1]
    %s1086 = scalar_lea.vmem %s0, 32
    %v1087 = vld [vmem:[%s1086] sm:$0x2]
    %vm1088 = vcmask 1041409
    %v1089 = vsel %vm1088, %v1087, %v1085
    %s1090 = scalar_lea.vmem %s0, 63
    %v1091 = vld [vmem:[%s1090] sm:$0x4]
    %vm1092 = vcmask 1042434
    %v1093 = vsel %vm1092, %v1091, %v1089
    %s1094 = scalar_lea.vmem %s0, 94
    %v1095 = vld [vmem:[%s1094] sm:$0x8]
    %vm1096 = vcmask 1043459
    %v1097 = vsel %vm1096, %v1095, %v1093
    %s1098 = scalar_lea.vmem %s0, 125
    %v1099 = vld [vmem:[%s1098] sm:$0x10]
    %vm1100 = vcmask 1044484
    %v1101 = vsel %vm1100, %v1099, %v1097
    %s1102 = scalar_lea.vmem %s0, 156
    %v1103 = vld [vmem:[%s1102] sm:$0x20]
    %vm1104 = vcmask 1045509
    %v1105 = vsel %vm1104, %v1103, %v1101
    %s1106 = scalar_lea.vmem %s0, 187
    %v1107 = vld [vmem:[%s1106] sm:$0x40]
    %vm1108 = vcmask 1046534
    %v1109 = vsel %vm1108, %v1107, %v1105
    %s1110 = scalar_lea.vmem %s0, 218
    %v1111 = vld [vmem:[%s1110] sm:$0x80]
    %vm1112 = vcmask 1047559
    %v1113 = vsel %vm1112, %v1111, %v1109
    %1114 = vrot.lane.b32.xlu0 %v1113, 4
    %v1115 = vpop.permute.xlu0 %1114
    %vm1116 = vcmask 64544
    %1117 = vst.msk [vmem:[#allocation0] ss:$8 sm:$0xf] %vm1116, %v1115
    %1118 = vst.msk [vmem:[#allocation0] ss:$8 sm:$0xf0] %vm1116, %v1115
    %s1120 = sshll.u32 1, 1
    %s1121 = ssub.s32 %s1120, 1
    %v1123 = vld [vmem:[#allocation0] sm:%s1121]
    %s1124 = sshll.u32 1, 1
    %s1125 = ssub.s32 %s1124, 1
    %1126 = vst [vmem:[%s1] sm:%s1125] %v1123
    %s1127 = scalar_lea.vmem [#allocation0], 8
    %v1128 = vld [vmem:[%s1127] sm:%s1121]
    %s1129 = sshll.u32 1, 1
    %s1130 = ssub.s32 %s1129, 1
    %s1131 = scalar_lea.vmem %s1, 1
    %1132 = vst [vmem:[%s1131] sm:%s1130] %v1128
    %s1133 = scalar_lea.vmem [#allocation0], 16
    %v1134 = vld [vmem:[%s1133] sm:%s1121]
    %s1135 = sshll.u32 1, 1
    %s1136 = ssub.s32 %s1135, 1
    %s1137 = smul.addr 1, 2
    %s1138 = scalar_lea.vmem %s1, %s1137
    %1139 = vst [vmem:[%s1138] sm:%s1136] %v1134
    %s1140 = scalar_lea.vmem [#allocation0], 24
    %v1141 = vld [vmem:[%s1140] sm:%s1121]
    %s1142 = sshll.u32 1, 1
    %s1143 = ssub.s32 %s1142, 1
    %s1144 = smul.addr 1, 3
    %s1145 = scalar_lea.vmem %s1, %s1144
    %1146 = vst [vmem:[%s1145] sm:%s1143] %v1141
    %s1147 = scalar_lea.vmem [#allocation0], 32
    %v1148 = vld [vmem:[%s1147] sm:%s1121]
    %s1149 = sshll.u32 1, 1
    %s1150 = ssub.s32 %s1149, 1
    %s1151 = smul.addr 1, 4
    %s1152 = scalar_lea.vmem %s1, %s1151
    %1153 = vst [vmem:[%s1152] sm:%s1150] %v1148
    %s1154 = scalar_lea.vmem [#allocation0], 40
    %v1155 = vld [vmem:[%s1154] sm:%s1121]
    %s1156 = sshll.u32 1, 1
    %s1157 = ssub.s32 %s1156, 1
    %s1158 = smul.addr 1, 5
    %s1159 = scalar_lea.vmem %s1, %s1158
    %1160 = vst [vmem:[%s1159] sm:%s1157] %v1155
    %s1161 = scalar_lea.vmem [#allocation0], 48
    %v1162 = vld [vmem:[%s1161] sm:%s1121]
    %s1163 = sshll.u32 1, 1
    %s1164 = ssub.s32 %s1163, 1
    %s1165 = smul.addr 1, 6
    %s1166 = scalar_lea.vmem %s1, %s1165
    %1167 = vst [vmem:[%s1166] sm:%s1164] %v1162
    %s1168 = scalar_lea.vmem [#allocation0], 56
    %v1169 = vld [vmem:[%s1168] sm:%s1121]
    %s1170 = sshll.u32 1, 1
    %s1171 = ssub.s32 %s1170, 1
    %s1172 = smul.addr 1, 7
    %s1173 = scalar_lea.vmem %s1, %s1172
    %1174 = vst [vmem:[%s1173] sm:%s1171] %v1169

// kernel: resblock_forward_nchw.3
$region0: #{resblock_forward_nchw.3}
  #allocation0 [shape = 'u32[]', space=smem, size = 0x4, offset = 0x4, fixed_abs, tag = 'smem constant byte address 0x4 - core index']
  #allocation1 [shape = 'u32[144,128]{1,0:T(1,128)}', space=vmem, size = 0x12000, scoped, tag = 'internal scratch']
  #allocation2 [shape = 'bf16[1,18,32,4]{3,2,1,0:T(8,128)(2,1)}', space=vmem, size = 0x24000, scoped, tag = 'scratch operand']
  %s0 = inlined_call_operand.vmem [shape: f32[2,16,16,4], index: 0, kind: input, shape index: {}]
  %s1 = inlined_call_operand.vmem [shape: bf16[9,4,8], index: 1, kind: input, shape index: {}]
  %s2 = inlined_call_operand.vmem [shape: bf16[2,16,16,8], index: 2, kind: output, shape index: {0}]
  %s3 = inlined_call_operand.vmem [shape: f32[2,2,8], index: 3, kind: output, shape index: {1}]
  %4 = xla_tuple %s2, %s3
  %s5 = sld [smem:[#allocation0]]
  $region49: #{resblock_forward_nchw.3} parent=0
    _
  %s7 = ssub.s32 1, %s5
  %s8 = scalar_select 0, %s7, %s5
  loop: start=0, step=1, limit=4
  $region2: #{resblock_forward_nchw.3} parent=0 // loop_pre_header
    _
  $region3: #{resblock_forward_nchw.3} parent=0 // loop_header
    %s10 = sphi 0, %s14
    %p11 = scmp.ge.s32.totalorder %s10, 4
    %s20 = sphi 0, %s22
    %s23 = sphi 0, %s20
    %s24 = sphi 0, %s23
    %s40 = sphi 0, %s24
    %s44 = sphi 0, %s44
    %s46 = sphi 0, %s44
    %s47 = sphi 0, %s46
    %s61 = sphi 0, %s47
    %s67 = sphi 0, %s69
    %s70 = sphi 0, %s67
    %s71 = sphi 0, %s70
    %s87 = sphi 0, %s71
    %s93 = sphi 0, %s95
    %s96 = sphi 0, %s93
    %s97 = sphi 0, %s96
    %s113 = sphi 0, %s97
  $region4: #{resblock_forward_nchw.3} parent=0 // loop_header_branch
    %13 = sbr.rel (%p11) target = $region8
  $region5: #{resblock_forward_nchw.3} parent=0 // loop_body
    %s15 = ssub.s32 %s10, 1
    %s16 = ssub.s32 %s10, 2
    %s17 = sadd.s32 %s10, 1
    %s18 = ssub.s32 %s10, %s17
    %p19 = scmp.eq.s32.totalorder %s18, 0
    %s21 = sadd.s32 %s20, 1
    %s22 = scalar_select %p19, %s20, %s21
    %p25 = pneg %p19
    %p26 = scmp.eq.s32.totalorder %s10, 1
    %p27 = por %p25, %p26
    %p28 = scmp.ne.s32.totalorder %s20, %s23
    %p29 = scmp.eq.s32.totalorder %s10, 0
    %p30 = por %p28, %p29
    %p31 = scmp.ne.s32.totalorder %s20, %s23
    %p32 = scmp.eq.s32.totalorder %s15, 1
    %p33 = por %p31, %p32
    %p34 = scmp.ne.s32.totalorder %s23, %s24
    %p35 = scmp.eq.s32.totalorder %s15, 0
    %p36 = por %p34, %p35
    %p37 = scmp.ne.s32.totalorder %s23, %s24
    %p38 = scmp.eq.s32.totalorder %s16, 1
    %p39 = por %p37, %p38
    %p41 = scmp.ne.s32.totalorder %s24, %s40
    %p42 = scmp.eq.s32.totalorder %s16, 0
    %p43 = por %p41, %p42
    %s45 = sadd.s32 %s44, 1
    %p48 = scmp.eq.s32.totalorder %s10, 1
    %p49 = scmp.ne.s32.totalorder %s44, %s46
    %p50 = scmp.eq.s32.totalorder %s10, 0
    %p51 = por %p49, %p50
    %p52 = scmp.ne.s32.totalorder %s44, %s46
    %p53 = scmp.eq.s32.totalorder %s15, 1
    %p54 = por %p52, %p53
    %p55 = scmp.ne.s32.totalorder %s46, %s47
    %p56 = scmp.eq.s32.totalorder %s15, 0
    %p57 = por %p55, %p56
    %p58 = scmp.ne.s32.totalorder %s46, %s47
    %p59 = scmp.eq.s32.totalorder %s16, 1
    %p60 = por %p58, %p59
    %p62 = scmp.ne.s32.totalorder %s47, %s61
    %p63 = scmp.eq.s32.totalorder %s16, 0
    %p64 = por %p62, %p63
    %s65 = ssub.s32 %s10, %s17
    %p66 = scmp.eq.s32.totalorder %s65, 0
    %s68 = sadd.s32 %s67, 1
    %s69 = scalar_select %p66, %s67, %s68
    %p72 = pneg %p66
    %p73 = scmp.eq.s32.totalorder %s10, 1
    %p74 = por %p72, %p73
    %p75 = scmp.ne.s32.totalorder %s67, %s70
    %p76 = scmp.eq.s32.totalorder %s10, 0
    %p77 = por %p75, %p76
    %p78 = scmp.ne.s32.totalorder %s67, %s70
    %p79 = scmp.eq.s32.totalorder %s15, 1
    %p80 = por %p78, %p79
    %p81 = scmp.ne.s32.totalorder %s70, %s71
    %p82 = scmp.eq.s32.totalorder %s15, 0
    %p83 = por %p81, %p82
    %p84 = scmp.ne.s32.totalorder %s70, %s71
    %p85 = scmp.eq.s32.totalorder %s16, 1
    %p86 = por %p84, %p85
    %p88 = scmp.ne.s32.totalorder %s71, %s87
    %p89 = scmp.eq.s32.totalorder %s16, 0
    %p90 = por %p88, %p89
    %s91 = ssub.s32 %s10, %s17
    %p92 = scmp.eq.s32.totalorder %s91, 0
    %s94 = sadd.s32 %s93, 1
    %s95 = scalar_select %p92, %s93, %s94
    %p98 = pneg %p92
    %p99 = scmp.eq.s32.totalorder %s10, 1
    %p100 = por %p98, %p99
    %p101 = scmp.ne.s32.totalorder %s93, %s96
    %p102 = scmp.eq.s32.totalorder %s10, 0
    %p103 = por %p101, %p102
    %p104 = scmp.ne.s32.totalorder %s93, %s96
    %p105 = scmp.eq.s32.totalorder %s15, 1
    %p106 = por %p104, %p105
    %p107 = scmp.ne.s32.totalorder %s96, %s97
    %p108 = scmp.eq.s32.totalorder %s15, 0
    %p109 = por %p107, %p108
    %p110 = scmp.ne.s32.totalorder %s96, %s97
    %p111 = scmp.eq.s32.totalorder %s16, 1
    %p112 = por %p110, %p111
    %p114 = scmp.ne.s32.totalorder %s97, %s113
    %p115 = scmp.eq.s32.totalorder %s16, 0
    %p116 = por %p114, %p115
    %p117 = scmp.le.s32.totalorder 1, %s10
    %p118 = scmp.lt.s32.totalorder %s10, 3
    %p119 = pnand %p117, %p118
    %p120 = pneg %p119
    // Predicated region
    $region9: #{resblock_forward_nchw.3} parent=5 // pred_check
      _
    $region10: #{resblock_forward_nchw.3} parent=5 // pred_check_branch
      %122 = sbr.rel (%p119) target = $region12
    $region11: #{resblock_forward_nchw.3} parent=5 // pred_region
      %s123 = ssub.s32 %s10, 1
      // Predicated region
      $region13: #{resblock_forward_nchw.3} parent=11 // pred_check
        %p124 = pneg %p57
      $region14: #{resblock_forward_nchw.3} parent=11 // pred_check_branch
        %126 = sbr.rel (%p124) target = $region16
      $region15: #{resblock_forward_nchw.3} parent=11 // pred_region
        _
      $region16: #{resblock_forward_nchw.3} parent=11 // pred_fallthru
        _
    $region12: #{resblock_forward_nchw.3} parent=5 // pred_fallthru
      _
    %p127 = scmp.lt.s32.totalorder %s10, 2
    // Predicated region
    $region17: #{resblock_forward_nchw.3} parent=5 // pred_check
      %p128 = pneg %p127
    $region18: #{resblock_forward_nchw.3} parent=5 // pred_check_branch
      %130 = sbr.rel (%p128) target = $region20
    $region19: #{resblock_forward_nchw.3} parent=5 // pred_region
      // Predicated region
      $region21: #{resblock_forward_nchw.3} parent=19 // pred_check
        %p131 = pneg %p30
      $region22: #{resblock_forward_nchw.3} parent=19 // pred_check_branch
        %133 = sbr.rel (%p131) target = $region24
      $region23: #{resblock_forward_nchw.3} parent=19 // pred_region
        %p134 = scmp.lt.s32.totalorder %s10, 1
        %s135 = scalar_select %p134, %s10, 1
        %s136 = smul.addr %s135, 32
        %s137 = smul.addr %s136, 8
        %s138 = scalar_lea.vmem %s0, %s137
      $region24: #{resblock_forward_nchw.3} parent=19 // pred_fallthru
        _
    $region20: #{resblock_forward_nchw.3} parent=5 // pred_fallthru
      _
    %p139 = scmp.le.s32.totalorder 1, %s10
    %p140 = scmp.lt.s32.totalorder %s10, 3
    %p141 = pnand %p139, %p140
    %p142 = pneg %p141
    // Predicated region
    $region25: #{resblock_forward_nchw.3} parent=5 // pred_check
      _
    $region26: #{resblock_forward_nchw.3} parent=5 // pred_check_branch
      %144 = sbr.rel (%p141) target = $region28
    $region27: #{resblock_forward_nchw.3} parent=5 // pred_region
      %s145 = ssub.s32 %s10, 1
      %p146 = scmp.lt.s32.totalorder %s15, 1
      %s147 = scalar_select %p146, %s15, 1
      %s148 = smul.addr %s147, 32
      %s149 = smul.addr %s148, 8
      %s150 = scalar_lea.vmem %s0, %s149
      %p151 = pneg %p36
      %p152 = pneg %p33
      %p153 = pneg %p57
      %p154 = pneg %p54
      %p155 = pneg %p83
      %p156 = pneg %p80
      %p157 = scmp.lt.s32.totalorder %s15, 1
      %s158 = scalar_select %p157, %s15, 1
      %s159 = smul.addr %s158, 32
      %s160 = smul.addr %s159, 4
      %s161 = scalar_lea.vmem %s2, %s160
      %p162 = pneg %p109
      %p163 = pneg %p106
      %p164 = scmp.lt.s32.totalorder %s15, 1
      %s165 = scalar_select %p164, %s15, 1
      %s166 = smul.addr %s165, 2
      %s167 = scalar_lea.vmem %s3, %s166
      %p168 = scmp.lt.s32.totalorder %s15, 1
      %s169 = scalar_select %p168, %s15, 1
      %s170 = smul.addr %s169, 32
      %s171 = smul.addr %s170, 8
      %s172 = scalar_lea.vmem %s0, %s171
      %p173 = scmp.lt.s32.totalorder %s15, 1
      %s174 = scalar_select %p173, %s15, 1
      %s175 = smul.addr %s174, 32
      %s176 = smul.addr %s175, 4
      %s177 = scalar_lea.vmem %s2, %s176
      %p178 = scmp.lt.s32.totalorder %s15, 1
      %s179 = scalar_select %p178, %s15, 1
      %s180 = smul.addr %s179, 2
      %s181 = scalar_lea.vmem %s3, %s180
      %v183 = vld [vmem:[%s172] sm:$0xff]
      %v184 = vld [vmem:[%s172 + $0x8] sm:$0xff]
      %v185 = vld [vmem:[%s172 + $0x10] sm:$0xff]
      %v186 = vld [vmem:[%s172 + $0x18] sm:$0xff]
      %v187 = vld [vmem:[%s172 + $0x20] sm:$0xff]
      %v188 = vld [vmem:[%s172 + $0x28] sm:$0xff]
      %v189 = vld [vmem:[%s172 + $0x30] sm:$0xff]
      %v190 = vld [vmem:[%s172 + $0x38] sm:$0xff]
      %v191 = vld [vmem:[%s172 + $0x40] sm:$0xff]
      %v192 = vld [vmem:[%s172 + $0x48] sm:$0xff]
      %v193 = vld [vmem:[%s172 + $0x50] sm:$0xff]
      %v194 = vld [vmem:[%s172 + $0x58] sm:$0xff]
      %v195 = vld [vmem:[%s172 + $0x60] sm:$0xff]
      %v196 = vld [vmem:[%s172 + $0x68] sm:$0xff]
      %v197 = vld [vmem:[%s172 + $0x70] sm:$0xff]
      %v198 = vld [vmem:[%s172 + $0x78] sm:$0xff]
      %v199 = vld [vmem:[%s172 + $0x80] sm:$0xff]
      %v200 = vld [vmem:[%s172 + $0x88] sm:$0xff]
      %v201 = vld [vmem:[%s172 + $0x90] sm:$0xff]
      %v202 = vld [vmem:[%s172 + $0x98] sm:$0xff]
      %v203 = vld [vmem:[%s172 + $0xa0] sm:$0xff]
      %v204 = vld [vmem:[%s172 + $0xa8] sm:$0xff]
      %v205 = vld [vmem:[%s172 + $0xb0] sm:$0xff]
      %v206 = vld [vmem:[%s172 + $0xb8] sm:$0xff]
      %v207 = vld [vmem:[%s172 + $0xc0] sm:$0xff]
      %v208 = vld [vmem:[%s172 + $0xc8] sm:$0xff]
      %v209 = vld [vmem:[%s172 + $0xd0] sm:$0xff]
      %v210 = vld [vmem:[%s172 + $0xd8] sm:$0xff]
      %v211 = vld [vmem:[%s172 + $0xe0] sm:$0xff]
      %v212 = vld [vmem:[%s172 + $0xe8] sm:$0xff]
      %v213 = vld [vmem:[%s172 + $0xf0] sm:$0xff]
      %v214 = vld [vmem:[%s172 + $0xf8] sm:$0xff]
      %vm215 = vcmask 27648
      %216 = vst.msk [vmem:[#allocation2] sm:$0xf] %vm215, 0
      %217 = vst.msk [vmem:[#allocation2 + $0x4] sm:$0xf] %vm215, 0
      %218 = vst.msk [vmem:[#allocation2 + $0x8] sm:$0xf] %vm215, 0
      %219 = vst.msk [vmem:[#allocation2 + $0xc] sm:$0xf] %vm215, 0
      %s220 = scalar_lea.vmem [#allocation2], 272
      %221 = vst.msk [vmem:[%s220] sm:$0xf] %vm215, 0
      %222 = vst.msk [vmem:[%s220 + $0x4] sm:$0xf] %vm215, 0
      %223 = vst.msk [vmem:[%s220 + $0x8] sm:$0xf] %vm215, 0
      %224 = vst.msk [vmem:[%s220 + $0xc] sm:$0xf] %vm215, 0
      %vm225 = vcmask 24576
      %vm226 = vsmask.f32 256
      %vm227 = vmand %vm225, %vm226
      %v228 = vld [vmem:[#allocation2] sm:$0x1]
      %v229 = vsel %vm227, 0, %v228
      %230 = vst [vmem:[#allocation2] sm:$0x1] %v229
      %v231 = vld [vmem:[#allocation2 + $0x10] sm:$0x1]
      %v232 = vsel %vm227, 0, %v231
      %233 = vst [vmem:[#allocation2 + $0x10] sm:$0x1] %v232
      %v234 = vld [vmem:[#allocation2 + $0x20] sm:$0x1]
      %v235 = vsel %vm227, 0, %v234
      %236 = vst [vmem:[#allocation2 + $0x20] sm:$0x1] %v235
      %v237 = vld [vmem:[#allocation2 + $0x30] sm:$0x1]
      %v238 = vsel %vm227, 0, %v237
      %239 = vst [vmem:[#allocation2 + $0x30] sm:$0x1] %v238
      %v240 = vld [vmem:[#allocation2 + $0x40] sm:$0x1]
      %v241 = vsel %vm227, 0, %v240
      %242 = vst [vmem:[#allocation2 + $0x40] sm:$0x1] %v241
      %v243 = vld [vmem:[#allocation2 + $0x50] sm:$0x1]
      %v244 = vsel %vm227, 0, %v243
      %245 = vst [vmem:[#allocation2 + $0x50] sm:$0x1] %v244
      %v246 = vld [vmem:[#allocation2 + $0x60] sm:$0x1]
      %v247 = vsel %vm227, 0, %v246
      %248 = vst [vmem:[#allocation2 + $0x60] sm:$0x1] %v247
      %v249 = vld [vmem:[#allocation2 + $0x70] sm:$0x1]
      %v250 = vsel %vm227, 0, %v249
      %251 = vst [vmem:[#allocation2 + $0x70] sm:$0x1] %v250
      %v252 = vld [vmem:[#allocation2 + $0x80] sm:$0x1]
      %v253 = vsel %vm227, 0, %v252
      %254 = vst [vmem:[#allocation2 + $0x80] sm:$0x1] %v253
      %v255 = vld [vmem:[#allocation2 + $0x90] sm:$0x1]
      %v256 = vsel %vm227, 0, %v255
      %257 = vst [vmem:[#allocation2 + $0x90] sm:$0x1] %v256
      %v258 = vld [vmem:[#allocation2 + $0xa0] sm:$0x1]
      %v259 = vsel %vm227, 0, %v258
      %260 = vst [vmem:[#allocation2 + $0xa0] sm:$0x1] %v259
      %v261 = vld [vmem:[#allocation2 + $0xb0] sm:$0x1]
      %v262 = vsel %vm227, 0, %v261
      %263 = vst [vmem:[#allocation2 + $0xb0] sm:$0x1] %v262
      %v264 = vld [vmem:[#allocation2 + $0xc0] sm:$0x1]
      %v265 = vsel %vm227, 0, %v264
      %266 = vst [vmem:[#allocation2 + $0xc0] sm:$0x1] %v265
      %v267 = vld [vmem:[#allocation2 + $0xd0] sm:$0x1]
      %v268 = vsel %vm227, 0, %v267
      %269 = vst [vmem:[#allocation2 + $0xd0] sm:$0x1] %v268
      %v270 = vld [vmem:[#allocation2 + $0xe0] sm:$0x1]
      %v271 = vsel %vm227, 0, %v270
      %272 = vst [vmem:[#allocation2 + $0xe0] sm:$0x1] %v271
      %v273 = vld [vmem:[#allocation2 + $0xf0] sm:$0x1]
      %v274 = vsel %vm227, 0, %v273
      %275 = vst [vmem:[#allocation2 + $0xf0] sm:$0x1] %v274
      %v276 = vld [vmem:[#allocation2 + $0x100] sm:$0x1]
      %v277 = vsel %vm227, 0, %v276
      %278 = vst [vmem:[#allocation2 + $0x100] sm:$0x1] %v277
      %v279 = vld [vmem:[#allocation2 + $0x110] sm:$0x1]
      %v280 = vsel %vm227, 0, %v279
      %281 = vst [vmem:[#allocation2 + $0x110] sm:$0x1] %v280
      %vm282 = vcmask 27648
      %vm283 = vsmask.f32 7938
      %vm284 = vmand %vm282, %vm283
      %v285 = vld [vmem:[#allocation2 + $0x8] sm:$0xf]
      %v286 = vsel %vm284, 0, %v285
      %287 = vst [vmem:[#allocation2 + $0x8] sm:$0xf] %v286
      %288 = vst.msk [vmem:[#allocation2 + $0xc] sm:$0xf] %vm215, 0
      %v289 = vld [vmem:[#allocation2 + $0x18] sm:$0xf]
      %v290 = vsel %vm284, 0, %v289
      %291 = vst [vmem:[#allocation2 + $0x18] sm:$0xf] %v290
      %292 = vst.msk [vmem:[#allocation2 + $0x1c] sm:$0xf] %vm215, 0
      %v293 = vld [vmem:[#allocation2 + $0x28] sm:$0xf]
      %v294 = vsel %vm284, 0, %v293
      %295 = vst [vmem:[#allocation2 + $0x28] sm:$0xf] %v294
      %296 = vst.msk [vmem:[#allocation2 + $0x2c] sm:$0xf] %vm215, 0
      %v297 = vld [vmem:[#allocation2 + $0x38] sm:$0xf]
      %v298 = vsel %vm284, 0, %v297
      %299 = vst [vmem:[#allocation2 + $0x38] sm:$0xf] %v298
      %300 = vst.msk [vmem:[#allocation2 + $0x3c] sm:$0xf] %vm215, 0
      %v301 = vld [vmem:[#allocation2 + $0x48] sm:$0xf]
      %v302 = vsel %vm284, 0, %v301
      %303 = vst [vmem:[#allocation2 + $0x48] sm:$0xf] %v302
      %304 = vst.msk [vmem:[#allocation2 + $0x4c] sm:$0xf] %vm215, 0
      %v305 = vld [vmem:[#allocation2 + $0x58] sm:$0xf]
      %v306 = vsel %vm284, 0, %v305
      %307 = vst [vmem:[#allocation2 + $0x58] sm:$0xf] %v306
      %308 = vst.msk [vmem:[#allocation2 + $0x5c] sm:$0xf] %vm215, 0
      %v309 = vld [vmem:[#allocation2 + $0x68] sm:$0xf]
      %v310 = vsel %vm284, 0, %v309
      %311 = vst [vmem:[#allocation2 + $0x68] sm:$0xf] %v310
      %312 = vst.msk [vmem:[#allocation2 + $0x6c] sm:$0xf] %vm215, 0
      %v313 = vld [vmem:[#allocation2 + $0x78] sm:$0xf]
      %v314 = vsel %vm284, 0, %v313
      %315 = vst [vmem:[#allocation2 + $0x78] sm:$0xf] %v314
      %316 = vst.msk [vmem:[#allocation2 + $0x7c] sm:$0xf] %vm215, 0
      %v317 = vld [vmem:[#allocation2 + $0x88] sm:$0xf]
      %v318 = vsel %vm284, 0, %v317
      %319 = vst [vmem:[#allocation2 + $0x88] sm:$0xf] %v318
      %320 = vst.msk [vmem:[#allocation2 + $0x8c] sm:$0xf] %vm215, 0
      %v321 = vld [vmem:[#allocation2 + $0x98] sm:$0xf]
      %v322 = vsel %vm284, 0, %v321
      %323 = vst [vmem:[#allocation2 + $0x98] sm:$0xf] %v322
      %324 = vst.msk [vmem:[#allocation2 + $0x9c] sm:$0xf] %vm215, 0
      %v325 = vld [vmem:[#allocation2 + $0xa8] sm:$0xf]
      %v326 = vsel %vm284, 0, %v325
      %327 = vst [vmem:[#allocation2 + $0xa8] sm:$0xf] %v326
      %328 = vst.msk [vmem:[#allocation2 + $0xac] sm:$0xf] %vm215, 0
      %v329 = vld [vmem:[#allocation2 + $0xb8] sm:$0xf]
      %v330 = vsel %vm284, 0, %v329
      %331 = vst [vmem:[#allocation2 + $0xb8] sm:$0xf] %v330
      %332 = vst.msk [vmem:[#allocation2 + $0xbc] sm:$0xf] %vm215, 0
      %v333 = vld [vmem:[#allocation2 + $0xc8] sm:$0xf]
      %v334 = vsel %vm284, 0, %v333
      %335 = vst [vmem:[#allocation2 + $0xc8] sm:$0xf] %v334
      %336 = vst.msk [vmem:[#allocation2 + $0xcc] sm:$0xf] %vm215, 0
      %v337 = vld [vmem:[#allocation2 + $0xd8] sm:$0xf]
      %v338 = vsel %vm284, 0, %v337
      %339 = vst [vmem:[#allocation2 + $0xd8] sm:$0xf] %v338
      %340 = vst.msk [vmem:[#allocation2 + $0xdc] sm:$0xf] %vm215, 0
      %v341 = vld [vmem:[#allocation2 + $0xe8] sm:$0xf]
      %v342 = vsel %vm284, 0, %v341
      %343 = vst [vmem:[#allocation2 + $0xe8] sm:$0xf] %v342
      %344 = vst.msk [vmem:[#allocation2 + $0xec] sm:$0xf] %vm215, 0
      %v345 = vld [vmem:[#allocation2 + $0xf8] sm:$0xf]
      %v346 = vsel %vm284, 0, %v345
      %347 = vst [vmem:[#allocation2 + $0xf8] sm:$0xf] %v346
      %348 = vst.msk [vmem:[#allocation2 + $0xfc] sm:$0xf] %vm215, 0
      %v349 = vld [vmem:[#allocation2 + $0x108] sm:$0xf]
      %v350 = vsel %vm284, 0, %v349
      %351 = vst [vmem:[#allocation2 + $0x108] sm:$0xf] %v350
      %352 = vst.msk [vmem:[#allocation2 + $0x10c] sm:$0xf] %vm215, 0
      %v353 = vld [vmem:[#allocation2 + $0x118] sm:$0xf]
      %v354 = vsel %vm284, 0, %v353
      %355 = vst [vmem:[#allocation2 + $0x118] sm:$0xf] %v354
      %356 = vst.msk [vmem:[#allocation2 + $0x11c] sm:$0xf] %vm215, 0
      %v357 = vpack.c.bf16 %v184, %v183
      %v358 = vpack.c.bf16 %v186, %v185
      %v359 = vpack.c.bf16 %v188, %v187
      %v360 = vpack.c.bf16 %v190, %v189
      %v361 = vpack.c.bf16 %v192, %v191
      %v362 = vpack.c.bf16 %v194, %v193
      %v363 = vpack.c.bf16 %v196, %v195
      %v364 = vpack.c.bf16 %v198, %v197
      %v365 = vpack.c.bf16 %v200, %v199
      %v366 = vpack.c.bf16 %v202, %v201
      %v367 = vpack.c.bf16 %v204, %v203
      %v368 = vpack.c.bf16 %v206, %v205
      %v369 = vpack.c.bf16 %v208, %v207
      %v370 = vpack.c.bf16 %v210, %v209
      %v371 = vpack.c.bf16 %v212, %v211
      %v372 = vpack.c.bf16 %v214, %v213
      %v389 = vunpack.c.l.b16 %v357
      %v390 = vunpack.c.h.b16 %v357
      %v391 = vunpack.c.l.b16 %v358
      %v392 = vunpack.c.h.b16 %v358
      %v393 = vunpack.c.l.b16 %v359
      %v394 = vunpack.c.h.b16 %v359
      %v395 = vunpack.c.l.b16 %v360
      %v396 = vunpack.c.h.b16 %v360
      %v397 = vunpack.c.l.b16 %v361
      %v398 = vunpack.c.h.b16 %v361
      %v399 = vunpack.c.l.b16 %v362
      %v400 = vunpack.c.h.b16 %v362
      %v401 = vunpack.c.l.b16 %v363
      %v402 = vunpack.c.h.b16 %v363
      %v403 = vunpack.c.l.b16 %v364
      %v404 = vunpack.c.h.b16 %v364
      %v405 = vunpack.c.l.b16 %v365
      %v406 = vunpack.c.h.b16 %v365
      %v407 = vunpack.c.l.b16 %v366
      %v408 = vunpack.c.h.b16 %v366
      %v409 = vunpack.c.l.b16 %v367
      %v410 = vunpack.c.h.b16 %v367
      %v411 = vunpack.c.l.b16 %v368
      %v412 = vunpack.c.h.b16 %v368
      %v413 = vunpack.c.l.b16 %v369
      %v414 = vunpack.c.h.b16 %v369
      %v415 = vunpack.c.l.b16 %v370
      %v416 = vunpack.c.h.b16 %v370
      %v417 = vunpack.c.l.b16 %v371
      %v418 = vunpack.c.h.b16 %v371
      %v419 = vunpack.c.l.b16 %v372
      %v420 = vunpack.c.h.b16 %v372
      %v421 = vpack.c.b16 %v389, %v389
      %v422 = vpack.c.b16 %v390, %v390
      %v423 = vpack.c.b16 %v391, %v391
      %v424 = vpack.c.b16 %v392, %v392
      %v425 = vpack.c.b16 %v393, %v393
      %v426 = vpack.c.b16 %v394, %v394
      %v427 = vpack.c.b16 %v395, %v395
      %v428 = vpack.c.b16 %v396, %v396
      %v429 = vpack.c.b16 %v397, %v397
      %v430 = vpack.c.b16 %v398, %v398
      %v431 = vpack.c.b16 %v399, %v399
      %v432 = vpack.c.b16 %v400, %v400
      %v433 = vpack.c.b16 %v401, %v401
      %v434 = vpack.c.b16 %v402, %v402
      %v435 = vpack.c.b16 %v403, %v403
      %v436 = vpack.c.b16 %v404, %v404
      %v437 = vpack.c.b16 %v405, %v405
      %v438 = vpack.c.b16 %v406, %v406
      %v439 = vpack.c.b16 %v407, %v407
      %v440 = vpack.c.b16 %v408, %v408
      %v441 = vpack.c.b16 %v409, %v409
      %v442 = vpack.c.b16 %v410, %v410
      %v443 = vpack.c.b16 %v411, %v411
      %v444 = vpack.c.b16 %v412, %v412
      %v445 = vpack.c.b16 %v413, %v413
      %v446 = vpack.c.b16 %v414, %v414
      %v447 = vpack.c.b16 %v415, %v415
      %v448 = vpack.c.b16 %v416, %v416
      %v449 = vpack.c.b16 %v417, %v417
      %v450 = vpack.c.b16 %v418, %v418
      %v451 = vpack.c.b16 %v419, %v419
      %v452 = vpack.c.b16 %v420, %v420
      %vm453 = vsmask.f32 4368
      %vm454 = vmor %vm226, %vm453
      %v456 = vshrl.u32 %v421, 16
      %v458 = vrot.slane %v456, 7
      %v459 = vshll.u32 %v421, 16
      %v461 = vor.u32 %v458, %v459
      %v462 = vrot.slane %v458, 4
      %v464 = vshrl.u32 %v422, 16
      %v466 = vrot.slane %v464, 7
      %v467 = vshll.u32 %v422, 16
      %v469 = vor.u32 %v466, %v467
      %v470 = vsel %vm454, %v462, %v469
      %v471 = vrot.slane %v466, 4
      %v473 = vshrl.u32 %v423, 16
      %v475 = vrot.slane %v473, 7
      %v476 = vshll.u32 %v423, 16
      %v478 = vor.u32 %v475, %v476
      %v479 = vrot.slane %v475, 4
      %v481 = vshrl.u32 %v424, 16
      %v483 = vrot.slane %v481, 7
      %v484 = vshll.u32 %v424, 16
      %v486 = vor.u32 %v483, %v484
      %v487 = vsel %vm454, %v479, %v486
      %v488 = vrot.slane %v483, 4
      %v490 = vshrl.u32 %v425, 16
      %v492 = vrot.slane %v490, 7
      %v493 = vshll.u32 %v425, 16
      %v495 = vor.u32 %v492, %v493
      %v496 = vrot.slane %v492, 4
      %v498 = vshrl.u32 %v426, 16
      %v500 = vrot.slane %v498, 7
      %v501 = vshll.u32 %v426, 16
      %v503 = vor.u32 %v500, %v501
      %v504 = vsel %vm454, %v496, %v503
      %v505 = vrot.slane %v500, 4
      %v507 = vshrl.u32 %v427, 16
      %v509 = vrot.slane %v507, 7
      %v510 = vshll.u32 %v427, 16
      %v512 = vor.u32 %v509, %v510
      %v513 = vrot.slane %v509, 4
      %v515 = vshrl.u32 %v428, 16
      %v517 = vrot.slane %v515, 7
      %v518 = vshll.u32 %v428, 16
      %v520 = vor.u32 %v517, %v518
      %v521 = vsel %vm454, %v513, %v520
      %v522 = vrot.slane %v517, 4
      %v524 = vshrl.u32 %v429, 16
      %v526 = vrot.slane %v524, 7
      %v527 = vshll.u32 %v429, 16
      %v529 = vor.u32 %v526, %v527
      %v530 = vrot.slane %v526, 4
      %v532 = vshrl.u32 %v430, 16
      %v534 = vrot.slane %v532, 7
      %v535 = vshll.u32 %v430, 16
      %v537 = vor.u32 %v534, %v535
      %v538 = vsel %vm454, %v530, %v537
      %v539 = vrot.slane %v534, 4
      %v541 = vshrl.u32 %v431, 16
      %v543 = vrot.slane %v541, 7
      %v544 = vshll.u32 %v431, 16
      %v546 = vor.u32 %v543, %v544
      %v547 = vrot.slane %v543, 4
      %v549 = vshrl.u32 %v432, 16
      %v551 = vrot.slane %v549, 7
      %v552 = vshll.u32 %v432, 16
      %v554 = vor.u32 %v551, %v552
      %v555 = vsel %vm454, %v547, %v554
      %v556 = vrot.slane %v551, 4
      %v558 = vshrl.u32 %v433, 16
      %v560 = vrot.slane %v558, 7
      %v561 = vshll.u32 %v433, 16
      %v563 = vor.u32 %v560, %v561
      %v564 = vrot.slane %v560, 4
      %v566 = vshrl.u32 %v434, 16
      %v568 = vrot.slane %v566, 7
      %v569 = vshll.u32 %v434, 16
      %v571 = vor.u32 %v568, %v569
      %v572 = vsel %vm454, %v564, %v571
      %v573 = vrot.slane %v568, 4
      %v575 = vshrl.u32 %v435, 16
      %v577 = vrot.slane %v575, 7
      %v578 = vshll.u32 %v435, 16
      %v580 = vor.u32 %v577, %v578
      %v581 = vrot.slane %v577, 4
      %v583 = vshrl.u32 %v436, 16
      %v585 = vrot.slane %v583, 7
      %v586 = vshll.u32 %v436, 16
      %v588 = vor.u32 %v585, %v586
      %v589 = vsel %vm454, %v581, %v588
      %v590 = vrot.slane %v585, 4
      %v592 = vshrl.u32 %v437, 16
      %v594 = vrot.slane %v592, 7
      %v595 = vshll.u32 %v437, 16
      %v597 = vor.u32 %v594, %v595
      %v598 = vrot.slane %v594, 4
      %v600 = vshrl.u32 %v438, 16
      %v602 = vrot.slane %v600, 7
      %v603 = vshll.u32 %v438, 16
      %v605 = vor.u32 %v602, %v603
      %v606 = vsel %vm454, %v598, %v605
      %v607 = vrot.slane %v602, 4
      %v609 = vshrl.u32 %v439, 16
      %v611 = vrot.slane %v609, 7
      %v612 = vshll.u32 %v439, 16
      %v614 = vor.u32 %v611, %v612
      %v615 = vrot.slane %v611, 4
      %v617 = vshrl.u32 %v440, 16
      %v619 = vrot.slane %v617, 7
      %v620 = vshll.u32 %v440, 16
      %v622 = vor.u32 %v619, %v620
      %v623 = vsel %vm454, %v615, %v622
      %v624 = vrot.slane %v619, 4
      %v626 = vshrl.u32 %v441, 16
      %v628 = vrot.slane %v626, 7
      %v629 = vshll.u32 %v441, 16
      %v631 = vor.u32 %v628, %v629
      %v632 = vrot.slane %v628, 4
      %v634 = vshrl.u32 %v442, 16
      %v636 = vrot.slane %v634, 7
      %v637 = vshll.u32 %v442, 16
      %v639 = vor.u32 %v636, %v637
      %v640 = vsel %vm454, %v632, %v639
      %v641 = vrot.slane %v636, 4
      %v643 = vshrl.u32 %v443, 16
      %v645 = vrot.slane %v643, 7
      %v646 = vshll.u32 %v443, 16
      %v648 = vor.u32 %v645, %v646
      %v649 = vrot.slane %v645, 4
      %v651 = vshrl.u32 %v444, 16
      %v653 = vrot.slane %v651, 7
      %v654 = vshll.u32 %v444, 16
      %v656 = vor.u32 %v653, %v654
      %v657 = vsel %vm454, %v649, %v656
      %v658 = vrot.slane %v653, 4
      %v660 = vshrl.u32 %v445, 16
      %v662 = vrot.slane %v660, 7
      %v663 = vshll.u32 %v445, 16
      %v665 = vor.u32 %v662, %v663
      %v666 = vrot.slane %v662, 4
      %v668 = vshrl.u32 %v446, 16
      %v670 = vrot.slane %v668, 7
      %v671 = vshll.u32 %v446, 16
      %v673 = vor.u32 %v670, %v671
      %v674 = vsel %vm454, %v666, %v673
      %v675 = vrot.slane %v670, 4
      %v677 = vshrl.u32 %v447, 16
      %v679 = vrot.slane %v677, 7
      %v680 = vshll.u32 %v447, 16
      %v682 = vor.u32 %v679, %v680
      %v683 = vrot.slane %v679, 4
      %v685 = vshrl.u32 %v448, 16
      %v687 = vrot.slane %v685, 7
      %v688 = vshll.u32 %v448, 16
      %v690 = vor.u32 %v687, %v688
      %v691 = vsel %vm454, %v683, %v690
      %v692 = vrot.slane %v687, 4
      %v694 = vshrl.u32 %v449, 16
      %v696 = vrot.slane %v694, 7
      %v697 = vshll.u32 %v449, 16
      %v699 = vor.u32 %v696, %v697
      %v700 = vrot.slane %v696, 4
      %v702 = vshrl.u32 %v450, 16
      %v704 = vrot.slane %v702, 7
      %v705 = vshll.u32 %v450, 16
      %v707 = vor.u32 %v704, %v705
      %v708 = vsel %vm454, %v700, %v707
      %v709 = vrot.slane %v704, 4
      %v711 = vshrl.u32 %v451, 16
      %v713 = vrot.slane %v711, 7
      %v714 = vshll.u32 %v451, 16
      %v716 = vor.u32 %v713, %v714
      %v717 = vrot.slane %v713, 4
      %v719 = vshrl.u32 %v452, 16
      %v721 = vrot.slane %v719, 7
      %v722 = vshll.u32 %v452, 16
      %v724 = vor.u32 %v721, %v722
      %v725 = vsel %vm454, %v717, %v724
      %v726 = vrot.slane %v721, 4
      %s775 = scalar_lea.vmem [#allocation2], 16
      %v776 = vld [vmem:[%s775] sm:$0xf]
      %v777 = vsel %vm284, %v461, %v776
      %778 = vst [vmem:[%s775] sm:$0xf] %v777
      %779 = vst.msk [vmem:[%s775 + $0x4] sm:$0xf] %vm215, %v470
      %v780 = vld [vmem:[%s775 + $0x8] sm:$0x1]
      %v781 = vsel %vm227, %v471, %v780
      %782 = vst [vmem:[%s775 + $0x8] sm:$0x1] %v781
      %v783 = vld [vmem:[%s775 + $0x10] sm:$0xf]
      %v784 = vsel %vm284, %v478, %v783
      %785 = vst [vmem:[%s775 + $0x10] sm:$0xf] %v784
      %786 = vst.msk [vmem:[%s775 + $0x14] sm:$0xf] %vm215, %v487
      %v787 = vld [vmem:[%s775 + $0x18] sm:$0x1]
      %v788 = vsel %vm227, %v488, %v787
      %789 = vst [vmem:[%s775 + $0x18] sm:$0x1] %v788
      %v790 = vld [vmem:[%s775 + $0x20] sm:$0xf]
      %v791 = vsel %vm284, %v495, %v790
      %792 = vst [vmem:[%s775 + $0x20] sm:$0xf] %v791
      %793 = vst.msk [vmem:[%s775 + $0x24] sm:$0xf] %vm215, %v504
      %v794 = vld [vmem:[%s775 + $0x28] sm:$0x1]
      %v795 = vsel %vm227, %v505, %v794
      %796 = vst [vmem:[%s775 + $0x28] sm:$0x1] %v795
      %v797 = vld [vmem:[%s775 + $0x30] sm:$0xf]
      %v798 = vsel %vm284, %v512, %v797
      %799 = vst [vmem:[%s775 + $0x30] sm:$0xf] %v798
      %800 = vst.msk [vmem:[%s775 + $0x34] sm:$0xf] %vm215, %v521
      %v801 = vld [vmem:[%s775 + $0x38] sm:$0x1]
      %v802 = vsel %vm227, %v522, %v801
      %803 = vst [vmem:[%s775 + $0x38] sm:$0x1] %v802
      %v804 = vld [vmem:[%s775 + $0x40] sm:$0xf]
      %v805 = vsel %vm284, %v529, %v804
      %806 = vst [vmem:[%s775 + $0x40] sm:$0xf] %v805
      %807 = vst.msk [vmem:[%s775 + $0x44] sm:$0xf] %vm215, %v538
      %v808 = vld [vmem:[%s775 + $0x48] sm:$0x1]
      %v809 = vsel %vm227, %v539, %v808
      %810 = vst [vmem:[%s775 + $0x48] sm:$0x1] %v809
      %v811 = vld [vmem:[%s775 + $0x50] sm:$0xf]
      %v812 = vsel %vm284, %v546, %v811
      %813 = vst [vmem:[%s775 + $0x50] sm:$0xf] %v812
      %814 = vst.msk [vmem:[%s775 + $0x54] sm:$0xf] %vm215, %v555
      %v815 = vld [vmem:[%s775 + $0x58] sm:$0x1]
      %v816 = vsel %vm227, %v556, %v815
      %817 = vst [vmem:[%s775 + $0x58] sm:$0x1] %v816
      %v818 = vld [vmem:[%s775 + $0x60] sm:$0xf]
      %v819 = vsel %vm284, %v563, %v818
      %820 = vst [vmem:[%s775 + $0x60] sm:$0xf] %v819
      %821 = vst.msk [vmem:[%s775 + $0x64] sm:$0xf] %vm215, %v572
      %v822 = vld [vmem:[%s775 + $0x68] sm:$0x1]
      %v823 = vsel %vm227, %v573, %v822
      %824 = vst [vmem:[%s775 + $0x68] sm:$0x1] %v823
      %v825 = vld [vmem:[%s775 + $0x70] sm:$0xf]
      %v826 = vsel %vm284, %v580, %v825
      %827 = vst [vmem:[%s775 + $0x70] sm:$0xf] %v826
      %828 = vst.msk [vmem:[%s775 + $0x74] sm:$0xf] %vm215, %v589
      %v829 = vld [vmem:[%s775 + $0x78] sm:$0x1]
      %v830 = vsel %vm227, %v590, %v829
      %831 = vst [vmem:[%s775 + $0x78] sm:$0x1] %v830
      %v832 = vld [vmem:[%s775 + $0x80] sm:$0xf]
      %v833 = vsel %vm284, %v597, %v832
      %834 = vst [vmem:[%s775 + $0x80] sm:$0xf] %v833
      %835 = vst.msk [vmem:[%s775 + $0x84] sm:$0xf] %vm215, %v606
      %v836 = vld [vmem:[%s775 + $0x88] sm:$0x1]
      %v837 = vsel %vm227, %v607, %v836
      %838 = vst [vmem:[%s775 + $0x88] sm:$0x1] %v837
      %v839 = vld [vmem:[%s775 + $0x90] sm:$0xf]
      %v840 = vsel %vm284, %v614, %v839
      %841 = vst [vmem:[%s775 + $0x90] sm:$0xf] %v840
      %842 = vst.msk [vmem:[%s775 + $0x94] sm:$0xf] %vm215, %v623
      %v843 = vld [vmem:[%s775 + $0x98] sm:$0x1]
      %v844 = vsel %vm227, %v624, %v843
      %845 = vst [vmem:[%s775 + $0x98] sm:$0x1] %v844
      %v846 = vld [vmem:[%s775 + $0xa0] sm:$0xf]
      %v847 = vsel %vm284, %v631, %v846
      %848 = vst [vmem:[%s775 + $0xa0] sm:$0xf] %v847
      %849 = vst.msk [vmem:[%s775 + $0xa4] sm:$0xf] %vm215, %v640
      %v850 = vld [vmem:[%s775 + $0xa8] sm:$0x1]
      %v851 = vsel %vm227, %v641, %v850
      %852 = vst [vmem:[%s775 + $0xa8] sm:$0x1] %v851
      %v853 = vld [vmem:[%s775 + $0xb0] sm:$0xf]
      %v854 = vsel %vm284, %v648, %v853
      %855 = vst [vmem:[%s775 + $0xb0] sm:$0xf] %v854
      %856 = vst.msk [vmem:[%s775 + $0xb4] sm:$0xf] %vm215, %v657
      %v857 = vld [vmem:[%s775 + $0xb8] sm:$0x1]
      %v858 = vsel %vm227, %v658, %v857
      %859 = vst [vmem:[%s775 + $0xb8] sm:$0x1] %v858
      %v860 = vld [vmem:[%s775 + $0xc0] sm:$0xf]
      %v861 = vsel %vm284, %v665, %v860
      %862 = vst [vmem:[%s775 + $0xc0] sm:$0xf] %v861
      %863 = vst.msk [vmem:[%s775 + $0xc4] sm:$0xf] %vm215, %v674
      %v864 = vld [vmem:[%s775 + $0xc8] sm:$0x1]
      %v865 = vsel %vm227, %v675, %v864
      %866 = vst [vmem:[%s775 + $0xc8] sm:$0x1] %v865
      %v867 = vld [vmem:[%s775 + $0xd0] sm:$0xf]
      %v868 = vsel %vm284, %v682, %v867
      %869 = vst [vmem:[%s775 + $0xd0] sm:$0xf] %v868
      %870 = vst.msk [vmem:[%s775 + $0xd4] sm:$0xf] %vm215, %v691
      %v871 = vld [vmem:[%s775 + $0xd8] sm:$0x1]
      %v872 = vsel %vm227, %v692, %v871
      %873 = vst [vmem:[%s775 + $0xd8] sm:$0x1] %v872
      %v874 = vld [vmem:[%s775 + $0xe0] sm:$0xf]
      %v875 = vsel %vm284, %v699, %v874
      %876 = vst [vmem:[%s775 + $0xe0] sm:$0xf] %v875
      %877 = vst.msk [vmem:[%s775 + $0xe4] sm:$0xf] %vm215, %v708
      %v878 = vld [vmem:[%s775 + $0xe8] sm:$0x1]
      %v879 = vsel %vm227, %v709, %v878
      %880 = vst [vmem:[%s775 + $0xe8] sm:$0x1] %v879
      %v881 = vld [vmem:[%s775 + $0xf0] sm:$0xf]
      %v882 = vsel %vm284, %v716, %v881
      %883 = vst [vmem:[%s775 + $0xf0] sm:$0xf] %v882
      %884 = vst.msk [vmem:[%s775 + $0xf4] sm:$0xf] %vm215, %v725
      %v885 = vld [vmem:[%s775 + $0xf8] sm:$0x1]
      %v886 = vsel %vm227, %v726, %v885
      %887 = vst [vmem:[%s775 + $0xf8] sm:$0x1] %v886
      %v888 = vld [vmem:[#allocation2] sm:$0xf]
      %v889 = vld [vmem:[#allocation2 + $0x4] sm:$0xf]
      %v890 = vld [vmem:[#allocation2 + $0x8] sm:$0xf]
      %v891 = vld [vmem:[#allocation2 + $0x10] sm:$0xf]
      %v892 = vld [vmem:[#allocation2 + $0x14] sm:$0xf]
      %v893 = vld [vmem:[#allocation2 + $0x18] sm:$0xf]
      %v894 = vld [vmem:[#allocation2 + $0x20] sm:$0xf]
      %v895 = vld [vmem:[#allocation2 + $0x24] sm:$0xf]
      %v896 = vld [vmem:[#allocation2 + $0x28] sm:$0xf]
      %v897 = vld [vmem:[#allocation2 + $0x30] sm:$0xf]
      %v898 = vld [vmem:[#allocation2 + $0x34] sm:$0xf]
      %v899 = vld [vmem:[#allocation2 + $0x38] sm:$0xf]
      %v900 = vld [vmem:[#allocation2 + $0x40] sm:$0xf]
      %v901 = vld [vmem:[#allocation2 + $0x44] sm:$0xf]
      %v902 = vld [vmem:[#allocation2 + $0x48] sm:$0xf]
      %v903 = vld [vmem:[#allocation2 + $0x50] sm:$0xf]
      %v904 = vld [vmem:[#allocation2 + $0x54] sm:$0xf]
      %v905 = vld [vmem:[#allocation2 + $0x58] sm:$0xf]
      %v906 = vld [vmem:[#allocation2 + $0x60] sm:$0xf]
      %v907 = vld [vmem:[#allocation2 + $0x64] sm:$0xf]
      %v908 = vld [vmem:[#allocation2 + $0x68] sm:$0xf]
      %v909 = vld [vmem:[#allocation2 + $0x70] sm:$0xf]
      %v910 = vld [vmem:[#allocation2 + $0x74] sm:$0xf]
      %v911 = vld [vmem:[#allocation2 + $0x78] sm:$0xf]
      %v912 = vld [vmem:[#allocation2 + $0x80] sm:$0xf]
      %v913 = vld [vmem:[#allocation2 + $0x84] sm:$0xf]
      %v914 = vld [vmem:[#allocation2 + $0x88] sm:$0xf]
      %v915 = vld [vmem:[#allocation2 + $0x90] sm:$0xf]
      %v916 = vld [vmem:[#allocation2 + $0x94] sm:$0xf]
      %v917 = vld [vmem:[#allocation2 + $0x98] sm:$0xf]
      %v918 = vld [vmem:[#allocation2 + $0xa0] sm:$0xf]
      %v919 = vld [vmem:[#allocation2 + $0xa4] sm:$0xf]
      %v920 = vld [vmem:[#allocation2 + $0xa8] sm:$0xf]
      %v921 = vld [vmem:[#allocation2 + $0xb0] sm:$0xf]
      %v922 = vld [vmem:[#allocation2 + $0xb4] sm:$0xf]
      %v923 = vld [vmem:[#allocation2 + $0xb8] sm:$0xf]
      %v924 = vld [vmem:[#allocation2 + $0xc0] sm:$0xf]
      %v925 = vld [vmem:[#allocation2 + $0xc4] sm:$0xf]
      %v926 = vld [vmem:[#allocation2 + $0xc8] sm:$0xf]
      %v927 = vld [vmem:[#allocation2 + $0xd0] sm:$0xf]
      %v928 = vld [vmem:[#allocation2 + $0xd4] sm:$0xf]
      %v929 = vld [vmem:[#allocation2 + $0xd8] sm:$0xf]
      %v930 = vld [vmem:[#allocation2 + $0xe0] sm:$0xf]
      %v931 = vld [vmem:[#allocation2 + $0xe4] sm:$0xf]
      %v932 = vld [vmem:[#allocation2 + $0xe8] sm:$0xf]
      %v933 = vld [vmem:[#allocation2 + $0xf0] sm:$0xf]
      %v934 = vld [vmem:[#allocation2 + $0xf4] sm:$0xf]
      %v935 = vld [vmem:[#allocation2 + $0xf8] sm:$0xf]
      %v936 = vld [vmem:[#allocation2 + $0x100] sm:$0xf]
      %v937 = vld [vmem:[#allocation2 + $0x104] sm:$0xf]
      %v938 = vld [vmem:[#allocation2 + $0x108] sm:$0xf]
      %v939 = vld [vmem:[#allocation2 + $0x110] sm:$0xf]
      %v940 = vld [vmem:[#allocation2 + $0x114] sm:$0xf]
      %v941 = vld [vmem:[#allocation2 + $0x118] sm:$0xf]
      %v942 = vld [vmem:[%s1] sm:$0x3]
      %vm943 = vsmask.f32 3328
      %vm944 = vsmask.f32 7440
      %vm945 = vmor %vm943, %vm944
      %v947 = vshrl.u32 %v888, 16
      %v949 = vrot.slane %v947, 4
      %v950 = vshll.u32 %v888, 16
      %v952 = vrot.slane %v950, 5
      %v953 = vor.u32 %v949, %v952
      %v954 = vrot.slane %v953, 4
      %v956 = vshll.u32 %v889, 16
      %v958 = vrot.slane %v956, 5
      %v959 = vsel %vm945, %v954, %v958
      %v960 = vshrl.u32 %v889, 16
      %v962 = vrot.slane %v960, 4
      %v963 = vor.u32 %v962, %v958
      %v964 = vrot.slane %v963, 4
      %v966 = vshll.u32 %v890, 16
      %v968 = vrot.slane %v966, 5
      %v969 = vsel %vm945, %v964, %v968
      %v971 = vshrl.u32 %v891, 16
      %v973 = vrot.slane %v971, 4
      %v974 = vshll.u32 %v891, 16
      %v976 = vrot.slane %v974, 5
      %v977 = vor.u32 %v973, %v976
      %v978 = vrot.slane %v977, 4
      %v980 = vshll.u32 %v892, 16
      %v982 = vrot.slane %v980, 5
      %v983 = vsel %vm945, %v978, %v982
      %v984 = vshrl.u32 %v892, 16
      %v986 = vrot.slane %v984, 4
      %v987 = vor.u32 %v986, %v982
      %v988 = vrot.slane %v987, 4
      %v990 = vshll.u32 %v893, 16
      %v992 = vrot.slane %v990, 5
      %v993 = vsel %vm945, %v988, %v992
      %v995 = vshrl.u32 %v894, 16
      %v997 = vrot.slane %v995, 4
      %v998 = vshll.u32 %v894, 16
      %v1000 = vrot.slane %v998, 5
      %v1001 = vor.u32 %v997, %v1000
      %v1002 = vrot.slane %v1001, 4
      %v1004 = vshll.u32 %v895, 16
      %v1006 = vrot.slane %v1004, 5
      %v1007 = vsel %vm945, %v1002, %v1006
      %v1008 = vshrl.u32 %v895, 16
      %v1010 = vrot.slane %v1008, 4
      %v1011 = vor.u32 %v1010, %v1006
      %v1012 = vrot.slane %v1011, 4
      %v1014 = vshll.u32 %v896, 16
      %v1016 = vrot.slane %v1014, 5
      %v1017 = vsel %vm945, %v1012, %v1016
      %v1019 = vshrl.u32 %v897, 16
      %v1021 = vrot.slane %v1019, 4
      %v1022 = vshll.u32 %v897, 16
      %v1024 = vrot.slane %v1022, 5
      %v1025 = vor.u32 %v1021, %v1024
      %v1026 = vrot.slane %v1025, 4
      %v1028 = vshll.u32 %v898, 16
      %v1030 = vrot.slane %v1028, 5
      %v1031 = vsel %vm945, %v1026, %v1030
      %v1032 = vshrl.u32 %v898, 16
      %v1034 = vrot.slane %v1032, 4
      %v1035 = vor.u32 %v1034, %v1030
      %v1036 = vrot.slane %v1035, 4
      %v1038 = vshll.u32 %v899, 16
      %v1040 = vrot.slane %v1038, 5
      %v1041 = vsel %vm945, %v1036, %v1040
      %v1043 = vshrl.u32 %v900, 16
      %v1045 = vrot.slane %v1043, 4
      %v1046 = vshll.u32 %v900, 16
      %v1048 = vrot.slane %v1046, 5
      %v1049 = vor.u32 %v1045, %v1048
      %v1050 = vrot.slane %v1049, 4
      %v1052 = vshll.u32 %v901, 16
      %v1054 = vrot.slane %v1052, 5
      %v1055 = vsel %vm945, %v1050, %v1054
      %v1056 = vshrl.u32 %v901, 16
      %v1058 = vrot.slane %v1056, 4
      %v1059 = vor.u32 %v1058, %v1054
      %v1060 = vrot.slane %v1059, 4
      %v1062 = vshll.u32 %v902, 16
      %v1064 = vrot.slane %v1062, 5
      %v1065 = vsel %vm945, %v1060, %v1064
      %v1067 = vshrl.u32 %v903, 16
      %v1069 = vrot.slane %v1067, 4
      %v1070 = vshll.u32 %v903, 16
      %v1072 = vrot.slane %v1070, 5
      %v1073 = vor.u32 %v1069, %v1072
      %v1074 = vrot.slane %v1073, 4
      %v1076 = vshll.u32 %v904, 16
      %v1078 = vrot.slane %v1076, 5
      %v1079 = vsel %vm945, %v1074, %v1078
      %v1080 = vshrl.u32 %v904, 16
      %v1082 = vrot.slane %v1080, 4
      %v1083 = vor.u32 %v1082, %v1078
      %v1084 = vrot.slane %v1083, 4
      %v1086 = vshll.u32 %v905, 16
      %v1088 = vrot.slane %v1086, 5
      %v1089 = vsel %vm945, %v1084, %v1088
      %v1091 = vshrl.u32 %v906, 16
      %v1093 = vrot.slane %v1091, 4
      %v1094 = vshll.u32 %v906, 16
      %v1096 = vrot.slane %v1094, 5
      %v1097 = vor.u32 %v1093, %v1096
      %v1098 = vrot.slane %v1097, 4
      %v1100 = vshll.u32 %v907, 16
      %v1102 = vrot.slane %v1100, 5
      %v1103 = vsel %vm945, %v1098, %v1102
      %v1104 = vshrl.u32 %v907, 16
      %v1106 = vrot.slane %v1104, 4
      %v1107 = vor.u32 %v1106, %v1102
      %v1108 = vrot.slane %v1107, 4
      %v1110 = vshll.u32 %v908, 16
      %v1112 = vrot.slane %v1110, 5
      %v1113 = vsel %vm945, %v1108, %v1112
      %v1115 = vshrl.u32 %v909, 16
      %v1117 = vrot.slane %v1115, 4
      %v1118 = vshll.u32 %v909, 16
      %v1120 = vrot.slane %v1118, 5
      %v1121 = vor.u32 %v1117, %v1120
      %v1122 = vrot.slane %v1121, 4
      %v1124 = vshll.u32 %v910, 16
      %v1126 = vrot.slane %v1124, 5
      %v1127 = vsel %vm945, %v1122, %v1126
      %v1128 = vshrl.u32 %v910, 16
      %v1130 = vrot.slane %v1128, 4
      %v1131 = vor.u32 %v1130, %v1126
      %v1132 = vrot.slane %v1131, 4
      %v1134 = vshll.u32 %v911, 16
      %v1136 = vrot.slane %v1134, 5
      %v1137 = vsel %vm945, %v1132, %v1136
      %v1139 = vshrl.u32 %v912, 16
      %v1141 = vrot.slane %v1139, 4
      %v1142 = vshll.u32 %v912, 16
      %v1144 = vrot.slane %v1142, 5
      %v1145 = vor.u32 %v1141, %v1144
      %v1146 = vrot.slane %v1145, 4
      %v1148 = vshll.u32 %v913, 16
      %v1150 = vrot.slane %v1148, 5
      %v1151 = vsel %vm945, %v1146, %v1150
      %v1152 = vshrl.u32 %v913, 16
      %v1154 = vrot.slane %v1152, 4
      %v1155 = vor.u32 %v1154, %v1150
      %v1156 = vrot.slane %v1155, 4
      %v1158 = vshll.u32 %v914, 16
      %v1160 = vrot.slane %v1158, 5
      %v1161 = vsel %vm945, %v1156, %v1160
      %v1163 = vshrl.u32 %v915, 16
      %v1165 = vrot.slane %v1163, 4
      %v1166 = vshll.u32 %v915, 16
      %v1168 = vrot.slane %v1166, 5
      %v1169 = vor.u32 %v1165, %v1168
      %v1170 = vrot.slane %v1169, 4
      %v1172 = vshll.u32 %v916, 16
      %v1174 = vrot.slane %v1172, 5
      %v1175 = vsel %vm945, %v1170, %v1174
      %v1176 = vshrl.u32 %v916, 16
      %v1178 = vrot.slane %v1176, 4
      %v1179 = vor.u32 %v1178, %v1174
      %v1180 = vrot.slane %v1179, 4
      %v1182 = vshll.u32 %v917, 16
      %v1184 = vrot.slane %v1182, 5
      %v1185 = vsel %vm945, %v1180, %v1184
      %v1187 = vshrl.u32 %v918, 16
      %v1189 = vrot.slane %v1187, 4
      %v1190 = vshll.u32 %v918, 16
      %v1192 = vrot.slane %v1190, 5
      %v1193 = vor.u32 %v1189, %v1192
      %v1194 = vrot.slane %v1193, 4
      %v1196 = vshll.u32 %v919, 16
      %v1198 = vrot.slane %v1196, 5
      %v1199 = vsel %vm945, %v1194, %v1198
      %v1200 = vshrl.u32 %v919, 16
      %v1202 = vrot.slane %v1200, 4
      %v1203 = vor.u32 %v1202, %v1198
      %v1204 = vrot.slane %v1203, 4
      %v1206 = vshll.u32 %v920, 16
      %v1208 = vrot.slane %v1206, 5
      %v1209 = vsel %vm945, %v1204, %v1208
      %v1211 = vshrl.u32 %v921, 16
      %v1213 = vrot.slane %v1211, 4
      %v1214 = vshll.u32 %v921, 16
      %v1216 = vrot.slane %v1214, 5
      %v1217 = vor.u32 %v1213, %v1216
      %v1218 = vrot.slane %v1217, 4
      %v1220 = vshll.u32 %v922, 16
      %v1222 = vrot.slane %v1220, 5
      %v1223 = vsel %vm945, %v1218, %v1222
      %v1224 = vshrl.u32 %v922, 16
      %v1226 = vrot.slane %v1224, 4
      %v1227 = vor.u32 %v1226, %v1222
      %v1228 = vrot.slane %v1227, 4
      %v1230 = vshll.u32 %v923, 16
      %v1232 = vrot.slane %v1230, 5
      %v1233 = vsel %vm945, %v1228, %v1232
      %v1235 = vshrl.u32 %v924, 16
      %v1237 = vrot.slane %v1235, 4
      %v1238 = vshll.u32 %v924, 16
      %v1240 = vrot.slane %v1238, 5
      %v1241 = vor.u32 %v1237, %v1240
      %v1242 = vrot.slane %v1241, 4
      %v1244 = vshll.u32 %v925, 16
      %v1246 = vrot.slane %v1244, 5
      %v1247 = vsel %vm945, %v1242, %v1246
      %v1248 = vshrl.u32 %v925, 16
      %v1250 = vrot.slane %v1248, 4
      %v1251 = vor.u32 %v1250, %v1246
      %v1252 = vrot.slane %v1251, 4
      %v1254 = vshll.u32 %v926, 16
      %v1256 = vrot.slane %v1254, 5
      %v1257 = vsel %vm945, %v1252, %v1256
      %v1259 = vshrl.u32 %v927, 16
      %v1261 = vrot.slane %v1259, 4
      %v1262 = vshll.u32 %v927, 16
      %v1264 = vrot.slane %v1262, 5
      %v1265 = vor.u32 %v1261, %v1264
      %v1266 = vrot.slane %v1265, 4
      %v1268 = vshll.u32 %v928, 16
      %v1270 = vrot.slane %v1268, 5
      %v1271 = vsel %vm945, %v1266, %v1270
      %v1272 = vshrl.u32 %v928, 16
      %v1274 = vrot.slane %v1272, 4
      %v1275 = vor.u32 %v1274, %v1270
      %v1276 = vrot.slane %v1275, 4
      %v1278 = vshll.u32 %v929, 16
      %v1280 = vrot.slane %v1278, 5
      %v1281 = vsel %vm945, %v1276, %v1280
      %v1283 = vshrl.u32 %v930, 16
      %v1285 = vrot.slane %v1283, 4
      %v1286 = vshll.u32 %v930, 16
      %v1288 = vrot.slane %v1286, 5
      %v1289 = vor.u32 %v1285, %v1288
      %v1290 = vrot.slane %v1289, 4
      %v1292 = vshll.u32 %v931, 16
      %v1294 = vrot.slane %v1292, 5
      %v1295 = vsel %vm945, %v1290, %v1294
      %v1296 = vshrl.u32 %v931, 16
      %v1298 = vrot.slane %v1296, 4
      %v1299 = vor.u32 %v1298, %v1294
      %v1300 = vrot.slane %v1299, 4
      %v1302 = vshll.u32 %v932, 16
      %v1304 = vrot.slane %v1302, 5
      %v1305 = vsel %vm945, %v1300, %v1304
      %v1307 = vshrl.u32 %v933, 16
      %v1309 = vrot.slane %v1307, 4
      %v1310 = vshll.u32 %v933, 16
      %v1312 = vrot.slane %v1310, 5
      %v1313 = vor.u32 %v1309, %v1312
      %v1314 = vrot.slane %v1313, 4
      %v1316 = vshll.u32 %v934, 16
      %v1318 = vrot.slane %v1316, 5
      %v1319 = vsel %vm945, %v1314, %v1318
      %v1320 = vshrl.u32 %v934, 16
      %v1322 = vrot.slane %v1320, 4
      %v1323 = vor.u32 %v1322, %v1318
      %v1324 = vrot.slane %v1323, 4
      %v1326 = vshll.u32 %v935, 16
      %v1328 = vrot.slane %v1326, 5
      %v1329 = vsel %vm945, %v1324, %v1328
      %s1330 = scalar_lea.vmem %s1, 2
      %v1331 = vld [vmem:[%s1330] sm:$0x3]
      %v1332 = vunpack.c.l.b16 %v959
      %v1333 = vunpack.c.l.b16 %v969
      %v1334 = vunpack.c.l.b16 %v983
      %v1335 = vunpack.c.l.b16 %v993
      %v1336 = vunpack.c.l.b16 %v1007
      %v1337 = vunpack.c.l.b16 %v1017
      %v1338 = vunpack.c.l.b16 %v1031
      %v1339 = vunpack.c.l.b16 %v1041
      %v1340 = vunpack.c.l.b16 %v1055
      %v1341 = vunpack.c.l.b16 %v1065
      %v1342 = vunpack.c.l.b16 %v1079
      %v1343 = vunpack.c.l.b16 %v1089
      %v1344 = vunpack.c.l.b16 %v1103
      %v1345 = vunpack.c.l.b16 %v1113
      %v1346 = vunpack.c.l.b16 %v1127
      %v1347 = vunpack.c.l.b16 %v1137
      %v1348 = vunpack.c.l.b16 %v1151
      %v1349 = vunpack.c.l.b16 %v1161
      %v1350 = vunpack.c.l.b16 %v1175
      %v1351 = vunpack.c.l.b16 %v1185
      %v1352 = vunpack.c.l.b16 %v1199
      %v1353 = vunpack.c.l.b16 %v1209
      %v1354 = vunpack.c.l.b16 %v1223
      %v1355 = vunpack.c.l.b16 %v1233
      %v1356 = vunpack.c.l.b16 %v1247
      %v1357 = vunpack.c.l.b16 %v1257
      %v1358 = vunpack.c.l.b16 %v1271
      %v1359 = vunpack.c.l.b16 %v1281
      %v1360 = vunpack.c.l.b16 %v1295
      %v1361 = vunpack.c.l.b16 %v1305
      %v1362 = vunpack.c.l.b16 %v1319
      %v1363 = vunpack.c.l.b16 %v1329
      %v1364 = vpack.c.b16 %v1333, %v1332
      %v1365 = vpack.c.b16 %v1335, %v1334
      %v1366 = vpack.c.b16 %v1337, %v1336
      %v1367 = vpack.c.b16 %v1339, %v1338
      %v1368 = vpack.c.b16 %v1341, %v1340
      %v1369 = vpack.c.b16 %v1343, %v1342
      %v1370 = vpack.c.b16 %v1345, %v1344
      %v1371 = vpack.c.b16 %v1347, %v1346
      %v1372 = vpack.c.b16 %v1349, %v1348
      %v1373 = vpack.c.b16 %v1351, %v1350
      %v1374 = vpack.c.b16 %v1353, %v1352
      %v1375 = vpack.c.b16 %v1355, %v1354
      %v1376 = vpack.c.b16 %v1357, %v1356
      %v1377 = vpack.c.b16 %v1359, %v1358
      %v1378 = vpack.c.b16 %v1361, %v1360
      %v1379 = vpack.c.b16 %v1363, %v1362
      %vm1380 = vcmask 31744
      %v1382 = vsel %vm1380, %v1364, 0
      %v1385 = vsel %vm1380, %v1365, 0
      %v1388 = vsel %vm1380, %v1366, 0
      %v1391 = vsel %vm1380, %v1367, 0
      %v1394 = vsel %vm1380, %v1368, 0
      %v1397 = vsel %vm1380, %v1369, 0
      %v1400 = vsel %vm1380, %v1370, 0
      %v1403 = vsel %vm1380, %v1371, 0
      %v1406 = vsel %vm1380, %v1372, 0
      %v1409 = vsel %vm1380, %v1373, 0
      %v1412 = vsel %vm1380, %v1374, 0
      %v1415 = vsel %vm1380, %v1375, 0
      %v1418 = vsel %vm1380, %v1376, 0
      %v1421 = vsel %vm1380, %v1377, 0
      %v1424 = vsel %vm1380, %v1378, 0
      %v1427 = vsel %vm1380, %v1379, 0
      %vm1429 = vcmask 1041408
      %v1431 = vsel %vm1429, %v1331, 0
      %1433 = vmatprep.subr.bf16.mxu0 0
      %1434 = vmatpush1.bf16.msra.mxu0 0
      %1435 = vmatprep.subr.bf16.mxu0 0
      %1436 = vmatpush1.bf16.msra.mxu0 0
      %1437 = vmatprep.subr.bf16.mxu0 0
      %1438 = vmatpush1.bf16.msra.mxu0 0
      %1439 = vmatprep.subr.bf16.mxu0 0
      %1440 = vmatpush1.bf16.msra.mxu0 0
      %1441 = vmatprep.subr.bf16.mxu0 0
      %1442 = vmatpush1.bf16.msra.mxu0 0
      %1443 = vmatprep.subr.bf16.mxu0 0
      %1444 = vmatpush1.bf16.msra.mxu0 0
      %1445 = vmatprep.subr.bf16.mxu0 0
      %1446 = vmatpush1.bf16.msra.mxu0 0
      %1447 = vmatprep.subr.bf16.mxu0 0
      %1448 = vmatpush1.bf16.msra.mxu0 %v1431
      %1449 = vmatprep.subr.bf16.mxu0 0
      %1450 = vmatpush2.bf16.msra.mxu0 0
      %1451 = vmatprep.subr.bf16.mxu0 0
      %1452 = vmatpush2.bf16.msra.mxu0 0
      %1453 = vmatprep.subr.bf16.mxu0 0
      %1454 = vmatpush2.bf16.msra.mxu0 0
      %1455 = vmatprep.subr.bf16.mxu0 0
      %1456 = vmatpush2.bf16.msra.mxu0 0
      %1457 = vmatprep.subr.bf16.mxu0 0
      %1458 = vmatpush2.bf16.msra.mxu0 0
      %1459 = vmatprep.subr.bf16.mxu0 0
      %1460 = vmatpush2.bf16.msra.mxu0 0
      %1461 = vmatprep.subr.bf16.mxu0 0
      %1462 = vmatpush2.bf16.msra.mxu0 0
      %1463 = vmatprep.subr.bf16.mxu0 0
      %1464 = vmatpush2.bf16.msra.mxu0 0
      %1465 = vmatprep.mubr.bf16.mxu0 0
      %1466 = vmatmul.mubr.bf16.gmra.mxu0 %v1382
      %v1467 = vpop.f32.mrf.mxu0
      %v1468 = vadd.f32 0.0, %v1467
      %v1469 = vpop.f32.mrf.mxu0
      %v1470 = vpop.f32.mrf.mxu0
      %v1471 = vadd.f32 0.0, %v1470
      %v1472 = vpop.f32.mrf.mxu0
      %1473 = vmatprep.mubr.bf16.mxu0 0
      %1474 = vmatmul.mubr.bf16.gmra.mxu0 %v1385
      %v1475 = vpop.f32.mrf.mxu0
      %v1476 = vadd.f32 0.0, %v1475
      %v1477 = vpop.f32.mrf.mxu0
      %v1478 = vpop.f32.mrf.mxu0
      %v1479 = vadd.f32 0.0, %v1478
      %v1480 = vpop.f32.mrf.mxu0
      %1481 = vmatprep.mubr.bf16.mxu0 0
      %1482 = vmatmul.mubr.bf16.gmra.mxu0 %v1388
      %v1483 = vpop.f32.mrf.mxu0
      %v1484 = vadd.f32 0.0, %v1483
      %v1485 = vpop.f32.mrf.mxu0
      %v1486 = vpop.f32.mrf.mxu0
      %v1487 = vadd.f32 0.0, %v1486
      %v1488 = vpop.f32.mrf.mxu0
      %1489 = vmatprep.mubr.bf16.mxu0 0
      %1490 = vmatmul.mubr.bf16.gmra.mxu0 %v1391
      %v1491 = vpop.f32.mrf.mxu0
      %v1492 = vadd.f32 0.0, %v1491
      %v1493 = vpop.f32.mrf.mxu0
      %v1494 = vpop.f32.mrf.mxu0
      %v1495 = vadd.f32 0.0, %v1494
      %v1496 = vpop.f32.mrf.mxu0
      %1497 = vmatprep.mubr.bf16.mxu0 0
      %1498 = vmatmul.mubr.bf16.gmra.mxu0 %v1394
      %v1499 = vpop.f32.mrf.mxu0
      %v1500 = vadd.f32 0.0, %v1499
      %v1501 = vpop.f32.mrf.mxu0
      %v1502 = vpop.f32.mrf.mxu0
      %v1503 = vadd.f32 0.0, %v1502
      %v1504 = vpop.f32.mrf.mxu0
      %1505 = vmatprep.mubr.bf16.mxu0 0
      %1506 = vmatmul.mubr.bf16.gmra.mxu0 %v1397
      %v1507 = vpop.f32.mrf.mxu0
      %v1508 = vadd.f32 0.0, %v1507
      %v1509 = vpop.f32.mrf.mxu0
      %v1510 = vpop.f32.mrf.mxu0
      %v1511 = vadd.f32 0.0, %v1510
      %v1512 = vpop.f32.mrf.mxu0
      %1513 = vmatprep.mubr.bf16.mxu0 0
      %1514 = vmatmul.mubr.bf16.gmra.mxu0 %v1400
      %v1515 = vpop.f32.mrf.mxu0
      %v1516 = vadd.f32 0.0, %v1515
      %v1517 = vpop.f32.mrf.mxu0
      %v1518 = vpop.f32.mrf.mxu0
      %v1519 = vadd.f32 0.0, %v1518
      %v1520 = vpop.f32.mrf.mxu0
      %1521 = vmatprep.mubr.bf16.mxu0 0
      %1522 = vmatmul.mubr.bf16.gmra.mxu0 %v1403
      %v1523 = vpop.f32.mrf.mxu0
      %v1524 = vadd.f32 0.0, %v1523
      %v1525 = vpop.f32.mrf.mxu0
      %v1526 = vpop.f32.mrf.mxu0
      %v1527 = vadd.f32 0.0, %v1526
      %v1528 = vpop.f32.mrf.mxu0
      %1529 = vmatprep.mubr.bf16.mxu0 0
      %1530 = vmatmul.mubr.bf16.gmra.mxu0 %v1406
      %v1531 = vpop.f32.mrf.mxu0
      %v1532 = vadd.f32 0.0, %v1531
      %v1533 = vpop.f32.mrf.mxu0
      %v1534 = vpop.f32.mrf.mxu0
      %v1535 = vadd.f32 0.0, %v1534
      %v1536 = vpop.f32.mrf.mxu0
      %1537 = vmatprep.mubr.bf16.mxu0 0
      %1538 = vmatmul.mubr.bf16.gmra.mxu0 %v1409
      %v1539 = vpop.f32.mrf.mxu0
      %v1540 = vadd.f32 0.0, %v1539
      %v1541 = vpop.f32.mrf.mxu0
      %v1542 = vpop.f32.mrf.mxu0
      %v1543 = vadd.f32 0.0, %v1542
      %v1544 = vpop.f32.mrf.mxu0
      %1545 = vmatprep.mubr.bf16.mxu0 0
      %1546 = vmatmul.mubr.bf16.gmra.mxu0 %v1412
      %v1547 = vpop.f32.mrf.mxu0
      %v1548 = vadd.f32 0.0, %v1547
      %v1549 = vpop.f32.mrf.mxu0
      %v1550 = vpop.f32.mrf.mxu0
      %v1551 = vadd.f32 0.0, %v1550
      %v1552 = vpop.f32.mrf.mxu0
      %1553 = vmatprep.mubr.bf16.mxu0 0
      %1554 = vmatmul.mubr.bf16.gmra.mxu0 %v1415
      %v1555 = vpop.f32.mrf.mxu0
      %v1556 = vadd.f32 0.0, %v1555
      %v1557 = vpop.f32.mrf.mxu0
      %v1558 = vpop.f32.mrf.mxu0
      %v1559 = vadd.f32 0.0, %v1558
      %v1560 = vpop.f32.mrf.mxu0
      %1561 = vmatprep.mubr.bf16.mxu0 0
      %1562 = vmatmul.mubr.bf16.gmra.mxu0 %v1418
      %v1563 = vpop.f32.mrf.mxu0
      %v1564 = vadd.f32 0.0, %v1563
      %v1565 = vpop.f32.mrf.mxu0
      %v1566 = vpop.f32.mrf.mxu0
      %v1567 = vadd.f32 0.0, %v1566
      %v1568 = vpop.f32.mrf.mxu0
      %1569 = vmatprep.mubr.bf16.mxu0 0
      %1570 = vmatmul.mubr.bf16.gmra.mxu0 %v1421
      %v1571 = vpop.f32.mrf.mxu0
      %v1572 = vadd.f32 0.0, %v1571
      %v1573 = vpop.f32.mrf.mxu0
      %v1574 = vpop.f32.mrf.mxu0
      %v1575 = vadd.f32 0.0, %v1574
      %v1576 = vpop.f32.mrf.mxu0
      %1577 = vmatprep.mubr.bf16.mxu0 0
      %1578 = vmatmul.mubr.bf16.gmra.mxu0 %v1424
      %v1579 = vpop.f32.mrf.mxu0
      %v1580 = vadd.f32 0.0, %v1579
      %v1581 = vpop.f32.mrf.mxu0
      %v1582 = vpop.f32.mrf.mxu0
      %v1583 = vadd.f32 0.0, %v1582
      %v1584 = vpop.f32.mrf.mxu0
      %1585 = vmatprep.mubr.bf16.mxu0 0
      %1586 = vmatmul.mubr.bf16.gmra.mxu0 %v1427
      %v1587 = vpop.f32.mrf.mxu0
      %v1588 = vadd.f32 0.0, %v1587
      %v1589 = vpop.f32.mrf.mxu0
      %v1590 = vpop.f32.mrf.mxu0
      %v1591 = vadd.f32 0.0, %v1590
      %v1592 = vpop.f32.mrf.mxu0
      %1593 = vdwg.mxu0
      %v1626 = vunpack.c.l.b16 %v888
      %v1627 = vunpack.c.l.b16 %v889
      %v1628 = vunpack.c.l.b16 %v891
      %v1629 = vunpack.c.l.b16 %v892
      %v1630 = vunpack.c.l.b16 %v894
      %v1631 = vunpack.c.l.b16 %v895
      %v1632 = vunpack.c.l.b16 %v897
      %v1633 = vunpack.c.l.b16 %v898
      %v1634 = vunpack.c.l.b16 %v900
      %v1635 = vunpack.c.l.b16 %v901
      %v1636 = vunpack.c.l.b16 %v903
      %v1637 = vunpack.c.l.b16 %v904
      %v1638 = vunpack.c.l.b16 %v906
      %v1639 = vunpack.c.l.b16 %v907
      %v1640 = vunpack.c.l.b16 %v909
      %v1641 = vunpack.c.l.b16 %v910
      %v1642 = vunpack.c.l.b16 %v912
      %v1643 = vunpack.c.l.b16 %v913
      %v1644 = vunpack.c.l.b16 %v915
      %v1645 = vunpack.c.l.b16 %v916
      %v1646 = vunpack.c.l.b16 %v918
      %v1647 = vunpack.c.l.b16 %v919
      %v1648 = vunpack.c.l.b16 %v921
      %v1649 = vunpack.c.l.b16 %v922
      %v1650 = vunpack.c.l.b16 %v924
      %v1651 = vunpack.c.l.b16 %v925
      %v1652 = vunpack.c.l.b16 %v927
      %v1653 = vunpack.c.l.b16 %v928
      %v1654 = vunpack.c.l.b16 %v930
      %v1655 = vunpack.c.l.b16 %v931
      %v1656 = vunpack.c.l.b16 %v933
      %v1657 = vunpack.c.l.b16 %v934
      %v1658 = vpack.c.b16 %v1627, %v1626
      %v1659 = vpack.c.b16 %v1629, %v1628
      %v1660 = vpack.c.b16 %v1631, %v1630
      %v1661 = vpack.c.b16 %v1633, %v1632
      %v1662 = vpack.c.b16 %v1635, %v1634
      %v1663 = vpack.c.b16 %v1637, %v1636
      %v1664 = vpack.c.b16 %v1639, %v1638
      %v1665 = vpack.c.b16 %v1641, %v1640
      %v1666 = vpack.c.b16 %v1643, %v1642
      %v1667 = vpack.c.b16 %v1645, %v1644
      %v1668 = vpack.c.b16 %v1647, %v1646
      %v1669 = vpack.c.b16 %v1649, %v1648
      %v1670 = vpack.c.b16 %v1651, %v1650
      %v1671 = vpack.c.b16 %v1653, %v1652
      %v1672 = vpack.c.b16 %v1655, %v1654
      %v1673 = vpack.c.b16 %v1657, %v1656
      %v1675 = vsel %vm1380, %v1658, 0
      %v1678 = vsel %vm1380, %v1659, 0
      %v1681 = vsel %vm1380, %v1660, 0
      %v1684 = vsel %vm1380, %v1661, 0
      %v1687 = vsel %vm1380, %v1662, 0
      %v1690 = vsel %vm1380, %v1663, 0
      %v1693 = vsel %vm1380, %v1664, 0
      %v1696 = vsel %vm1380, %v1665, 0
      %v1699 = vsel %vm1380, %v1666, 0
      %v1702 = vsel %vm1380, %v1667, 0
      %v1705 = vsel %vm1380, %v1668, 0
      %v1708 = vsel %vm1380, %v1669, 0
      %v1711 = vsel %vm1380, %v1670, 0
      %v1714 = vsel %vm1380, %v1671, 0
      %v1717 = vsel %vm1380, %v1672, 0
      %v1720 = vsel %vm1380, %v1673, 0
      %v1723 = vsel %vm1429, %v942, 0
      %1725 = vmatprep.subr.bf16.mxu0 0
      %1726 = vmatpush1.bf16.msra.mxu0 0
      %1727 = vmatprep.subr.bf16.mxu0 0
      %1728 = vmatpush1.bf16.msra.mxu0 0
      %1729 = vmatprep.subr.bf16.mxu0 0
      %1730 = vmatpush1.bf16.msra.mxu0 0
      %1731 = vmatprep.subr.bf16.mxu0 0
      %1732 = vmatpush1.bf16.msra.mxu0 0
      %1733 = vmatprep.subr.bf16.mxu0 0
      %1734 = vmatpush1.bf16.msra.mxu0 0
      %1735 = vmatprep.subr.bf16.mxu0 0
      %1736 = vmatpush1.bf16.msra.mxu0 0
      %1737 = vmatprep.subr.bf16.mxu0 0
      %1738 = vmatpush1.bf16.msra.mxu0 0
      %1739 = vmatprep.subr.bf16.mxu0 0
      %1740 = vmatpush1.bf16.msra.mxu0 %v1723
      %1741 = vmatprep.subr.bf16.mxu0 0
      %1742 = vmatpush2.bf16.msra.mxu0 0
      %1743 = vmatprep.subr.bf16.mxu0 0
      %1744 = vmatpush2.bf16.msra.mxu0 0
      %1745 = vmatprep.subr.bf16.mxu0 0
      %1746 = vmatpush2.bf16.msra.mxu0 0
      %1747 = vmatprep.subr.bf16.mxu0 0
      %1748 = vmatpush2.bf16.msra.mxu0 0
      %1749 = vmatprep.subr.bf16.mxu0 0
      %1750 = vmatpush2.bf16.msra.mxu0 0
      %1751 = vmatprep.subr.bf16.mxu0 0
      %1752 = vmatpush2.bf16.msra.mxu0 0
      %1753 = vmatprep.subr.bf16.mxu0 0
      %1754 = vmatpush2.bf16.msra.mxu0 0
      %1755 = vmatprep.subr.bf16.mxu0 0
      %1756 = vmatpush2.bf16.msra.mxu0 0
      %1757 = vmatprep.mubr.bf16.mxu0 0
      %1758 = vmatmul.mubr.bf16.gmra.mxu0 %v1675
      %v1759 = vpop.f32.mrf.mxu0
      %v1760 = vadd.f32 %v1468, %v1759
      %v1761 = vpop.f32.mrf.mxu0
      %v1762 = vpop.f32.mrf.mxu0
      %v1763 = vadd.f32 %v1471, %v1762
      %v1764 = vpop.f32.mrf.mxu0
      %1765 = vmatprep.mubr.bf16.mxu0 0
      %1766 = vmatmul.mubr.bf16.gmra.mxu0 %v1678
      %v1767 = vpop.f32.mrf.mxu0
      %v1768 = vadd.f32 %v1476, %v1767
      %v1769 = vpop.f32.mrf.mxu0
      %v1770 = vpop.f32.mrf.mxu0
      %v1771 = vadd.f32 %v1479, %v1770
      %v1772 = vpop.f32.mrf.mxu0
      %1773 = vmatprep.mubr.bf16.mxu0 0
      %1774 = vmatmul.mubr.bf16.gmra.mxu0 %v1681
      %v1775 = vpop.f32.mrf.mxu0
      %v1776 = vadd.f32 %v1484, %v1775
      %v1777 = vpop.f32.mrf.mxu0
      %v1778 = vpop.f32.mrf.mxu0
      %v1779 = vadd.f32 %v1487, %v1778
      %v1780 = vpop.f32.mrf.mxu0
      %1781 = vmatprep.mubr.bf16.mxu0 0
      %1782 = vmatmul.mubr.bf16.gmra.mxu0 %v1684
      %v1783 = vpop.f32.mrf.mxu0
      %v1784 = vadd.f32 %v1492, %v1783
      %v1785 = vpop.f32.mrf.mxu0
      %v1786 = vpop.f32.mrf.mxu0
      %v1787 = vadd.f32 %v1495, %v1786
      %v1788 = vpop.f32.mrf.mxu0
      %1789 = vmatprep.mubr.bf16.mxu0 0
      %1790 = vmatmul.mubr.bf16.gmra.mxu0 %v1687
      %v1791 = vpop.f32.mrf.mxu0
      %v1792 = vadd.f32 %v1500, %v1791
      %v1793 = vpop.f32.mrf.mxu0
      %v1794 = vpop.f32.mrf.mxu0
      %v1795 = vadd.f32 %v1503, %v1794
      %v1796 = vpop.f32.mrf.mxu0
      %1797 = vmatprep.mubr.bf16.mxu0 0
      %1798 = vmatmul.mubr.bf16.gmra.mxu0 %v1690
      %v1799 = vpop.f32.mrf.mxu0
      %v1800 = vadd.f32 %v1508, %v1799
      %v1801 = vpop.f32.mrf.mxu0
      %v1802 = vpop.f32.mrf.mxu0
      %v1803 = vadd.f32 %v1511, %v1802
      %v1804 = vpop.f32.mrf.mxu0
      %1805 = vmatprep.mubr.bf16.mxu0 0
      %1806 = vmatmul.mubr.bf16.gmra.mxu0 %v1693
      %v1807 = vpop.f32.mrf.mxu0
      %v1808 = vadd.f32 %v1516, %v1807
      %v1809 = vpop.f32.mrf.mxu0
      %v1810 = vpop.f32.mrf.mxu0
      %v1811 = vadd.f32 %v1519, %v1810
      %v1812 = vpop.f32.mrf.mxu0
      %1813 = vmatprep.mubr.bf16.mxu0 0
      %1814 = vmatmul.mubr.bf16.gmra.mxu0 %v1696
      %v1815 = vpop.f32.mrf.mxu0
      %v1816 = vadd.f32 %v1524, %v1815
      %v1817 = vpop.f32.mrf.mxu0
      %v1818 = vpop.f32.mrf.mxu0
      %v1819 = vadd.f32 %v1527, %v1818
      %v1820 = vpop.f32.mrf.mxu0
      %1821 = vmatprep.mubr.bf16.mxu0 0
      %1822 = vmatmul.mubr.bf16.gmra.mxu0 %v1699
      %v1823 = vpop.f32.mrf.mxu0
      %v1824 = vadd.f32 %v1532, %v1823
      %v1825 = vpop.f32.mrf.mxu0
      %v1826 = vpop.f32.mrf.mxu0
      %v1827 = vadd.f32 %v1535, %v1826
      %v1828 = vpop.f32.mrf.mxu0
      %1829 = vmatprep.mubr.bf16.mxu0 0
      %1830 = vmatmul.mubr.bf16.gmra.mxu0 %v1702
      %v1831 = vpop.f32.mrf.mxu0
      %v1832 = vadd.f32 %v1540, %v1831
      %v1833 = vpop.f32.mrf.mxu0
      %v1834 = vpop.f32.mrf.mxu0
      %v1835 = vadd.f32 %v1543, %v1834
      %v1836 = vpop.f32.mrf.mxu0
      %1837 = vmatprep.mubr.bf16.mxu0 0
      %1838 = vmatmul.mubr.bf16.gmra.mxu0 %v1705
      %v1839 = vpop.f32.mrf.mxu0
      %v1840 = vadd.f32 %v1548, %v1839
      %v1841 = vpop.f32.mrf.mxu0
      %v1842 = vpop.f32.mrf.mxu0
      %v1843 = vadd.f32 %v1551, %v1842
      %v1844 = vpop.f32.mrf.mxu0
      %1845 = vmatprep.mubr.bf16.mxu0 0
      %1846 = vmatmul.mubr.bf16.gmra.mxu0 %v1708
      %v1847 = vpop.f32.mrf.mxu0
      %v1848 = vadd.f32 %v1556, %v1847
      %v1849 = vpop.f32.mrf.mxu0
      %v1850 = vpop.f32.mrf.mxu0
      %v1851 = vadd.f32 %v1559, %v1850
      %v1852 = vpop.f32.mrf.mxu0
      %1853 = vmatprep.mubr.bf16.mxu0 0
      %1854 = vmatmul.mubr.bf16.gmra.mxu0 %v1711
      %v1855 = vpop.f32.mrf.mxu0
      %v1856 = vadd.f32 %v1564, %v1855
      %v1857 = vpop.f32.mrf.mxu0
      %v1858 = vpop.f32.mrf.mxu0
      %v1859 = vadd.f32 %v1567, %v1858
      %v1860 = vpop.f32.mrf.mxu0
      %1861 = vmatprep.mubr.bf16.mxu0 0
      %1862 = vmatmul.mubr.bf16.gmra.mxu0 %v1714
      %v1863 = vpop.f32.mrf.mxu0
      %v1864 = vadd.f32 %v1572, %v1863
      %v1865 = vpop.f32.mrf.mxu0
      %v1866 = vpop.f32.mrf.mxu0
      %v1867 = vadd.f32 %v1575, %v1866
      %v1868 = vpop.f32.mrf.mxu0
      %1869 = vmatprep.mubr.bf16.mxu0 0
      %1870 = vmatmul.mubr.bf16.gmra.mxu0 %v1717
      %v1871 = vpop.f32.mrf.mxu0
      %v1872 = vadd.f32 %v1580, %v1871
      %v1873 = vpop.f32.mrf.mxu0
      %v1874 = vpop.f32.mrf.mxu0
      %v1875 = vadd.f32 %v1583, %v1874
      %v1876 = vpop.f32.mrf.mxu0
      %1877 = vmatprep.mubr.bf16.mxu0 0
      %1878 = vmatmul.mubr.bf16.gmra.mxu0 %v1720
      %v1879 = vpop.f32.mrf.mxu0
      %v1880 = vadd.f32 %v1588, %v1879
      %v1881 = vpop.f32.mrf.mxu0
      %v1882 = vpop.f32.mrf.mxu0
      %v1883 = vadd.f32 %v1591, %v1882
      %v1884 = vpop.f32.mrf.mxu0
      %1885 = vdwg.mxu0
      %vm1902 = vcmask 1042432
      %vm1903 = vcmask 1046532
      %vm1904 = vmor %vm1902, %vm1903
      %v1905 = vrot.slane %v888, 5
      %v1906 = vrot.slane %v1905, 4
      %v1907 = vrot.slane %v889, 5
      %v1908 = vsel %vm1904, %v1906, %v1907
      %v1909 = vrot.slane %v1907, 4
      %v1910 = vrot.slane %v890, 5
      %v1911 = vsel %vm1904, %v1909, %v1910
      %v1912 = vrot.slane %v891, 5
      %v1913 = vrot.slane %v1912, 4
      %v1914 = vrot.slane %v892, 5
      %v1915 = vsel %vm1904, %v1913, %v1914
      %v1916 = vrot.slane %v1914, 4
      %v1917 = vrot.slane %v893, 5
      %v1918 = vsel %vm1904, %v1916, %v1917
      %v1919 = vrot.slane %v894, 5
      %v1920 = vrot.slane %v1919, 4
      %v1921 = vrot.slane %v895, 5
      %v1922 = vsel %vm1904, %v1920, %v1921
      %v1923 = vrot.slane %v1921, 4
      %v1924 = vrot.slane %v896, 5
      %v1925 = vsel %vm1904, %v1923, %v1924
      %v1926 = vrot.slane %v897, 5
      %v1927 = vrot.slane %v1926, 4
      %v1928 = vrot.slane %v898, 5
      %v1929 = vsel %vm1904, %v1927, %v1928
      %v1930 = vrot.slane %v1928, 4
      %v1931 = vrot.slane %v899, 5
      %v1932 = vsel %vm1904, %v1930, %v1931
      %v1933 = vrot.slane %v900, 5
      %v1934 = vrot.slane %v1933, 4
      %v1935 = vrot.slane %v901, 5
      %v1936 = vsel %vm1904, %v1934, %v1935
      %v1937 = vrot.slane %v1935, 4
      %v1938 = vrot.slane %v902, 5
      %v1939 = vsel %vm1904, %v1937, %v1938
      %v1940 = vrot.slane %v903, 5
      %v1941 = vrot.slane %v1940, 4
      %v1942 = vrot.slane %v904, 5
      %v1943 = vsel %vm1904, %v1941, %v1942
      %v1944 = vrot.slane %v1942, 4
      %v1945 = vrot.slane %v905, 5
      %v1946 = vsel %vm1904, %v1944, %v1945
      %v1947 = vrot.slane %v906, 5
      %v1948 = vrot.slane %v1947, 4
      %v1949 = vrot.slane %v907, 5
      %v1950 = vsel %vm1904, %v1948, %v1949
      %v1951 = vrot.slane %v1949, 4
      %v1952 = vrot.slane %v908, 5
      %v1953 = vsel %vm1904, %v1951, %v1952
      %v1954 = vrot.slane %v909, 5
      %v1955 = vrot.slane %v1954, 4
      %v1956 = vrot.slane %v910, 5
      %v1957 = vsel %vm1904, %v1955, %v1956
      %v1958 = vrot.slane %v1956, 4
      %v1959 = vrot.slane %v911, 5
      %v1960 = vsel %vm1904, %v1958, %v1959
      %v1961 = vrot.slane %v912, 5
      %v1962 = vrot.slane %v1961, 4
      %v1963 = vrot.slane %v913, 5
      %v1964 = vsel %vm1904, %v1962, %v1963
      %v1965 = vrot.slane %v1963, 4
      %v1966 = vrot.slane %v914, 5
      %v1967 = vsel %vm1904, %v1965, %v1966
      %v1968 = vrot.slane %v915, 5
      %v1969 = vrot.slane %v1968, 4
      %v1970 = vrot.slane %v916, 5
      %v1971 = vsel %vm1904, %v1969, %v1970
      %v1972 = vrot.slane %v1970, 4
      %v1973 = vrot.slane %v917, 5
      %v1974 = vsel %vm1904, %v1972, %v1973
      %v1975 = vrot.slane %v918, 5
      %v1976 = vrot.slane %v1975, 4
      %v1977 = vrot.slane %v919, 5
      %v1978 = vsel %vm1904, %v1976, %v1977
      %v1979 = vrot.slane %v1977, 4
      %v1980 = vrot.slane %v920, 5
      %v1981 = vsel %vm1904, %v1979, %v1980
      %v1982 = vrot.slane %v921, 5
      %v1983 = vrot.slane %v1982, 4
      %v1984 = vrot.slane %v922, 5
      %v1985 = vsel %vm1904, %v1983, %v1984
      %v1986 = vrot.slane %v1984, 4
      %v1987 = vrot.slane %v923, 5
      %v1988 = vsel %vm1904, %v1986, %v1987
      %v1989 = vrot.slane %v924, 5
      %v1990 = vrot.slane %v1989, 4
      %v1991 = vrot.slane %v925, 5
      %v1992 = vsel %vm1904, %v1990, %v1991
      %v1993 = vrot.slane %v1991, 4
      %v1994 = vrot.slane %v926, 5
      %v1995 = vsel %vm1904, %v1993, %v1994
      %v1996 = vrot.slane %v927, 5
      %v1997 = vrot.slane %v1996, 4
      %v1998 = vrot.slane %v928, 5
      %v1999 = vsel %vm1904, %v1997, %v1998
      %v2000 = vrot.slane %v1998, 4
      %v2001 = vrot.slane %v929, 5
      %v2002 = vsel %vm1904, %v2000, %v2001
      %v2003 = vrot.slane %v930, 5
      %v2004 = vrot.slane %v2003, 4
      %v2005 = vrot.slane %v931, 5
      %v2006 = vsel %vm1904, %v2004, %v2005
      %v2007 = vrot.slane %v2005, 4
      %v2008 = vrot.slane %v932, 5
      %v2009 = vsel %vm1904, %v2007, %v2008
      %v2010 = vrot.slane %v933, 5
      %v2011 = vrot.slane %v2010, 4
      %v2012 = vrot.slane %v934, 5
      %v2013 = vsel %vm1904, %v2011, %v2012
      %v2014 = vrot.slane %v2012, 4
      %v2015 = vrot.slane %v935, 5
      %v2016 = vsel %vm1904, %v2014, %v2015
      %s2017 = scalar_lea.vmem %s1, 4
      %v2018 = vld [vmem:[%s2017] sm:$0x3]
      %v2019 = vunpack.c.l.b16 %v1908
      %v2020 = vunpack.c.l.b16 %v1911
      %v2021 = vunpack.c.l.b16 %v1915
      %v2022 = vunpack.c.l.b16 %v1918
      %v2023 = vunpack.c.l.b16 %v1922
      %v2024 = vunpack.c.l.b16 %v1925
      %v2025 = vunpack.c.l.b16 %v1929
      %v2026 = vunpack.c.l.b16 %v1932
      %v2027 = vunpack.c.l.b16 %v1936
      %v2028 = vunpack.c.l.b16 %v1939
      %v2029 = vunpack.c.l.b16 %v1943
      %v2030 = vunpack.c.l.b16 %v1946
      %v2031 = vunpack.c.l.b16 %v1950
      %v2032 = vunpack.c.l.b16 %v1953
      %v2033 = vunpack.c.l.b16 %v1957
      %v2034 = vunpack.c.l.b16 %v1960
      %v2035 = vunpack.c.l.b16 %v1964
      %v2036 = vunpack.c.l.b16 %v1967
      %v2037 = vunpack.c.l.b16 %v1971
      %v2038 = vunpack.c.l.b16 %v1974
      %v2039 = vunpack.c.l.b16 %v1978
      %v2040 = vunpack.c.l.b16 %v1981
      %v2041 = vunpack.c.l.b16 %v1985
      %v2042 = vunpack.c.l.b16 %v1988
      %v2043 = vunpack.c.l.b16 %v1992
      %v2044 = vunpack.c.l.b16 %v1995
      %v2045 = vunpack.c.l.b16 %v1999
      %v2046 = vunpack.c.l.b16 %v2002
      %v2047 = vunpack.c.l.b16 %v2006
      %v2048 = vunpack.c.l.b16 %v2009
      %v2049 = vunpack.c.l.b16 %v2013
      %v2050 = vunpack.c.l.b16 %v2016
      %v2051 = vpack.c.b16 %v2020, %v2019
      %v2052 = vpack.c.b16 %v2022, %v2021
      %v2053 = vpack.c.b16 %v2024, %v2023
      %v2054 = vpack.c.b16 %v2026, %v2025
      %v2055 = vpack.c.b16 %v2028, %v2027
      %v2056 = vpack.c.b16 %v2030, %v2029
      %v2057 = vpack.c.b16 %v2032, %v2031
      %v2058 = vpack.c.b16 %v2034, %v2033
      %v2059 = vpack.c.b16 %v2036, %v2035
      %v2060 = vpack.c.b16 %v2038, %v2037
      %v2061 = vpack.c.b16 %v2040, %v2039
      %v2062 = vpack.c.b16 %v2042, %v2041
      %v2063 = vpack.c.b16 %v2044, %v2043
      %v2064 = vpack.c.b16 %v2046, %v2045
      %v2065 = vpack.c.b16 %v2048, %v2047
      %v2066 = vpack.c.b16 %v2050, %v2049
      %v2068 = vsel %vm1380, %v2051, 0
      %v2071 = vsel %vm1380, %v2052, 0
      %v2074 = vsel %vm1380, %v2053, 0
      %v2077 = vsel %vm1380, %v2054, 0
      %v2080 = vsel %vm1380, %v2055, 0
      %v2083 = vsel %vm1380, %v2056, 0
      %v2086 = vsel %vm1380, %v2057, 0
      %v2089 = vsel %vm1380, %v2058, 0
      %v2092 = vsel %vm1380, %v2059, 0
      %v2095 = vsel %vm1380, %v2060, 0
      %v2098 = vsel %vm1380, %v2061, 0
      %v2101 = vsel %vm1380, %v2062, 0
      %v2104 = vsel %vm1380, %v2063, 0
      %v2107 = vsel %vm1380, %v2064, 0
      %v2110 = vsel %vm1380, %v2065, 0
      %v2113 = vsel %vm1380, %v2066, 0
      %v2116 = vsel %vm1429, %v2018, 0
      %2118 = vmatprep.subr.bf16.mxu0 0
      %2119 = vmatpush1.bf16.msra.mxu0 0
      %2120 = vmatprep.subr.bf16.mxu0 0
      %2121 = vmatpush1.bf16.msra.mxu0 0
      %2122 = vmatprep.subr.bf16.mxu0 0
      %2123 = vmatpush1.bf16.msra.mxu0 0
      %2124 = vmatprep.subr.bf16.mxu0 0
      %2125 = vmatpush1.bf16.msra.mxu0 0
      %2126 = vmatprep.subr.bf16.mxu0 0
      %2127 = vmatpush1.bf16.msra.mxu0 0
      %2128 = vmatprep.subr.bf16.mxu0 0
      %2129 = vmatpush1.bf16.msra.mxu0 0
      %2130 = vmatprep.subr.bf16.mxu0 0
      %2131 = vmatpush1.bf16.msra.mxu0 0
      %2132 = vmatprep.subr.bf16.mxu0 0
      %2133 = vmatpush1.bf16.msra.mxu0 %v2116
      %2134 = vmatprep.subr.bf16.mxu0 0
      %2135 = vmatpush2.bf16.msra.mxu0 0
      %2136 = vmatprep.subr.bf16.mxu0 0
      %2137 = vmatpush2.bf16.msra.mxu0 0
      %2138 = vmatprep.subr.bf16.mxu0 0
      %2139 = vmatpush2.bf16.msra.mxu0 0
      %2140 = vmatprep.subr.bf16.mxu0 0
      %2141 = vmatpush2.bf16.msra.mxu0 0
      %2142 = vmatprep.subr.bf16.mxu0 0
      %2143 = vmatpush2.bf16.msra.mxu0 0
      %2144 = vmatprep.subr.bf16.mxu0 0
      %2145 = vmatpush2.bf16.msra.mxu0 0
      %2146 = vmatprep.subr.bf16.mxu0 0
      %2147 = vmatpush2.bf16.msra.mxu0 0
      %2148 = vmatprep.subr.bf16.mxu0 0
      %2149 = vmatpush2.bf16.msra.mxu0 0
      %2150 = vmatprep.mubr.bf16.mxu0 0
      %2151 = vmatmul.mubr.bf16.gmra.mxu0 %v2068
      %v2152 = vpop.f32.mrf.mxu0
      %v2153 = vadd.f32 0.0, %v2152
      %v2154 = vpop.f32.mrf.mxu0
      %v2155 = vpop.f32.mrf.mxu0
      %v2156 = vadd.f32 0.0, %v2155
      %v2157 = vpop.f32.mrf.mxu0
      %2158 = vmatprep.mubr.bf16.mxu0 0
      %2159 = vmatmul.mubr.bf16.gmra.mxu0 %v2071
      %v2160 = vpop.f32.mrf.mxu0
      %v2161 = vadd.f32 0.0, %v2160
      %v2162 = vpop.f32.mrf.mxu0
      %v2163 = vpop.f32.mrf.mxu0
      %v2164 = vadd.f32 0.0, %v2163
      %v2165 = vpop.f32.mrf.mxu0
      %2166 = vmatprep.mubr.bf16.mxu0 0
      %2167 = vmatmul.mubr.bf16.gmra.mxu0 %v2074
      %v2168 = vpop.f32.mrf.mxu0
      %v2169 = vadd.f32 0.0, %v2168
      %v2170 = vpop.f32.mrf.mxu0
      %v2171 = vpop.f32.mrf.mxu0
      %v2172 = vadd.f32 0.0, %v2171
      %v2173 = vpop.f32.mrf.mxu0
      %2174 = vmatprep.mubr.bf16.mxu0 0
      %2175 = vmatmul.mubr.bf16.gmra.mxu0 %v2077
      %v2176 = vpop.f32.mrf.mxu0
      %v2177 = vadd.f32 0.0, %v2176
      %v2178 = vpop.f32.mrf.mxu0
      %v2179 = vpop.f32.mrf.mxu0
      %v2180 = vadd.f32 0.0, %v2179
      %v2181 = vpop.f32.mrf.mxu0
      %2182 = vmatprep.mubr.bf16.mxu0 0
      %2183 = vmatmul.mubr.bf16.gmra.mxu0 %v2080
      %v2184 = vpop.f32.mrf.mxu0
      %v2185 = vadd.f32 0.0, %v2184
      %v2186 = vpop.f32.mrf.mxu0
      %v2187 = vpop.f32.mrf.mxu0
      %v2188 = vadd.f32 0.0, %v2187
      %v2189 = vpop.f32.mrf.mxu0
      %2190 = vmatprep.mubr.bf16.mxu0 0
      %2191 = vmatmul.mubr.bf16.gmra.mxu0 %v2083
      %v2192 = vpop.f32.mrf.mxu0
      %v2193 = vadd.f32 0.0, %v2192
      %v2194 = vpop.f32.mrf.mxu0
      %v2195 = vpop.f32.mrf.mxu0
      %v2196 = vadd.f32 0.0, %v2195
      %v2197 = vpop.f32.mrf.mxu0
      %2198 = vmatprep.mubr.bf16.mxu0 0
      %2199 = vmatmul.mubr.bf16.gmra.mxu0 %v2086
      %v2200 = vpop.f32.mrf.mxu0
      %v2201 = vadd.f32 0.0, %v2200
      %v2202 = vpop.f32.mrf.mxu0
      %v2203 = vpop.f32.mrf.mxu0
      %v2204 = vadd.f32 0.0, %v2203
      %v2205 = vpop.f32.mrf.mxu0
      %2206 = vmatprep.mubr.bf16.mxu0 0
      %2207 = vmatmul.mubr.bf16.gmra.mxu0 %v2089
      %v2208 = vpop.f32.mrf.mxu0
      %v2209 = vadd.f32 0.0, %v2208
      %v2210 = vpop.f32.mrf.mxu0
      %v2211 = vpop.f32.mrf.mxu0
      %v2212 = vadd.f32 0.0, %v2211
      %v2213 = vpop.f32.mrf.mxu0
      %2214 = vmatprep.mubr.bf16.mxu0 0
      %2215 = vmatmul.mubr.bf16.gmra.mxu0 %v2092
      %v2216 = vpop.f32.mrf.mxu0
      %v2217 = vadd.f32 0.0, %v2216
      %v2218 = vpop.f32.mrf.mxu0
      %v2219 = vpop.f32.mrf.mxu0
      %v2220 = vadd.f32 0.0, %v2219
      %v2221 = vpop.f32.mrf.mxu0
      %2222 = vmatprep.mubr.bf16.mxu0 0
      %2223 = vmatmul.mubr.bf16.gmra.mxu0 %v2095
      %v2224 = vpop.f32.mrf.mxu0
      %v2225 = vadd.f32 0.0, %v2224
      %v2226 = vpop.f32.mrf.mxu0
      %v2227 = vpop.f32.mrf.mxu0
      %v2228 = vadd.f32 0.0, %v2227
      %v2229 = vpop.f32.mrf.mxu0
      %2230 = vmatprep.mubr.bf16.mxu0 0
      %2231 = vmatmul.mubr.bf16.gmra.mxu0 %v2098
      %v2232 = vpop.f32.mrf.mxu0
      %v2233 = vadd.f32 0.0, %v2232
      %v2234 = vpop.f32.mrf.mxu0
      %v2235 = vpop.f32.mrf.mxu0
      %v2236 = vadd.f32 0.0, %v2235
      %v2237 = vpop.f32.mrf.mxu0
      %2238 = vmatprep.mubr.bf16.mxu0 0
      %2239 = vmatmul.mubr.bf16.gmra.mxu0 %v2101
      %v2240 = vpop.f32.mrf.mxu0
      %v2241 = vadd.f32 0.0, %v2240
      %v2242 = vpop.f32.mrf.mxu0
      %v2243 = vpop.f32.mrf.mxu0
      %v2244 = vadd.f32 0.0, %v2243
      %v2245 = vpop.f32.mrf.mxu0
      %2246 = vmatprep.mubr.bf16.mxu0 0
      %2247 = vmatmul.mubr.bf16.gmra.mxu0 %v2104
      %v2248 = vpop.f32.mrf.mxu0
      %v2249 = vadd.f32 0.0, %v2248
      %v2250 = vpop.f32.mrf.mxu0
      %v2251 = vpop.f32.mrf.mxu0
      %v2252 = vadd.f32 0.0, %v2251
      %v2253 = vpop.f32.mrf.mxu0
      %2254 = vmatprep.mubr.bf16.mxu0 0
      %2255 = vmatmul.mubr.bf16.gmra.mxu0 %v2107
      %v2256 = vpop.f32.mrf.mxu0
      %v2257 = vadd.f32 0.0, %v2256
      %v2258 = vpop.f32.mrf.mxu0
      %v2259 = vpop.f32.mrf.mxu0
      %v2260 = vadd.f32 0.0, %v2259
      %v2261 = vpop.f32.mrf.mxu0
      %2262 = vmatprep.mubr.bf16.mxu0 0
      %2263 = vmatmul.mubr.bf16.gmra.mxu0 %v2110
      %v2264 = vpop.f32.mrf.mxu0
      %v2265 = vadd.f32 0.0, %v2264
      %v2266 = vpop.f32.mrf.mxu0
      %v2267 = vpop.f32.mrf.mxu0
      %v2268 = vadd.f32 0.0, %v2267
      %v2269 = vpop.f32.mrf.mxu0
      %2270 = vmatprep.mubr.bf16.mxu0 0
      %2271 = vmatmul.mubr.bf16.gmra.mxu0 %v2113
      %v2272 = vpop.f32.mrf.mxu0
      %v2273 = vadd.f32 0.0, %v2272
      %v2274 = vpop.f32.mrf.mxu0
      %v2275 = vpop.f32.mrf.mxu0
      %v2276 = vadd.f32 0.0, %v2275
      %v2277 = vpop.f32.mrf.mxu0
      %2278 = vdwg.mxu0
      %v2279 = vadd.f32 %v1760, %v2153
      %v2280 = vadd.f32 %v1763, %v2156
      %v2281 = vadd.f32 %v1768, %v2161
      %v2282 = vadd.f32 %v1771, %v2164
      %v2283 = vadd.f32 %v1776, %v2169
      %v2284 = vadd.f32 %v1779, %v2172
      %v2285 = vadd.f32 %v1784, %v2177
      %v2286 = vadd.f32 %v1787, %v2180
      %v2287 = vadd.f32 %v1792, %v2185
      %v2288 = vadd.f32 %v1795, %v2188
      %v2289 = vadd.f32 %v1800, %v2193
      %v2290 = vadd.f32 %v1803, %v2196
      %v2291 = vadd.f32 %v1808, %v2201
      %v2292 = vadd.f32 %v1811, %v2204
      %v2293 = vadd.f32 %v1816, %v2209
      %v2294 = vadd.f32 %v1819, %v2212
      %v2295 = vadd.f32 %v1824, %v2217
      %v2296 = vadd.f32 %v1827, %v2220
      %v2297 = vadd.f32 %v1832, %v2225
      %v2298 = vadd.f32 %v1835, %v2228
      %v2299 = vadd.f32 %v1840, %v2233
      %v2300 = vadd.f32 %v1843, %v2236
      %v2301 = vadd.f32 %v1848, %v2241
      %v2302 = vadd.f32 %v1851, %v2244
      %v2303 = vadd.f32 %v1856, %v2249
      %v2304 = vadd.f32 %v1859, %v2252
      %v2305 = vadd.f32 %v1864, %v2257
      %v2306 = vadd.f32 %v1867, %v2260
      %v2307 = vadd.f32 %v1872, %v2265
      %v2308 = vadd.f32 %v1875, %v2268
      %v2309 = vadd.f32 %v1880, %v2273
      %v2310 = vadd.f32 %v1883, %v2276
      %s2311 = scalar_lea.vmem %s1, 6
      %v2312 = vld [vmem:[%s2311] sm:$0x3]
      %v2315 = vunpack.c.l.b16 %v936
      %v2316 = vunpack.c.l.b16 %v937
      %v2317 = vpack.c.b16 %v2316, %v2315
      %v2319 = vsel %vm1380, %v2317, 0
      %v2322 = vsel %vm1429, %v2312, 0
      %2324 = vmatprep.subr.bf16.mxu0 0
      %2325 = vmatpush1.bf16.msra.mxu0 0
      %2326 = vmatprep.subr.bf16.mxu0 0
      %2327 = vmatpush1.bf16.msra.mxu0 0
      %2328 = vmatprep.subr.bf16.mxu0 0
      %2329 = vmatpush1.bf16.msra.mxu0 0
      %2330 = vmatprep.subr.bf16.mxu0 0
      %2331 = vmatpush1.bf16.msra.mxu0 0
      %2332 = vmatprep.subr.bf16.mxu0 0
      %2333 = vmatpush1.bf16.msra.mxu0 0
      %2334 = vmatprep.subr.bf16.mxu0 0
      %2335 = vmatpush1.bf16.msra.mxu0 0
      %2336 = vmatprep.subr.bf16.mxu0 0
      %2337 = vmatpush1.bf16.msra.mxu0 0
      %2338 = vmatprep.subr.bf16.mxu0 0
      %2339 = vmatpush1.bf16.msra.mxu0 %v2322
      %2340 = vmatprep.subr.bf16.mxu0 0
      %2341 = vmatpush2.bf16.msra.mxu0 0
      %2342 = vmatprep.subr.bf16.mxu0 0
      %2343 = vmatpush2.bf16.msra.mxu0 0
      %2344 = vmatprep.subr.bf16.mxu0 0
      %2345 = vmatpush2.bf16.msra.mxu0 0
      %2346 = vmatprep.subr.bf16.mxu0 0
      %2347 = vmatpush2.bf16.msra.mxu0 0
      %2348 = vmatprep.subr.bf16.mxu0 0
      %2349 = vmatpush2.bf16.msra.mxu0 0
      %2350 = vmatprep.subr.bf16.mxu0 0
      %2351 = vmatpush2.bf16.msra.mxu0 0
      %2352 = vmatprep.subr.bf16.mxu0 0
      %2353 = vmatpush2.bf16.msra.mxu0 0
      %2354 = vmatprep.subr.bf16.mxu0 0
      %2355 = vmatpush2.bf16.msra.mxu0 0
      %2356 = vmatprep.mubr.bf16.mxu0 0
      %2357 = vmatmul.mubr.bf16.gmra.mxu0 %v1678
      %v2358 = vpop.f32.mrf.mxu0
      %v2359 = vadd.f32 0.0, %v2358
      %v2360 = vpop.f32.mrf.mxu0
      %v2361 = vpop.f32.mrf.mxu0
      %v2362 = vadd.f32 0.0, %v2361
      %v2363 = vpop.f32.mrf.mxu0
      %2364 = vmatprep.mubr.bf16.mxu0 0
      %2365 = vmatmul.mubr.bf16.gmra.mxu0 %v1681
      %v2366 = vpop.f32.mrf.mxu0
      %v2367 = vadd.f32 0.0, %v2366
      %v2368 = vpop.f32.mrf.mxu0
      %v2369 = vpop.f32.mrf.mxu0
      %v2370 = vadd.f32 0.0, %v2369
      %v2371 = vpop.f32.mrf.mxu0
      %2372 = vmatprep.mubr.bf16.mxu0 0
      %2373 = vmatmul.mubr.bf16.gmra.mxu0 %v1684
      %v2374 = vpop.f32.mrf.mxu0
      %v2375 = vadd.f32 0.0, %v2374
      %v2376 = vpop.f32.mrf.mxu0
      %v2377 = vpop.f32.mrf.mxu0
      %v2378 = vadd.f32 0.0, %v2377
      %v2379 = vpop.f32.mrf.mxu0
      %2380 = vmatprep.mubr.bf16.mxu0 0
      %2381 = vmatmul.mubr.bf16.gmra.mxu0 %v1687
      %v2382 = vpop.f32.mrf.mxu0
      %v2383 = vadd.f32 0.0, %v2382
      %v2384 = vpop.f32.mrf.mxu0
      %v2385 = vpop.f32.mrf.mxu0
      %v2386 = vadd.f32 0.0, %v2385
      %v2387 = vpop.f32.mrf.mxu0
      %2388 = vmatprep.mubr.bf16.mxu0 0
      %2389 = vmatmul.mubr.bf16.gmra.mxu0 %v1690
      %v2390 = vpop.f32.mrf.mxu0
      %v2391 = vadd.f32 0.0, %v2390
      %v2392 = vpop.f32.mrf.mxu0
      %v2393 = vpop.f32.mrf.mxu0
      %v2394 = vadd.f32 0.0, %v2393
      %v2395 = vpop.f32.mrf.mxu0
      %2396 = vmatprep.mubr.bf16.mxu0 0
      %2397 = vmatmul.mubr.bf16.gmra.mxu0 %v1693
      %v2398 = vpop.f32.mrf.mxu0
      %v2399 = vadd.f32 0.0, %v2398
      %v2400 = vpop.f32.mrf.mxu0
      %v2401 = vpop.f32.mrf.mxu0
      %v2402 = vadd.f32 0.0, %v2401
      %v2403 = vpop.f32.mrf.mxu0
      %2404 = vmatprep.mubr.bf16.mxu0 0
      %2405 = vmatmul.mubr.bf16.gmra.mxu0 %v1696
      %v2406 = vpop.f32.mrf.mxu0
      %v2407 = vadd.f32 0.0, %v2406
      %v2408 = vpop.f32.mrf.mxu0
      %v2409 = vpop.f32.mrf.mxu0
      %v2410 = vadd.f32 0.0, %v2409
      %v2411 = vpop.f32.mrf.mxu0
      %2412 = vmatprep.mubr.bf16.mxu0 0
      %2413 = vmatmul.mubr.bf16.gmra.mxu0 %v1699
      %v2414 = vpop.f32.mrf.mxu0
      %v2415 = vadd.f32 0.0, %v2414
      %v2416 = vpop.f32.mrf.mxu0
      %v2417 = vpop.f32.mrf.mxu0
      %v2418 = vadd.f32 0.0, %v2417
      %v2419 = vpop.f32.mrf.mxu0
      %2420 = vmatprep.mubr.bf16.mxu0 0
      %2421 = vmatmul.mubr.bf16.gmra.mxu0 %v1702
      %v2422 = vpop.f32.mrf.mxu0
      %v2423 = vadd.f32 0.0, %v2422
      %v2424 = vpop.f32.mrf.mxu0
      %v2425 = vpop.f32.mrf.mxu0
      %v2426 = vadd.f32 0.0, %v2425
      %v2427 = vpop.f32.mrf.mxu0
      %2428 = vmatprep.mubr.bf16.mxu0 0
      %2429 = vmatmul.mubr.bf16.gmra.mxu0 %v1705
      %v2430 = vpop.f32.mrf.mxu0
      %v2431 = vadd.f32 0.0, %v2430
      %v2432 = vpop.f32.mrf.mxu0
      %v2433 = vpop.f32.mrf.mxu0
      %v2434 = vadd.f32 0.0, %v2433
      %v2435 = vpop.f32.mrf.mxu0
      %2436 = vmatprep.mubr.bf16.mxu0 0
      %2437 = vmatmul.mubr.bf16.gmra.mxu0 %v1708
      %v2438 = vpop.f32.mrf.mxu0
      %v2439 = vadd.f32 0.0, %v2438
      %v2440 = vpop.f32.mrf.mxu0
      %v2441 = vpop.f32.mrf.mxu0
      %v2442 = vadd.f32 0.0, %v2441
      %v2443 = vpop.f32.mrf.mxu0
      %2444 = vmatprep.mubr.bf16.mxu0 0
      %2445 = vmatmul.mubr.bf16.gmra.mxu0 %v1711
      %v2446 = vpop.f32.mrf.mxu0
      %v2447 = vadd.f32 0.0, %v2446
      %v2448 = vpop.f32.mrf.mxu0
      %v2449 = vpop.f32.mrf.mxu0
      %v2450 = vadd.f32 0.0, %v2449
      %v2451 = vpop.f32.mrf.mxu0
      %2452 = vmatprep.mubr.bf16.mxu0 0
      %2453 = vmatmul.mubr.bf16.gmra.mxu0 %v1714
      %v2454 = vpop.f32.mrf.mxu0
      %v2455 = vadd.f32 0.0, %v2454
      %v2456 = vpop.f32.mrf.mxu0
      %v2457 = vpop.f32.mrf.mxu0
      %v2458 = vadd.f32 0.0, %v2457
      %v2459 = vpop.f32.mrf.mxu0
      %2460 = vmatprep.mubr.bf16.mxu0 0
      %2461 = vmatmul.mubr.bf16.gmra.mxu0 %v1717
      %v2462 = vpop.f32.mrf.mxu0
      %v2463 = vadd.f32 0.0, %v2462
      %v2464 = vpop.f32.mrf.mxu0
      %v2465 = vpop.f32.mrf.mxu0
      %v2466 = vadd.f32 0.0, %v2465
      %v2467 = vpop.f32.mrf.mxu0
      %2468 = vmatprep.mubr.bf16.mxu0 0
      %2469 = vmatmul.mubr.bf16.gmra.mxu0 %v1720
      %v2470 = vpop.f32.mrf.mxu0
      %v2471 = vadd.f32 0.0, %v2470
      %v2472 = vpop.f32.mrf.mxu0
      %v2473 = vpop.f32.mrf.mxu0
      %v2474 = vadd.f32 0.0, %v2473
      %v2475 = vpop.f32.mrf.mxu0
      %2476 = vmatprep.mubr.bf16.mxu0 0
      %2477 = vmatmul.mubr.bf16.gmra.mxu0 %v2319
      %v2478 = vpop.f32.mrf.mxu0
      %v2479 = vadd.f32 0.0, %v2478
      %v2480 = vpop.f32.mrf.mxu0
      %v2481 = vpop.f32.mrf.mxu0
      %v2482 = vadd.f32 0.0, %v2481
      %v2483 = vpop.f32.mrf.mxu0
      %2484 = vdwg.mxu0
      %v2485 = vadd.f32 %v2279, %v2359
      %v2486 = vadd.f32 %v2280, %v2362
      %v2487 = vadd.f32 %v2281, %v2367
      %v2488 = vadd.f32 %v2282, %v2370
      %v2489 = vadd.f32 %v2283, %v2375
      %v2490 = vadd.f32 %v2284, %v2378
      %v2491 = vadd.f32 %v2285, %v2383
      %v2492 = vadd.f32 %v2286, %v2386
      %v2493 = vadd.f32 %v2287, %v2391
      %v2494 = vadd.f32 %v2288, %v2394
      %v2495 = vadd.f32 %v2289, %v2399
      %v2496 = vadd.f32 %v2290, %v2402
      %v2497 = vadd.f32 %v2291, %v2407
      %v2498 = vadd.f32 %v2292, %v2410
      %v2499 = vadd.f32 %v2293, %v2415
      %v2500 = vadd.f32 %v2294, %v2418
      %v2501 = vadd.f32 %v2295, %v2423
      %v2502 = vadd.f32 %v2296, %v2426
      %v2503 = vadd.f32 %v2297, %v2431
      %v2504 = vadd.f32 %v2298, %v2434
      %v2505 = vadd.f32 %v2299, %v2439
      %v2506 = vadd.f32 %v2300, %v2442
      %v2507 = vadd.f32 %v2301, %v2447
      %v2508 = vadd.f32 %v2302, %v2450
      %v2509 = vadd.f32 %v2303, %v2455
      %v2510 = vadd.f32 %v2304, %v2458
      %v2511 = vadd.f32 %v2305, %v2463
      %v2512 = vadd.f32 %v2306, %v2466
      %v2513 = vadd.f32 %v2307, %v2471
      %v2514 = vadd.f32 %v2308, %v2474
      %v2515 = vadd.f32 %v2309, %v2479
      %v2516 = vadd.f32 %v2310, %v2482
      %v2518 = vshrl.u32 %v936, 16
      %v2520 = vrot.slane %v2518, 4
      %v2521 = vshll.u32 %v936, 16
      %v2523 = vrot.slane %v2521, 5
      %v2524 = vor.u32 %v2520, %v2523
      %v2525 = vrot.slane %v2524, 4
      %v2527 = vshll.u32 %v937, 16
      %v2529 = vrot.slane %v2527, 5
      %v2530 = vsel %vm945, %v2525, %v2529
      %v2531 = vshrl.u32 %v937, 16
      %v2533 = vrot.slane %v2531, 4
      %v2534 = vor.u32 %v2533, %v2529
      %v2535 = vrot.slane %v2534, 4
      %v2537 = vshll.u32 %v938, 16
      %v2539 = vrot.slane %v2537, 5
      %v2540 = vsel %vm945, %v2535, %v2539
      %s2541 = scalar_lea.vmem %s1, 8
      %v2542 = vld [vmem:[%s2541] sm:$0x3]
      %v2543 = vunpack.c.l.b16 %v2530
      %v2544 = vunpack.c.l.b16 %v2540
      %v2545 = vpack.c.b16 %v2544, %v2543
      %v2547 = vsel %vm1380, %v2545, 0
      %v2550 = vsel %vm1429, %v2542, 0
      %2552 = vmatprep.subr.bf16.mxu0 0
      %2553 = vmatpush1.bf16.msra.mxu0 0
      %2554 = vmatprep.subr.bf16.mxu0 0
      %2555 = vmatpush1.bf16.msra.mxu0 0
      %2556 = vmatprep.subr.bf16.mxu0 0
      %2557 = vmatpush1.bf16.msra.mxu0 0
      %2558 = vmatprep.subr.bf16.mxu0 0
      %2559 = vmatpush1.bf16.msra.mxu0 0
      %2560 = vmatprep.subr.bf16.mxu0 0
      %2561 = vmatpush1.bf16.msra.mxu0 0
      %2562 = vmatprep.subr.bf16.mxu0 0
      %2563 = vmatpush1.bf16.msra.mxu0 0
      %2564 = vmatprep.subr.bf16.mxu0 0
      %2565 = vmatpush1.bf16.msra.mxu0 0
      %2566 = vmatprep.subr.bf16.mxu0 0
      %2567 = vmatpush1.bf16.msra.mxu0 %v2550
      %2568 = vmatprep.subr.bf16.mxu0 0
      %2569 = vmatpush2.bf16.msra.mxu0 0
      %2570 = vmatprep.subr.bf16.mxu0 0
      %2571 = vmatpush2.bf16.msra.mxu0 0
      %2572 = vmatprep.subr.bf16.mxu0 0
      %2573 = vmatpush2.bf16.msra.mxu0 0
      %2574 = vmatprep.subr.bf16.mxu0 0
      %2575 = vmatpush2.bf16.msra.mxu0 0
      %2576 = vmatprep.subr.bf16.mxu0 0
      %2577 = vmatpush2.bf16.msra.mxu0 0
      %2578 = vmatprep.subr.bf16.mxu0 0
      %2579 = vmatpush2.bf16.msra.mxu0 0
      %2580 = vmatprep.subr.bf16.mxu0 0
      %2581 = vmatpush2.bf16.msra.mxu0 0
      %2582 = vmatprep.subr.bf16.mxu0 0
      %2583 = vmatpush2.bf16.msra.mxu0 0
      %2584 = vmatprep.mubr.bf16.mxu0 0
      %2585 = vmatmul.mubr.bf16.gmra.mxu0 %v1385
      %v2586 = vpop.f32.mrf.mxu0
      %v2587 = vadd.f32 0.0, %v2586
      %v2588 = vpop.f32.mrf.mxu0
      %v2589 = vpop.f32.mrf.mxu0
      %v2590 = vadd.f32 0.0, %v2589
      %v2591 = vpop.f32.mrf.mxu0
      %2592 = vmatprep.mubr.bf16.mxu0 0
      %2593 = vmatmul.mubr.bf16.gmra.mxu0 %v1388
      %v2594 = vpop.f32.mrf.mxu0
      %v2595 = vadd.f32 0.0, %v2594
      %v2596 = vpop.f32.mrf.mxu0
      %v2597 = vpop.f32.mrf.mxu0
      %v2598 = vadd.f32 0.0, %v2597
      %v2599 = vpop.f32.mrf.mxu0
      %2600 = vmatprep.mubr.bf16.mxu0 0
      %2601 = vmatmul.mubr.bf16.gmra.mxu0 %v1391
      %v2602 = vpop.f32.mrf.mxu0
      %v2603 = vadd.f32 0.0, %v2602
      %v2604 = vpop.f32.mrf.mxu0
      %v2605 = vpop.f32.mrf.mxu0
      %v2606 = vadd.f32 0.0, %v2605
      %v2607 = vpop.f32.mrf.mxu0
      %2608 = vmatprep.mubr.bf16.mxu0 0
      %2609 = vmatmul.mubr.bf16.gmra.mxu0 %v1394
      %v2610 = vpop.f32.mrf.mxu0
      %v2611 = vadd.f32 0.0, %v2610
      %v2612 = vpop.f32.mrf.mxu0
      %v2613 = vpop.f32.mrf.mxu0
      %v2614 = vadd.f32 0.0, %v2613
      %v2615 = vpop.f32.mrf.mxu0
      %2616 = vmatprep.mubr.bf16.mxu0 0
      %2617 = vmatmul.mubr.bf16.gmra.mxu0 %v1397
      %v2618 = vpop.f32.mrf.mxu0
      %v2619 = vadd.f32 0.0, %v2618
      %v2620 = vpop.f32.mrf.mxu0
      %v2621 = vpop.f32.mrf.mxu0
      %v2622 = vadd.f32 0.0, %v2621
      %v2623 = vpop.f32.mrf.mxu0
      %2624 = vmatprep.mubr.bf16.mxu0 0
      %2625 = vmatmul.mubr.bf16.gmra.mxu0 %v1400
      %v2626 = vpop.f32.mrf.mxu0
      %v2627 = vadd.f32 0.0, %v2626
      %v2628 = vpop.f32.mrf.mxu0
      %v2629 = vpop.f32.mrf.mxu0
      %v2630 = vadd.f32 0.0, %v2629
      %v2631 = vpop.f32.mrf.mxu0
      %2632 = vmatprep.mubr.bf16.mxu0 0
      %2633 = vmatmul.mubr.bf16.gmra.mxu0 %v1403
      %v2634 = vpop.f32.mrf.mxu0
      %v2635 = vadd.f32 0.0, %v2634
      %v2636 = vpop.f32.mrf.mxu0
      %v2637 = vpop.f32.mrf.mxu0
      %v2638 = vadd.f32 0.0, %v2637
      %v2639 = vpop.f32.mrf.mxu0
      %2640 = vmatprep.mubr.bf16.mxu0 0
      %2641 = vmatmul.mubr.bf16.gmra.mxu0 %v1406
      %v2642 = vpop.f32.mrf.mxu0
      %v2643 = vadd.f32 0.0, %v2642
      %v2644 = vpop.f32.mrf.mxu0
      %v2645 = vpop.f32.mrf.mxu0
      %v2646 = vadd.f32 0.0, %v2645
      %v2647 = vpop.f32.mrf.mxu0
      %2648 = vmatprep.mubr.bf16.mxu0 0
      %2649 = vmatmul.mubr.bf16.gmra.mxu0 %v1409
      %v2650 = vpop.f32.mrf.mxu0
      %v2651 = vadd.f32 0.0, %v2650
      %v2652 = vpop.f32.mrf.mxu0
      %v2653 = vpop.f32.mrf.mxu0
      %v2654 = vadd.f32 0.0, %v2653
      %v2655 = vpop.f32.mrf.mxu0
      %2656 = vmatprep.mubr.bf16.mxu0 0
      %2657 = vmatmul.mubr.bf16.gmra.mxu0 %v1412
      %v2658 = vpop.f32.mrf.mxu0
      %v2659 = vadd.f32 0.0, %v2658
      %v2660 = vpop.f32.mrf.mxu0
      %v2661 = vpop.f32.mrf.mxu0
      %v2662 = vadd.f32 0.0, %v2661
      %v2663 = vpop.f32.mrf.mxu0
      %2664 = vmatprep.mubr.bf16.mxu0 0
      %2665 = vmatmul.mubr.bf16.gmra.mxu0 %v1415
      %v2666 = vpop.f32.mrf.mxu0
      %v2667 = vadd.f32 0.0, %v2666
      %v2668 = vpop.f32.mrf.mxu0
      %v2669 = vpop.f32.mrf.mxu0
      %v2670 = vadd.f32 0.0, %v2669
      %v2671 = vpop.f32.mrf.mxu0
      %2672 = vmatprep.mubr.bf16.mxu0 0
      %2673 = vmatmul.mubr.bf16.gmra.mxu0 %v1418
      %v2674 = vpop.f32.mrf.mxu0
      %v2675 = vadd.f32 0.0, %v2674
      %v2676 = vpop.f32.mrf.mxu0
      %v2677 = vpop.f32.mrf.mxu0
      %v2678 = vadd.f32 0.0, %v2677
      %v2679 = vpop.f32.mrf.mxu0
      %2680 = vmatprep.mubr.bf16.mxu0 0
      %2681 = vmatmul.mubr.bf16.gmra.mxu0 %v1421
      %v2682 = vpop.f32.mrf.mxu0
      %v2683 = vadd.f32 0.0, %v2682
      %v2684 = vpop.f32.mrf.mxu0
      %v2685 = vpop.f32.mrf.mxu0
      %v2686 = vadd.f32 0.0, %v2685
      %v2687 = vpop.f32.mrf.mxu0
      %2688 = vmatprep.mubr.bf16.mxu0 0
      %2689 = vmatmul.mubr.bf16.gmra.mxu0 %v1424
      %v2690 = vpop.f32.mrf.mxu0
      %v2691 = vadd.f32 0.0, %v2690
      %v2692 = vpop.f32.mrf.mxu0
      %v2693 = vpop.f32.mrf.mxu0
      %v2694 = vadd.f32 0.0, %v2693
      %v2695 = vpop.f32.mrf.mxu0
      %2696 = vmatprep.mubr.bf16.mxu0 0
      %2697 = vmatmul.mubr.bf16.gmra.mxu0 %v1427
      %v2698 = vpop.f32.mrf.mxu0
      %v2699 = vadd.f32 0.0, %v2698
      %v2700 = vpop.f32.mrf.mxu0
      %v2701 = vpop.f32.mrf.mxu0
      %v2702 = vadd.f32 0.0, %v2701
      %v2703 = vpop.f32.mrf.mxu0
      %2704 = vmatprep.mubr.bf16.mxu0 0
      %2705 = vmatmul.mubr.bf16.gmra.mxu0 %v2547
      %v2706 = vpop.f32.mrf.mxu0
      %v2707 = vadd.f32 0.0, %v2706
      %v2708 = vpop.f32.mrf.mxu0
      %v2709 = vpop.f32.mrf.mxu0
      %v2710 = vadd.f32 0.0, %v2709
      %v2711 = vpop.f32.mrf.mxu0
      %2712 = vdwg.mxu0
      %v2713 = vadd.f32 %v2485, %v2587
      %v2714 = vadd.f32 %v2486, %v2590
      %v2715 = vadd.f32 %v2487, %v2595
      %v2716 = vadd.f32 %v2488, %v2598
      %v2717 = vadd.f32 %v2489, %v2603
      %v2718 = vadd.f32 %v2490, %v2606
      %v2719 = vadd.f32 %v2491, %v2611
      %v2720 = vadd.f32 %v2492, %v2614
      %v2721 = vadd.f32 %v2493, %v2619
      %v2722 = vadd.f32 %v2494, %v2622
      %v2723 = vadd.f32 %v2495, %v2627
      %v2724 = vadd.f32 %v2496, %v2630
      %v2725 = vadd.f32 %v2497, %v2635
      %v2726 = vadd.f32 %v2498, %v2638
      %v2727 = vadd.f32 %v2499, %v2643
      %v2728 = vadd.f32 %v2500, %v2646
      %v2729 = vadd.f32 %v2501, %v2651
      %v2730 = vadd.f32 %v2502, %v2654
      %v2731 = vadd.f32 %v2503, %v2659
      %v2732 = vadd.f32 %v2504, %v2662
      %v2733 = vadd.f32 %v2505, %v2667
      %v2734 = vadd.f32 %v2506, %v2670
      %v2735 = vadd.f32 %v2507, %v2675
      %v2736 = vadd.f32 %v2508, %v2678
      %v2737 = vadd.f32 %v2509, %v2683
      %v2738 = vadd.f32 %v2510, %v2686
      %v2739 = vadd.f32 %v2511, %v2691
      %v2740 = vadd.f32 %v2512, %v2694
      %v2741 = vadd.f32 %v2513, %v2699
      %v2742 = vadd.f32 %v2514, %v2702
      %v2743 = vadd.f32 %v2515, %v2707
      %v2744 = vadd.f32 %v2516, %v2710
      %v2746 = vrot.slane %v936, 5
      %v2747 = vrot.slane %v2746, 4
      %v2748 = vrot.slane %v937, 5
      %v2749 = vsel %vm1904, %v2747, %v2748
      %v2750 = vrot.slane %v2748, 4
      %v2751 = vrot.slane %v938, 5
      %v2752 = vsel %vm1904, %v2750, %v2751
      %s2753 = scalar_lea.vmem %s1, 10
      %v2754 = vld [vmem:[%s2753] sm:$0x3]
      %v2755 = vunpack.c.l.b16 %v2749
      %v2756 = vunpack.c.l.b16 %v2752
      %v2757 = vpack.c.b16 %v2756, %v2755
      %v2759 = vsel %vm1380, %v2757, 0
      %v2762 = vsel %vm1429, %v2754, 0
      %2764 = vmatprep.subr.bf16.mxu0 0
      %2765 = vmatpush1.bf16.msra.mxu0 0
      %2766 = vmatprep.subr.bf16.mxu0 0
      %2767 = vmatpush1.bf16.msra.mxu0 0
      %2768 = vmatprep.subr.bf16.mxu0 0
      %2769 = vmatpush1.bf16.msra.mxu0 0
      %2770 = vmatprep.subr.bf16.mxu0 0
      %2771 = vmatpush1.bf16.msra.mxu0 0
      %2772 = vmatprep.subr.bf16.mxu0 0
      %2773 = vmatpush1.bf16.msra.mxu0 0
      %2774 = vmatprep.subr.bf16.mxu0 0
      %2775 = vmatpush1.bf16.msra.mxu0 0
      %2776 = vmatprep.subr.bf16.mxu0 0
      %2777 = vmatpush1.bf16.msra.mxu0 0
      %2778 = vmatprep.subr.bf16.mxu0 0
      %2779 = vmatpush1.bf16.msra.mxu0 %v2762
      %2780 = vmatprep.subr.bf16.mxu0 0
      %2781 = vmatpush2.bf16.msra.mxu0 0
      %2782 = vmatprep.subr.bf16.mxu0 0
      %2783 = vmatpush2.bf16.msra.mxu0 0
      %2784 = vmatprep.subr.bf16.mxu0 0
      %2785 = vmatpush2.bf16.msra.mxu0 0
      %2786 = vmatprep.subr.bf16.mxu0 0
      %2787 = vmatpush2.bf16.msra.mxu0 0
      %2788 = vmatprep.subr.bf16.mxu0 0
      %2789 = vmatpush2.bf16.msra.mxu0 0
      %2790 = vmatprep.subr.bf16.mxu0 0
      %2791 = vmatpush2.bf16.msra.mxu0 0
      %2792 = vmatprep.subr.bf16.mxu0 0
      %2793 = vmatpush2.bf16.msra.mxu0 0
      %2794 = vmatprep.subr.bf16.mxu0 0
      %2795 = vmatpush2.bf16.msra.mxu0 0
      %2796 = vmatprep.mubr.bf16.mxu0 0
      %2797 = vmatmul.mubr.bf16.gmra.mxu0 %v2071
      %v2798 = vpop.f32.mrf.mxu0
      %v2799 = vadd.f32 0.0, %v2798
      %v2800 = vpop.f32.mrf.mxu0
      %v2801 = vpop.f32.mrf.mxu0
      %v2802 = vadd.f32 0.0, %v2801
      %v2803 = vpop.f32.mrf.mxu0
      %2804 = vmatprep.mubr.bf16.mxu0 0
      %2805 = vmatmul.mubr.bf16.gmra.mxu0 %v2074
      %v2806 = vpop.f32.mrf.mxu0
      %v2807 = vadd.f32 0.0, %v2806
      %v2808 = vpop.f32.mrf.mxu0
      %v2809 = vpop.f32.mrf.mxu0
      %v2810 = vadd.f32 0.0, %v2809
      %v2811 = vpop.f32.mrf.mxu0
      %2812 = vmatprep.mubr.bf16.mxu0 0
      %2813 = vmatmul.mubr.bf16.gmra.mxu0 %v2077
      %v2814 = vpop.f32.mrf.mxu0
      %v2815 = vadd.f32 0.0, %v2814
      %v2816 = vpop.f32.mrf.mxu0
      %v2817 = vpop.f32.mrf.mxu0
      %v2818 = vadd.f32 0.0, %v2817
      %v2819 = vpop.f32.mrf.mxu0
      %2820 = vmatprep.mubr.bf16.mxu0 0
      %2821 = vmatmul.mubr.bf16.gmra.mxu0 %v2080
      %v2822 = vpop.f32.mrf.mxu0
      %v2823 = vadd.f32 0.0, %v2822
      %v2824 = vpop.f32.mrf.mxu0
      %v2825 = vpop.f32.mrf.mxu0
      %v2826 = vadd.f32 0.0, %v2825
      %v2827 = vpop.f32.mrf.mxu0
      %2828 = vmatprep.mubr.bf16.mxu0 0
      %2829 = vmatmul.mubr.bf16.gmra.mxu0 %v2083
      %v2830 = vpop.f32.mrf.mxu0
      %v2831 = vadd.f32 0.0, %v2830
      %v2832 = vpop.f32.mrf.mxu0
      %v2833 = vpop.f32.mrf.mxu0
      %v2834 = vadd.f32 0.0, %v2833
      %v2835 = vpop.f32.mrf.mxu0
      %2836 = vmatprep.mubr.bf16.mxu0 0
      %2837 = vmatmul.mubr.bf16.gmra.mxu0 %v2086
      %v2838 = vpop.f32.mrf.mxu0
      %v2839 = vadd.f32 0.0, %v2838
      %v2840 = vpop.f32.mrf.mxu0
      %v2841 = vpop.f32.mrf.mxu0
      %v2842 = vadd.f32 0.0, %v2841
      %v2843 = vpop.f32.mrf.mxu0
      %2844 = vmatprep.mubr.bf16.mxu0 0
      %2845 = vmatmul.mubr.bf16.gmra.mxu0 %v2089
      %v2846 = vpop.f32.mrf.mxu0
      %v2847 = vadd.f32 0.0, %v2846
      %v2848 = vpop.f32.mrf.mxu0
      %v2849 = vpop.f32.mrf.mxu0
      %v2850 = vadd.f32 0.0, %v2849
      %v2851 = vpop.f32.mrf.mxu0
      %2852 = vmatprep.mubr.bf16.mxu0 0
      %2853 = vmatmul.mubr.bf16.gmra.mxu0 %v2092
      %v2854 = vpop.f32.mrf.mxu0
      %v2855 = vadd.f32 0.0, %v2854
      %v2856 = vpop.f32.mrf.mxu0
      %v2857 = vpop.f32.mrf.mxu0
      %v2858 = vadd.f32 0.0, %v2857
      %v2859 = vpop.f32.mrf.mxu0
      %2860 = vmatprep.mubr.bf16.mxu0 0
      %2861 = vmatmul.mubr.bf16.gmra.mxu0 %v2095
      %v2862 = vpop.f32.mrf.mxu0
      %v2863 = vadd.f32 0.0, %v2862
      %v2864 = vpop.f32.mrf.mxu0
      %v2865 = vpop.f32.mrf.mxu0
      %v2866 = vadd.f32 0.0, %v2865
      %v2867 = vpop.f32.mrf.mxu0
      %2868 = vmatprep.mubr.bf16.mxu0 0
      %2869 = vmatmul.mubr.bf16.gmra.mxu0 %v2098
      %v2870 = vpop.f32.mrf.mxu0
      %v2871 = vadd.f32 0.0, %v2870
      %v2872 = vpop.f32.mrf.mxu0
      %v2873 = vpop.f32.mrf.mxu0
      %v2874 = vadd.f32 0.0, %v2873
      %v2875 = vpop.f32.mrf.mxu0
      %2876 = vmatprep.mubr.bf16.mxu0 0
      %2877 = vmatmul.mubr.bf16.gmra.mxu0 %v2101
      %v2878 = vpop.f32.mrf.mxu0
      %v2879 = vadd.f32 0.0, %v2878
      %v2880 = vpop.f32.mrf.mxu0
      %v2881 = vpop.f32.mrf.mxu0
      %v2882 = vadd.f32 0.0, %v2881
      %v2883 = vpop.f32.mrf.mxu0
      %2884 = vmatprep.mubr.bf16.mxu0 0
      %2885 = vmatmul.mubr.bf16.gmra.mxu0 %v2104
      %v2886 = vpop.f32.mrf.mxu0
      %v2887 = vadd.f32 0.0, %v2886
      %v2888 = vpop.f32.mrf.mxu0
      %v2889 = vpop.f32.mrf.mxu0
      %v2890 = vadd.f32 0.0, %v2889
      %v2891 = vpop.f32.mrf.mxu0
      %2892 = vmatprep.mubr.bf16.mxu0 0
      %2893 = vmatmul.mubr.bf16.gmra.mxu0 %v2107
      %v2894 = vpop.f32.mrf.mxu0
      %v2895 = vadd.f32 0.0, %v2894
      %v2896 = vpop.f32.mrf.mxu0
      %v2897 = vpop.f32.mrf.mxu0
      %v2898 = vadd.f32 0.0, %v2897
      %v2899 = vpop.f32.mrf.mxu0
      %2900 = vmatprep.mubr.bf16.mxu0 0
      %2901 = vmatmul.mubr.bf16.gmra.mxu0 %v2110
      %v2902 = vpop.f32.mrf.mxu0
      %v2903 = vadd.f32 0.0, %v2902
      %v2904 = vpop.f32.mrf.mxu0
      %v2905 = vpop.f32.mrf.mxu0
      %v2906 = vadd.f32 0.0, %v2905
      %v2907 = vpop.f32.mrf.mxu0
      %2908 = vmatprep.mubr.bf16.mxu0 0
      %2909 = vmatmul.mubr.bf16.gmra.mxu0 %v2113
      %v2910 = vpop.f32.mrf.mxu0
      %v2911 = vadd.f32 0.0, %v2910
      %v2912 = vpop.f32.mrf.mxu0
      %v2913 = vpop.f32.mrf.mxu0
      %v2914 = vadd.f32 0.0, %v2913
      %v2915 = vpop.f32.mrf.mxu0
      %2916 = vmatprep.mubr.bf16.mxu0 0
      %2917 = vmatmul.mubr.bf16.gmra.mxu0 %v2759
      %v2918 = vpop.f32.mrf.mxu0
      %v2919 = vadd.f32 0.0, %v2918
      %v2920 = vpop.f32.mrf.mxu0
      %v2921 = vpop.f32.mrf.mxu0
      %v2922 = vadd.f32 0.0, %v2921
      %v2923 = vpop.f32.mrf.mxu0
      %2924 = vdwg.mxu0
      %v2925 = vadd.f32 %v2713, %v2799
      %v2926 = vadd.f32 %v2714, %v2802
      %v2927 = vadd.f32 %v2715, %v2807
      %v2928 = vadd.f32 %v2716, %v2810
      %v2929 = vadd.f32 %v2717, %v2815
      %v2930 = vadd.f32 %v2718, %v2818
      %v2931 = vadd.f32 %v2719, %v2823
      %v2932 = vadd.f32 %v2720, %v2826
      %v2933 = vadd.f32 %v2721, %v2831
      %v2934 = vadd.f32 %v2722, %v2834
      %v2935 = vadd.f32 %v2723, %v2839
      %v2936 = vadd.f32 %v2724, %v2842
      %v2937 = vadd.f32 %v2725, %v2847
      %v2938 = vadd.f32 %v2726, %v2850
      %v2939 = vadd.f32 %v2727, %v2855
      %v2940 = vadd.f32 %v2728, %v2858
      %v2941 = vadd.f32 %v2729, %v2863
      %v2942 = vadd.f32 %v2730, %v2866
      %v2943 = vadd.f32 %v2731, %v2871
      %v2944 = vadd.f32 %v2732, %v2874
      %v2945 = vadd.f32 %v2733, %v2879
      %v2946 = vadd.f32 %v2734, %v2882
      %v2947 = vadd.f32 %v2735, %v2887
      %v2948 = vadd.f32 %v2736, %v2890
      %v2949 = vadd.f32 %v2737, %v2895
      %v2950 = vadd.f32 %v2738, %v2898
      %v2951 = vadd.f32 %v2739, %v2903
      %v2952 = vadd.f32 %v2740, %v2906
      %v2953 = vadd.f32 %v2741, %v2911
      %v2954 = vadd.f32 %v2742, %v2914
      %v2955 = vadd.f32 %v2743, %v2919
      %v2956 = vadd.f32 %v2744, %v2922
      %s2957 = scalar_lea.vmem %s1, 12
      %v2958 = vld [vmem:[%s2957] sm:$0x3]
      %v2961 = vunpack.c.l.b16 %v939
      %v2962 = vunpack.c.l.b16 %v940
      %v2963 = vpack.c.b16 %v2962, %v2961
      %v2965 = vsel %vm1380, %v2963, 0
      %v2968 = vsel %vm1429, %v2958, 0
      %2970 = vmatprep.subr.bf16.mxu0 0
      %2971 = vmatpush1.bf16.msra.mxu0 0
      %2972 = vmatprep.subr.bf16.mxu0 0
      %2973 = vmatpush1.bf16.msra.mxu0 0
      %2974 = vmatprep.subr.bf16.mxu0 0
      %2975 = vmatpush1.bf16.msra.mxu0 0
      %2976 = vmatprep.subr.bf16.mxu0 0
      %2977 = vmatpush1.bf16.msra.mxu0 0
      %2978 = vmatprep.subr.bf16.mxu0 0
      %2979 = vmatpush1.bf16.msra.mxu0 0
      %2980 = vmatprep.subr.bf16.mxu0 0
      %2981 = vmatpush1.bf16.msra.mxu0 0
      %2982 = vmatprep.subr.bf16.mxu0 0
      %2983 = vmatpush1.bf16.msra.mxu0 0
      %2984 = vmatprep.subr.bf16.mxu0 0
      %2985 = vmatpush1.bf16.msra.mxu0 %v2968
      %2986 = vmatprep.subr.bf16.mxu0 0
      %2987 = vmatpush2.bf16.msra.mxu0 0
      %2988 = vmatprep.subr.bf16.mxu0 0
      %2989 = vmatpush2.bf16.msra.mxu0 0
      %2990 = vmatprep.subr.bf16.mxu0 0
      %2991 = vmatpush2.bf16.msra.mxu0 0
      %2992 = vmatprep.subr.bf16.mxu0 0
      %2993 = vmatpush2.bf16.msra.mxu0 0
      %2994 = vmatprep.subr.bf16.mxu0 0
      %2995 = vmatpush2.bf16.msra.mxu0 0
      %2996 = vmatprep.subr.bf16.mxu0 0
      %2997 = vmatpush2.bf16.msra.mxu0 0
      %2998 = vmatprep.subr.bf16.mxu0 0
      %2999 = vmatpush2.bf16.msra.mxu0 0
      %3000 = vmatprep.subr.bf16.mxu0 0
      %3001 = vmatpush2.bf16.msra.mxu0 0
      %3002 = vmatprep.mubr.bf16.mxu0 0
      %3003 = vmatmul.mubr.bf16.gmra.mxu0 %v1681
      %v3004 = vpop.f32.mrf.mxu0
      %v3005 = vadd.f32 0.0, %v3004
      %v3006 = vpop.f32.mrf.mxu0
      %v3007 = vpop.f32.mrf.mxu0
      %v3008 = vadd.f32 0.0, %v3007
      %v3009 = vpop.f32.mrf.mxu0
      %3010 = vmatprep.mubr.bf16.mxu0 0
      %3011 = vmatmul.mubr.bf16.gmra.mxu0 %v1684
      %v3012 = vpop.f32.mrf.mxu0
      %v3013 = vadd.f32 0.0, %v3012
      %v3014 = vpop.f32.mrf.mxu0
      %v3015 = vpop.f32.mrf.mxu0
      %v3016 = vadd.f32 0.0, %v3015
      %v3017 = vpop.f32.mrf.mxu0
      %3018 = vmatprep.mubr.bf16.mxu0 0
      %3019 = vmatmul.mubr.bf16.gmra.mxu0 %v1687
      %v3020 = vpop.f32.mrf.mxu0
      %v3021 = vadd.f32 0.0, %v3020
      %v3022 = vpop.f32.mrf.mxu0
      %v3023 = vpop.f32.mrf.mxu0
      %v3024 = vadd.f32 0.0, %v3023
      %v3025 = vpop.f32.mrf.mxu0
      %3026 = vmatprep.mubr.bf16.mxu0 0
      %3027 = vmatmul.mubr.bf16.gmra.mxu0 %v1690
      %v3028 = vpop.f32.mrf.mxu0
      %v3029 = vadd.f32 0.0, %v3028
      %v3030 = vpop.f32.mrf.mxu0
      %v3031 = vpop.f32.mrf.mxu0
      %v3032 = vadd.f32 0.0, %v3031
      %v3033 = vpop.f32.mrf.mxu0
      %3034 = vmatprep.mubr.bf16.mxu0 0
      %3035 = vmatmul.mubr.bf16.gmra.mxu0 %v1693
      %v3036 = vpop.f32.mrf.mxu0
      %v3037 = vadd.f32 0.0, %v3036
      %v3038 = vpop.f32.mrf.mxu0
      %v3039 = vpop.f32.mrf.mxu0
      %v3040 = vadd.f32 0.0, %v3039
      %v3041 = vpop.f32.mrf.mxu0
      %3042 = vmatprep.mubr.bf16.mxu0 0
      %3043 = vmatmul.mubr.bf16.gmra.mxu0 %v1696
      %v3044 = vpop.f32.mrf.mxu0
      %v3045 = vadd.f32 0.0, %v3044
      %v3046 = vpop.f32.mrf.mxu0
      %v3047 = vpop.f32.mrf.mxu0
      %v3048 = vadd.f32 0.0, %v3047
      %v3049 = vpop.f32.mrf.mxu0
      %3050 = vmatprep.mubr.bf16.mxu0 0
      %3051 = vmatmul.mubr.bf16.gmra.mxu0 %v1699
      %v3052 = vpop.f32.mrf.mxu0
      %v3053 = vadd.f32 0.0, %v3052
      %v3054 = vpop.f32.mrf.mxu0
      %v3055 = vpop.f32.mrf.mxu0
      %v3056 = vadd.f32 0.0, %v3055
      %v3057 = vpop.f32.mrf.mxu0
      %3058 = vmatprep.mubr.bf16.mxu0 0
      %3059 = vmatmul.mubr.bf16.gmra.mxu0 %v1702
      %v3060 = vpop.f32.mrf.mxu0
      %v3061 = vadd.f32 0.0, %v3060
      %v3062 = vpop.f32.mrf.mxu0
      %v3063 = vpop.f32.mrf.mxu0
      %v3064 = vadd.f32 0.0, %v3063
      %v3065 = vpop.f32.mrf.mxu0
      %3066 = vmatprep.mubr.bf16.mxu0 0
      %3067 = vmatmul.mubr.bf16.gmra.mxu0 %v1705
      %v3068 = vpop.f32.mrf.mxu0
      %v3069 = vadd.f32 0.0, %v3068
      %v3070 = vpop.f32.mrf.mxu0
      %v3071 = vpop.f32.mrf.mxu0
      %v3072 = vadd.f32 0.0, %v3071
      %v3073 = vpop.f32.mrf.mxu0
      %3074 = vmatprep.mubr.bf16.mxu0 0
      %3075 = vmatmul.mubr.bf16.gmra.mxu0 %v1708
      %v3076 = vpop.f32.mrf.mxu0
      %v3077 = vadd.f32 0.0, %v3076
      %v3078 = vpop.f32.mrf.mxu0
      %v3079 = vpop.f32.mrf.mxu0
      %v3080 = vadd.f32 0.0, %v3079
      %v3081 = vpop.f32.mrf.mxu0
      %3082 = vmatprep.mubr.bf16.mxu0 0
      %3083 = vmatmul.mubr.bf16.gmra.mxu0 %v1711
      %v3084 = vpop.f32.mrf.mxu0
      %v3085 = vadd.f32 0.0, %v3084
      %v3086 = vpop.f32.mrf.mxu0
      %v3087 = vpop.f32.mrf.mxu0
      %v3088 = vadd.f32 0.0, %v3087
      %v3089 = vpop.f32.mrf.mxu0
      %3090 = vmatprep.mubr.bf16.mxu0 0
      %3091 = vmatmul.mubr.bf16.gmra.mxu0 %v1714
      %v3092 = vpop.f32.mrf.mxu0
      %v3093 = vadd.f32 0.0, %v3092
      %v3094 = vpop.f32.mrf.mxu0
      %v3095 = vpop.f32.mrf.mxu0
      %v3096 = vadd.f32 0.0, %v3095
      %v3097 = vpop.f32.mrf.mxu0
      %3098 = vmatprep.mubr.bf16.mxu0 0
      %3099 = vmatmul.mubr.bf16.gmra.mxu0 %v1717
      %v3100 = vpop.f32.mrf.mxu0
      %v3101 = vadd.f32 0.0, %v3100
      %v3102 = vpop.f32.mrf.mxu0
      %v3103 = vpop.f32.mrf.mxu0
      %v3104 = vadd.f32 0.0, %v3103
      %v3105 = vpop.f32.mrf.mxu0
      %3106 = vmatprep.mubr.bf16.mxu0 0
      %3107 = vmatmul.mubr.bf16.gmra.mxu0 %v1720
      %v3108 = vpop.f32.mrf.mxu0
      %v3109 = vadd.f32 0.0, %v3108
      %v3110 = vpop.f32.mrf.mxu0
      %v3111 = vpop.f32.mrf.mxu0
      %v3112 = vadd.f32 0.0, %v3111
      %v3113 = vpop.f32.mrf.mxu0
      %3114 = vmatprep.mubr.bf16.mxu0 0
      %3115 = vmatmul.mubr.bf16.gmra.mxu0 %v2319
      %v3116 = vpop.f32.mrf.mxu0
      %v3117 = vadd.f32 0.0, %v3116
      %v3118 = vpop.f32.mrf.mxu0
      %v3119 = vpop.f32.mrf.mxu0
      %v3120 = vadd.f32 0.0, %v3119
      %v3121 = vpop.f32.mrf.mxu0
      %3122 = vmatprep.mubr.bf16.mxu0 0
      %3123 = vmatmul.mubr.bf16.gmra.mxu0 %v2965
      %v3124 = vpop.f32.mrf.mxu0
      %v3125 = vadd.f32 0.0, %v3124
      %v3126 = vpop.f32.mrf.mxu0
      %v3127 = vpop.f32.mrf.mxu0
      %v3128 = vadd.f32 0.0, %v3127
      %v3129 = vpop.f32.mrf.mxu0
      %3130 = vdwg.mxu0
      %v3131 = vadd.f32 %v2925, %v3005
      %v3132 = vadd.f32 %v2926, %v3008
      %v3133 = vadd.f32 %v2927, %v3013
      %v3134 = vadd.f32 %v2928, %v3016
      %v3135 = vadd.f32 %v2929, %v3021
      %v3136 = vadd.f32 %v2930, %v3024
      %v3137 = vadd.f32 %v2931, %v3029
      %v3138 = vadd.f32 %v2932, %v3032
      %v3139 = vadd.f32 %v2933, %v3037
      %v3140 = vadd.f32 %v2934, %v3040
      %v3141 = vadd.f32 %v2935, %v3045
      %v3142 = vadd.f32 %v2936, %v3048
      %v3143 = vadd.f32 %v2937, %v3053
      %v3144 = vadd.f32 %v2938, %v3056
      %v3145 = vadd.f32 %v2939, %v3061
      %v3146 = vadd.f32 %v2940, %v3064
      %v3147 = vadd.f32 %v2941, %v3069
      %v3148 = vadd.f32 %v2942, %v3072
      %v3149 = vadd.f32 %v2943, %v3077
      %v3150 = vadd.f32 %v2944, %v3080
      %v3151 = vadd.f32 %v2945, %v3085
      %v3152 = vadd.f32 %v2946, %v3088
      %v3153 = vadd.f32 %v2947, %v3093
      %v3154 = vadd.f32 %v2948, %v3096
      %v3155 = vadd.f32 %v2949, %v3101
      %v3156 = vadd.f32 %v2950, %v3104
      %v3157 = vadd.f32 %v2951, %v3109
      %v3158 = vadd.f32 %v2952, %v3112
      %v3159 = vadd.f32 %v2953, %v3117
      %v3160 = vadd.f32 %v2954, %v3120
      %v3161 = vadd.f32 %v2955, %v3125
      %v3162 = vadd.f32 %v2956, %v3128
      %v3164 = vshrl.u32 %v939, 16
      %v3166 = vrot.slane %v3164, 4
      %v3167 = vshll.u32 %v939, 16
      %v3169 = vrot.slane %v3167, 5
      %v3170 = vor.u32 %v3166, %v3169
      %v3171 = vrot.slane %v3170, 4
      %v3173 = vshll.u32 %v940, 16
      %v3175 = vrot.slane %v3173, 5
      %v3176 = vsel %vm945, %v3171, %v3175
      %v3177 = vshrl.u32 %v940, 16
      %v3179 = vrot.slane %v3177, 4
      %v3180 = vor.u32 %v3179, %v3175
      %v3181 = vrot.slane %v3180, 4
      %v3183 = vshll.u32 %v941, 16
      %v3185 = vrot.slane %v3183, 5
      %v3186 = vsel %vm945, %v3181, %v3185
      %s3187 = scalar_lea.vmem %s1, 14
      %v3188 = vld [vmem:[%s3187] sm:$0x3]
      %v3189 = vunpack.c.l.b16 %v3176
      %v3190 = vunpack.c.l.b16 %v3186
      %v3191 = vpack.c.b16 %v3190, %v3189
      %v3193 = vsel %vm1380, %v3191, 0
      %v3196 = vsel %vm1429, %v3188, 0
      %3198 = vmatprep.subr.bf16.mxu0 0
      %3199 = vmatpush1.bf16.msra.mxu0 0
      %3200 = vmatprep.subr.bf16.mxu0 0
      %3201 = vmatpush1.bf16.msra.mxu0 0
      %3202 = vmatprep.subr.bf16.mxu0 0
      %3203 = vmatpush1.bf16.msra.mxu0 0
      %3204 = vmatprep.subr.bf16.mxu0 0
      %3205 = vmatpush1.bf16.msra.mxu0 0
      %3206 = vmatprep.subr.bf16.mxu0 0
      %3207 = vmatpush1.bf16.msra.mxu0 0
      %3208 = vmatprep.subr.bf16.mxu0 0
      %3209 = vmatpush1.bf16.msra.mxu0 0
      %3210 = vmatprep.subr.bf16.mxu0 0
      %3211 = vmatpush1.bf16.msra.mxu0 0
      %3212 = vmatprep.subr.bf16.mxu0 0
      %3213 = vmatpush1.bf16.msra.mxu0 %v3196
      %3214 = vmatprep.subr.bf16.mxu0 0
      %3215 = vmatpush2.bf16.msra.mxu0 0
      %3216 = vmatprep.subr.bf16.mxu0 0
      %3217 = vmatpush2.bf16.msra.mxu0 0
      %3218 = vmatprep.subr.bf16.mxu0 0
      %3219 = vmatpush2.bf16.msra.mxu0 0
      %3220 = vmatprep.subr.bf16.mxu0 0
      %3221 = vmatpush2.bf16.msra.mxu0 0
      %3222 = vmatprep.subr.bf16.mxu0 0
      %3223 = vmatpush2.bf16.msra.mxu0 0
      %3224 = vmatprep.subr.bf16.mxu0 0
      %3225 = vmatpush2.bf16.msra.mxu0 0
      %3226 = vmatprep.subr.bf16.mxu0 0
      %3227 = vmatpush2.bf16.msra.mxu0 0
      %3228 = vmatprep.subr.bf16.mxu0 0
      %3229 = vmatpush2.bf16.msra.mxu0 0
      %3230 = vmatprep.mubr.bf16.mxu0 0
      %3231 = vmatmul.mubr.bf16.gmra.mxu0 %v1388
      %v3232 = vpop.f32.mrf.mxu0
      %v3233 = vadd.f32 0.0, %v3232
      %v3234 = vpop.f32.mrf.mxu0
      %v3235 = vpop.f32.mrf.mxu0
      %v3236 = vadd.f32 0.0, %v3235
      %v3237 = vpop.f32.mrf.mxu0
      %3238 = vmatprep.mubr.bf16.mxu0 0
      %3239 = vmatmul.mubr.bf16.gmra.mxu0 %v1391
      %v3240 = vpop.f32.mrf.mxu0
      %v3241 = vadd.f32 0.0, %v3240
      %v3242 = vpop.f32.mrf.mxu0
      %v3243 = vpop.f32.mrf.mxu0
      %v3244 = vadd.f32 0.0, %v3243
      %v3245 = vpop.f32.mrf.mxu0
      %3246 = vmatprep.mubr.bf16.mxu0 0
      %3247 = vmatmul.mubr.bf16.gmra.mxu0 %v1394
      %v3248 = vpop.f32.mrf.mxu0
      %v3249 = vadd.f32 0.0, %v3248
      %v3250 = vpop.f32.mrf.mxu0
      %v3251 = vpop.f32.mrf.mxu0
      %v3252 = vadd.f32 0.0, %v3251
      %v3253 = vpop.f32.mrf.mxu0
      %3254 = vmatprep.mubr.bf16.mxu0 0
      %3255 = vmatmul.mubr.bf16.gmra.mxu0 %v1397
      %v3256 = vpop.f32.mrf.mxu0
      %v3257 = vadd.f32 0.0, %v3256
      %v3258 = vpop.f32.mrf.mxu0
      %v3259 = vpop.f32.mrf.mxu0
      %v3260 = vadd.f32 0.0, %v3259
      %v3261 = vpop.f32.mrf.mxu0
      %3262 = vmatprep.mubr.bf16.mxu0 0
      %3263 = vmatmul.mubr.bf16.gmra.mxu0 %v1400
      %v3264 = vpop.f32.mrf.mxu0
      %v3265 = vadd.f32 0.0, %v3264
      %v3266 = vpop.f32.mrf.mxu0
      %v3267 = vpop.f32.mrf.mxu0
      %v3268 = vadd.f32 0.0, %v3267
      %v3269 = vpop.f32.mrf.mxu0
      %3270 = vmatprep.mubr.bf16.mxu0 0
      %3271 = vmatmul.mubr.bf16.gmra.mxu0 %v1403
      %v3272 = vpop.f32.mrf.mxu0
      %v3273 = vadd.f32 0.0, %v3272
      %v3274 = vpop.f32.mrf.mxu0
      %v3275 = vpop.f32.mrf.mxu0
      %v3276 = vadd.f32 0.0, %v3275
      %v3277 = vpop.f32.mrf.mxu0
      %3278 = vmatprep.mubr.bf16.mxu0 0
      %3279 = vmatmul.mubr.bf16.gmra.mxu0 %v1406
      %v3280 = vpop.f32.mrf.mxu0
      %v3281 = vadd.f32 0.0, %v3280
      %v3282 = vpop.f32.mrf.mxu0
      %v3283 = vpop.f32.mrf.mxu0
      %v3284 = vadd.f32 0.0, %v3283
      %v3285 = vpop.f32.mrf.mxu0
      %3286 = vmatprep.mubr.bf16.mxu0 0
      %3287 = vmatmul.mubr.bf16.gmra.mxu0 %v1409
      %v3288 = vpop.f32.mrf.mxu0
      %v3289 = vadd.f32 0.0, %v3288
      %v3290 = vpop.f32.mrf.mxu0
      %v3291 = vpop.f32.mrf.mxu0
      %v3292 = vadd.f32 0.0, %v3291
      %v3293 = vpop.f32.mrf.mxu0
      %3294 = vmatprep.mubr.bf16.mxu0 0
      %3295 = vmatmul.mubr.bf16.gmra.mxu0 %v1412
      %v3296 = vpop.f32.mrf.mxu0
      %v3297 = vadd.f32 0.0, %v3296
      %v3298 = vpop.f32.mrf.mxu0
      %v3299 = vpop.f32.mrf.mxu0
      %v3300 = vadd.f32 0.0, %v3299
      %v3301 = vpop.f32.mrf.mxu0
      %3302 = vmatprep.mubr.bf16.mxu0 0
      %3303 = vmatmul.mubr.bf16.gmra.mxu0 %v1415
      %v3304 = vpop.f32.mrf.mxu0
      %v3305 = vadd.f32 0.0, %v3304
      %v3306 = vpop.f32.mrf.mxu0
      %v3307 = vpop.f32.mrf.mxu0
      %v3308 = vadd.f32 0.0, %v3307
      %v3309 = vpop.f32.mrf.mxu0
      %3310 = vmatprep.mubr.bf16.mxu0 0
      %3311 = vmatmul.mubr.bf16.gmra.mxu0 %v1418
      %v3312 = vpop.f32.mrf.mxu0
      %v3313 = vadd.f32 0.0, %v3312
      %v3314 = vpop.f32.mrf.mxu0
      %v3315 = vpop.f32.mrf.mxu0
      %v3316 = vadd.f32 0.0, %v3315
      %v3317 = vpop.f32.mrf.mxu0
      %3318 = vmatprep.mubr.bf16.mxu0 0
      %3319 = vmatmul.mubr.bf16.gmra.mxu0 %v1421
      %v3320 = vpop.f32.mrf.mxu0
      %v3321 = vadd.f32 0.0, %v3320
      %v3322 = vpop.f32.mrf.mxu0
      %v3323 = vpop.f32.mrf.mxu0
      %v3324 = vadd.f32 0.0, %v3323
      %v3325 = vpop.f32.mrf.mxu0
      %3326 = vmatprep.mubr.bf16.mxu0 0
      %3327 = vmatmul.mubr.bf16.gmra.mxu0 %v1424
      %v3328 = vpop.f32.mrf.mxu0
      %v3329 = vadd.f32 0.0, %v3328
      %v3330 = vpop.f32.mrf.mxu0
      %v3331 = vpop.f32.mrf.mxu0
      %v3332 = vadd.f32 0.0, %v3331
      %v3333 = vpop.f32.mrf.mxu0
      %3334 = vmatprep.mubr.bf16.mxu0 0
      %3335 = vmatmul.mubr.bf16.gmra.mxu0 %v1427
      %v3336 = vpop.f32.mrf.mxu0
      %v3337 = vadd.f32 0.0, %v3336
      %v3338 = vpop.f32.mrf.mxu0
      %v3339 = vpop.f32.mrf.mxu0
      %v3340 = vadd.f32 0.0, %v3339
      %v3341 = vpop.f32.mrf.mxu0
      %3342 = vmatprep.mubr.bf16.mxu0 0
      %3343 = vmatmul.mubr.bf16.gmra.mxu0 %v2547
      %v3344 = vpop.f32.mrf.mxu0
      %v3345 = vadd.f32 0.0, %v3344
      %v3346 = vpop.f32.mrf.mxu0
      %v3347 = vpop.f32.mrf.mxu0
      %v3348 = vadd.f32 0.0, %v3347
      %v3349 = vpop.f32.mrf.mxu0
      %3350 = vmatprep.mubr.bf16.mxu0 0
      %3351 = vmatmul.mubr.bf16.gmra.mxu0 %v3193
      %v3352 = vpop.f32.mrf.mxu0
      %v3353 = vadd.f32 0.0, %v3352
      %v3354 = vpop.f32.mrf.mxu0
      %v3355 = vpop.f32.mrf.mxu0
      %v3356 = vadd.f32 0.0, %v3355
      %v3357 = vpop.f32.mrf.mxu0
      %3358 = vdwg.mxu0
      %v3359 = vadd.f32 %v3131, %v3233
      %v3360 = vadd.f32 %v3132, %v3236
      %v3361 = vadd.f32 %v3133, %v3241
      %v3362 = vadd.f32 %v3134, %v3244
      %v3363 = vadd.f32 %v3135, %v3249
      %v3364 = vadd.f32 %v3136, %v3252
      %v3365 = vadd.f32 %v3137, %v3257
      %v3366 = vadd.f32 %v3138, %v3260
      %v3367 = vadd.f32 %v3139, %v3265
      %v3368 = vadd.f32 %v3140, %v3268
      %v3369 = vadd.f32 %v3141, %v3273
      %v3370 = vadd.f32 %v3142, %v3276
      %v3371 = vadd.f32 %v3143, %v3281
      %v3372 = vadd.f32 %v3144, %v3284
      %v3373 = vadd.f32 %v3145, %v3289
      %v3374 = vadd.f32 %v3146, %v3292
      %v3375 = vadd.f32 %v3147, %v3297
      %v3376 = vadd.f32 %v3148, %v3300
      %v3377 = vadd.f32 %v3149, %v3305
      %v3378 = vadd.f32 %v3150, %v3308
      %v3379 = vadd.f32 %v3151, %v3313
      %v3380 = vadd.f32 %v3152, %v3316
      %v3381 = vadd.f32 %v3153, %v3321
      %v3382 = vadd.f32 %v3154, %v3324
      %v3383 = vadd.f32 %v3155, %v3329
      %v3384 = vadd.f32 %v3156, %v3332
      %v3385 = vadd.f32 %v3157, %v3337
      %v3386 = vadd.f32 %v3158, %v3340
      %v3387 = vadd.f32 %v3159, %v3345
      %v3388 = vadd.f32 %v3160, %v3348
      %v3389 = vadd.f32 %v3161, %v3353
      %v3390 = vadd.f32 %v3162, %v3356
      %v3392 = vrot.slane %v939, 5
      %v3393 = vrot.slane %v3392, 4
      %v3394 = vrot.slane %v940, 5
      %v3395 = vsel %vm1904, %v3393, %v3394
      %v3396 = vrot.slane %v3394, 4
      %v3397 = vrot.slane %v941, 5
      %v3398 = vsel %vm1904, %v3396, %v3397
      %s3399 = scalar_lea.vmem %s1, 16
      %v3400 = vld [vmem:[%s3399] sm:$0x3]
      %v3401 = vunpack.c.l.b16 %v3395
      %v3402 = vunpack.c.l.b16 %v3398
      %v3403 = vpack.c.b16 %v3402, %v3401
      %v3405 = vsel %vm1380, %v3403, 0
      %v3408 = vsel %vm1429, %v3400, 0
      %3410 = vmatprep.subr.bf16.mxu0 0
      %3411 = vmatpush1.bf16.msra.mxu0 0
      %3412 = vmatprep.subr.bf16.mxu0 0
      %3413 = vmatpush1.bf16.msra.mxu0 0
      %3414 = vmatprep.subr.bf16.mxu0 0
      %3415 = vmatpush1.bf16.msra.mxu0 0
      %3416 = vmatprep.subr.bf16.mxu0 0
      %3417 = vmatpush1.bf16.msra.mxu0 0
      %3418 = vmatprep.subr.bf16.mxu0 0
      %3419 = vmatpush1.bf16.msra.mxu0 0
      %3420 = vmatprep.subr.bf16.mxu0 0
      %3421 = vmatpush1.bf16.msra.mxu0 0
      %3422 = vmatprep.subr.bf16.mxu0 0
      %3423 = vmatpush1.bf16.msra.mxu0 0
      %3424 = vmatprep.subr.bf16.mxu0 0
      %3425 = vmatpush1.bf16.msra.mxu0 %v3408
      %3426 = vmatprep.subr.bf16.mxu0 0
      %3427 = vmatpush2.bf16.msra.mxu0 0
      %3428 = vmatprep.subr.bf16.mxu0 0
      %3429 = vmatpush2.bf16.msra.mxu0 0
      %3430 = vmatprep.subr.bf16.mxu0 0
      %3431 = vmatpush2.bf16.msra.mxu0 0
      %3432 = vmatprep.subr.bf16.mxu0 0
      %3433 = vmatpush2.bf16.msra.mxu0 0
      %3434 = vmatprep.subr.bf16.mxu0 0
      %3435 = vmatpush2.bf16.msra.mxu0 0
      %3436 = vmatprep.subr.bf16.mxu0 0
      %3437 = vmatpush2.bf16.msra.mxu0 0
      %3438 = vmatprep.subr.bf16.mxu0 0
      %3439 = vmatpush2.bf16.msra.mxu0 0
      %3440 = vmatprep.subr.bf16.mxu0 0
      %3441 = vmatpush2.bf16.msra.mxu0 0
      %3442 = vmatprep.mubr.bf16.mxu0 0
      %3443 = vmatmul.mubr.bf16.gmra.mxu0 %v2074
      %v3444 = vpop.f32.mrf.mxu0
      %v3445 = vadd.f32 0.0, %v3444
      %v3446 = vpop.f32.mrf.mxu0
      %v3447 = vpop.f32.mrf.mxu0
      %v3448 = vadd.f32 0.0, %v3447
      %v3449 = vpop.f32.mrf.mxu0
      %3450 = vmatprep.mubr.bf16.mxu0 0
      %3451 = vmatmul.mubr.bf16.gmra.mxu0 %v2077
      %v3452 = vpop.f32.mrf.mxu0
      %v3453 = vadd.f32 0.0, %v3452
      %v3454 = vpop.f32.mrf.mxu0
      %v3455 = vpop.f32.mrf.mxu0
      %v3456 = vadd.f32 0.0, %v3455
      %v3457 = vpop.f32.mrf.mxu0
      %3458 = vmatprep.mubr.bf16.mxu0 0
      %3459 = vmatmul.mubr.bf16.gmra.mxu0 %v2080
      %v3460 = vpop.f32.mrf.mxu0
      %v3461 = vadd.f32 0.0, %v3460
      %v3462 = vpop.f32.mrf.mxu0
      %v3463 = vpop.f32.mrf.mxu0
      %v3464 = vadd.f32 0.0, %v3463
      %v3465 = vpop.f32.mrf.mxu0
      %3466 = vmatprep.mubr.bf16.mxu0 0
      %3467 = vmatmul.mubr.bf16.gmra.mxu0 %v2083
      %v3468 = vpop.f32.mrf.mxu0
      %v3469 = vadd.f32 0.0, %v3468
      %v3470 = vpop.f32.mrf.mxu0
      %v3471 = vpop.f32.mrf.mxu0
      %v3472 = vadd.f32 0.0, %v3471
      %v3473 = vpop.f32.mrf.mxu0
      %3474 = vmatprep.mubr.bf16.mxu0 0
      %3475 = vmatmul.mubr.bf16.gmra.mxu0 %v2086
      %v3476 = vpop.f32.mrf.mxu0
      %v3477 = vadd.f32 0.0, %v3476
      %v3478 = vpop.f32.mrf.mxu0
      %v3479 = vpop.f32.mrf.mxu0
      %v3480 = vadd.f32 0.0, %v3479
      %v3481 = vpop.f32.mrf.mxu0
      %3482 = vmatprep.mubr.bf16.mxu0 0
      %3483 = vmatmul.mubr.bf16.gmra.mxu0 %v2089
      %v3484 = vpop.f32.mrf.mxu0
      %v3485 = vadd.f32 0.0, %v3484
      %v3486 = vpop.f32.mrf.mxu0
      %v3487 = vpop.f32.mrf.mxu0
      %v3488 = vadd.f32 0.0, %v3487
      %v3489 = vpop.f32.mrf.mxu0
      %3490 = vmatprep.mubr.bf16.mxu0 0
      %3491 = vmatmul.mubr.bf16.gmra.mxu0 %v2092
      %v3492 = vpop.f32.mrf.mxu0
      %v3493 = vadd.f32 0.0, %v3492
      %v3494 = vpop.f32.mrf.mxu0
      %v3495 = vpop.f32.mrf.mxu0
      %v3496 = vadd.f32 0.0, %v3495
      %v3497 = vpop.f32.mrf.mxu0
      %3498 = vmatprep.mubr.bf16.mxu0 0
      %3499 = vmatmul.mubr.bf16.gmra.mxu0 %v2095
      %v3500 = vpop.f32.mrf.mxu0
      %v3501 = vadd.f32 0.0, %v3500
      %v3502 = vpop.f32.mrf.mxu0
      %v3503 = vpop.f32.mrf.mxu0
      %v3504 = vadd.f32 0.0, %v3503
      %v3505 = vpop.f32.mrf.mxu0
      %3506 = vmatprep.mubr.bf16.mxu0 0
      %3507 = vmatmul.mubr.bf16.gmra.mxu0 %v2098
      %v3508 = vpop.f32.mrf.mxu0
      %v3509 = vadd.f32 0.0, %v3508
      %v3510 = vpop.f32.mrf.mxu0
      %v3511 = vpop.f32.mrf.mxu0
      %v3512 = vadd.f32 0.0, %v3511
      %v3513 = vpop.f32.mrf.mxu0
      %3514 = vmatprep.mubr.bf16.mxu0 0
      %3515 = vmatmul.mubr.bf16.gmra.mxu0 %v2101
      %v3516 = vpop.f32.mrf.mxu0
      %v3517 = vadd.f32 0.0, %v3516
      %v3518 = vpop.f32.mrf.mxu0
      %v3519 = vpop.f32.mrf.mxu0
      %v3520 = vadd.f32 0.0, %v3519
      %v3521 = vpop.f32.mrf.mxu0
      %3522 = vmatprep.mubr.bf16.mxu0 0
      %3523 = vmatmul.mubr.bf16.gmra.mxu0 %v2104
      %v3524 = vpop.f32.mrf.mxu0
      %v3525 = vadd.f32 0.0, %v3524
      %v3526 = vpop.f32.mrf.mxu0
      %v3527 = vpop.f32.mrf.mxu0
      %v3528 = vadd.f32 0.0, %v3527
      %v3529 = vpop.f32.mrf.mxu0
      %3530 = vmatprep.mubr.bf16.mxu0 0
      %3531 = vmatmul.mubr.bf16.gmra.mxu0 %v2107
      %v3532 = vpop.f32.mrf.mxu0
      %v3533 = vadd.f32 0.0, %v3532
      %v3534 = vpop.f32.mrf.mxu0
      %v3535 = vpop.f32.mrf.mxu0
      %v3536 = vadd.f32 0.0, %v3535
      %v3537 = vpop.f32.mrf.mxu0
      %3538 = vmatprep.mubr.bf16.mxu0 0
      %3539 = vmatmul.mubr.bf16.gmra.mxu0 %v2110
      %v3540 = vpop.f32.mrf.mxu0
      %v3541 = vadd.f32 0.0, %v3540
      %v3542 = vpop.f32.mrf.mxu0
      %v3543 = vpop.f32.mrf.mxu0
      %v3544 = vadd.f32 0.0, %v3543
      %v3545 = vpop.f32.mrf.mxu0
      %3546 = vmatprep.mubr.bf16.mxu0 0
      %3547 = vmatmul.mubr.bf16.gmra.mxu0 %v2113
      %v3548 = vpop.f32.mrf.mxu0
      %v3549 = vadd.f32 0.0, %v3548
      %v3550 = vpop.f32.mrf.mxu0
      %v3551 = vpop.f32.mrf.mxu0
      %v3552 = vadd.f32 0.0, %v3551
      %v3553 = vpop.f32.mrf.mxu0
      %3554 = vmatprep.mubr.bf16.mxu0 0
      %3555 = vmatmul.mubr.bf16.gmra.mxu0 %v2759
      %v3556 = vpop.f32.mrf.mxu0
      %v3557 = vadd.f32 0.0, %v3556
      %v3558 = vpop.f32.mrf.mxu0
      %v3559 = vpop.f32.mrf.mxu0
      %v3560 = vadd.f32 0.0, %v3559
      %v3561 = vpop.f32.mrf.mxu0
      %3562 = vmatprep.mubr.bf16.mxu0 0
      %3563 = vmatmul.mubr.bf16.gmra.mxu0 %v3405
      %v3564 = vpop.f32.mrf.mxu0
      %v3565 = vadd.f32 0.0, %v3564
      %v3566 = vpop.f32.mrf.mxu0
      %v3567 = vpop.f32.mrf.mxu0
      %v3568 = vadd.f32 0.0, %v3567
      %v3569 = vpop.f32.mrf.mxu0
      %3570 = vdwg.mxu0
      %v3571 = vadd.f32 %v3359, %v3445
      %v3572 = vadd.f32 %v3360, %v3448
      %v3573 = vadd.f32 %v3361, %v3453
      %v3574 = vadd.f32 %v3362, %v3456
      %v3575 = vadd.f32 %v3363, %v3461
      %v3576 = vadd.f32 %v3364, %v3464
      %v3577 = vadd.f32 %v3365, %v3469
      %v3578 = vadd.f32 %v3366, %v3472
      %v3579 = vadd.f32 %v3367, %v3477
      %v3580 = vadd.f32 %v3368, %v3480
      %v3581 = vadd.f32 %v3369, %v3485
      %v3582 = vadd.f32 %v3370, %v3488
      %v3583 = vadd.f32 %v3371, %v3493
      %v3584 = vadd.f32 %v3372, %v3496
      %v3585 = vadd.f32 %v3373, %v3501
      %v3586 = vadd.f32 %v3374, %v3504
      %v3587 = vadd.f32 %v3375, %v3509
      %v3588 = vadd.f32 %v3376, %v3512
      %v3589 = vadd.f32 %v3377, %v3517
      %v3590 = vadd.f32 %v3378, %v3520
      %v3591 = vadd.f32 %v3379, %v3525
      %v3592 = vadd.f32 %v3380, %v3528
      %v3593 = vadd.f32 %v3381, %v3533
      %v3594 = vadd.f32 %v3382, %v3536
      %v3595 = vadd.f32 %v3383, %v3541
      %v3596 = vadd.f32 %v3384, %v3544
      %v3597 = vadd.f32 %v3385, %v3549
      %v3598 = vadd.f32 %v3386, %v3552
      %v3599 = vadd.f32 %v3387, %v3557
      %v3600 = vadd.f32 %v3388, %v3560
      %v3601 = vadd.f32 %v3389, %v3565
      %v3602 = vadd.f32 %v3390, %v3568
      %v3603 = vpack.c.bf16 %v3572, %v3571
      %v3604 = vpack.c.bf16 %v3574, %v3573
      %v3605 = vpack.c.bf16 %v3576, %v3575
      %v3606 = vpack.c.bf16 %v3578, %v3577
      %v3607 = vpack.c.bf16 %v3580, %v3579
      %v3608 = vpack.c.bf16 %v3582, %v3581
      %v3609 = vpack.c.bf16 %v3584, %v3583
      %v3610 = vpack.c.bf16 %v3586, %v3585
      %v3611 = vpack.c.bf16 %v3588, %v3587
      %v3612 = vpack.c.bf16 %v3590, %v3589
      %v3613 = vpack.c.bf16 %v3592, %v3591
      %v3614 = vpack.c.bf16 %v3594, %v3593
      %v3615 = vpack.c.bf16 %v3596, %v3595
      %v3616 = vpack.c.bf16 %v3598, %v3597
      %v3617 = vpack.c.bf16 %v3600, %v3599
      %v3618 = vpack.c.bf16 %v3602, %v3601
      %v3635 = vunpack.c.l.b16 %v3603
      %v3636 = vunpack.c.h.b16 %v3603
      %v3637 = vunpack.c.l.b16 %v3604
      %v3638 = vunpack.c.h.b16 %v3604
      %v3639 = vunpack.c.l.b16 %v3605
      %v3640 = vunpack.c.h.b16 %v3605
      %v3641 = vunpack.c.l.b16 %v3606
      %v3642 = vunpack.c.h.b16 %v3606
      %v3643 = vunpack.c.l.b16 %v3607
      %v3644 = vunpack.c.h.b16 %v3607
      %v3645 = vunpack.c.l.b16 %v3608
      %v3646 = vunpack.c.h.b16 %v3608
      %v3647 = vunpack.c.l.b16 %v3609
      %v3648 = vunpack.c.h.b16 %v3609
      %v3649 = vunpack.c.l.b16 %v3610
      %v3650 = vunpack.c.h.b16 %v3610
      %v3651 = vunpack.c.l.b16 %v3611
      %v3652 = vunpack.c.h.b16 %v3611
      %v3653 = vunpack.c.l.b16 %v3612
      %v3654 = vunpack.c.h.b16 %v3612
      %v3655 = vunpack.c.l.b16 %v3613
      %v3656 = vunpack.c.h.b16 %v3613
      %v3657 = vunpack.c.l.b16 %v3614
      %v3658 = vunpack.c.h.b16 %v3614
      %v3659 = vunpack.c.l.b16 %v3615
      %v3660 = vunpack.c.h.b16 %v3615
      %v3661 = vunpack.c.l.b16 %v3616
      %v3662 = vunpack.c.h.b16 %v3616
      %v3663 = vunpack.c.l.b16 %v3617
      %v3664 = vunpack.c.h.b16 %v3617
      %v3665 = vunpack.c.l.b16 %v3618
      %v3666 = vunpack.c.h.b16 %v3618
      %v3667 = vpack.c.b16 %v3635, %v3635
      %v3668 = vpack.c.b16 %v3636, %v3636
      %v3669 = vpack.c.b16 %v3637, %v3637
      %v3670 = vpack.c.b16 %v3638, %v3638
      %v3671 = vpack.c.b16 %v3639, %v3639
      %v3672 = vpack.c.b16 %v3640, %v3640
      %v3673 = vpack.c.b16 %v3641, %v3641
      %v3674 = vpack.c.b16 %v3642, %v3642
      %v3675 = vpack.c.b16 %v3643, %v3643
      %v3676 = vpack.c.b16 %v3644, %v3644
      %v3677 = vpack.c.b16 %v3645, %v3645
      %v3678 = vpack.c.b16 %v3646, %v3646
      %v3679 = vpack.c.b16 %v3647, %v3647
      %v3680 = vpack.c.b16 %v3648, %v3648
      %v3681 = vpack.c.b16 %v3649, %v3649
      %v3682 = vpack.c.b16 %v3650, %v3650
      %v3683 = vpack.c.b16 %v3651, %v3651
      %v3684 = vpack.c.b16 %v3652, %v3652
      %v3685 = vpack.c.b16 %v3653, %v3653
      %v3686 = vpack.c.b16 %v3654, %v3654
      %v3687 = vpack.c.b16 %v3655, %v3655
      %v3688 = vpack.c.b16 %v3656, %v3656
      %v3689 = vpack.c.b16 %v3657, %v3657
      %v3690 = vpack.c.b16 %v3658, %v3658
      %v3691 = vpack.c.b16 %v3659, %v3659
      %v3692 = vpack.c.b16 %v3660, %v3660
      %v3693 = vpack.c.b16 %v3661, %v3661
      %v3694 = vpack.c.b16 %v3662, %v3662
      %v3695 = vpack.c.b16 %v3663, %v3663
      %v3696 = vpack.c.b16 %v3664, %v3664
      %v3697 = vpack.c.b16 %v3665, %v3665
      %v3698 = vpack.c.b16 %v3666, %v3666
      %vm3731 = vcmask 60416
      %3732 = vst.msk [vmem:[%s177] sm:$0xf] %vm3731, %v3667
      %3733 = vst.msk [vmem:[%s177 + $0x4] sm:$0xf] %vm3731, %v3668
      %3734 = vst.msk [vmem:[%s177 + $0x8] sm:$0xf] %vm3731, %v3669
      %3735 = vst.msk [vmem:[%s177 + $0xc] sm:$0xf] %vm3731, %v3670
      %3736 = vst.msk [vmem:[%s177 + $0x10] sm:$0xf] %vm3731, %v3671
      %3737 = vst.msk [vmem:[%s177 + $0x14] sm:$0xf] %vm3731, %v3672
      %3738 = vst.msk [vmem:[%s177 + $0x18] sm:$0xf] %vm3731, %v3673
      %3739 = vst.msk [vmem:[%s177 + $0x1c] sm:$0xf] %vm3731, %v3674
      %3740 = vst.msk [vmem:[%s177 + $0x20] sm:$0xf] %vm3731, %v3675
      %3741 = vst.msk [vmem:[%s177 + $0x24] sm:$0xf] %vm3731, %v3676
      %3742 = vst.msk [vmem:[%s177 + $0x28] sm:$0xf] %vm3731, %v3677
      %3743 = vst.msk [vmem:[%s177 + $0x2c] sm:$0xf] %vm3731, %v3678
      %3744 = vst.msk [vmem:[%s177 + $0x30] sm:$0xf] %vm3731, %v3679
      %3745 = vst.msk [vmem:[%s177 + $0x34] sm:$0xf] %vm3731, %v3680
      %3746 = vst.msk [vmem:[%s177 + $0x38] sm:$0xf] %vm3731, %v3681
      %3747 = vst.msk [vmem:[%s177 + $0x3c] sm:$0xf] %vm3731, %v3682
      %3748 = vst.msk [vmem:[%s177 + $0x40] sm:$0xf] %vm3731, %v3683
      %3749 = vst.msk [vmem:[%s177 + $0x44] sm:$0xf] %vm3731, %v3684
      %3750 = vst.msk [vmem:[%s177 + $0x48] sm:$0xf] %vm3731, %v3685
      %3751 = vst.msk [vmem:[%s177 + $0x4c] sm:$0xf] %vm3731, %v3686
      %3752 = vst.msk [vmem:[%s177 + $0x50] sm:$0xf] %vm3731, %v3687
      %3753 = vst.msk [vmem:[%s177 + $0x54] sm:$0xf] %vm3731, %v3688
      %3754 = vst.msk [vmem:[%s177 + $0x58] sm:$0xf] %vm3731, %v3689
      %3755 = vst.msk [vmem:[%s177 + $0x5c] sm:$0xf] %vm3731, %v3690
      %3756 = vst.msk [vmem:[%s177 + $0x60] sm:$0xf] %vm3731, %v3691
      %3757 = vst.msk [vmem:[%s177 + $0x64] sm:$0xf] %vm3731, %v3692
      %3758 = vst.msk [vmem:[%s177 + $0x68] sm:$0xf] %vm3731, %v3693
      %3759 = vst.msk [vmem:[%s177 + $0x6c] sm:$0xf] %vm3731, %v3694
      %3760 = vst.msk [vmem:[%s177 + $0x70] sm:$0xf] %vm3731, %v3695
      %3761 = vst.msk [vmem:[%s177 + $0x74] sm:$0xf] %vm3731, %v3696
      %3762 = vst.msk [vmem:[%s177 + $0x78] sm:$0xf] %vm3731, %v3697
      %3763 = vst.msk [vmem:[%s177 + $0x7c] sm:$0xf] %vm3731, %v3698
      %vm3764 = vcmask 64512
      %v3765 = vsel %vm3764, %v3571, 0.0
      %v3766 = vsel %vm3764, %v3572, 0.0
      %v3767 = vadd.f32 %v3765, %v3766
      %v3768 = vsel %vm3764, %v3573, 0.0
      %v3769 = vadd.f32 %v3767, %v3768
      %v3770 = vsel %vm3764, %v3574, 0.0
      %v3771 = vadd.f32 %v3769, %v3770
      %v3772 = vsel %vm3764, %v3575, 0.0
      %v3773 = vadd.f32 %v3771, %v3772
      %v3774 = vsel %vm3764, %v3576, 0.0
      %v3775 = vadd.f32 %v3773, %v3774
      %v3776 = vsel %vm3764, %v3577, 0.0
      %v3777 = vadd.f32 %v3775, %v3776
      %v3778 = vsel %vm3764, %v3578, 0.0
      %v3779 = vadd.f32 %v3777, %v3778
      %v3780 = vsel %vm3764, %v3579, 0.0
      %v3781 = vadd.f32 %v3779, %v3780
      %v3782 = vsel %vm3764, %v3580, 0.0
      %v3783 = vadd.f32 %v3781, %v3782
      %v3784 = vsel %vm3764, %v3581, 0.0
      %v3785 = vadd.f32 %v3783, %v3784
      %v3786 = vsel %vm3764, %v3582, 0.0
      %v3787 = vadd.f32 %v3785, %v3786
      %v3788 = vsel %vm3764, %v3583, 0.0
      %v3789 = vadd.f32 %v3787, %v3788
      %v3790 = vsel %vm3764, %v3584, 0.0
      %v3791 = vadd.f32 %v3789, %v3790
      %v3792 = vsel %vm3764, %v3585, 0.0
      %v3793 = vadd.f32 %v3791, %v3792
      %v3794 = vsel %vm3764, %v3586, 0.0
      %v3795 = vadd.f32 %v3793, %v3794
      %v3796 = vsel %vm3764, %v3587, 0.0
      %v3797 = vadd.f32 %v3795, %v3796
      %v3798 = vsel %vm3764, %v3588, 0.0
      %v3799 = vadd.f32 %v3797, %v3798
      %v3800 = vsel %vm3764, %v3589, 0.0
      %v3801 = vadd.f32 %v3799, %v3800
      %v3802 = vsel %vm3764, %v3590, 0.0
      %v3803 = vadd.f32 %v3801, %v3802
      %v3804 = vsel %vm3764, %v3591, 0.0
      %v3805 = vadd.f32 %v3803, %v3804
      %v3806 = vsel %vm3764, %v3592, 0.0
      %v3807 = vadd.f32 %v3805, %v3806
      %v3808 = vsel %vm3764, %v3593, 0.0
      %v3809 = vadd.f32 %v3807, %v3808
      %v3810 = vsel %vm3764, %v3594, 0.0
      %v3811 = vadd.f32 %v3809, %v3810
      %v3812 = vsel %vm3764, %v3595, 0.0
      %v3813 = vadd.f32 %v3811, %v3812
      %v3814 = vsel %vm3764, %v3596, 0.0
      %v3815 = vadd.f32 %v3813, %v3814
      %v3816 = vsel %vm3764, %v3597, 0.0
      %v3817 = vadd.f32 %v3815, %v3816
      %v3818 = vsel %vm3764, %v3598, 0.0
      %v3819 = vadd.f32 %v3817, %v3818
      %v3820 = vsel %vm3764, %v3599, 0.0
      %v3821 = vadd.f32 %v3819, %v3820
      %v3822 = vsel %vm3764, %v3600, 0.0
      %v3823 = vadd.f32 %v3821, %v3822
      %v3824 = vsel %vm3764, %v3601, 0.0
      %v3825 = vadd.f32 %v3823, %v3824
      %v3826 = vsel %vm3764, %v3602, 0.0
      %v3827 = vadd.f32 %v3825, %v3826
      %v3828 = vrot.slane %v3827, 4
      %v3829 = vadd.f32 %v3827, %v3828
      %v3830 = vrot.slane %v3829, 2
      %v3831 = vadd.f32 %v3829, %v3830
      %v3832 = vrot.slane %v3831, 1
      %v3833 = vadd.f32 %v3831, %v3832
      %vm3834 = vcmask 57344
      %3835 = vst.msk [vmem:[%s181] sm:$0x1] %vm3834, %v3833
      %v3836 = vmul.f32 %v3571, %v3571
      %v3837 = vmul.f32 %v3572, %v3572
      %v3838 = vmul.f32 %v3573, %v3573
      %v3839 = vmul.f32 %v3574, %v3574
      %v3840 = vmul.f32 %v3575, %v3575
      %v3841 = vmul.f32 %v3576, %v3576
      %v3842 = vmul.f32 %v3577, %v3577
      %v3843 = vmul.f32 %v3578, %v3578
      %v3844 = vmul.f32 %v3579, %v3579
      %v3845 = vmul.f32 %v3580, %v3580
      %v3846 = vmul.f32 %v3581, %v3581
      %v3847 = vmul.f32 %v3582, %v3582
      %v3848 = vmul.f32 %v3583, %v3583
      %v3849 = vmul.f32 %v3584, %v3584
      %v3850 = vmul.f32 %v3585, %v3585
      %v3851 = vmul.f32 %v3586, %v3586
      %v3852 = vmul.f32 %v3587, %v3587
      %v3853 = vmul.f32 %v3588, %v3588
      %v3854 = vmul.f32 %v3589, %v3589
      %v3855 = vmul.f32 %v3590, %v3590
      %v3856 = vmul.f32 %v3591, %v3591
      %v3857 = vmul.f32 %v3592, %v3592
      %v3858 = vmul.f32 %v3593, %v3593
      %v3859 = vmul.f32 %v3594, %v3594
      %v3860 = vmul.f32 %v3595, %v3595
      %v3861 = vmul.f32 %v3596, %v3596
      %v3862 = vmul.f32 %v3597, %v3597
      %v3863 = vmul.f32 %v3598, %v3598
      %v3864 = vmul.f32 %v3599, %v3599
      %v3865 = vmul.f32 %v3600, %v3600
      %v3866 = vmul.f32 %v3601, %v3601
      %v3867 = vmul.f32 %v3602, %v3602
      %v3868 = vsel %vm3764, %v3836, 0.0
      %v3869 = vsel %vm3764, %v3837, 0.0
      %v3870 = vadd.f32 %v3868, %v3869
      %v3871 = vsel %vm3764, %v3838, 0.0
      %v3872 = vadd.f32 %v3870, %v3871
      %v3873 = vsel %vm3764, %v3839, 0.0
      %v3874 = vadd.f32 %v3872, %v3873
      %v3875 = vsel %vm3764, %v3840, 0.0
      %v3876 = vadd.f32 %v3874, %v3875
      %v3877 = vsel %vm3764, %v3841, 0.0
      %v3878 = vadd.f32 %v3876, %v3877
      %v3879 = vsel %vm3764, %v3842, 0.0
      %v3880 = vadd.f32 %v3878, %v3879
      %v3881 = vsel %vm3764, %v3843, 0.0
      %v3882 = vadd.f32 %v3880, %v3881
      %v3883 = vsel %vm3764, %v3844, 0.0
      %v3884 = vadd.f32 %v3882, %v3883
      %v3885 = vsel %vm3764, %v3845, 0.0
      %v3886 = vadd.f32 %v3884, %v3885
      %v3887 = vsel %vm3764, %v3846, 0.0
      %v3888 = vadd.f32 %v3886, %v3887
      %v3889 = vsel %vm3764, %v3847, 0.0
      %v3890 = vadd.f32 %v3888, %v3889
      %v3891 = vsel %vm3764, %v3848, 0.0
      %v3892 = vadd.f32 %v3890, %v3891
      %v3893 = vsel %vm3764, %v3849, 0.0
      %v3894 = vadd.f32 %v3892, %v3893
      %v3895 = vsel %vm3764, %v3850, 0.0
      %v3896 = vadd.f32 %v3894, %v3895
      %v3897 = vsel %vm3764, %v3851, 0.0
      %v3898 = vadd.f32 %v3896, %v3897
      %v3899 = vsel %vm3764, %v3852, 0.0
      %v3900 = vadd.f32 %v3898, %v3899
      %v3901 = vsel %vm3764, %v3853, 0.0
      %v3902 = vadd.f32 %v3900, %v3901
      %v3903 = vsel %vm3764, %v3854, 0.0
      %v3904 = vadd.f32 %v3902, %v3903
      %v3905 = vsel %vm3764, %v3855, 0.0
      %v3906 = vadd.f32 %v3904, %v3905
      %v3907 = vsel %vm3764, %v3856, 0.0
      %v3908 = vadd.f32 %v3906, %v3907
      %v3909 = vsel %vm3764, %v3857, 0.0
      %v3910 = vadd.f32 %v3908, %v3909
      %v3911 = vsel %vm3764, %v3858, 0.0
      %v3912 = vadd.f32 %v3910, %v3911
      %v3913 = vsel %vm3764, %v3859, 0.0
      %v3914 = vadd.f32 %v3912, %v3913
      %v3915 = vsel %vm3764, %v3860, 0.0
      %v3916 = vadd.f32 %v3914, %v3915
      %v3917 = vsel %vm3764, %v3861, 0.0
      %v3918 = vadd.f32 %v3916, %v3917
      %v3919 = vsel %vm3764, %v3862, 0.0
      %v3920 = vadd.f32 %v3918, %v3919
      %v3921 = vsel %vm3764, %v3863, 0.0
      %v3922 = vadd.f32 %v3920, %v3921
      %v3923 = vsel %vm3764, %v3864, 0.0
      %v3924 = vadd.f32 %v3922, %v3923
      %v3925 = vsel %vm3764, %v3865, 0.0
      %v3926 = vadd.f32 %v3924, %v3925
      %v3927 = vsel %vm3764, %v3866, 0.0
      %v3928 = vadd.f32 %v3926, %v3927
      %v3929 = vsel %vm3764, %v3867, 0.0
      %v3930 = vadd.f32 %v3928, %v3929
      %v3931 = vrot.slane %v3930, 4
      %v3932 = vadd.f32 %v3930, %v3931
      %v3933 = vrot.slane %v3932, 2
      %v3934 = vadd.f32 %v3932, %v3933
      %v3935 = vrot.slane %v3934, 1
      %v3936 = vadd.f32 %v3934, %v3935
      %3937 = vst.msk [vmem:[%s181 + $0x1] sm:$0x1] %vm3834, %v3936
      %p3938 = scmp.lt.s32.totalorder %s15, 1
      %s3939 = scalar_select %p3938, %s15, 1
      %s3940 = smul.addr %s3939, 32
      %s3941 = smul.addr %s3940, 4
      %s3942 = scalar_lea.vmem %s2, %s3941
      %p3943 = scmp.lt.s32.totalorder %s15, 1
      %s3944 = scalar_select %p3943, %s15, 1
      %s3945 = smul.addr %s3944, 2
      %s3946 = scalar_lea.vmem %s3, %s3945
      // Predicated region
      $region29: #{resblock_forward_nchw.3} parent=27 // pred_check
        %p3947 = pneg %p80
      $region30: #{resblock_forward_nchw.3} parent=27 // pred_check_branch
        %3949 = sbr.rel (%p3947) target = $region32
      $region31: #{resblock_forward_nchw.3} parent=27 // pred_region
        _
      $region32: #{resblock_forward_nchw.3} parent=27 // pred_fallthru
        _
      // Predicated region
      $region33: #{resblock_forward_nchw.3} parent=27 // pred_check
        %p3950 = pneg %p106
      $region34: #{resblock_forward_nchw.3} parent=27 // pred_check_branch
        %3952 = sbr.rel (%p3950) target = $region36
      $region35: #{resblock_forward_nchw.3} parent=27 // pred_region
        _
      $region36: #{resblock_forward_nchw.3} parent=27 // pred_fallthru
        _
    $region28: #{resblock_forward_nchw.3} parent=5 // pred_fallthru
      _
    %p3953 = scmp.le.s32.totalorder 2, %s10
    // Predicated region
    $region37: #{resblock_forward_nchw.3} parent=5 // pred_check
      %p3954 = pneg %p3953
    $region38: #{resblock_forward_nchw.3} parent=5 // pred_check_branch
      %3956 = sbr.rel (%p3954) target = $region40
    $region39: #{resblock_forward_nchw.3} parent=5 // pred_region
      %s3957 = ssub.s32 %s10, 2
      // Predicated region
      $region41: #{resblock_forward_nchw.3} parent=39 // pred_check
        %p3958 = pneg %p86
      $region42: #{resblock_forward_nchw.3} parent=39 // pred_check_branch
        %3960 = sbr.rel (%p3958) target = $region44
      $region43: #{resblock_forward_nchw.3} parent=39 // pred_region
        %p3961 = scmp.lt.s32.totalorder %s16, 1
        %s3962 = scalar_select %p3961, %s16, 1
        %s3963 = smul.addr %s3962, 32
        %s3964 = smul.addr %s3963, 4
        %s3965 = scalar_lea.vmem %s2, %s3964
      $region44: #{resblock_forward_nchw.3} parent=39 // pred_fallthru
        _
      // Predicated region
      $region45: #{resblock_forward_nchw.3} parent=39 // pred_check
        %p3966 = pneg %p112
      $region46: #{resblock_forward_nchw.3} parent=39 // pred_check_branch
        %3968 = sbr.rel (%p3966) target = $region48
      $region47: #{resblock_forward_nchw.3} parent=39 // pred_region
        %p3969 = scmp.lt.s32.totalorder %s16, 1
        %s3970 = scalar_select %p3969, %s16, 1
        %s3971 = smul.addr %s3970, 2
        %s3972 = scalar_lea.vmem %s3, %s3971
      $region48: #{resblock_forward_nchw.3} parent=39 // pred_fallthru
        _
    $region40: #{resblock_forward_nchw.3} parent=5 // pred_fallthru
      _
  $region6: #{resblock_forward_nchw.3} parent=0 // loop_footer
    %s14 = sadd.s32 1, %s10
  $region7: #{resblock_forward_nchw.3} parent=0 // loop_footer_branch
    %9 = sbr.rel target = $region3
  $region8: #{resblock_forward_nchw.3} parent=0 // loop_exit
    _

// kernel: resblock_forward_nchw.4
$region0: #{resblock_forward_nchw.4}
  #allocation0 [shape = 'u32[]', space=smem, size = 0x4, offset = 0x4, fixed_abs, tag = 'smem constant byte address 0x4 - core index']
  #allocation1 [shape = 'u32[144,128]{1,0:T(1,128)}', space=vmem, size = 0x12000, scoped, tag = 'internal scratch']
  #allocation2 [shape = 'bf16[1,18,32,4]{3,2,1,0:T(8,128)(2,1)}', space=vmem, size = 0x24000, scoped, tag = 'scratch operand']
  %s0 = inlined_call_operand.vmem [shape: bf16[2,16,16,8], index: 0, kind: input, shape index: {}]
  %s1 = inlined_call_operand.vmem [shape: f32[1,8], index: 1, kind: input, shape index: {}]
  %s2 = inlined_call_operand.vmem [shape: f32[1,8], index: 2, kind: input, shape index: {}]
  %s3 = inlined_call_operand.vmem [shape: bf16[9,4,4], index: 3, kind: input, shape index: {}]
  %s4 = inlined_call_operand.vmem [shape: bf16[2,16,16,4], index: 4, kind: output, shape index: {0}]
  %s5 = inlined_call_operand.vmem [shape: f32[2,2,4], index: 5, kind: output, shape index: {1}]
  %6 = xla_tuple %s4, %s5
  %s7 = sld [smem:[#allocation0]]
  $region57: #{resblock_forward_nchw.4} parent=0
    _
  %s9 = ssub.s32 1, %s7
  %s10 = scalar_select 0, %s9, %s7
  loop: start=0, step=1, limit=4
  $region2: #{resblock_forward_nchw.4} parent=0 // loop_pre_header
    _
  $region3: #{resblock_forward_nchw.4} parent=0 // loop_header
    %s12 = sphi 0, %s16
    %p13 = scmp.ge.s32.totalorder %s12, 4
    %s22 = sphi 0, %s24
    %s25 = sphi 0, %s22
    %s26 = sphi 0, %s25
    %s42 = sphi 0, %s26
    %s46 = sphi 0, %s46
    %s48 = sphi 0, %s46
    %s49 = sphi 0, %s48
    %s63 = sphi 0, %s49
    %s67 = sphi 0, %s67
    %s69 = sphi 0, %s67
    %s70 = sphi 0, %s69
    %s84 = sphi 0, %s70
    %s88 = sphi 0, %s88
    %s90 = sphi 0, %s88
    %s91 = sphi 0, %s90
    %s105 = sphi 0, %s91
    %s111 = sphi 0, %s113
    %s114 = sphi 0, %s111
    %s115 = sphi 0, %s114
    %s131 = sphi 0, %s115
    %s137 = sphi 0, %s139
    %s140 = sphi 0, %s137
    %s141 = sphi 0, %s140
    %s157 = sphi 0, %s141
  $region4: #{resblock_forward_nchw.4} parent=0 // loop_header_branch
    %15 = sbr.rel (%p13) target = $region8
  $region5: #{resblock_forward_nchw.4} parent=0 // loop_body
    %s17 = ssub.s32 %s12, 1
    %s18 = ssub.s32 %s12, 2
    %s19 = sadd.s32 %s12, 1
    %s20 = ssub.s32 %s12, %s19
    %p21 = scmp.eq.s32.totalorder %s20, 0
    %s23 = sadd.s32 %s22, 1
    %s24 = scalar_select %p21, %s22, %s23
    %p27 = pneg %p21
    %p28 = scmp.eq.s32.totalorder %s12, 1
    %p29 = por %p27, %p28
    %p30 = scmp.ne.s32.totalorder %s22, %s25
    %p31 = scmp.eq.s32.totalorder %s12, 0
    %p32 = por %p30, %p31
    %p33 = scmp.ne.s32.totalorder %s22, %s25
    %p34 = scmp.eq.s32.totalorder %s17, 1
    %p35 = por %p33, %p34
    %p36 = scmp.ne.s32.totalorder %s25, %s26
    %p37 = scmp.eq.s32.totalorder %s17, 0
    %p38 = por %p36, %p37
    %p39 = scmp.ne.s32.totalorder %s25, %s26
    %p40 = scmp.eq.s32.totalorder %s18, 1
    %p41 = por %p39, %p40
    %p43 = scmp.ne.s32.totalorder %s26, %s42
    %p44 = scmp.eq.s32.totalorder %s18, 0
    %p45 = por %p43, %p44
    %s47 = sadd.s32 %s46, 1
    %p50 = scmp.eq.s32.totalorder %s12, 1
    %p51 = scmp.ne.s32.totalorder %s46, %s48
    %p52 = scmp.eq.s32.totalorder %s12, 0
    %p53 = por %p51, %p52
    %p54 = scmp.ne.s32.totalorder %s46, %s48
    %p55 = scmp.eq.s32.totalorder %s17, 1
    %p56 = por %p54, %p55
    %p57 = scmp.ne.s32.totalorder %s48, %s49
    %p58 = scmp.eq.s32.totalorder %s17, 0
    %p59 = por %p57, %p58
    %p60 = scmp.ne.s32.totalorder %s48, %s49
    %p61 = scmp.eq.s32.totalorder %s18, 1
    %p62 = por %p60, %p61
    %p64 = scmp.ne.s32.totalorder %s49, %s63
    %p65 = scmp.eq.s32.totalorder %s18, 0
    %p66 = por %p64, %p65
    %s68 = sadd.s32 %s67, 1
    %p71 = scmp.eq.s32.totalorder %s12, 1
    %p72 = scmp.ne.s32.totalorder %s67, %s69
    %p73 = scmp.eq.s32.totalorder %s12, 0
    %p74 = por %p72, %p73
    %p75 = scmp.ne.s32.totalorder %s67, %s69
    %p76 = scmp.eq.s32.totalorder %s17, 1
    %p77 = por %p75, %p76
    %p78 = scmp.ne.s32.totalorder %s69, %s70
    %p79 = scmp.eq.s32.totalorder %s17, 0
    %p80 = por %p78, %p79
    %p81 = scmp.ne.s32.totalorder %s69, %s70
    %p82 = scmp.eq.s32.totalorder %s18, 1
    %p83 = por %p81, %p82
    %p85 = scmp.ne.s32.totalorder %s70, %s84
    %p86 = scmp.eq.s32.totalorder %s18, 0
    %p87 = por %p85, %p86
    %s89 = sadd.s32 %s88, 1
    %p92 = scmp.eq.s32.totalorder %s12, 1
    %p93 = scmp.ne.s32.totalorder %s88, %s90
    %p94 = scmp.eq.s32.totalorder %s12, 0
    %p95 = por %p93, %p94
    %p96 = scmp.ne.s32.totalorder %s88, %s90
    %p97 = scmp.eq.s32.totalorder %s17, 1
    %p98 = por %p96, %p97
    %p99 = scmp.ne.s32.totalorder %s90, %s91
    %p100 = scmp.eq.s32.totalorder %s17, 0
    %p101 = por %p99, %p100
    %p102 = scmp.ne.s32.totalorder %s90, %s91
    %p103 = scmp.eq.s32.totalorder %s18, 1
    %p104 = por %p102, %p103
    %p106 = scmp.ne.s32.totalorder %s91, %s105
    %p107 = scmp.eq.s32.totalorder %s18, 0
    %p108 = por %p106, %p107
    %s109 = ssub.s32 %s12, %s19
    %p110 = scmp.eq.s32.totalorder %s109, 0
    %s112 = sadd.s32 %s111, 1
    %s113 = scalar_select %p110, %s111, %s112
    %p116 = pneg %p110
    %p117 = scmp.eq.s32.totalorder %s12, 1
    %p118 = por %p116, %p117
    %p119 = scmp.ne.s32.totalorder %s111, %s114
    %p120 = scmp.eq.s32.totalorder %s12, 0
    %p121 = por %p119, %p120
    %p122 = scmp.ne.s32.totalorder %s111, %s114
    %p123 = scmp.eq.s32.totalorder %s17, 1
    %p124 = por %p122, %p123
    %p125 = scmp.ne.s32.totalorder %s114, %s115
    %p126 = scmp.eq.s32.totalorder %s17, 0
    %p127 = por %p125, %p126
    %p128 = scmp.ne.s32.totalorder %s114, %s115
    %p129 = scmp.eq.s32.totalorder %s18, 1
    %p130 = por %p128, %p129
    %p132 = scmp.ne.s32.totalorder %s115, %s131
    %p133 = scmp.eq.s32.totalorder %s18, 0
    %p134 = por %p132, %p133
    %s135 = ssub.s32 %s12, %s19
    %p136 = scmp.eq.s32.totalorder %s135, 0
    %s138 = sadd.s32 %s137, 1
    %s139 = scalar_select %p136, %s137, %s138
    %p142 = pneg %p136
    %p143 = scmp.eq.s32.totalorder %s12, 1
    %p144 = por %p142, %p143
    %p145 = scmp.ne.s32.totalorder %s137, %s140
    %p146 = scmp.eq.s32.totalorder %s12, 0
    %p147 = por %p145, %p146
    %p148 = scmp.ne.s32.totalorder %s137, %s140
    %p149 = scmp.eq.s32.totalorder %s17, 1
    %p150 = por %p148, %p149
    %p151 = scmp.ne.s32.totalorder %s140, %s141
    %p152 = scmp.eq.s32.totalorder %s17, 0
    %p153 = por %p151, %p152
    %p154 = scmp.ne.s32.totalorder %s140, %s141
    %p155 = scmp.eq.s32.totalorder %s18, 1
    %p156 = por %p154, %p155
    %p158 = scmp.ne.s32.totalorder %s141, %s157
    %p159 = scmp.eq.s32.totalorder %s18, 0
    %p160 = por %p158, %p159
    %p161 = scmp.le.s32.totalorder 1, %s12
    %p162 = scmp.lt.s32.totalorder %s12, 3
    %p163 = pnand %p161, %p162
    %p164 = pneg %p163
    // Predicated region
    $region9: #{resblock_forward_nchw.4} parent=5 // pred_check
      _
    $region10: #{resblock_forward_nchw.4} parent=5 // pred_check_branch
      %166 = sbr.rel (%p163) target = $region12
    $region11: #{resblock_forward_nchw.4} parent=5 // pred_region
      %s167 = ssub.s32 %s12, 1
      // Predicated region
      $region13: #{resblock_forward_nchw.4} parent=11 // pred_check
        %p168 = pneg %p59
      $region14: #{resblock_forward_nchw.4} parent=11 // pred_check_branch
        %170 = sbr.rel (%p168) target = $region16
      $region15: #{resblock_forward_nchw.4} parent=11 // pred_region
        _
      $region16: #{resblock_forward_nchw.4} parent=11 // pred_fallthru
        _
      // Predicated region
      $region17: #{resblock_forward_nchw.4} parent=11 // pred_check
        %p171 = pneg %p80
      $region18: #{resblock_forward_nchw.4} parent=11 // pred_check_branch
        %173 = sbr.rel (%p171) target = $region20
      $region19: #{resblock_forward_nchw.4} parent=11 // pred_region
        _
      $region20: #{resblock_forward_nchw.4} parent=11 // pred_fallthru
        _
      // Predicated region
      $region21: #{resblock_forward_nchw.4} parent=11 // pred_check
        %p174 = pneg %p101
      $region22: #{resblock_forward_nchw.4} parent=11 // pred_check_branch
        %176 = sbr.rel (%p174) target = $region24
      $region23: #{resblock_forward_nchw.4} parent=11 // pred_region
        _
      $region24: #{resblock_forward_nchw.4} parent=11 // pred_fallthru
        _
    $region12: #{resblock_forward_nchw.4} parent=5 // pred_fallthru
      _
    %p177 = scmp.lt.s32.totalorder %s12, 2
    // Predicated region
    $region25: #{resblock_forward_nchw.4} parent=5 // pred_check
      %p178 = pneg %p177
    $region26: #{resblock_forward_nchw.4} parent=5 // pred_check_branch
      %180 = sbr.rel (%p178) target = $region28
    $region27: #{resblock_forward_nchw.4} parent=5 // pred_region
      // Predicated region
      $region29: #{resblock_forward_nchw.4} parent=27 // pred_check
        %p181 = pneg %p32
      $region30: #{resblock_forward_nchw.4} parent=27 // pred_check_branch
        %183 = sbr.rel (%p181) target = $region32
      $region31: #{resblock_forward_nchw.4} parent=27 // pred_region
        %p184 = scmp.lt.s32.totalorder %s12, 1
        %s185 = scalar_select %p184, %s12, 1
        %s186 = smul.addr %s185, 32
        %s187 = smul.addr %s186, 4
        %s188 = scalar_lea.vmem %s0, %s187
      $region32: #{resblock_forward_nchw.4} parent=27 // pred_fallthru
        _
    $region28: #{resblock_forward_nchw.4} parent=5 // pred_fallthru
      _
    %p189 = scmp.le.s32.totalorder 1, %s12
    %p190 = scmp.lt.s32.totalorder %s12, 3
    %p191 = pnand %p189, %p190
    %p192 = pneg %p191
    // Predicated region
    $region33: #{resblock_forward_nchw.4} parent=5 // pred_check
      _
    $region34: #{resblock_forward_nchw.4} parent=5 // pred_check_branch
      %194 = sbr.rel (%p191) target = $region36
    $region35: #{resblock_forward_nchw.4} parent=5 // pred_region
      %s195 = ssub.s32 %s12, 1
      %p196 = scmp.lt.s32.totalorder %s17, 1
      %s197 = scalar_select %p196, %s17, 1
      %s198 = smul.addr %s197, 32
      %s199 = smul.addr %s198, 4
      %s200 = scalar_lea.vmem %s0, %s199
      %p201 = pneg %p38
      %p202 = pneg %p35
      %p203 = pneg %p59
      %p204 = pneg %p56
      %p205 = pneg %p80
      %p206 = pneg %p77
      %p207 = pneg %p101
      %p208 = pneg %p98
      %p209 = pneg %p127
      %p210 = pneg %p124
      %p211 = scmp.lt.s32.totalorder %s17, 1
      %s212 = scalar_select %p211, %s17, 1
      %s213 = smul.addr %s212, 32
      %s214 = smul.addr %s213, 4
      %s215 = scalar_lea.vmem %s4, %s214
      %p216 = pneg %p153
      %p217 = pneg %p150
      %p218 = scmp.lt.s32.totalorder %s17, 1
      %s219 = scalar_select %p218, %s17, 1
      %s220 = smul.addr %s219, 2
      %s221 = scalar_lea.vmem %s5, %s220
      %p222 = scmp.lt.s32.totalorder %s17, 1
      %s223 = scalar_select %p222, %s17, 1
      %s224 = smul.addr %s223, 32
      %s225 = smul.addr %s224, 4
      %s226 = scalar_lea.vmem %s0, %s225
      %p227 = scmp.lt.s32.totalorder %s17, 1
      %s228 = scalar_select %p227, %s17, 1
      %s229 = smul.addr %s228, 32
      %s230 = smul.addr %s229, 4
      %s231 = scalar_lea.vmem %s4, %s230
      %p232 = scmp.lt.s32.totalorder %s17, 1
      %s233 = scalar_select %p232, %s17, 1
      %s234 = smul.addr %s233, 2
      %s235 = scalar_lea.vmem %s5, %s234
      %v237 = vld [vmem:[%s1] sm:$0x1]
      %v238 = vld [vmem:[%s2] sm:$0x1]
      %v239 = vld [vmem:[%s226] sm:$0xf]
      %v240 = vld [vmem:[%s226 + $0x4] sm:$0xf]
      %v241 = vld [vmem:[%s226 + $0x8] sm:$0xf]
      %v242 = vld [vmem:[%s226 + $0xc] sm:$0xf]
      %v243 = vld [vmem:[%s226 + $0x10] sm:$0xf]
      %v244 = vld [vmem:[%s226 + $0x14] sm:$0xf]
      %v245 = vld [vmem:[%s226 + $0x18] sm:$0xf]
      %v246 = vld [vmem:[%s226 + $0x1c] sm:$0xf]
      %v247 = vld [vmem:[%s226 + $0x20] sm:$0xf]
      %v248 = vld [vmem:[%s226 + $0x24] sm:$0xf]
      %v249 = vld [vmem:[%s226 + $0x28] sm:$0xf]
      %v250 = vld [vmem:[%s226 + $0x2c] sm:$0xf]
      %v251 = vld [vmem:[%s226 + $0x30] sm:$0xf]
      %v252 = vld [vmem:[%s226 + $0x34] sm:$0xf]
      %v253 = vld [vmem:[%s226 + $0x38] sm:$0xf]
      %v254 = vld [vmem:[%s226 + $0x3c] sm:$0xf]
      %v255 = vld [vmem:[%s226 + $0x40] sm:$0xf]
      %v256 = vld [vmem:[%s226 + $0x44] sm:$0xf]
      %v257 = vld [vmem:[%s226 + $0x48] sm:$0xf]
      %v258 = vld [vmem:[%s226 + $0x4c] sm:$0xf]
      %v259 = vld [vmem:[%s226 + $0x50] sm:$0xf]
      %v260 = vld [vmem:[%s226 + $0x54] sm:$0xf]
      %v261 = vld [vmem:[%s226 + $0x58] sm:$0xf]
      %v262 = vld [vmem:[%s226 + $0x5c] sm:$0xf]
      %v263 = vld [vmem:[%s226 + $0x60] sm:$0xf]
      %v264 = vld [vmem:[%s226 + $0x64] sm:$0xf]
      %v265 = vld [vmem:[%s226 + $0x68] sm:$0xf]
      %v266 = vld [vmem:[%s226 + $0x6c] sm:$0xf]
      %v267 = vld [vmem:[%s226 + $0x70] sm:$0xf]
      %v268 = vld [vmem:[%s226 + $0x74] sm:$0xf]
      %v269 = vld [vmem:[%s226 + $0x78] sm:$0xf]
      %v270 = vld [vmem:[%s226 + $0x7c] sm:$0xf]
      %v271 = vunpack.c.l.bf16 %v239
      %v272 = vunpack.c.l.bf16 %v240
      %v273 = vunpack.c.l.bf16 %v241
      %v274 = vunpack.c.l.bf16 %v242
      %v275 = vunpack.c.l.bf16 %v243
      %v276 = vunpack.c.l.bf16 %v244
      %v277 = vunpack.c.l.bf16 %v245
      %v278 = vunpack.c.l.bf16 %v246
      %v279 = vunpack.c.l.bf16 %v247
      %v280 = vunpack.c.l.bf16 %v248
      %v281 = vunpack.c.l.bf16 %v249
      %v282 = vunpack.c.l.bf16 %v250
      %v283 = vunpack.c.l.bf16 %v251
      %v284 = vunpack.c.l.bf16 %v252
      %v285 = vunpack.c.l.bf16 %v253
      %v286 = vunpack.c.l.bf16 %v254
      %v287 = vunpack.c.l.bf16 %v255
      %v288 = vunpack.c.l.bf16 %v256
      %v289 = vunpack.c.l.bf16 %v257
      %v290 = vunpack.c.l.bf16 %v258
      %v291 = vunpack.c.l.bf16 %v259
      %v292 = vunpack.c.l.bf16 %v260
      %v293 = vunpack.c.l.bf16 %v261
      %v294 = vunpack.c.l.bf16 %v262
      %v295 = vunpack.c.l.bf16 %v263
      %v296 = vunpack.c.l.bf16 %v264
      %v297 = vunpack.c.l.bf16 %v265
      %v298 = vunpack.c.l.bf16 %v266
      %v299 = vunpack.c.l.bf16 %v267
      %v300 = vunpack.c.l.bf16 %v268
      %v301 = vunpack.c.l.bf16 %v269
      %v302 = vunpack.c.l.bf16 %v270
      %v304 = vlaneseq
      %v305 = vshrl.u32 %v304, 7
      %v306 = vsub.s32 0, %v305
      %v307 = vrot.slane %v237, %v306
      %v309 = vmul.f32 %v271, %v307
      %v310 = vmul.f32 %v272, %v307
      %v311 = vmul.f32 %v273, %v307
      %v312 = vmul.f32 %v274, %v307
      %v313 = vmul.f32 %v275, %v307
      %v314 = vmul.f32 %v276, %v307
      %v315 = vmul.f32 %v277, %v307
      %v316 = vmul.f32 %v278, %v307
      %v317 = vmul.f32 %v279, %v307
      %v318 = vmul.f32 %v280, %v307
      %v319 = vmul.f32 %v281, %v307
      %v320 = vmul.f32 %v282, %v307
      %v321 = vmul.f32 %v283, %v307
      %v322 = vmul.f32 %v284, %v307
      %v323 = vmul.f32 %v285, %v307
      %v324 = vmul.f32 %v286, %v307
      %v325 = vmul.f32 %v287, %v307
      %v326 = vmul.f32 %v288, %v307
      %v327 = vmul.f32 %v289, %v307
      %v328 = vmul.f32 %v290, %v307
      %v329 = vmul.f32 %v291, %v307
      %v330 = vmul.f32 %v292, %v307
      %v331 = vmul.f32 %v293, %v307
      %v332 = vmul.f32 %v294, %v307
      %v333 = vmul.f32 %v295, %v307
      %v334 = vmul.f32 %v296, %v307
      %v335 = vmul.f32 %v297, %v307
      %v336 = vmul.f32 %v298, %v307
      %v337 = vmul.f32 %v299, %v307
      %v338 = vmul.f32 %v300, %v307
      %v339 = vmul.f32 %v301, %v307
      %v340 = vmul.f32 %v302, %v307
      %v342 = vlaneseq
      %v343 = vshrl.u32 %v342, 7
      %v344 = vsub.s32 0, %v343
      %v345 = vrot.slane %v238, %v344
      %v347 = vadd.f32 %v309, %v345
      %v348 = vadd.f32 %v310, %v345
      %v349 = vadd.f32 %v311, %v345
      %v350 = vadd.f32 %v312, %v345
      %v351 = vadd.f32 %v313, %v345
      %v352 = vadd.f32 %v314, %v345
      %v353 = vadd.f32 %v315, %v345
      %v354 = vadd.f32 %v316, %v345
      %v355 = vadd.f32 %v317, %v345
      %v356 = vadd.f32 %v318, %v345
      %v357 = vadd.f32 %v319, %v345
      %v358 = vadd.f32 %v320, %v345
      %v359 = vadd.f32 %v321, %v345
      %v360 = vadd.f32 %v322, %v345
      %v361 = vadd.f32 %v323, %v345
      %v362 = vadd.f32 %v324, %v345
      %v363 = vadd.f32 %v325, %v345
      %v364 = vadd.f32 %v326, %v345
      %v365 = vadd.f32 %v327, %v345
      %v366 = vadd.f32 %v328, %v345
      %v367 = vadd.f32 %v329, %v345
      %v368 = vadd.f32 %v330, %v345
      %v369 = vadd.f32 %v331, %v345
      %v370 = vadd.f32 %v332, %v345
      %v371 = vadd.f32 %v333, %v345
      %v372 = vadd.f32 %v334, %v345
      %v373 = vadd.f32 %v335, %v345
      %v374 = vadd.f32 %v336, %v345
      %v375 = vadd.f32 %v337, %v345
      %v376 = vadd.f32 %v338, %v345
      %v377 = vadd.f32 %v339, %v345
      %v378 = vadd.f32 %v340, %v345
      %v379 = vxor.u32 %v347, 2147483648
      %v380 = vxor.u32 %v348, 2147483648
      %v381 = vxor.u32 %v349, 2147483648
      %v382 = vxor.u32 %v350, 2147483648
      %v383 = vxor.u32 %v351, 2147483648
      %v384 = vxor.u32 %v352, 2147483648
      %v385 = vxor.u32 %v353, 2147483648
      %v386 = vxor.u32 %v354, 2147483648
      %v387 = vxor.u32 %v355, 2147483648
      %v388 = vxor.u32 %v356, 2147483648
      %v389 = vxor.u32 %v357, 2147483648
      %v390 = vxor.u32 %v358, 2147483648
      %v391 = vxor.u32 %v359, 2147483648
      %v392 = vxor.u32 %v360, 2147483648
      %v393 = vxor.u32 %v361, 2147483648
      %v394 = vxor.u32 %v362, 2147483648
      %v395 = vxor.u32 %v363, 2147483648
      %v396 = vxor.u32 %v364, 2147483648
      %v397 = vxor.u32 %v365, 2147483648
      %v398 = vxor.u32 %v366, 2147483648
      %v399 = vxor.u32 %v367, 2147483648
      %v400 = vxor.u32 %v368, 2147483648
      %v401 = vxor.u32 %v369, 2147483648
      %v402 = vxor.u32 %v370, 2147483648
      %v403 = vxor.u32 %v371, 2147483648
      %v404 = vxor.u32 %v372, 2147483648
      %v405 = vxor.u32 %v373, 2147483648
      %v406 = vxor.u32 %v374, 2147483648
      %v407 = vxor.u32 %v375, 2147483648
      %v408 = vxor.u32 %v376, 2147483648
      %v409 = vxor.u32 %v377, 2147483648
      %v410 = vxor.u32 %v378, 2147483648
      %v411 = vmul.f32 %v379, 1.442695
      %v412 = vpow.pop %v411
      %v413 = vmul.f32 %v380, 1.442695
      %v414 = vpow.pop %v413
      %v415 = vmul.f32 %v381, 1.442695
      %v416 = vpow.pop %v415
      %v417 = vmul.f32 %v382, 1.442695
      %v418 = vpow.pop %v417
      %v419 = vmul.f32 %v383, 1.442695
      %v420 = vpow.pop %v419
      %v421 = vmul.f32 %v384, 1.442695
      %v422 = vpow.pop %v421
      %v423 = vmul.f32 %v385, 1.442695
      %v424 = vpow.pop %v423
      %v425 = vmul.f32 %v386, 1.442695
      %v426 = vpow.pop %v425
      %v427 = vmul.f32 %v387, 1.442695
      %v428 = vpow.pop %v427
      %v429 = vmul.f32 %v388, 1.442695
      %v430 = vpow.pop %v429
      %v431 = vmul.f32 %v389, 1.442695
      %v432 = vpow.pop %v431
      %v433 = vmul.f32 %v390, 1.442695
      %v434 = vpow.pop %v433
      %v435 = vmul.f32 %v391, 1.442695
      %v436 = vpow.pop %v435
      %v437 = vmul.f32 %v392, 1.442695
      %v438 = vpow.pop %v437
      %v439 = vmul.f32 %v393, 1.442695
      %v440 = vpow.pop %v439
      %v441 = vmul.f32 %v394, 1.442695
      %v442 = vpow.pop %v441
      %v443 = vmul.f32 %v395, 1.442695
      %v444 = vpow.pop %v443
      %v445 = vmul.f32 %v396, 1.442695
      %v446 = vpow.pop %v445
      %v447 = vmul.f32 %v397, 1.442695
      %v448 = vpow.pop %v447
      %v449 = vmul.f32 %v398, 1.442695
      %v450 = vpow.pop %v449
      %v451 = vmul.f32 %v399, 1.442695
      %v452 = vpow.pop %v451
      %v453 = vmul.f32 %v400, 1.442695
      %v454 = vpow.pop %v453
      %v455 = vmul.f32 %v401, 1.442695
      %v456 = vpow.pop %v455
      %v457 = vmul.f32 %v402, 1.442695
      %v458 = vpow.pop %v457
      %v459 = vmul.f32 %v403, 1.442695
      %v460 = vpow.pop %v459
      %v461 = vmul.f32 %v404, 1.442695
      %v462 = vpow.pop %v461
      %v463 = vmul.f32 %v405, 1.442695
      %v464 = vpow.pop %v463
      %v465 = vmul.f32 %v406, 1.442695
      %v466 = vpow.pop %v465
      %v467 = vmul.f32 %v407, 1.442695
      %v468 = vpow.pop %v467
      %v469 = vmul.f32 %v408, 1.442695
      %v470 = vpow.pop %v469
      %v471 = vmul.f32 %v409, 1.442695
      %v472 = vpow.pop %v471
      %v473 = vmul.f32 %v410, 1.442695
      %v474 = vpow.pop %v473
      %v475 = vadd.f32 %v412, 1.0
      %v476 = vadd.f32 %v414, 1.0
      %v477 = vadd.f32 %v416, 1.0
      %v478 = vadd.f32 %v418, 1.0
      %v479 = vadd.f32 %v420, 1.0
      %v480 = vadd.f32 %v422, 1.0
      %v481 = vadd.f32 %v424, 1.0
      %v482 = vadd.f32 %v426, 1.0
      %v483 = vadd.f32 %v428, 1.0
      %v484 = vadd.f32 %v430, 1.0
      %v485 = vadd.f32 %v432, 1.0
      %v486 = vadd.f32 %v434, 1.0
      %v487 = vadd.f32 %v436, 1.0
      %v488 = vadd.f32 %v438, 1.0
      %v489 = vadd.f32 %v440, 1.0
      %v490 = vadd.f32 %v442, 1.0
      %v491 = vadd.f32 %v444, 1.0
      %v492 = vadd.f32 %v446, 1.0
      %v493 = vadd.f32 %v448, 1.0
      %v494 = vadd.f32 %v450, 1.0
      %v495 = vadd.f32 %v452, 1.0
      %v496 = vadd.f32 %v454, 1.0
      %v497 = vadd.f32 %v456, 1.0
      %v498 = vadd.f32 %v458, 1.0
      %v499 = vadd.f32 %v460, 1.0
      %v500 = vadd.f32 %v462, 1.0
      %v501 = vadd.f32 %v464, 1.0
      %v502 = vadd.f32 %v466, 1.0
      %v503 = vadd.f32 %v468, 1.0
      %v504 = vadd.f32 %v470, 1.0
      %v505 = vadd.f32 %v472, 1.0
      %v506 = vadd.f32 %v474, 1.0
      %v507 = vrcp.pop %v475
      %v508 = vmul.f32 1.0, %v507
      %v509 = vrcp.pop %v476
      %v510 = vmul.f32 1.0, %v509
      %v511 = vrcp.pop %v477
      %v512 = vmul.f32 1.0, %v511
      %v513 = vrcp.pop %v478
      %v514 = vmul.f32 1.0, %v513
      %v515 = vrcp.pop %v479
      %v516 = vmul.f32 1.0, %v515
      %v517 = vrcp.pop %v480
      %v518 = vmul.f32 1.0, %v517
      %v519 = vrcp.pop %v481
      %v520 = vmul.f32 1.0, %v519
      %v521 = vrcp.pop %v482
      %v522 = vmul.f32 1.0, %v521
      %v523 = vrcp.pop %v483
      %v524 = vmul.f32 1.0, %v523
      %v525 = vrcp.pop %v484
      %v526 = vmul.f32 1.0, %v525
      %v527 = vrcp.pop %v485
      %v528 = vmul.f32 1.0, %v527
      %v529 = vrcp.pop %v486
      %v530 = vmul.f32 1.0, %v529
      %v531 = vrcp.pop %v487
      %v532 = vmul.f32 1.0, %v531
      %v533 = vrcp.pop %v488
      %v534 = vmul.f32 1.0, %v533
      %v535 = vrcp.pop %v489
      %v536 = vmul.f32 1.0, %v535
      %v537 = vrcp.pop %v490
      %v538 = vmul.f32 1.0, %v537
      %v539 = vrcp.pop %v491
      %v540 = vmul.f32 1.0, %v539
      %v541 = vrcp.pop %v492
      %v542 = vmul.f32 1.0, %v541
      %v543 = vrcp.pop %v493
      %v544 = vmul.f32 1.0, %v543
      %v545 = vrcp.pop %v494
      %v546 = vmul.f32 1.0, %v545
      %v547 = vrcp.pop %v495
      %v548 = vmul.f32 1.0, %v547
      %v549 = vrcp.pop %v496
      %v550 = vmul.f32 1.0, %v549
      %v551 = vrcp.pop %v497
      %v552 = vmul.f32 1.0, %v551
      %v553 = vrcp.pop %v498
      %v554 = vmul.f32 1.0, %v553
      %v555 = vrcp.pop %v499
      %v556 = vmul.f32 1.0, %v555
      %v557 = vrcp.pop %v500
      %v558 = vmul.f32 1.0, %v557
      %v559 = vrcp.pop %v501
      %v560 = vmul.f32 1.0, %v559
      %v561 = vrcp.pop %v502
      %v562 = vmul.f32 1.0, %v561
      %v563 = vrcp.pop %v503
      %v564 = vmul.f32 1.0, %v563
      %v565 = vrcp.pop %v504
      %v566 = vmul.f32 1.0, %v565
      %v567 = vrcp.pop %v505
      %v568 = vmul.f32 1.0, %v567
      %v569 = vrcp.pop %v506
      %v570 = vmul.f32 1.0, %v569
      %603 = vrot.lane.b32.xlu0 %v508, 124
      %v604 = vpop.permute.xlu0 %603
      %605 = vrot.lane.b32.xlu0 %v510, 124
      %v606 = vpop.permute.xlu0 %605
      %607 = vrot.lane.b32.xlu0 %v512, 124
      %v608 = vpop.permute.xlu0 %607
      %609 = vrot.lane.b32.xlu0 %v514, 124
      %v610 = vpop.permute.xlu0 %609
      %611 = vrot.lane.b32.xlu0 %v516, 124
      %v612 = vpop.permute.xlu0 %611
      %613 = vrot.lane.b32.xlu0 %v518, 124
      %v614 = vpop.permute.xlu0 %613
      %615 = vrot.lane.b32.xlu0 %v520, 124
      %v616 = vpop.permute.xlu0 %615
      %617 = vrot.lane.b32.xlu0 %v522, 124
      %v618 = vpop.permute.xlu0 %617
      %619 = vrot.lane.b32.xlu0 %v524, 124
      %v620 = vpop.permute.xlu0 %619
      %621 = vrot.lane.b32.xlu0 %v526, 124
      %v622 = vpop.permute.xlu0 %621
      %623 = vrot.lane.b32.xlu0 %v528, 124
      %v624 = vpop.permute.xlu0 %623
      %625 = vrot.lane.b32.xlu0 %v530, 124
      %v626 = vpop.permute.xlu0 %625
      %627 = vrot.lane.b32.xlu0 %v532, 124
      %v628 = vpop.permute.xlu0 %627
      %629 = vrot.lane.b32.xlu0 %v534, 124
      %v630 = vpop.permute.xlu0 %629
      %631 = vrot.lane.b32.xlu0 %v536, 124
      %v632 = vpop.permute.xlu0 %631
      %633 = vrot.lane.b32.xlu0 %v538, 124
      %v634 = vpop.permute.xlu0 %633
      %635 = vrot.lane.b32.xlu0 %v540, 124
      %v636 = vpop.permute.xlu0 %635
      %637 = vrot.lane.b32.xlu0 %v542, 124
      %v638 = vpop.permute.xlu0 %637
      %639 = vrot.lane.b32.xlu0 %v544, 124
      %v640 = vpop.permute.xlu0 %639
      %641 = vrot.lane.b32.xlu0 %v546, 124
      %v642 = vpop.permute.xlu0 %641
      %643 = vrot.lane.b32.xlu0 %v548, 124
      %v644 = vpop.permute.xlu0 %643
      %645 = vrot.lane.b32.xlu0 %v550, 124
      %v646 = vpop.permute.xlu0 %645
      %647 = vrot.lane.b32.xlu0 %v552, 124
      %v648 = vpop.permute.xlu0 %647
      %649 = vrot.lane.b32.xlu0 %v554, 124
      %v650 = vpop.permute.xlu0 %649
      %651 = vrot.lane.b32.xlu0 %v556, 124
      %v652 = vpop.permute.xlu0 %651
      %653 = vrot.lane.b32.xlu0 %v558, 124
      %v654 = vpop.permute.xlu0 %653
      %655 = vrot.lane.b32.xlu0 %v560, 124
      %v656 = vpop.permute.xlu0 %655
      %657 = vrot.lane.b32.xlu0 %v562, 124
      %v658 = vpop.permute.xlu0 %657
      %659 = vrot.lane.b32.xlu0 %v564, 124
      %v660 = vpop.permute.xlu0 %659
      %661 = vrot.lane.b32.xlu0 %v566, 124
      %v662 = vpop.permute.xlu0 %661
      %663 = vrot.lane.b32.xlu0 %v568, 124
      %v664 = vpop.permute.xlu0 %663
      %665 = vrot.lane.b32.xlu0 %v570, 124
      %v666 = vpop.permute.xlu0 %665
      %v699 = vmul.f32 %v347, %v604
      %v700 = vmul.f32 %v348, %v606
      %v701 = vmul.f32 %v349, %v608
      %v702 = vmul.f32 %v350, %v610
      %v703 = vmul.f32 %v351, %v612
      %v704 = vmul.f32 %v352, %v614
      %v705 = vmul.f32 %v353, %v616
      %v706 = vmul.f32 %v354, %v618
      %v707 = vmul.f32 %v355, %v620
      %v708 = vmul.f32 %v356, %v622
      %v709 = vmul.f32 %v357, %v624
      %v710 = vmul.f32 %v358, %v626
      %v711 = vmul.f32 %v359, %v628
      %v712 = vmul.f32 %v360, %v630
      %v713 = vmul.f32 %v361, %v632
      %v714 = vmul.f32 %v362, %v634
      %v715 = vmul.f32 %v363, %v636
      %v716 = vmul.f32 %v364, %v638
      %v717 = vmul.f32 %v365, %v640
      %v718 = vmul.f32 %v366, %v642
      %v719 = vmul.f32 %v367, %v644
      %v720 = vmul.f32 %v368, %v646
      %v721 = vmul.f32 %v369, %v648
      %v722 = vmul.f32 %v370, %v650
      %v723 = vmul.f32 %v371, %v652
      %v724 = vmul.f32 %v372, %v654
      %v725 = vmul.f32 %v373, %v656
      %v726 = vmul.f32 %v374, %v658
      %v727 = vmul.f32 %v375, %v660
      %v728 = vmul.f32 %v376, %v662
      %v729 = vmul.f32 %v377, %v664
      %v730 = vmul.f32 %v378, %v666
      %vm731 = vcmask 27648
      %732 = vst.msk [vmem:[#allocation2] sm:$0xf] %vm731, 0
      %733 = vst.msk [vmem:[#allocation2 + $0x4] sm:$0xf] %vm731, 0
      %734 = vst.msk [vmem:[#allocation2 + $0x8] sm:$0xf] %vm731, 0
      %735 = vst.msk [vmem:[#allocation2 + $0xc] sm:$0xf] %vm731, 0
      %s736 = scalar_lea.vmem [#allocation2], 272
      %737 = vst.msk [vmem:[%s736] sm:$0xf] %vm731, 0
      %738 = vst.msk [vmem:[%s736 + $0x4] sm:$0xf] %vm731, 0
      %739 = vst.msk [vmem:[%s736 + $0x8] sm:$0xf] %vm731, 0
      %740 = vst.msk [vmem:[%s736 + $0xc] sm:$0xf] %vm731, 0
      %vm741 = vcmask 24576
      %vm742 = vsmask.f32 256
      %vm743 = vmand %vm741, %vm742
      %v744 = vld [vmem:[#allocation2] sm:$0x1]
      %v745 = vsel %vm743, 0, %v744
      %746 = vst [vmem:[#allocation2] sm:$0x1] %v745
      %v747 = vld [vmem:[#allocation2 + $0x10] sm:$0x1]
      %v748 = vsel %vm743, 0, %v747
      %749 = vst [vmem:[#allocation2 + $0x10] sm:$0x1] %v748
      %v750 = vld [vmem:[#allocation2 + $0x20] sm:$0x1]
      %v751 = vsel %vm743, 0, %v750
      %752 = vst [vmem:[#allocation2 + $0x20] sm:$0x1] %v751
      %v753 = vld [vmem:[#allocation2 + $0x30] sm:$0x1]
      %v754 = vsel %vm743, 0, %v753
      %755 = vst [vmem:[#allocation2 + $0x30] sm:$0x1] %v754
      %v756 = vld [vmem:[#allocation2 + $0x40] sm:$0x1]
      %v757 = vsel %vm743, 0, %v756
      %758 = vst [vmem:[#allocation2 + $0x40] sm:$0x1] %v757
      %v759 = vld [vmem:[#allocation2 + $0x50] sm:$0x1]
      %v760 = vsel %vm743, 0, %v759
      %761 = vst [vmem:[#allocation2 + $0x50] sm:$0x1] %v760
      %v762 = vld [vmem:[#allocation2 + $0x60] sm:$0x1]
      %v763 = vsel %vm743, 0, %v762
      %764 = vst [vmem:[#allocation2 + $0x60] sm:$0x1] %v763
      %v765 = vld [vmem:[#allocation2 + $0x70] sm:$0x1]
      %v766 = vsel %vm743, 0, %v765
      %767 = vst [vmem:[#allocation2 + $0x70] sm:$0x1] %v766
      %v768 = vld [vmem:[#allocation2 + $0x80] sm:$0x1]
      %v769 = vsel %vm743, 0, %v768
      %770 = vst [vmem:[#allocation2 + $0x80] sm:$0x1] %v769
      %v771 = vld [vmem:[#allocation2 + $0x90] sm:$0x1]
      %v772 = vsel %vm743, 0, %v771
      %773 = vst [vmem:[#allocation2 + $0x90] sm:$0x1] %v772
      %v774 = vld [vmem:[#allocation2 + $0xa0] sm:$0x1]
      %v775 = vsel %vm743, 0, %v774
      %776 = vst [vmem:[#allocation2 + $0xa0] sm:$0x1] %v775
      %v777 = vld [vmem:[#allocation2 + $0xb0] sm:$0x1]
      %v778 = vsel %vm743, 0, %v777
      %779 = vst [vmem:[#allocation2 + $0xb0] sm:$0x1] %v778
      %v780 = vld [vmem:[#allocation2 + $0xc0] sm:$0x1]
      %v781 = vsel %vm743, 0, %v780
      %782 = vst [vmem:[#allocation2 + $0xc0] sm:$0x1] %v781
      %v783 = vld [vmem:[#allocation2 + $0xd0] sm:$0x1]
      %v784 = vsel %vm743, 0, %v783
      %785 = vst [vmem:[#allocation2 + $0xd0] sm:$0x1] %v784
      %v786 = vld [vmem:[#allocation2 + $0xe0] sm:$0x1]
      %v787 = vsel %vm743, 0, %v786
      %788 = vst [vmem:[#allocation2 + $0xe0] sm:$0x1] %v787
      %v789 = vld [vmem:[#allocation2 + $0xf0] sm:$0x1]
      %v790 = vsel %vm743, 0, %v789
      %791 = vst [vmem:[#allocation2 + $0xf0] sm:$0x1] %v790
      %v792 = vld [vmem:[#allocation2 + $0x100] sm:$0x1]
      %v793 = vsel %vm743, 0, %v792
      %794 = vst [vmem:[#allocation2 + $0x100] sm:$0x1] %v793
      %v795 = vld [vmem:[#allocation2 + $0x110] sm:$0x1]
      %v796 = vsel %vm743, 0, %v795
      %797 = vst [vmem:[#allocation2 + $0x110] sm:$0x1] %v796
      %vm798 = vcmask 27648
      %vm799 = vsmask.f32 7938
      %vm800 = vmand %vm798, %vm799
      %v801 = vld [vmem:[#allocation2 + $0x8] sm:$0xf]
      %v802 = vsel %vm800, 0, %v801
      %803 = vst [vmem:[#allocation2 + $0x8] sm:$0xf] %v802
      %804 = vst.msk [vmem:[#allocation2 + $0xc] sm:$0xf] %vm731, 0
      %v805 = vld [vmem:[#allocation2 + $0x18] sm:$0xf]
      %v806 = vsel %vm800, 0, %v805
      %807 = vst [vmem:[#allocation2 + $0x18] sm:$0xf] %v806
      %808 = vst.msk [vmem:[#allocation2 + $0x1c] sm:$0xf] %vm731, 0
      %v809 = vld [vmem:[#allocation2 + $0x28] sm:$0xf]
      %v810 = vsel %vm800, 0, %v809
      %811 = vst [vmem:[#allocation2 + $0x28] sm:$0xf] %v810
      %812 = vst.msk [vmem:[#allocation2 + $0x2c] sm:$0xf] %vm731, 0
      %v813 = vld [vmem:[#allocation2 + $0x38] sm:$0xf]
      %v814 = vsel %vm800, 0, %v813
      %815 = vst [vmem:[#allocation2 + $0x38] sm:$0xf] %v814
      %816 = vst.msk [vmem:[#allocation2 + $0x3c] sm:$0xf] %vm731, 0
      %v817 = vld [vmem:[#allocation2 + $0x48] sm:$0xf]
      %v818 = vsel %vm800, 0, %v817
      %819 = vst [vmem:[#allocation2 + $0x48] sm:$0xf] %v818
      %820 = vst.msk [vmem:[#allocation2 + $0x4c] sm:$0xf] %vm731, 0
      %v821 = vld [vmem:[#allocation2 + $0x58] sm:$0xf]
      %v822 = vsel %vm800, 0, %v821
      %823 = vst [vmem:[#allocation2 + $0x58] sm:$0xf] %v822
      %824 = vst.msk [vmem:[#allocation2 + $0x5c] sm:$0xf] %vm731, 0
      %v825 = vld [vmem:[#allocation2 + $0x68] sm:$0xf]
      %v826 = vsel %vm800, 0, %v825
      %827 = vst [vmem:[#allocation2 + $0x68] sm:$0xf] %v826
      %828 = vst.msk [vmem:[#allocation2 + $0x6c] sm:$0xf] %vm731, 0
      %v829 = vld [vmem:[#allocation2 + $0x78] sm:$0xf]
      %v830 = vsel %vm800, 0, %v829
      %831 = vst [vmem:[#allocation2 + $0x78] sm:$0xf] %v830
      %832 = vst.msk [vmem:[#allocation2 + $0x7c] sm:$0xf] %vm731, 0
      %v833 = vld [vmem:[#allocation2 + $0x88] sm:$0xf]
      %v834 = vsel %vm800, 0, %v833
      %835 = vst [vmem:[#allocation2 + $0x88] sm:$0xf] %v834
      %836 = vst.msk [vmem:[#allocation2 + $0x8c] sm:$0xf] %vm731, 0
      %v837 = vld [vmem:[#allocation2 + $0x98] sm:$0xf]
      %v838 = vsel %vm800, 0, %v837
      %839 = vst [vmem:[#allocation2 + $0x98] sm:$0xf] %v838
      %840 = vst.msk [vmem:[#allocation2 + $0x9c] sm:$0xf] %vm731, 0
      %v841 = vld [vmem:[#allocation2 + $0xa8] sm:$0xf]
      %v842 = vsel %vm800, 0, %v841
      %843 = vst [vmem:[#allocation2 + $0xa8] sm:$0xf] %v842
      %844 = vst.msk [vmem:[#allocation2 + $0xac] sm:$0xf] %vm731, 0
      %v845 = vld [vmem:[#allocation2 + $0xb8] sm:$0xf]
      %v846 = vsel %vm800, 0, %v845
      %847 = vst [vmem:[#allocation2 + $0xb8] sm:$0xf] %v846
      %848 = vst.msk [vmem:[#allocation2 + $0xbc] sm:$0xf] %vm731, 0
      %v849 = vld [vmem:[#allocation2 + $0xc8] sm:$0xf]
      %v850 = vsel %vm800, 0, %v849
      %851 = vst [vmem:[#allocation2 + $0xc8] sm:$0xf] %v850
      %852 = vst.msk [vmem:[#allocation2 + $0xcc] sm:$0xf] %vm731, 0
      %v853 = vld [vmem:[#allocation2 + $0xd8] sm:$0xf]
      %v854 = vsel %vm800, 0, %v853
      %855 = vst [vmem:[#allocation2 + $0xd8] sm:$0xf] %v854
      %856 = vst.msk [vmem:[#allocation2 + $0xdc] sm:$0xf] %vm731, 0
      %v857 = vld [vmem:[#allocation2 + $0xe8] sm:$0xf]
      %v858 = vsel %vm800, 0, %v857
      %859 = vst [vmem:[#allocation2 + $0xe8] sm:$0xf] %v858
      %860 = vst.msk [vmem:[#allocation2 + $0xec] sm:$0xf] %vm731, 0
      %v861 = vld [vmem:[#allocation2 + $0xf8] sm:$0xf]
      %v862 = vsel %vm800, 0, %v861
      %863 = vst [vmem:[#allocation2 + $0xf8] sm:$0xf] %v862
      %864 = vst.msk [vmem:[#allocation2 + $0xfc] sm:$0xf] %vm731, 0
      %v865 = vld [vmem:[#allocation2 + $0x108] sm:$0xf]
      %v866 = vsel %vm800, 0, %v865
      %867 = vst [vmem:[#allocation2 + $0x108] sm:$0xf] %v866
      %868 = vst.msk [vmem:[#allocation2 + $0x10c] sm:$0xf] %vm731, 0
      %v869 = vld [vmem:[#allocation2 + $0x118] sm:$0xf]
      %v870 = vsel %vm800, 0, %v869
      %871 = vst [vmem:[#allocation2 + $0x118] sm:$0xf] %v870
      %872 = vst.msk [vmem:[#allocation2 + $0x11c] sm:$0xf] %vm731, 0
      %v873 = vpack.c.bf16 %v700, %v699
      %v874 = vpack.c.bf16 %v702, %v701
      %v875 = vpack.c.bf16 %v704, %v703
      %v876 = vpack.c.bf16 %v706, %v705
      %v877 = vpack.c.bf16 %v708, %v707
      %v878 = vpack.c.bf16 %v710, %v709
      %v879 = vpack.c.bf16 %v712, %v711
      %v880 = vpack.c.bf16 %v714, %v713
      %v881 = vpack.c.bf16 %v716, %v715
      %v882 = vpack.c.bf16 %v718, %v717
      %v883 = vpack.c.bf16 %v720, %v719
      %v884 = vpack.c.bf16 %v722, %v721
      %v885 = vpack.c.bf16 %v724, %v723
      %v886 = vpack.c.bf16 %v726, %v725
      %v887 = vpack.c.bf16 %v728, %v727
      %v888 = vpack.c.bf16 %v730, %v729
      %v905 = vunpack.c.l.b16 %v873
      %v906 = vunpack.c.h.b16 %v873
      %v907 = vunpack.c.l.b16 %v874
      %v908 = vunpack.c.h.b16 %v874
      %v909 = vunpack.c.l.b16 %v875
      %v910 = vunpack.c.h.b16 %v875
      %v911 = vunpack.c.l.b16 %v876
      %v912 = vunpack.c.h.b16 %v876
      %v913 = vunpack.c.l.b16 %v877
      %v914 = vunpack.c.h.b16 %v877
      %v915 = vunpack.c.l.b16 %v878
      %v916 = vunpack.c.h.b16 %v878
      %v917 = vunpack.c.l.b16 %v879
      %v918 = vunpack.c.h.b16 %v879
      %v919 = vunpack.c.l.b16 %v880
      %v920 = vunpack.c.h.b16 %v880
      %v921 = vunpack.c.l.b16 %v881
      %v922 = vunpack.c.h.b16 %v881
      %v923 = vunpack.c.l.b16 %v882
      %v924 = vunpack.c.h.b16 %v882
      %v925 = vunpack.c.l.b16 %v883
      %v926 = vunpack.c.h.b16 %v883
      %v927 = vunpack.c.l.b16 %v884
      %v928 = vunpack.c.h.b16 %v884
      %v929 = vunpack.c.l.b16 %v885
      %v930 = vunpack.c.h.b16 %v885
      %v931 = vunpack.c.l.b16 %v886
      %v932 = vunpack.c.h.b16 %v886
      %v933 = vunpack.c.l.b16 %v887
      %v934 = vunpack.c.h.b16 %v887
      %v935 = vunpack.c.l.b16 %v888
      %v936 = vunpack.c.h.b16 %v888
      %v937 = vpack.c.b16 %v905, %v905
      %v938 = vpack.c.b16 %v906, %v906
      %v939 = vpack.c.b16 %v907, %v907
      %v940 = vpack.c.b16 %v908, %v908
      %v941 = vpack.c.b16 %v909, %v909
      %v942 = vpack.c.b16 %v910, %v910
      %v943 = vpack.c.b16 %v911, %v911
      %v944 = vpack.c.b16 %v912, %v912
      %v945 = vpack.c.b16 %v913, %v913
      %v946 = vpack.c.b16 %v914, %v914
      %v947 = vpack.c.b16 %v915, %v915
      %v948 = vpack.c.b16 %v916, %v916
      %v949 = vpack.c.b16 %v917, %v917
      %v950 = vpack.c.b16 %v918, %v918
      %v951 = vpack.c.b16 %v919, %v919
      %v952 = vpack.c.b16 %v920, %v920
      %v953 = vpack.c.b16 %v921, %v921
      %v954 = vpack.c.b16 %v922, %v922
      %v955 = vpack.c.b16 %v923, %v923
      %v956 = vpack.c.b16 %v924, %v924
      %v957 = vpack.c.b16 %v925, %v925
      %v958 = vpack.c.b16 %v926, %v926
      %v959 = vpack.c.b16 %v927, %v927
      %v960 = vpack.c.b16 %v928, %v928
      %v961 = vpack.c.b16 %v929, %v929
      %v962 = vpack.c.b16 %v930, %v930
      %v963 = vpack.c.b16 %v931, %v931
      %v964 = vpack.c.b16 %v932, %v932
      %v965 = vpack.c.b16 %v933, %v933
      %v966 = vpack.c.b16 %v934, %v934
      %v967 = vpack.c.b16 %v935, %v935
      %v968 = vpack.c.b16 %v936, %v936
      %vm969 = vsmask.f32 4368
      %vm970 = vmor %vm742, %vm969
      %v972 = vshrl.u32 %v937, 16
      %v974 = vrot.slane %v972, 7
      %v975 = vshll.u32 %v937, 16
      %v977 = vor.u32 %v974, %v975
      %v978 = vrot.slane %v974, 4
      %v980 = vshrl.u32 %v938, 16
      %v982 = vrot.slane %v980, 7
      %v983 = vshll.u32 %v938, 16
      %v985 = vor.u32 %v982, %v983
      %v986 = vsel %vm970, %v978, %v985
      %v987 = vrot.slane %v982, 4
      %v989 = vshrl.u32 %v939, 16
      %v991 = vrot.slane %v989, 7
      %v992 = vshll.u32 %v939, 16
      %v994 = vor.u32 %v991, %v992
      %v995 = vrot.slane %v991, 4
      %v997 = vshrl.u32 %v940, 16
      %v999 = vrot.slane %v997, 7
      %v1000 = vshll.u32 %v940, 16
      %v1002 = vor.u32 %v999, %v1000
      %v1003 = vsel %vm970, %v995, %v1002
      %v1004 = vrot.slane %v999, 4
      %v1006 = vshrl.u32 %v941, 16
      %v1008 = vrot.slane %v1006, 7
      %v1009 = vshll.u32 %v941, 16
      %v1011 = vor.u32 %v1008, %v1009
      %v1012 = vrot.slane %v1008, 4
      %v1014 = vshrl.u32 %v942, 16
      %v1016 = vrot.slane %v1014, 7
      %v1017 = vshll.u32 %v942, 16
      %v1019 = vor.u32 %v1016, %v1017
      %v1020 = vsel %vm970, %v1012, %v1019
      %v1021 = vrot.slane %v1016, 4
      %v1023 = vshrl.u32 %v943, 16
      %v1025 = vrot.slane %v1023, 7
      %v1026 = vshll.u32 %v943, 16
      %v1028 = vor.u32 %v1025, %v1026
      %v1029 = vrot.slane %v1025, 4
      %v1031 = vshrl.u32 %v944, 16
      %v1033 = vrot.slane %v1031, 7
      %v1034 = vshll.u32 %v944, 16
      %v1036 = vor.u32 %v1033, %v1034
      %v1037 = vsel %vm970, %v1029, %v1036
      %v1038 = vrot.slane %v1033, 4
      %v1040 = vshrl.u32 %v945, 16
      %v1042 = vrot.slane %v1040, 7
      %v1043 = vshll.u32 %v945, 16
      %v1045 = vor.u32 %v1042, %v1043
      %v1046 = vrot.slane %v1042, 4
      %v1048 = vshrl.u32 %v946, 16
      %v1050 = vrot.slane %v1048, 7
      %v1051 = vshll.u32 %v946, 16
      %v1053 = vor.u32 %v1050, %v1051
      %v1054 = vsel %vm970, %v1046, %v1053
      %v1055 = vrot.slane %v1050, 4
      %v1057 = vshrl.u32 %v947, 16
      %v1059 = vrot.slane %v1057, 7
      %v1060 = vshll.u32 %v947, 16
      %v1062 = vor.u32 %v1059, %v1060
      %v1063 = vrot.slane %v1059, 4
      %v1065 = vshrl.u32 %v948, 16
      %v1067 = vrot.slane %v1065, 7
      %v1068 = vshll.u32 %v948, 16
      %v1070 = vor.u32 %v1067, %v1068
      %v1071 = vsel %vm970, %v1063, %v1070
      %v1072 = vrot.slane %v1067, 4
      %v1074 = vshrl.u32 %v949, 16
      %v1076 = vrot.slane %v1074, 7
      %v1077 = vshll.u32 %v949, 16
      %v1079 = vor.u32 %v1076, %v1077
      %v1080 = vrot.slane %v1076, 4
      %v1082 = vshrl.u32 %v950, 16
      %v1084 = vrot.slane %v1082, 7
      %v1085 = vshll.u32 %v950, 16
      %v1087 = vor.u32 %v1084, %v1085
      %v1088 = vsel %vm970, %v1080, %v1087
      %v1089 = vrot.slane %v1084, 4
      %v1091 = vshrl.u32 %v951, 16
      %v1093 = vrot.slane %v1091, 7
      %v1094 = vshll.u32 %v951, 16
      %v1096 = vor.u32 %v1093, %v1094
      %v1097 = vrot.slane %v1093, 4
      %v1099 = vshrl.u32 %v952, 16
      %v1101 = vrot.slane %v1099, 7
      %v1102 = vshll.u32 %v952, 16
      %v1104 = vor.u32 %v1101, %v1102
      %v1105 = vsel %vm970, %v1097, %v1104
      %v1106 = vrot.slane %v1101, 4
      %v1108 = vshrl.u32 %v953, 16
      %v1110 = vrot.slane %v1108, 7
      %v1111 = vshll.u32 %v953, 16
      %v1113 = vor.u32 %v1110, %v1111
      %v1114 = vrot.slane %v1110, 4
      %v1116 = vshrl.u32 %v954, 16
      %v1118 = vrot.slane %v1116, 7
      %v1119 = vshll.u32 %v954, 16
      %v1121 = vor.u32 %v1118, %v1119
      %v1122 = vsel %vm970, %v1114, %v1121
      %v1123 = vrot.slane %v1118, 4
      %v1125 = vshrl.u32 %v955, 16
      %v1127 = vrot.slane %v1125, 7
      %v1128 = vshll.u32 %v955, 16
      %v1130 = vor.u32 %v1127, %v1128
      %v1131 = vrot.slane %v1127, 4
      %v1133 = vshrl.u32 %v956, 16
      %v1135 = vrot.slane %v1133, 7
      %v1136 = vshll.u32 %v956, 16
      %v1138 = vor.u32 %v1135, %v1136
      %v1139 = vsel %vm970, %v1131, %v1138
      %v1140 = vrot.slane %v1135, 4
      %v1142 = vshrl.u32 %v957, 16
      %v1144 = vrot.slane %v1142, 7
      %v1145 = vshll.u32 %v957, 16
      %v1147 = vor.u32 %v1144, %v1145
      %v1148 = vrot.slane %v1144, 4
      %v1150 = vshrl.u32 %v958, 16
      %v1152 = vrot.slane %v1150, 7
      %v1153 = vshll.u32 %v958, 16
      %v1155 = vor.u32 %v1152, %v1153
      %v1156 = vsel %vm970, %v1148, %v1155
      %v1157 = vrot.slane %v1152, 4
      %v1159 = vshrl.u32 %v959, 16
      %v1161 = vrot.slane %v1159, 7
      %v1162 = vshll.u32 %v959, 16
      %v1164 = vor.u32 %v1161, %v1162
      %v1165 = vrot.slane %v1161, 4
      %v1167 = vshrl.u32 %v960, 16
      %v1169 = vrot.slane %v1167, 7
      %v1170 = vshll.u32 %v960, 16
      %v1172 = vor.u32 %v1169, %v1170
      %v1173 = vsel %vm970, %v1165, %v1172
      %v1174 = vrot.slane %v1169, 4
      %v1176 = vshrl.u32 %v961, 16
      %v1178 = vrot.slane %v1176, 7
      %v1179 = vshll.u32 %v961, 16
      %v1181 = vor.u32 %v1178, %v1179
      %v1182 = vrot.slane %v1178, 4
      %v1184 = vshrl.u32 %v962, 16
      %v1186 = vrot.slane %v1184, 7
      %v1187 = vshll.u32 %v962, 16
      %v1189 = vor.u32 %v1186, %v1187
      %v1190 = vsel %vm970, %v1182, %v1189
      %v1191 = vrot.slane %v1186, 4
      %v1193 = vshrl.u32 %v963, 16
      %v1195 = vrot.slane %v1193, 7
      %v1196 = vshll.u32 %v963, 16
      %v1198 = vor.u32 %v1195, %v1196
      %v1199 = vrot.slane %v1195, 4
      %v1201 = vshrl.u32 %v964, 16
      %v1203 = vrot.slane %v1201, 7
      %v1204 = vshll.u32 %v964, 16
      %v1206 = vor.u32 %v1203, %v1204
      %v1207 = vsel %vm970, %v1199, %v1206
      %v1208 = vrot.slane %v1203, 4
      %v1210 = vshrl.u32 %v965, 16
      %v1212 = vrot.slane %v1210, 7
      %v1213 = vshll.u32 %v965, 16
      %v1215 = vor.u32 %v1212, %v1213
      %v1216 = vrot.slane %v1212, 4
      %v1218 = vshrl.u32 %v966, 16
      %v1220 = vrot.slane %v1218, 7
      %v1221 = vshll.u32 %v966, 16
      %v1223 = vor.u32 %v1220, %v1221
      %v1224 = vsel %vm970, %v1216, %v1223
      %v1225 = vrot.slane %v1220, 4
      %v1227 = vshrl.u32 %v967, 16
      %v1229 = vrot.slane %v1227, 7
      %v1230 = vshll.u32 %v967, 16
      %v1232 = vor.u32 %v1229, %v1230
      %v1233 = vrot.slane %v1229, 4
      %v1235 = vshrl.u32 %v968, 16
      %v1237 = vrot.slane %v1235, 7
      %v1238 = vshll.u32 %v968, 16
      %v1240 = vor.u32 %v1237, %v1238
      %v1241 = vsel %vm970, %v1233, %v1240
      %v1242 = vrot.slane %v1237, 4
      %s1291 = scalar_lea.vmem [#allocation2], 16
      %v1292 = vld [vmem:[%s1291] sm:$0xf]
      %v1293 = vsel %vm800, %v977, %v1292
      %1294 = vst [vmem:[%s1291] sm:$0xf] %v1293
      %1295 = vst.msk [vmem:[%s1291 + $0x4] sm:$0xf] %vm731, %v986
      %v1296 = vld [vmem:[%s1291 + $0x8] sm:$0x1]
      %v1297 = vsel %vm743, %v987, %v1296
      %1298 = vst [vmem:[%s1291 + $0x8] sm:$0x1] %v1297
      %v1299 = vld [vmem:[%s1291 + $0x10] sm:$0xf]
      %v1300 = vsel %vm800, %v994, %v1299
      %1301 = vst [vmem:[%s1291 + $0x10] sm:$0xf] %v1300
      %1302 = vst.msk [vmem:[%s1291 + $0x14] sm:$0xf] %vm731, %v1003
      %v1303 = vld [vmem:[%s1291 + $0x18] sm:$0x1]
      %v1304 = vsel %vm743, %v1004, %v1303
      %1305 = vst [vmem:[%s1291 + $0x18] sm:$0x1] %v1304
      %v1306 = vld [vmem:[%s1291 + $0x20] sm:$0xf]
      %v1307 = vsel %vm800, %v1011, %v1306
      %1308 = vst [vmem:[%s1291 + $0x20] sm:$0xf] %v1307
      %1309 = vst.msk [vmem:[%s1291 + $0x24] sm:$0xf] %vm731, %v1020
      %v1310 = vld [vmem:[%s1291 + $0x28] sm:$0x1]
      %v1311 = vsel %vm743, %v1021, %v1310
      %1312 = vst [vmem:[%s1291 + $0x28] sm:$0x1] %v1311
      %v1313 = vld [vmem:[%s1291 + $0x30] sm:$0xf]
      %v1314 = vsel %vm800, %v1028, %v1313
      %1315 = vst [vmem:[%s1291 + $0x30] sm:$0xf] %v1314
      %1316 = vst.msk [vmem:[%s1291 + $0x34] sm:$0xf] %vm731, %v1037
      %v1317 = vld [vmem:[%s1291 + $0x38] sm:$0x1]
      %v1318 = vsel %vm743, %v1038, %v1317
      %1319 = vst [vmem:[%s1291 + $0x38] sm:$0x1] %v1318
      %v1320 = vld [vmem:[%s1291 + $0x40] sm:$0xf]
      %v1321 = vsel %vm800, %v1045, %v1320
      %1322 = vst [vmem:[%s1291 + $0x40] sm:$0xf] %v1321
      %1323 = vst.msk [vmem:[%s1291 + $0x44] sm:$0xf] %vm731, %v1054
      %v1324 = vld [vmem:[%s1291 + $0x48] sm:$0x1]
      %v1325 = vsel %vm743, %v1055, %v1324
      %1326 = vst [vmem:[%s1291 + $0x48] sm:$0x1] %v1325
      %v1327 = vld [vmem:[%s1291 + $0x50] sm:$0xf]
      %v1328 = vsel %vm800, %v1062, %v1327
      %1329 = vst [vmem:[%s1291 + $0x50] sm:$0xf] %v1328
      %1330 = vst.msk [vmem:[%s1291 + $0x54] sm:$0xf] %vm731, %v1071
      %v1331 = vld [vmem:[%s1291 + $0x58] sm:$0x1]
      %v1332 = vsel %vm743, %v1072, %v1331
      %1333 = vst [vmem:[%s1291 + $0x58] sm:$0x1] %v1332
      %v1334 = vld [vmem:[%s1291 + $0x60] sm:$0xf]
      %v1335 = vsel %vm800, %v1079, %v1334
      %1336 = vst [vmem:[%s1291 + $0x60] sm:$0xf] %v1335
      %1337 = vst.msk [vmem:[%s1291 + $0x64] sm:$0xf] %vm731, %v1088
      %v1338 = vld [vmem:[%s1291 + $0x68] sm:$0x1]
      %v1339 = vsel %vm743, %v1089, %v1338
      %1340 = vst [vmem:[%s1291 + $0x68] sm:$0x1] %v1339
      %v1341 = vld [vmem:[%s1291 + $0x70] sm:$0xf]
      %v1342 = vsel %vm800, %v1096, %v1341
      %1343 = vst [vmem:[%s1291 + $0x70] sm:$0xf] %v1342
      %1344 = vst.msk [vmem:[%s1291 + $0x74] sm:$0xf] %vm731, %v1105
      %v1345 = vld [vmem:[%s1291 + $0x78] sm:$0x1]
      %v1346 = vsel %vm743, %v1106, %v1345
      %1347 = vst [vmem:[%s1291 + $0x78] sm:$0x1] %v1346
      %v1348 = vld [vmem:[%s1291 + $0x80] sm:$0xf]
      %v1349 = vsel %vm800, %v1113, %v1348
      %1350 = vst [vmem:[%s1291 + $0x80] sm:$0xf] %v1349
      %1351 = vst.msk [vmem:[%s1291 + $0x84] sm:$0xf] %vm731, %v1122
      %v1352 = vld [vmem:[%s1291 + $0x88] sm:$0x1]
      %v1353 = vsel %vm743, %v1123, %v1352
      %1354 = vst [vmem:[%s1291 + $0x88] sm:$0x1] %v1353
      %v1355 = vld [vmem:[%s1291 + $0x90] sm:$0xf]
      %v1356 = vsel %vm800, %v1130, %v1355
      %1357 = vst [vmem:[%s1291 + $0x90] sm:$0xf] %v1356
      %1358 = vst.msk [vmem:[%s1291 + $0x94] sm:$0xf] %vm731, %v1139
      %v1359 = vld [vmem:[%s1291 + $0x98] sm:$0x1]
      %v1360 = vsel %vm743, %v1140, %v1359
      %1361 = vst [vmem:[%s1291 + $0x98] sm:$0x1] %v1360
      %v1362 = vld [vmem:[%s1291 + $0xa0] sm:$0xf]
      %v1363 = vsel %vm800, %v1147, %v1362
      %1364 = vst [vmem:[%s1291 + $0xa0] sm:$0xf] %v1363
      %1365 = vst.msk [vmem:[%s1291 + $0xa4] sm:$0xf] %vm731, %v1156
      %v1366 = vld [vmem:[%s1291 + $0xa8] sm:$0x1]
      %v1367 = vsel %vm743, %v1157, %v1366
      %1368 = vst [vmem:[%s1291 + $0xa8] sm:$0x1] %v1367
      %v1369 = vld [vmem:[%s1291 + $0xb0] sm:$0xf]
      %v1370 = vsel %vm800, %v1164, %v1369
      %1371 = vst [vmem:[%s1291 + $0xb0] sm:$0xf] %v1370
      %1372 = vst.msk [vmem:[%s1291 + $0xb4] sm:$0xf] %vm731, %v1173
      %v1373 = vld [vmem:[%s1291 + $0xb8] sm:$0x1]
      %v1374 = vsel %vm743, %v1174, %v1373
      %1375 = vst [vmem:[%s1291 + $0xb8] sm:$0x1] %v1374
      %v1376 = vld [vmem:[%s1291 + $0xc0] sm:$0xf]
      %v1377 = vsel %vm800, %v1181, %v1376
      %1378 = vst [vmem:[%s1291 + $0xc0] sm:$0xf] %v1377
      %1379 = vst.msk [vmem:[%s1291 + $0xc4] sm:$0xf] %vm731, %v1190
      %v1380 = vld [vmem:[%s1291 + $0xc8] sm:$0x1]
      %v1381 = vsel %vm743, %v1191, %v1380
      %1382 = vst [vmem:[%s1291 + $0xc8] sm:$0x1] %v1381
      %v1383 = vld [vmem:[%s1291 + $0xd0] sm:$0xf]
      %v1384 = vsel %vm800, %v1198, %v1383
      %1385 = vst [vmem:[%s1291 + $0xd0] sm:$0xf] %v1384
      %1386 = vst.msk [vmem:[%s1291 + $0xd4] sm:$0xf] %vm731, %v1207
      %v1387 = vld [vmem:[%s1291 + $0xd8] sm:$0x1]
      %v1388 = vsel %vm743, %v1208, %v1387
      %1389 = vst [vmem:[%s1291 + $0xd8] sm:$0x1] %v1388
      %v1390 = vld [vmem:[%s1291 + $0xe0] sm:$0xf]
      %v1391 = vsel %vm800, %v1215, %v1390
      %1392 = vst [vmem:[%s1291 + $0xe0] sm:$0xf] %v1391
      %1393 = vst.msk [vmem:[%s1291 + $0xe4] sm:$0xf] %vm731, %v1224
      %v1394 = vld [vmem:[%s1291 + $0xe8] sm:$0x1]
      %v1395 = vsel %vm743, %v1225, %v1394
      %1396 = vst [vmem:[%s1291 + $0xe8] sm:$0x1] %v1395
      %v1397 = vld [vmem:[%s1291 + $0xf0] sm:$0xf]
      %v1398 = vsel %vm800, %v1232, %v1397
      %1399 = vst [vmem:[%s1291 + $0xf0] sm:$0xf] %v1398
      %1400 = vst.msk [vmem:[%s1291 + $0xf4] sm:$0xf] %vm731, %v1241
      %v1401 = vld [vmem:[%s1291 + $0xf8] sm:$0x1]
      %v1402 = vsel %vm743, %v1242, %v1401
      %1403 = vst [vmem:[%s1291 + $0xf8] sm:$0x1] %v1402
      %v1404 = vld [vmem:[#allocation2] sm:$0xf]
      %v1405 = vld [vmem:[#allocation2 + $0x4] sm:$0xf]
      %v1406 = vld [vmem:[#allocation2 + $0x8] sm:$0xf]
      %v1407 = vld [vmem:[#allocation2 + $0x10] sm:$0xf]
      %v1408 = vld [vmem:[#allocation2 + $0x14] sm:$0xf]
      %v1409 = vld [vmem:[#allocation2 + $0x18] sm:$0xf]
      %v1410 = vld [vmem:[#allocation2 + $0x20] sm:$0xf]
      %v1411 = vld [vmem:[#allocation2 + $0x24] sm:$0xf]
      %v1412 = vld [vmem:[#allocation2 + $0x28] sm:$0xf]
      %v1413 = vld [vmem:[#allocation2 + $0x30] sm:$0xf]
      %v1414 = vld [vmem:[#allocation2 + $0x34] sm:$0xf]
      %v1415 = vld [vmem:[#allocation2 + $0x38] sm:$0xf]
      %v1416 = vld [vmem:[#allocation2 + $0x40] sm:$0xf]
      %v1417 = vld [vmem:[#allocation2 + $0x44] sm:$0xf]
      %v1418 = vld [vmem:[#allocation2 + $0x48] sm:$0xf]
      %v1419 = vld [vmem:[#allocation2 + $0x50] sm:$0xf]
      %v1420 = vld [vmem:[#allocation2 + $0x54] sm:$0xf]
      %v1421 = vld [vmem:[#allocation2 + $0x58] sm:$0xf]
      %v1422 = vld [vmem:[#allocation2 + $0x60] sm:$0xf]
      %v1423 = vld [vmem:[#allocation2 + $0x64] sm:$0xf]
      %v1424 = vld [vmem:[#allocation2 + $0x68] sm:$0xf]
      %v1425 = vld [vmem:[#allocation2 + $0x70] sm:$0xf]
      %v1426 = vld [vmem:[#allocation2 + $0x74] sm:$0xf]
      %v1427 = vld [vmem:[#allocation2 + $0x78] sm:$0xf]
      %v1428 = vld [vmem:[#allocation2 + $0x80] sm:$0xf]
      %v1429 = vld [vmem:[#allocation2 + $0x84] sm:$0xf]
      %v1430 = vld [vmem:[#allocation2 + $0x88] sm:$0xf]
      %v1431 = vld [vmem:[#allocation2 + $0x90] sm:$0xf]
      %v1432 = vld [vmem:[#allocation2 + $0x94] sm:$0xf]
      %v1433 = vld [vmem:[#allocation2 + $0x98] sm:$0xf]
      %v1434 = vld [vmem:[#allocation2 + $0xa0] sm:$0xf]
      %v1435 = vld [vmem:[#allocation2 + $0xa4] sm:$0xf]
      %v1436 = vld [vmem:[#allocation2 + $0xa8] sm:$0xf]
      %v1437 = vld [vmem:[#allocation2 + $0xb0] sm:$0xf]
      %v1438 = vld [vmem:[#allocation2 + $0xb4] sm:$0xf]
      %v1439 = vld [vmem:[#allocation2 + $0xb8] sm:$0xf]
      %v1440 = vld [vmem:[#allocation2 + $0xc0] sm:$0xf]
      %v1441 = vld [vmem:[#allocation2 + $0xc4] sm:$0xf]
      %v1442 = vld [vmem:[#allocation2 + $0xc8] sm:$0xf]
      %v1443 = vld [vmem:[#allocation2 + $0xd0] sm:$0xf]
      %v1444 = vld [vmem:[#allocation2 + $0xd4] sm:$0xf]
      %v1445 = vld [vmem:[#allocation2 + $0xd8] sm:$0xf]
      %v1446 = vld [vmem:[#allocation2 + $0xe0] sm:$0xf]
      %v1447 = vld [vmem:[#allocation2 + $0xe4] sm:$0xf]
      %v1448 = vld [vmem:[#allocation2 + $0xe8] sm:$0xf]
      %v1449 = vld [vmem:[#allocation2 + $0xf0] sm:$0xf]
      %v1450 = vld [vmem:[#allocation2 + $0xf4] sm:$0xf]
      %v1451 = vld [vmem:[#allocation2 + $0xf8] sm:$0xf]
      %v1452 = vld [vmem:[#allocation2 + $0x100] sm:$0xf]
      %v1453 = vld [vmem:[#allocation2 + $0x104] sm:$0xf]
      %v1454 = vld [vmem:[#allocation2 + $0x108] sm:$0xf]
      %v1455 = vld [vmem:[#allocation2 + $0x110] sm:$0xf]
      %v1456 = vld [vmem:[#allocation2 + $0x114] sm:$0xf]
      %v1457 = vld [vmem:[#allocation2 + $0x118] sm:$0xf]
      %v1458 = vld [vmem:[%s3] sm:$0x3]
      %vm1459 = vsmask.f32 3328
      %vm1460 = vsmask.f32 7440
      %vm1461 = vmor %vm1459, %vm1460
      %v1463 = vshrl.u32 %v1404, 16
      %v1465 = vrot.slane %v1463, 4
      %v1466 = vshll.u32 %v1404, 16
      %v1468 = vrot.slane %v1466, 5
      %v1469 = vor.u32 %v1465, %v1468
      %v1470 = vrot.slane %v1469, 4
      %v1472 = vshll.u32 %v1405, 16
      %v1474 = vrot.slane %v1472, 5
      %v1475 = vsel %vm1461, %v1470, %v1474
      %v1476 = vshrl.u32 %v1405, 16
      %v1478 = vrot.slane %v1476, 4
      %v1479 = vor.u32 %v1478, %v1474
      %v1480 = vrot.slane %v1479, 4
      %v1482 = vshll.u32 %v1406, 16
      %v1484 = vrot.slane %v1482, 5
      %v1485 = vsel %vm1461, %v1480, %v1484
      %v1487 = vshrl.u32 %v1407, 16
      %v1489 = vrot.slane %v1487, 4
      %v1490 = vshll.u32 %v1407, 16
      %v1492 = vrot.slane %v1490, 5
      %v1493 = vor.u32 %v1489, %v1492
      %v1494 = vrot.slane %v1493, 4
      %v1496 = vshll.u32 %v1408, 16
      %v1498 = vrot.slane %v1496, 5
      %v1499 = vsel %vm1461, %v1494, %v1498
      %v1500 = vshrl.u32 %v1408, 16
      %v1502 = vrot.slane %v1500, 4
      %v1503 = vor.u32 %v1502, %v1498
      %v1504 = vrot.slane %v1503, 4
      %v1506 = vshll.u32 %v1409, 16
      %v1508 = vrot.slane %v1506, 5
      %v1509 = vsel %vm1461, %v1504, %v1508
      %v1511 = vshrl.u32 %v1410, 16
      %v1513 = vrot.slane %v1511, 4
      %v1514 = vshll.u32 %v1410, 16
      %v1516 = vrot.slane %v1514, 5
      %v1517 = vor.u32 %v1513, %v1516
      %v1518 = vrot.slane %v1517, 4
      %v1520 = vshll.u32 %v1411, 16
      %v1522 = vrot.slane %v1520, 5
      %v1523 = vsel %vm1461, %v1518, %v1522
      %v1524 = vshrl.u32 %v1411, 16
      %v1526 = vrot.slane %v1524, 4
      %v1527 = vor.u32 %v1526, %v1522
      %v1528 = vrot.slane %v1527, 4
      %v1530 = vshll.u32 %v1412, 16
      %v1532 = vrot.slane %v1530, 5
      %v1533 = vsel %vm1461, %v1528, %v1532
      %v1535 = vshrl.u32 %v1413, 16
      %v1537 = vrot.slane %v1535, 4
      %v1538 = vshll.u32 %v1413, 16
      %v1540 = vrot.slane %v1538, 5
      %v1541 = vor.u32 %v1537, %v1540
      %v1542 = vrot.slane %v1541, 4
      %v1544 = vshll.u32 %v1414, 16
      %v1546 = vrot.slane %v1544, 5
      %v1547 = vsel %vm1461, %v1542, %v1546
      %v1548 = vshrl.u32 %v1414, 16
      %v1550 = vrot.slane %v1548, 4
      %v1551 = vor.u32 %v1550, %v1546
      %v1552 = vrot.slane %v1551, 4
      %v1554 = vshll.u32 %v1415, 16
      %v1556 = vrot.slane %v1554, 5
      %v1557 = vsel %vm1461, %v1552, %v1556
      %v1559 = vshrl.u32 %v1416, 16
      %v1561 = vrot.slane %v1559, 4
      %v1562 = vshll.u32 %v1416, 16
      %v1564 = vrot.slane %v1562, 5
      %v1565 = vor.u32 %v1561, %v1564
      %v1566 = vrot.slane %v1565, 4
      %v1568 = vshll.u32 %v1417, 16
      %v1570 = vrot.slane %v1568, 5
      %v1571 = vsel %vm1461, %v1566, %v1570
      %v1572 = vshrl.u32 %v1417, 16
      %v1574 = vrot.slane %v1572, 4
      %v1575 = vor.u32 %v1574, %v1570
      %v1576 = vrot.slane %v1575, 4
      %v1578 = vshll.u32 %v1418, 16
      %v1580 = vrot.slane %v1578, 5
      %v1581 = vsel %vm1461, %v1576, %v1580
      %v1583 = vshrl.u32 %v1419, 16
      %v1585 = vrot.slane %v1583, 4
      %v1586 = vshll.u32 %v1419, 16
      %v1588 = vrot.slane %v1586, 5
      %v1589 = vor.u32 %v1585, %v1588
      %v1590 = vrot.slane %v1589, 4
      %v1592 = vshll.u32 %v1420, 16
      %v1594 = vrot.slane %v1592, 5
      %v1595 = vsel %vm1461, %v1590, %v1594
      %v1596 = vshrl.u32 %v1420, 16
      %v1598 = vrot.slane %v1596, 4
      %v1599 = vor.u32 %v1598, %v1594
      %v1600 = vrot.slane %v1599, 4
      %v1602 = vshll.u32 %v1421, 16
      %v1604 = vrot.slane %v1602, 5
      %v1605 = vsel %vm1461, %v1600, %v1604
      %v1607 = vshrl.u32 %v1422, 16
      %v1609 = vrot.slane %v1607, 4
      %v1610 = vshll.u32 %v1422, 16
      %v1612 = vrot.slane %v1610, 5
      %v1613 = vor.u32 %v1609, %v1612
      %v1614 = vrot.slane %v1613, 4
      %v1616 = vshll.u32 %v1423, 16
      %v1618 = vrot.slane %v1616, 5
      %v1619 = vsel %vm1461, %v1614, %v1618
      %v1620 = vshrl.u32 %v1423, 16
      %v1622 = vrot.slane %v1620, 4
      %v1623 = vor.u32 %v1622, %v1618
      %v1624 = vrot.slane %v1623, 4
      %v1626 = vshll.u32 %v1424, 16
      %v1628 = vrot.slane %v1626, 5
      %v1629 = vsel %vm1461, %v1624, %v1628
      %v1631 = vshrl.u32 %v1425, 16
      %v1633 = vrot.slane %v1631, 4
      %v1634 = vshll.u32 %v1425, 16
      %v1636 = vrot.slane %v1634, 5
      %v1637 = vor.u32 %v1633, %v1636
      %v1638 = vrot.slane %v1637, 4
      %v1640 = vshll.u32 %v1426, 16
      %v1642 = vrot.slane %v1640, 5
      %v1643 = vsel %vm1461, %v1638, %v1642
      %v1644 = vshrl.u32 %v1426, 16
      %v1646 = vrot.slane %v1644, 4
      %v1647 = vor.u32 %v1646, %v1642
      %v1648 = vrot.slane %v1647, 4
      %v1650 = vshll.u32 %v1427, 16
      %v1652 = vrot.slane %v1650, 5
      %v1653 = vsel %vm1461, %v1648, %v1652
      %v1655 = vshrl.u32 %v1428, 16
      %v1657 = vrot.slane %v1655, 4
      %v1658 = vshll.u32 %v1428, 16
      %v1660 = vrot.slane %v1658, 5
      %v1661 = vor.u32 %v1657, %v1660
      %v1662 = vrot.slane %v1661, 4
      %v1664 = vshll.u32 %v1429, 16
      %v1666 = vrot.slane %v1664, 5
      %v1667 = vsel %vm1461, %v1662, %v1666
      %v1668 = vshrl.u32 %v1429, 16
      %v1670 = vrot.slane %v1668, 4
      %v1671 = vor.u32 %v1670, %v1666
      %v1672 = vrot.slane %v1671, 4
      %v1674 = vshll.u32 %v1430, 16
      %v1676 = vrot.slane %v1674, 5
      %v1677 = vsel %vm1461, %v1672, %v1676
      %v1679 = vshrl.u32 %v1431, 16
      %v1681 = vrot.slane %v1679, 4
      %v1682 = vshll.u32 %v1431, 16
      %v1684 = vrot.slane %v1682, 5
      %v1685 = vor.u32 %v1681, %v1684
      %v1686 = vrot.slane %v1685, 4
      %v1688 = vshll.u32 %v1432, 16
      %v1690 = vrot.slane %v1688, 5
      %v1691 = vsel %vm1461, %v1686, %v1690
      %v1692 = vshrl.u32 %v1432, 16
      %v1694 = vrot.slane %v1692, 4
      %v1695 = vor.u32 %v1694, %v1690
      %v1696 = vrot.slane %v1695, 4
      %v1698 = vshll.u32 %v1433, 16
      %v1700 = vrot.slane %v1698, 5
      %v1701 = vsel %vm1461, %v1696, %v1700
      %v1703 = vshrl.u32 %v1434, 16
      %v1705 = vrot.slane %v1703, 4
      %v1706 = vshll.u32 %v1434, 16
      %v1708 = vrot.slane %v1706, 5
      %v1709 = vor.u32 %v1705, %v1708
      %v1710 = vrot.slane %v1709, 4
      %v1712 = vshll.u32 %v1435, 16
      %v1714 = vrot.slane %v1712, 5
      %v1715 = vsel %vm1461, %v1710, %v1714
      %v1716 = vshrl.u32 %v1435, 16
      %v1718 = vrot.slane %v1716, 4
      %v1719 = vor.u32 %v1718, %v1714
      %v1720 = vrot.slane %v1719, 4
      %v1722 = vshll.u32 %v1436, 16
      %v1724 = vrot.slane %v1722, 5
      %v1725 = vsel %vm1461, %v1720, %v1724
      %v1727 = vshrl.u32 %v1437, 16
      %v1729 = vrot.slane %v1727, 4
      %v1730 = vshll.u32 %v1437, 16
      %v1732 = vrot.slane %v1730, 5
      %v1733 = vor.u32 %v1729, %v1732
      %v1734 = vrot.slane %v1733, 4
      %v1736 = vshll.u32 %v1438, 16
      %v1738 = vrot.slane %v1736, 5
      %v1739 = vsel %vm1461, %v1734, %v1738
      %v1740 = vshrl.u32 %v1438, 16
      %v1742 = vrot.slane %v1740, 4
      %v1743 = vor.u32 %v1742, %v1738
      %v1744 = vrot.slane %v1743, 4
      %v1746 = vshll.u32 %v1439, 16
      %v1748 = vrot.slane %v1746, 5
      %v1749 = vsel %vm1461, %v1744, %v1748
      %v1751 = vshrl.u32 %v1440, 16
      %v1753 = vrot.slane %v1751, 4
      %v1754 = vshll.u32 %v1440, 16
      %v1756 = vrot.slane %v1754, 5
      %v1757 = vor.u32 %v1753, %v1756
      %v1758 = vrot.slane %v1757, 4
      %v1760 = vshll.u32 %v1441, 16
      %v1762 = vrot.slane %v1760, 5
      %v1763 = vsel %vm1461, %v1758, %v1762
      %v1764 = vshrl.u32 %v1441, 16
      %v1766 = vrot.slane %v1764, 4
      %v1767 = vor.u32 %v1766, %v1762
      %v1768 = vrot.slane %v1767, 4
      %v1770 = vshll.u32 %v1442, 16
      %v1772 = vrot.slane %v1770, 5
      %v1773 = vsel %vm1461, %v1768, %v1772
      %v1775 = vshrl.u32 %v1443, 16
      %v1777 = vrot.slane %v1775, 4
      %v1778 = vshll.u32 %v1443, 16
      %v1780 = vrot.slane %v1778, 5
      %v1781 = vor.u32 %v1777, %v1780
      %v1782 = vrot.slane %v1781, 4
      %v1784 = vshll.u32 %v1444, 16
      %v1786 = vrot.slane %v1784, 5
      %v1787 = vsel %vm1461, %v1782, %v1786
      %v1788 = vshrl.u32 %v1444, 16
      %v1790 = vrot.slane %v1788, 4
      %v1791 = vor.u32 %v1790, %v1786
      %v1792 = vrot.slane %v1791, 4
      %v1794 = vshll.u32 %v1445, 16
      %v1796 = vrot.slane %v1794, 5
      %v1797 = vsel %vm1461, %v1792, %v1796
      %v1799 = vshrl.u32 %v1446, 16
      %v1801 = vrot.slane %v1799, 4
      %v1802 = vshll.u32 %v1446, 16
      %v1804 = vrot.slane %v1802, 5
      %v1805 = vor.u32 %v1801, %v1804
      %v1806 = vrot.slane %v1805, 4
      %v1808 = vshll.u32 %v1447, 16
      %v1810 = vrot.slane %v1808, 5
      %v1811 = vsel %vm1461, %v1806, %v1810
      %v1812 = vshrl.u32 %v1447, 16
      %v1814 = vrot.slane %v1812, 4
      %v1815 = vor.u32 %v1814, %v1810
      %v1816 = vrot.slane %v1815, 4
      %v1818 = vshll.u32 %v1448, 16
      %v1820 = vrot.slane %v1818, 5
      %v1821 = vsel %vm1461, %v1816, %v1820
      %v1823 = vshrl.u32 %v1449, 16
      %v1825 = vrot.slane %v1823, 4
      %v1826 = vshll.u32 %v1449, 16
      %v1828 = vrot.slane %v1826, 5
      %v1829 = vor.u32 %v1825, %v1828
      %v1830 = vrot.slane %v1829, 4
      %v1832 = vshll.u32 %v1450, 16
      %v1834 = vrot.slane %v1832, 5
      %v1835 = vsel %vm1461, %v1830, %v1834
      %v1836 = vshrl.u32 %v1450, 16
      %v1838 = vrot.slane %v1836, 4
      %v1839 = vor.u32 %v1838, %v1834
      %v1840 = vrot.slane %v1839, 4
      %v1842 = vshll.u32 %v1451, 16
      %v1844 = vrot.slane %v1842, 5
      %v1845 = vsel %vm1461, %v1840, %v1844
      %s1846 = scalar_lea.vmem %s3, 2
      %v1847 = vld [vmem:[%s1846] sm:$0x3]
      %v1848 = vunpack.c.l.b16 %v1475
      %v1849 = vunpack.c.l.b16 %v1485
      %v1850 = vunpack.c.l.b16 %v1499
      %v1851 = vunpack.c.l.b16 %v1509
      %v1852 = vunpack.c.l.b16 %v1523
      %v1853 = vunpack.c.l.b16 %v1533
      %v1854 = vunpack.c.l.b16 %v1547
      %v1855 = vunpack.c.l.b16 %v1557
      %v1856 = vunpack.c.l.b16 %v1571
      %v1857 = vunpack.c.l.b16 %v1581
      %v1858 = vunpack.c.l.b16 %v1595
      %v1859 = vunpack.c.l.b16 %v1605
      %v1860 = vunpack.c.l.b16 %v1619
      %v1861 = vunpack.c.l.b16 %v1629
      %v1862 = vunpack.c.l.b16 %v1643
      %v1863 = vunpack.c.l.b16 %v1653
      %v1864 = vunpack.c.l.b16 %v1667
      %v1865 = vunpack.c.l.b16 %v1677
      %v1866 = vunpack.c.l.b16 %v1691
      %v1867 = vunpack.c.l.b16 %v1701
      %v1868 = vunpack.c.l.b16 %v1715
      %v1869 = vunpack.c.l.b16 %v1725
      %v1870 = vunpack.c.l.b16 %v1739
      %v1871 = vunpack.c.l.b16 %v1749
      %v1872 = vunpack.c.l.b16 %v1763
      %v1873 = vunpack.c.l.b16 %v1773
      %v1874 = vunpack.c.l.b16 %v1787
      %v1875 = vunpack.c.l.b16 %v1797
      %v1876 = vunpack.c.l.b16 %v1811
      %v1877 = vunpack.c.l.b16 %v1821
      %v1878 = vunpack.c.l.b16 %v1835
      %v1879 = vunpack.c.l.b16 %v1845
      %v1880 = vpack.c.b16 %v1849, %v1848
      %v1881 = vpack.c.b16 %v1851, %v1850
      %v1882 = vpack.c.b16 %v1853, %v1852
      %v1883 = vpack.c.b16 %v1855, %v1854
      %v1884 = vpack.c.b16 %v1857, %v1856
      %v1885 = vpack.c.b16 %v1859, %v1858
      %v1886 = vpack.c.b16 %v1861, %v1860
      %v1887 = vpack.c.b16 %v1863, %v1862
      %v1888 = vpack.c.b16 %v1865, %v1864
      %v1889 = vpack.c.b16 %v1867, %v1866
      %v1890 = vpack.c.b16 %v1869, %v1868
      %v1891 = vpack.c.b16 %v1871, %v1870
      %v1892 = vpack.c.b16 %v1873, %v1872
      %v1893 = vpack.c.b16 %v1875, %v1874
      %v1894 = vpack.c.b16 %v1877, %v1876
      %v1895 = vpack.c.b16 %v1879, %v1878
      %vm1896 = vcmask 31744
      %v1898 = vsel %vm1896, %v1880, 0
      %v1901 = vsel %vm1896, %v1881, 0
      %v1904 = vsel %vm1896, %v1882, 0
      %v1907 = vsel %vm1896, %v1883, 0
      %v1910 = vsel %vm1896, %v1884, 0
      %v1913 = vsel %vm1896, %v1885, 0
      %v1916 = vsel %vm1896, %v1886, 0
      %v1919 = vsel %vm1896, %v1887, 0
      %v1922 = vsel %vm1896, %v1888, 0
      %v1925 = vsel %vm1896, %v1889, 0
      %v1928 = vsel %vm1896, %v1890, 0
      %v1931 = vsel %vm1896, %v1891, 0
      %v1934 = vsel %vm1896, %v1892, 0
      %v1937 = vsel %vm1896, %v1893, 0
      %v1940 = vsel %vm1896, %v1894, 0
      %v1943 = vsel %vm1896, %v1895, 0
      %vm1945 = vcmask 1041408
      %v1947 = vsel %vm1945, %v1847, 0
      %1949 = vmatprep.subr.bf16.mxu0 0
      %1950 = vmatpush1.bf16.msra.mxu0 0
      %1951 = vmatprep.subr.bf16.mxu0 0
      %1952 = vmatpush1.bf16.msra.mxu0 0
      %1953 = vmatprep.subr.bf16.mxu0 0
      %1954 = vmatpush1.bf16.msra.mxu0 0
      %1955 = vmatprep.subr.bf16.mxu0 0
      %1956 = vmatpush1.bf16.msra.mxu0 0
      %1957 = vmatprep.subr.bf16.mxu0 0
      %1958 = vmatpush1.bf16.msra.mxu0 0
      %1959 = vmatprep.subr.bf16.mxu0 0
      %1960 = vmatpush1.bf16.msra.mxu0 0
      %1961 = vmatprep.subr.bf16.mxu0 0
      %1962 = vmatpush1.bf16.msra.mxu0 0
      %1963 = vmatprep.subr.bf16.mxu0 0
      %1964 = vmatpush1.bf16.msra.mxu0 %v1947
      %1965 = vmatprep.subr.bf16.mxu0 0
      %1966 = vmatpush2.bf16.msra.mxu0 0
      %1967 = vmatprep.subr.bf16.mxu0 0
      %1968 = vmatpush2.bf16.msra.mxu0 0
      %1969 = vmatprep.subr.bf16.mxu0 0
      %1970 = vmatpush2.bf16.msra.mxu0 0
      %1971 = vmatprep.subr.bf16.mxu0 0
      %1972 = vmatpush2.bf16.msra.mxu0 0
      %1973 = vmatprep.subr.bf16.mxu0 0
      %1974 = vmatpush2.bf16.msra.mxu0 0
      %1975 = vmatprep.subr.bf16.mxu0 0
      %1976 = vmatpush2.bf16.msra.mxu0 0
      %1977 = vmatprep.subr.bf16.mxu0 0
      %1978 = vmatpush2.bf16.msra.mxu0 0
      %1979 = vmatprep.subr.bf16.mxu0 0
      %1980 = vmatpush2.bf16.msra.mxu0 0
      %1981 = vmatprep.mubr.bf16.mxu0 0
      %1982 = vmatmul.mubr.bf16.gmra.mxu0 %v1898
      %v1983 = vpop.f32.mrf.mxu0
      %v1984 = vadd.f32 0.0, %v1983
      %v1985 = vpop.f32.mrf.mxu0
      %v1986 = vpop.f32.mrf.mxu0
      %v1987 = vadd.f32 0.0, %v1986
      %v1988 = vpop.f32.mrf.mxu0
      %1989 = vmatprep.mubr.bf16.mxu0 0
      %1990 = vmatmul.mubr.bf16.gmra.mxu0 %v1901
      %v1991 = vpop.f32.mrf.mxu0
      %v1992 = vadd.f32 0.0, %v1991
      %v1993 = vpop.f32.mrf.mxu0
      %v1994 = vpop.f32.mrf.mxu0
      %v1995 = vadd.f32 0.0, %v1994
      %v1996 = vpop.f32.mrf.mxu0
      %1997 = vmatprep.mubr.bf16.mxu0 0
      %1998 = vmatmul.mubr.bf16.gmra.mxu0 %v1904
      %v1999 = vpop.f32.mrf.mxu0
      %v2000 = vadd.f32 0.0, %v1999
      %v2001 = vpop.f32.mrf.mxu0
      %v2002 = vpop.f32.mrf.mxu0
      %v2003 = vadd.f32 0.0, %v2002
      %v2004 = vpop.f32.mrf.mxu0
      %2005 = vmatprep.mubr.bf16.mxu0 0
      %2006 = vmatmul.mubr.bf16.gmra.mxu0 %v1907
      %v2007 = vpop.f32.mrf.mxu0
      %v2008 = vadd.f32 0.0, %v2007
      %v2009 = vpop.f32.mrf.mxu0
      %v2010 = vpop.f32.mrf.mxu0
      %v2011 = vadd.f32 0.0, %v2010
      %v2012 = vpop.f32.mrf.mxu0
      %2013 = vmatprep.mubr.bf16.mxu0 0
      %2014 = vmatmul.mubr.bf16.gmra.mxu0 %v1910
      %v2015 = vpop.f32.mrf.mxu0
      %v2016 = vadd.f32 0.0, %v2015
      %v2017 = vpop.f32.mrf.mxu0
      %v2018 = vpop.f32.mrf.mxu0
      %v2019 = vadd.f32 0.0, %v2018
      %v2020 = vpop.f32.mrf.mxu0
      %2021 = vmatprep.mubr.bf16.mxu0 0
      %2022 = vmatmul.mubr.bf16.gmra.mxu0 %v1913
      %v2023 = vpop.f32.mrf.mxu0
      %v2024 = vadd.f32 0.0, %v2023
      %v2025 = vpop.f32.mrf.mxu0
      %v2026 = vpop.f32.mrf.mxu0
      %v2027 = vadd.f32 0.0, %v2026
      %v2028 = vpop.f32.mrf.mxu0
      %2029 = vmatprep.mubr.bf16.mxu0 0
      %2030 = vmatmul.mubr.bf16.gmra.mxu0 %v1916
      %v2031 = vpop.f32.mrf.mxu0
      %v2032 = vadd.f32 0.0, %v2031
      %v2033 = vpop.f32.mrf.mxu0
      %v2034 = vpop.f32.mrf.mxu0
      %v2035 = vadd.f32 0.0, %v2034
      %v2036 = vpop.f32.mrf.mxu0
      %2037 = vmatprep.mubr.bf16.mxu0 0
      %2038 = vmatmul.mubr.bf16.gmra.mxu0 %v1919
      %v2039 = vpop.f32.mrf.mxu0
      %v2040 = vadd.f32 0.0, %v2039
      %v2041 = vpop.f32.mrf.mxu0
      %v2042 = vpop.f32.mrf.mxu0
      %v2043 = vadd.f32 0.0, %v2042
      %v2044 = vpop.f32.mrf.mxu0
      %2045 = vmatprep.mubr.bf16.mxu0 0
      %2046 = vmatmul.mubr.bf16.gmra.mxu0 %v1922
      %v2047 = vpop.f32.mrf.mxu0
      %v2048 = vadd.f32 0.0, %v2047
      %v2049 = vpop.f32.mrf.mxu0
      %v2050 = vpop.f32.mrf.mxu0
      %v2051 = vadd.f32 0.0, %v2050
      %v2052 = vpop.f32.mrf.mxu0
      %2053 = vmatprep.mubr.bf16.mxu0 0
      %2054 = vmatmul.mubr.bf16.gmra.mxu0 %v1925
      %v2055 = vpop.f32.mrf.mxu0
      %v2056 = vadd.f32 0.0, %v2055
      %v2057 = vpop.f32.mrf.mxu0
      %v2058 = vpop.f32.mrf.mxu0
      %v2059 = vadd.f32 0.0, %v2058
      %v2060 = vpop.f32.mrf.mxu0
      %2061 = vmatprep.mubr.bf16.mxu0 0
      %2062 = vmatmul.mubr.bf16.gmra.mxu0 %v1928
      %v2063 = vpop.f32.mrf.mxu0
      %v2064 = vadd.f32 0.0, %v2063
      %v2065 = vpop.f32.mrf.mxu0
      %v2066 = vpop.f32.mrf.mxu0
      %v2067 = vadd.f32 0.0, %v2066
      %v2068 = vpop.f32.mrf.mxu0
      %2069 = vmatprep.mubr.bf16.mxu0 0
      %2070 = vmatmul.mubr.bf16.gmra.mxu0 %v1931
      %v2071 = vpop.f32.mrf.mxu0
      %v2072 = vadd.f32 0.0, %v2071
      %v2073 = vpop.f32.mrf.mxu0
      %v2074 = vpop.f32.mrf.mxu0
      %v2075 = vadd.f32 0.0, %v2074
      %v2076 = vpop.f32.mrf.mxu0
      %2077 = vmatprep.mubr.bf16.mxu0 0
      %2078 = vmatmul.mubr.bf16.gmra.mxu0 %v1934
      %v2079 = vpop.f32.mrf.mxu0
      %v2080 = vadd.f32 0.0, %v2079
      %v2081 = vpop.f32.mrf.mxu0
      %v2082 = vpop.f32.mrf.mxu0
      %v2083 = vadd.f32 0.0, %v2082
      %v2084 = vpop.f32.mrf.mxu0
      %2085 = vmatprep.mubr.bf16.mxu0 0
      %2086 = vmatmul.mubr.bf16.gmra.mxu0 %v1937
      %v2087 = vpop.f32.mrf.mxu0
      %v2088 = vadd.f32 0.0, %v2087
      %v2089 = vpop.f32.mrf.mxu0
      %v2090 = vpop.f32.mrf.mxu0
      %v2091 = vadd.f32 0.0, %v2090
      %v2092 = vpop.f32.mrf.mxu0
      %2093 = vmatprep.mubr.bf16.mxu0 0
      %2094 = vmatmul.mubr.bf16.gmra.mxu0 %v1940
      %v2095 = vpop.f32.mrf.mxu0
      %v2096 = vadd.f32 0.0, %v2095
      %v2097 = vpop.f32.mrf.mxu0
      %v2098 = vpop.f32.mrf.mxu0
      %v2099 = vadd.f32 0.0, %v2098
      %v2100 = vpop.f32.mrf.mxu0
      %2101 = vmatprep.mubr.bf16.mxu0 0
      %2102 = vmatmul.mubr.bf16.gmra.mxu0 %v1943
      %v2103 = vpop.f32.mrf.mxu0
      %v2104 = vadd.f32 0.0, %v2103
      %v2105 = vpop.f32.mrf.mxu0
      %v2106 = vpop.f32.mrf.mxu0
      %v2107 = vadd.f32 0.0, %v2106
      %v2108 = vpop.f32.mrf.mxu0
      %2109 = vdwg.mxu0
      %v2142 = vunpack.c.l.b16 %v1404
      %v2143 = vunpack.c.l.b16 %v1405
      %v2144 = vunpack.c.l.b16 %v1407
      %v2145 = vunpack.c.l.b16 %v1408
      %v2146 = vunpack.c.l.b16 %v1410
      %v2147 = vunpack.c.l.b16 %v1411
      %v2148 = vunpack.c.l.b16 %v1413
      %v2149 = vunpack.c.l.b16 %v1414
      %v2150 = vunpack.c.l.b16 %v1416
      %v2151 = vunpack.c.l.b16 %v1417
      %v2152 = vunpack.c.l.b16 %v1419
      %v2153 = vunpack.c.l.b16 %v1420
      %v2154 = vunpack.c.l.b16 %v1422
      %v2155 = vunpack.c.l.b16 %v1423
      %v2156 = vunpack.c.l.b16 %v1425
      %v2157 = vunpack.c.l.b16 %v1426
      %v2158 = vunpack.c.l.b16 %v1428
      %v2159 = vunpack.c.l.b16 %v1429
      %v2160 = vunpack.c.l.b16 %v1431
      %v2161 = vunpack.c.l.b16 %v1432
      %v2162 = vunpack.c.l.b16 %v1434
      %v2163 = vunpack.c.l.b16 %v1435
      %v2164 = vunpack.c.l.b16 %v1437
      %v2165 = vunpack.c.l.b16 %v1438
      %v2166 = vunpack.c.l.b16 %v1440
      %v2167 = vunpack.c.l.b16 %v1441
      %v2168 = vunpack.c.l.b16 %v1443
      %v2169 = vunpack.c.l.b16 %v1444
      %v2170 = vunpack.c.l.b16 %v1446
      %v2171 = vunpack.c.l.b16 %v1447
      %v2172 = vunpack.c.l.b16 %v1449
      %v2173 = vunpack.c.l.b16 %v1450
      %v2174 = vpack.c.b16 %v2143, %v2142
      %v2175 = vpack.c.b16 %v2145, %v2144
      %v2176 = vpack.c.b16 %v2147, %v2146
      %v2177 = vpack.c.b16 %v2149, %v2148
      %v2178 = vpack.c.b16 %v2151, %v2150
      %v2179 = vpack.c.b16 %v2153, %v2152
      %v2180 = vpack.c.b16 %v2155, %v2154
      %v2181 = vpack.c.b16 %v2157, %v2156
      %v2182 = vpack.c.b16 %v2159, %v2158
      %v2183 = vpack.c.b16 %v2161, %v2160
      %v2184 = vpack.c.b16 %v2163, %v2162
      %v2185 = vpack.c.b16 %v2165, %v2164
      %v2186 = vpack.c.b16 %v2167, %v2166
      %v2187 = vpack.c.b16 %v2169, %v2168
      %v2188 = vpack.c.b16 %v2171, %v2170
      %v2189 = vpack.c.b16 %v2173, %v2172
      %v2191 = vsel %vm1896, %v2174, 0
      %v2194 = vsel %vm1896, %v2175, 0
      %v2197 = vsel %vm1896, %v2176, 0
      %v2200 = vsel %vm1896, %v2177, 0
      %v2203 = vsel %vm1896, %v2178, 0
      %v2206 = vsel %vm1896, %v2179, 0
      %v2209 = vsel %vm1896, %v2180, 0
      %v2212 = vsel %vm1896, %v2181, 0
      %v2215 = vsel %vm1896, %v2182, 0
      %v2218 = vsel %vm1896, %v2183, 0
      %v2221 = vsel %vm1896, %v2184, 0
      %v2224 = vsel %vm1896, %v2185, 0
      %v2227 = vsel %vm1896, %v2186, 0
      %v2230 = vsel %vm1896, %v2187, 0
      %v2233 = vsel %vm1896, %v2188, 0
      %v2236 = vsel %vm1896, %v2189, 0
      %v2239 = vsel %vm1945, %v1458, 0
      %2241 = vmatprep.subr.bf16.mxu0 0
      %2242 = vmatpush1.bf16.msra.mxu0 0
      %2243 = vmatprep.subr.bf16.mxu0 0
      %2244 = vmatpush1.bf16.msra.mxu0 0
      %2245 = vmatprep.subr.bf16.mxu0 0
      %2246 = vmatpush1.bf16.msra.mxu0 0
      %2247 = vmatprep.subr.bf16.mxu0 0
      %2248 = vmatpush1.bf16.msra.mxu0 0
      %2249 = vmatprep.subr.bf16.mxu0 0
      %2250 = vmatpush1.bf16.msra.mxu0 0
      %2251 = vmatprep.subr.bf16.mxu0 0
      %2252 = vmatpush1.bf16.msra.mxu0 0
      %2253 = vmatprep.subr.bf16.mxu0 0
      %2254 = vmatpush1.bf16.msra.mxu0 0
      %2255 = vmatprep.subr.bf16.mxu0 0
      %2256 = vmatpush1.bf16.msra.mxu0 %v2239
      %2257 = vmatprep.subr.bf16.mxu0 0
      %2258 = vmatpush2.bf16.msra.mxu0 0
      %2259 = vmatprep.subr.bf16.mxu0 0
      %2260 = vmatpush2.bf16.msra.mxu0 0
      %2261 = vmatprep.subr.bf16.mxu0 0
      %2262 = vmatpush2.bf16.msra.mxu0 0
      %2263 = vmatprep.subr.bf16.mxu0 0
      %2264 = vmatpush2.bf16.msra.mxu0 0
      %2265 = vmatprep.subr.bf16.mxu0 0
      %2266 = vmatpush2.bf16.msra.mxu0 0
      %2267 = vmatprep.subr.bf16.mxu0 0
      %2268 = vmatpush2.bf16.msra.mxu0 0
      %2269 = vmatprep.subr.bf16.mxu0 0
      %2270 = vmatpush2.bf16.msra.mxu0 0
      %2271 = vmatprep.subr.bf16.mxu0 0
      %2272 = vmatpush2.bf16.msra.mxu0 0
      %2273 = vmatprep.mubr.bf16.mxu0 0
      %2274 = vmatmul.mubr.bf16.gmra.mxu0 %v2191
      %v2275 = vpop.f32.mrf.mxu0
      %v2276 = vadd.f32 %v1984, %v2275
      %v2277 = vpop.f32.mrf.mxu0
      %v2278 = vpop.f32.mrf.mxu0
      %v2279 = vadd.f32 %v1987, %v2278
      %v2280 = vpop.f32.mrf.mxu0
      %2281 = vmatprep.mubr.bf16.mxu0 0
      %2282 = vmatmul.mubr.bf16.gmra.mxu0 %v2194
      %v2283 = vpop.f32.mrf.mxu0
      %v2284 = vadd.f32 %v1992, %v2283
      %v2285 = vpop.f32.mrf.mxu0
      %v2286 = vpop.f32.mrf.mxu0
      %v2287 = vadd.f32 %v1995, %v2286
      %v2288 = vpop.f32.mrf.mxu0
      %2289 = vmatprep.mubr.bf16.mxu0 0
      %2290 = vmatmul.mubr.bf16.gmra.mxu0 %v2197
      %v2291 = vpop.f32.mrf.mxu0
      %v2292 = vadd.f32 %v2000, %v2291
      %v2293 = vpop.f32.mrf.mxu0
      %v2294 = vpop.f32.mrf.mxu0
      %v2295 = vadd.f32 %v2003, %v2294
      %v2296 = vpop.f32.mrf.mxu0
      %2297 = vmatprep.mubr.bf16.mxu0 0
      %2298 = vmatmul.mubr.bf16.gmra.mxu0 %v2200
      %v2299 = vpop.f32.mrf.mxu0
      %v2300 = vadd.f32 %v2008, %v2299
      %v2301 = vpop.f32.mrf.mxu0
      %v2302 = vpop.f32.mrf.mxu0
      %v2303 = vadd.f32 %v2011, %v2302
      %v2304 = vpop.f32.mrf.mxu0
      %2305 = vmatprep.mubr.bf16.mxu0 0
      %2306 = vmatmul.mubr.bf16.gmra.mxu0 %v2203
      %v2307 = vpop.f32.mrf.mxu0
      %v2308 = vadd.f32 %v2016, %v2307
      %v2309 = vpop.f32.mrf.mxu0
      %v2310 = vpop.f32.mrf.mxu0
      %v2311 = vadd.f32 %v2019, %v2310
      %v2312 = vpop.f32.mrf.mxu0
      %2313 = vmatprep.mubr.bf16.mxu0 0
      %2314 = vmatmul.mubr.bf16.gmra.mxu0 %v2206
      %v2315 = vpop.f32.mrf.mxu0
      %v2316 = vadd.f32 %v2024, %v2315
      %v2317 = vpop.f32.mrf.mxu0
      %v2318 = vpop.f32.mrf.mxu0
      %v2319 = vadd.f32 %v2027, %v2318
      %v2320 = vpop.f32.mrf.mxu0
      %2321 = vmatprep.mubr.bf16.mxu0 0
      %2322 = vmatmul.mubr.bf16.gmra.mxu0 %v2209
      %v2323 = vpop.f32.mrf.mxu0
      %v2324 = vadd.f32 %v2032, %v2323
      %v2325 = vpop.f32.mrf.mxu0
      %v2326 = vpop.f32.mrf.mxu0
      %v2327 = vadd.f32 %v2035, %v2326
      %v2328 = vpop.f32.mrf.mxu0
      %2329 = vmatprep.mubr.bf16.mxu0 0
      %2330 = vmatmul.mubr.bf16.gmra.mxu0 %v2212
      %v2331 = vpop.f32.mrf.mxu0
      %v2332 = vadd.f32 %v2040, %v2331
      %v2333 = vpop.f32.mrf.mxu0
      %v2334 = vpop.f32.mrf.mxu0
      %v2335 = vadd.f32 %v2043, %v2334
      %v2336 = vpop.f32.mrf.mxu0
      %2337 = vmatprep.mubr.bf16.mxu0 0
      %2338 = vmatmul.mubr.bf16.gmra.mxu0 %v2215
      %v2339 = vpop.f32.mrf.mxu0
      %v2340 = vadd.f32 %v2048, %v2339
      %v2341 = vpop.f32.mrf.mxu0
      %v2342 = vpop.f32.mrf.mxu0
      %v2343 = vadd.f32 %v2051, %v2342
      %v2344 = vpop.f32.mrf.mxu0
      %2345 = vmatprep.mubr.bf16.mxu0 0
      %2346 = vmatmul.mubr.bf16.gmra.mxu0 %v2218
      %v2347 = vpop.f32.mrf.mxu0
      %v2348 = vadd.f32 %v2056, %v2347
      %v2349 = vpop.f32.mrf.mxu0
      %v2350 = vpop.f32.mrf.mxu0
      %v2351 = vadd.f32 %v2059, %v2350
      %v2352 = vpop.f32.mrf.mxu0
      %2353 = vmatprep.mubr.bf16.mxu0 0
      %2354 = vmatmul.mubr.bf16.gmra.mxu0 %v2221
      %v2355 = vpop.f32.mrf.mxu0
      %v2356 = vadd.f32 %v2064, %v2355
      %v2357 = vpop.f32.mrf.mxu0
      %v2358 = vpop.f32.mrf.mxu0
      %v2359 = vadd.f32 %v2067, %v2358
      %v2360 = vpop.f32.mrf.mxu0
      %2361 = vmatprep.mubr.bf16.mxu0 0
      %2362 = vmatmul.mubr.bf16.gmra.mxu0 %v2224
      %v2363 = vpop.f32.mrf.mxu0
      %v2364 = vadd.f32 %v2072, %v2363
      %v2365 = vpop.f32.mrf.mxu0
      %v2366 = vpop.f32.mrf.mxu0
      %v2367 = vadd.f32 %v2075, %v2366
      %v2368 = vpop.f32.mrf.mxu0
      %2369 = vmatprep.mubr.bf16.mxu0 0
      %2370 = vmatmul.mubr.bf16.gmra.mxu0 %v2227
      %v2371 = vpop.f32.mrf.mxu0
      %v2372 = vadd.f32 %v2080, %v2371
      %v2373 = vpop.f32.mrf.mxu0
      %v2374 = vpop.f32.mrf.mxu0
      %v2375 = vadd.f32 %v2083, %v2374
      %v2376 = vpop.f32.mrf.mxu0
      %2377 = vmatprep.mubr.bf16.mxu0 0
      %2378 = vmatmul.mubr.bf16.gmra.mxu0 %v2230
      %v2379 = vpop.f32.mrf.mxu0
      %v2380 = vadd.f32 %v2088, %v2379
      %v2381 = vpop.f32.mrf.mxu0
      %v2382 = vpop.f32.mrf.mxu0
      %v2383 = vadd.f32 %v2091, %v2382
      %v2384 = vpop.f32.mrf.mxu0
      %2385 = vmatprep.mubr.bf16.mxu0 0
      %2386 = vmatmul.mubr.bf16.gmra.mxu0 %v2233
      %v2387 = vpop.f32.mrf.mxu0
      %v2388 = vadd.f32 %v2096, %v2387
      %v2389 = vpop.f32.mrf.mxu0
      %v2390 = vpop.f32.mrf.mxu0
      %v2391 = vadd.f32 %v2099, %v2390
      %v2392 = vpop.f32.mrf.mxu0
      %2393 = vmatprep.mubr.bf16.mxu0 0
      %2394 = vmatmul.mubr.bf16.gmra.mxu0 %v2236
      %v2395 = vpop.f32.mrf.mxu0
      %v2396 = vadd.f32 %v2104, %v2395
      %v2397 = vpop.f32.mrf.mxu0
      %v2398 = vpop.f32.mrf.mxu0
      %v2399 = vadd.f32 %v2107, %v2398
      %v2400 = vpop.f32.mrf.mxu0
      %2401 = vdwg.mxu0
      %vm2418 = vcmask 1042432
      %vm2419 = vcmask 1046532
      %vm2420 = vmor %vm2418, %vm2419
      %v2421 = vrot.slane %v1404, 5
      %v2422 = vrot.slane %v2421, 4
      %v2423 = vrot.slane %v1405, 5
      %v2424 = vsel %vm2420, %v2422, %v2423
      %v2425 = vrot.slane %v2423, 4
      %v2426 = vrot.slane %v1406, 5
      %v2427 = vsel %vm2420, %v2425, %v2426
      %v2428 = vrot.slane %v1407, 5
      %v2429 = vrot.slane %v2428, 4
      %v2430 = vrot.slane %v1408, 5
      %v2431 = vsel %vm2420, %v2429, %v2430
      %v2432 = vrot.slane %v2430, 4
      %v2433 = vrot.slane %v1409, 5
      %v2434 = vsel %vm2420, %v2432, %v2433
      %v2435 = vrot.slane %v1410, 5
      %v2436 = vrot.slane %v2435, 4
      %v2437 = vrot.slane %v1411, 5
      %v2438 = vsel %vm2420, %v2436, %v2437
      %v2439 = vrot.slane %v2437, 4
      %v2440 = vrot.slane %v1412, 5
      %v2441 = vsel %vm2420, %v2439, %v2440
      %v2442 = vrot.slane %v1413, 5
      %v2443 = vrot.slane %v2442, 4
      %v2444 = vrot.slane %v1414, 5
      %v2445 = vsel %vm2420, %v2443, %v2444
      %v2446 = vrot.slane %v2444, 4
      %v2447 = vrot.slane %v1415, 5
      %v2448 = vsel %vm2420, %v2446, %v2447
      %v2449 = vrot.slane %v1416, 5
      %v2450 = vrot.slane %v2449, 4
      %v2451 = vrot.slane %v1417, 5
      %v2452 = vsel %vm2420, %v2450, %v2451
      %v2453 = vrot.slane %v2451, 4
      %v2454 = vrot.slane %v1418, 5
      %v2455 = vsel %vm2420, %v2453, %v2454
      %v2456 = vrot.slane %v1419, 5
      %v2457 = vrot.slane %v2456, 4
      %v2458 = vrot.slane %v1420, 5
      %v2459 = vsel %vm2420, %v2457, %v2458
      %v2460 = vrot.slane %v2458, 4
      %v2461 = vrot.slane %v1421, 5
      %v2462 = vsel %vm2420, %v2460, %v2461
      %v2463 = vrot.slane %v1422, 5
      %v2464 = vrot.slane %v2463, 4
      %v2465 = vrot.slane %v1423, 5
      %v2466 = vsel %vm2420, %v2464, %v2465
      %v2467 = vrot.slane %v2465, 4
      %v2468 = vrot.slane %v1424, 5
      %v2469 = vsel %vm2420, %v2467, %v2468
      %v2470 = vrot.slane %v1425, 5
      %v2471 = vrot.slane %v2470, 4
      %v2472 = vrot.slane %v1426, 5
      %v2473 = vsel %vm2420, %v2471, %v2472
      %v2474 = vrot.slane %v2472, 4
      %v2475 = vrot.slane %v1427, 5
      %v2476 = vsel %vm2420, %v2474, %v2475
      %v2477 = vrot.slane %v1428, 5
      %v2478 = vrot.slane %v2477, 4
      %v2479 = vrot.slane %v1429, 5
      %v2480 = vsel %vm2420, %v2478, %v2479
      %v2481 = vrot.slane %v2479, 4
      %v2482 = vrot.slane %v1430, 5
      %v2483 = vsel %vm2420, %v2481, %v2482
      %v2484 = vrot.slane %v1431, 5
      %v2485 = vrot.slane %v2484, 4
      %v2486 = vrot.slane %v1432, 5
      %v2487 = vsel %vm2420, %v2485, %v2486
      %v2488 = vrot.slane %v2486, 4
      %v2489 = vrot.slane %v1433, 5
      %v2490 = vsel %vm2420, %v2488, %v2489
      %v2491 = vrot.slane %v1434, 5
      %v2492 = vrot.slane %v2491, 4
      %v2493 = vrot.slane %v1435, 5
      %v2494 = vsel %vm2420, %v2492, %v2493
      %v2495 = vrot.slane %v2493, 4
      %v2496 = vrot.slane %v1436, 5
      %v2497 = vsel %vm2420, %v2495, %v2496
      %v2498 = vrot.slane %v1437, 5
      %v2499 = vrot.slane %v2498, 4
      %v2500 = vrot.slane %v1438, 5
      %v2501 = vsel %vm2420, %v2499, %v2500
      %v2502 = vrot.slane %v2500, 4
      %v2503 = vrot.slane %v1439, 5
      %v2504 = vsel %vm2420, %v2502, %v2503
      %v2505 = vrot.slane %v1440, 5
      %v2506 = vrot.slane %v2505, 4
      %v2507 = vrot.slane %v1441, 5
      %v2508 = vsel %vm2420, %v2506, %v2507
      %v2509 = vrot.slane %v2507, 4
      %v2510 = vrot.slane %v1442, 5
      %v2511 = vsel %vm2420, %v2509, %v2510
      %v2512 = vrot.slane %v1443, 5
      %v2513 = vrot.slane %v2512, 4
      %v2514 = vrot.slane %v1444, 5
      %v2515 = vsel %vm2420, %v2513, %v2514
      %v2516 = vrot.slane %v2514, 4
      %v2517 = vrot.slane %v1445, 5
      %v2518 = vsel %vm2420, %v2516, %v2517
      %v2519 = vrot.slane %v1446, 5
      %v2520 = vrot.slane %v2519, 4
      %v2521 = vrot.slane %v1447, 5
      %v2522 = vsel %vm2420, %v2520, %v2521
      %v2523 = vrot.slane %v2521, 4
      %v2524 = vrot.slane %v1448, 5
      %v2525 = vsel %vm2420, %v2523, %v2524
      %v2526 = vrot.slane %v1449, 5
      %v2527 = vrot.slane %v2526, 4
      %v2528 = vrot.slane %v1450, 5
      %v2529 = vsel %vm2420, %v2527, %v2528
      %v2530 = vrot.slane %v2528, 4
      %v2531 = vrot.slane %v1451, 5
      %v2532 = vsel %vm2420, %v2530, %v2531
      %s2533 = scalar_lea.vmem %s3, 4
      %v2534 = vld [vmem:[%s2533] sm:$0x3]
      %v2535 = vunpack.c.l.b16 %v2424
      %v2536 = vunpack.c.l.b16 %v2427
      %v2537 = vunpack.c.l.b16 %v2431
      %v2538 = vunpack.c.l.b16 %v2434
      %v2539 = vunpack.c.l.b16 %v2438
      %v2540 = vunpack.c.l.b16 %v2441
      %v2541 = vunpack.c.l.b16 %v2445
      %v2542 = vunpack.c.l.b16 %v2448
      %v2543 = vunpack.c.l.b16 %v2452
      %v2544 = vunpack.c.l.b16 %v2455
      %v2545 = vunpack.c.l.b16 %v2459
      %v2546 = vunpack.c.l.b16 %v2462
      %v2547 = vunpack.c.l.b16 %v2466
      %v2548 = vunpack.c.l.b16 %v2469
      %v2549 = vunpack.c.l.b16 %v2473
      %v2550 = vunpack.c.l.b16 %v2476
      %v2551 = vunpack.c.l.b16 %v2480
      %v2552 = vunpack.c.l.b16 %v2483
      %v2553 = vunpack.c.l.b16 %v2487
      %v2554 = vunpack.c.l.b16 %v2490
      %v2555 = vunpack.c.l.b16 %v2494
      %v2556 = vunpack.c.l.b16 %v2497
      %v2557 = vunpack.c.l.b16 %v2501
      %v2558 = vunpack.c.l.b16 %v2504
      %v2559 = vunpack.c.l.b16 %v2508
      %v2560 = vunpack.c.l.b16 %v2511
      %v2561 = vunpack.c.l.b16 %v2515
      %v2562 = vunpack.c.l.b16 %v2518
      %v2563 = vunpack.c.l.b16 %v2522
      %v2564 = vunpack.c.l.b16 %v2525
      %v2565 = vunpack.c.l.b16 %v2529
      %v2566 = vunpack.c.l.b16 %v2532
      %v2567 = vpack.c.b16 %v2536, %v2535
      %v2568 = vpack.c.b16 %v2538, %v2537
      %v2569 = vpack.c.b16 %v2540, %v2539
      %v2570 = vpack.c.b16 %v2542, %v2541
      %v2571 = vpack.c.b16 %v2544, %v2543
      %v2572 = vpack.c.b16 %v2546, %v2545
      %v2573 = vpack.c.b16 %v2548, %v2547
      %v2574 = vpack.c.b16 %v2550, %v2549
      %v2575 = vpack.c.b16 %v2552, %v2551
      %v2576 = vpack.c.b16 %v2554, %v2553
      %v2577 = vpack.c.b16 %v2556, %v2555
      %v2578 = vpack.c.b16 %v2558, %v2557
      %v2579 = vpack.c.b16 %v2560, %v2559
      %v2580 = vpack.c.b16 %v2562, %v2561
      %v2581 = vpack.c.b16 %v2564, %v2563
      %v2582 = vpack.c.b16 %v2566, %v2565
      %v2584 = vsel %vm1896, %v2567, 0
      %v2587 = vsel %vm1896, %v2568, 0
      %v2590 = vsel %vm1896, %v2569, 0
      %v2593 = vsel %vm1896, %v2570, 0
      %v2596 = vsel %vm1896, %v2571, 0
      %v2599 = vsel %vm1896, %v2572, 0
      %v2602 = vsel %vm1896, %v2573, 0
      %v2605 = vsel %vm1896, %v2574, 0
      %v2608 = vsel %vm1896, %v2575, 0
      %v2611 = vsel %vm1896, %v2576, 0
      %v2614 = vsel %vm1896, %v2577, 0
      %v2617 = vsel %vm1896, %v2578, 0
      %v2620 = vsel %vm1896, %v2579, 0
      %v2623 = vsel %vm1896, %v2580, 0
      %v2626 = vsel %vm1896, %v2581, 0
      %v2629 = vsel %vm1896, %v2582, 0
      %v2632 = vsel %vm1945, %v2534, 0
      %2634 = vmatprep.subr.bf16.mxu0 0
      %2635 = vmatpush1.bf16.msra.mxu0 0
      %2636 = vmatprep.subr.bf16.mxu0 0
      %2637 = vmatpush1.bf16.msra.mxu0 0
      %2638 = vmatprep.subr.bf16.mxu0 0
      %2639 = vmatpush1.bf16.msra.mxu0 0
      %2640 = vmatprep.subr.bf16.mxu0 0
      %2641 = vmatpush1.bf16.msra.mxu0 0
      %2642 = vmatprep.subr.bf16.mxu0 0
      %2643 = vmatpush1.bf16.msra.mxu0 0
      %2644 = vmatprep.subr.bf16.mxu0 0
      %2645 = vmatpush1.bf16.msra.mxu0 0
      %2646 = vmatprep.subr.bf16.mxu0 0
      %2647 = vmatpush1.bf16.msra.mxu0 0
      %2648 = vmatprep.subr.bf16.mxu0 0
      %2649 = vmatpush1.bf16.msra.mxu0 %v2632
      %2650 = vmatprep.subr.bf16.mxu0 0
      %2651 = vmatpush2.bf16.msra.mxu0 0
      %2652 = vmatprep.subr.bf16.mxu0 0
      %2653 = vmatpush2.bf16.msra.mxu0 0
      %2654 = vmatprep.subr.bf16.mxu0 0
      %2655 = vmatpush2.bf16.msra.mxu0 0
      %2656 = vmatprep.subr.bf16.mxu0 0
      %2657 = vmatpush2.bf16.msra.mxu0 0
      %2658 = vmatprep.subr.bf16.mxu0 0
      %2659 = vmatpush2.bf16.msra.mxu0 0
      %2660 = vmatprep.subr.bf16.mxu0 0
      %2661 = vmatpush2.bf16.msra.mxu0 0
      %2662 = vmatprep.subr.bf16.mxu0 0
      %2663 = vmatpush2.bf16.msra.mxu0 0
      %2664 = vmatprep.subr.bf16.mxu0 0
      %2665 = vmatpush2.bf16.msra.mxu0 0
      %2666 = vmatprep.mubr.bf16.mxu0 0
      %2667 = vmatmul.mubr.bf16.gmra.mxu0 %v2584
      %v2668 = vpop.f32.mrf.mxu0
      %v2669 = vadd.f32 0.0, %v2668
      %v2670 = vpop.f32.mrf.mxu0
      %v2671 = vpop.f32.mrf.mxu0
      %v2672 = vadd.f32 0.0, %v2671
      %v2673 = vpop.f32.mrf.mxu0
      %2674 = vmatprep.mubr.bf16.mxu0 0
      %2675 = vmatmul.mubr.bf16.gmra.mxu0 %v2587
      %v2676 = vpop.f32.mrf.mxu0
      %v2677 = vadd.f32 0.0, %v2676
      %v2678 = vpop.f32.mrf.mxu0
      %v2679 = vpop.f32.mrf.mxu0
      %v2680 = vadd.f32 0.0, %v2679
      %v2681 = vpop.f32.mrf.mxu0
      %2682 = vmatprep.mubr.bf16.mxu0 0
      %2683 = vmatmul.mubr.bf16.gmra.mxu0 %v2590
      %v2684 = vpop.f32.mrf.mxu0
      %v2685 = vadd.f32 0.0, %v2684
      %v2686 = vpop.f32.mrf.mxu0
      %v2687 = vpop.f32.mrf.mxu0
      %v2688 = vadd.f32 0.0, %v2687
      %v2689 = vpop.f32.mrf.mxu0
      %2690 = vmatprep.mubr.bf16.mxu0 0
      %2691 = vmatmul.mubr.bf16.gmra.mxu0 %v2593
      %v2692 = vpop.f32.mrf.mxu0
      %v2693 = vadd.f32 0.0, %v2692
      %v2694 = vpop.f32.mrf.mxu0
      %v2695 = vpop.f32.mrf.mxu0
      %v2696 = vadd.f32 0.0, %v2695
      %v2697 = vpop.f32.mrf.mxu0
      %2698 = vmatprep.mubr.bf16.mxu0 0
      %2699 = vmatmul.mubr.bf16.gmra.mxu0 %v2596
      %v2700 = vpop.f32.mrf.mxu0
      %v2701 = vadd.f32 0.0, %v2700
      %v2702 = vpop.f32.mrf.mxu0
      %v2703 = vpop.f32.mrf.mxu0
      %v2704 = vadd.f32 0.0, %v2703
      %v2705 = vpop.f32.mrf.mxu0
      %2706 = vmatprep.mubr.bf16.mxu0 0
      %2707 = vmatmul.mubr.bf16.gmra.mxu0 %v2599
      %v2708 = vpop.f32.mrf.mxu0
      %v2709 = vadd.f32 0.0, %v2708
      %v2710 = vpop.f32.mrf.mxu0
      %v2711 = vpop.f32.mrf.mxu0
      %v2712 = vadd.f32 0.0, %v2711
      %v2713 = vpop.f32.mrf.mxu0
      %2714 = vmatprep.mubr.bf16.mxu0 0
      %2715 = vmatmul.mubr.bf16.gmra.mxu0 %v2602
      %v2716 = vpop.f32.mrf.mxu0
      %v2717 = vadd.f32 0.0, %v2716
      %v2718 = vpop.f32.mrf.mxu0
      %v2719 = vpop.f32.mrf.mxu0
      %v2720 = vadd.f32 0.0, %v2719
      %v2721 = vpop.f32.mrf.mxu0
      %2722 = vmatprep.mubr.bf16.mxu0 0
      %2723 = vmatmul.mubr.bf16.gmra.mxu0 %v2605
      %v2724 = vpop.f32.mrf.mxu0
      %v2725 = vadd.f32 0.0, %v2724
      %v2726 = vpop.f32.mrf.mxu0
      %v2727 = vpop.f32.mrf.mxu0
      %v2728 = vadd.f32 0.0, %v2727
      %v2729 = vpop.f32.mrf.mxu0
      %2730 = vmatprep.mubr.bf16.mxu0 0
      %2731 = vmatmul.mubr.bf16.gmra.mxu0 %v2608
      %v2732 = vpop.f32.mrf.mxu0
      %v2733 = vadd.f32 0.0, %v2732
      %v2734 = vpop.f32.mrf.mxu0
      %v2735 = vpop.f32.mrf.mxu0
      %v2736 = vadd.f32 0.0, %v2735
      %v2737 = vpop.f32.mrf.mxu0
      %2738 = vmatprep.mubr.bf16.mxu0 0
      %2739 = vmatmul.mubr.bf16.gmra.mxu0 %v2611
      %v2740 = vpop.f32.mrf.mxu0
      %v2741 = vadd.f32 0.0, %v2740
      %v2742 = vpop.f32.mrf.mxu0
      %v2743 = vpop.f32.mrf.mxu0
      %v2744 = vadd.f32 0.0, %v2743
      %v2745 = vpop.f32.mrf.mxu0
      %2746 = vmatprep.mubr.bf16.mxu0 0
      %2747 = vmatmul.mubr.bf16.gmra.mxu0 %v2614
      %v2748 = vpop.f32.mrf.mxu0
      %v2749 = vadd.f32 0.0, %v2748
      %v2750 = vpop.f32.mrf.mxu0
      %v2751 = vpop.f32.mrf.mxu0
      %v2752 = vadd.f32 0.0, %v2751
      %v2753 = vpop.f32.mrf.mxu0
      %2754 = vmatprep.mubr.bf16.mxu0 0
      %2755 = vmatmul.mubr.bf16.gmra.mxu0 %v2617
      %v2756 = vpop.f32.mrf.mxu0
      %v2757 = vadd.f32 0.0, %v2756
      %v2758 = vpop.f32.mrf.mxu0
      %v2759 = vpop.f32.mrf.mxu0
      %v2760 = vadd.f32 0.0, %v2759
      %v2761 = vpop.f32.mrf.mxu0
      %2762 = vmatprep.mubr.bf16.mxu0 0
      %2763 = vmatmul.mubr.bf16.gmra.mxu0 %v2620
      %v2764 = vpop.f32.mrf.mxu0
      %v2765 = vadd.f32 0.0, %v2764
      %v2766 = vpop.f32.mrf.mxu0
      %v2767 = vpop.f32.mrf.mxu0
      %v2768 = vadd.f32 0.0, %v2767
      %v2769 = vpop.f32.mrf.mxu0
      %2770 = vmatprep.mubr.bf16.mxu0 0
      %2771 = vmatmul.mubr.bf16.gmra.mxu0 %v2623
      %v2772 = vpop.f32.mrf.mxu0
      %v2773 = vadd.f32 0.0, %v2772
      %v2774 = vpop.f32.mrf.mxu0
      %v2775 = vpop.f32.mrf.mxu0
      %v2776 = vadd.f32 0.0, %v2775
      %v2777 = vpop.f32.mrf.mxu0
      %2778 = vmatprep.mubr.bf16.mxu0 0
      %2779 = vmatmul.mubr.bf16.gmra.mxu0 %v2626
      %v2780 = vpop.f32.mrf.mxu0
      %v2781 = vadd.f32 0.0, %v2780
      %v2782 = vpop.f32.mrf.mxu0
      %v2783 = vpop.f32.mrf.mxu0
      %v2784 = vadd.f32 0.0, %v2783
      %v2785 = vpop.f32.mrf.mxu0
      %2786 = vmatprep.mubr.bf16.mxu0 0
      %2787 = vmatmul.mubr.bf16.gmra.mxu0 %v2629
      %v2788 = vpop.f32.mrf.mxu0
      %v2789 = vadd.f32 0.0, %v2788
      %v2790 = vpop.f32.mrf.mxu0
      %v2791 = vpop.f32.mrf.mxu0
      %v2792 = vadd.f32 0.0, %v2791
      %v2793 = vpop.f32.mrf.mxu0
      %2794 = vdwg.mxu0
      %v2795 = vadd.f32 %v2276, %v2669
      %v2796 = vadd.f32 %v2279, %v2672
      %v2797 = vadd.f32 %v2284, %v2677
      %v2798 = vadd.f32 %v2287, %v2680
      %v2799 = vadd.f32 %v2292, %v2685
      %v2800 = vadd.f32 %v2295, %v2688
      %v2801 = vadd.f32 %v2300, %v2693
      %v2802 = vadd.f32 %v2303, %v2696
      %v2803 = vadd.f32 %v2308, %v2701
      %v2804 = vadd.f32 %v2311, %v2704
      %v2805 = vadd.f32 %v2316, %v2709
      %v2806 = vadd.f32 %v2319, %v2712
      %v2807 = vadd.f32 %v2324, %v2717
      %v2808 = vadd.f32 %v2327, %v2720
      %v2809 = vadd.f32 %v2332, %v2725
      %v2810 = vadd.f32 %v2335, %v2728
      %v2811 = vadd.f32 %v2340, %v2733
      %v2812 = vadd.f32 %v2343, %v2736
      %v2813 = vadd.f32 %v2348, %v2741
      %v2814 = vadd.f32 %v2351, %v2744
      %v2815 = vadd.f32 %v2356, %v2749
      %v2816 = vadd.f32 %v2359, %v2752
      %v2817 = vadd.f32 %v2364, %v2757
      %v2818 = vadd.f32 %v2367, %v2760
      %v2819 = vadd.f32 %v2372, %v2765
      %v2820 = vadd.f32 %v2375, %v2768
      %v2821 = vadd.f32 %v2380, %v2773
      %v2822 = vadd.f32 %v2383, %v2776
      %v2823 = vadd.f32 %v2388, %v2781
      %v2824 = vadd.f32 %v2391, %v2784
      %v2825 = vadd.f32 %v2396, %v2789
      %v2826 = vadd.f32 %v2399, %v2792
      %s2827 = scalar_lea.vmem %s3, 6
      %v2828 = vld [vmem:[%s2827] sm:$0x3]
      %v2831 = vunpack.c.l.b16 %v1452
      %v2832 = vunpack.c.l.b16 %v1453
      %v2833 = vpack.c.b16 %v2832, %v2831
      %v2835 = vsel %vm1896, %v2833, 0
      %v2838 = vsel %vm1945, %v2828, 0
      %2840 = vmatprep.subr.bf16.mxu0 0
      %2841 = vmatpush1.bf16.msra.mxu0 0
      %2842 = vmatprep.subr.bf16.mxu0 0
      %2843 = vmatpush1.bf16.msra.mxu0 0
      %2844 = vmatprep.subr.bf16.mxu0 0
      %2845 = vmatpush1.bf16.msra.mxu0 0
      %2846 = vmatprep.subr.bf16.mxu0 0
      %2847 = vmatpush1.bf16.msra.mxu0 0
      %2848 = vmatprep.subr.bf16.mxu0 0
      %2849 = vmatpush1.bf16.msra.mxu0 0
      %2850 = vmatprep.subr.bf16.mxu0 0
      %2851 = vmatpush1.bf16.msra.mxu0 0
      %2852 = vmatprep.subr.bf16.mxu0 0
      %2853 = vmatpush1.bf16.msra.mxu0 0
      %2854 = vmatprep.subr.bf16.mxu0 0
      %2855 = vmatpush1.bf16.msra.mxu0 %v2838
      %2856 = vmatprep.subr.bf16.mxu0 0
      %2857 = vmatpush2.bf16.msra.mxu0 0
      %2858 = vmatprep.subr.bf16.mxu0 0
      %2859 = vmatpush2.bf16.msra.mxu0 0
      %2860 = vmatprep.subr.bf16.mxu0 0
      %2861 = vmatpush2.bf16.msra.mxu0 0
      %2862 = vmatprep.subr.bf16.mxu0 0
      %2863 = vmatpush2.bf16.msra.mxu0 0
      %2864 = vmatprep.subr.bf16.mxu0 0
      %2865 = vmatpush2.bf16.msra.mxu0 0
      %2866 = vmatprep.subr.bf16.mxu0 0
      %2867 = vmatpush2.bf16.msra.mxu0 0
      %2868 = vmatprep.subr.bf16.mxu0 0
      %2869 = vmatpush2.bf16.msra.mxu0 0
      %2870 = vmatprep.subr.bf16.mxu0 0
      %2871 = vmatpush2.bf16.msra.mxu0 0
      %2872 = vmatprep.mubr.bf16.mxu0 0
      %2873 = vmatmul.mubr.bf16.gmra.mxu0 %v2194
      %v2874 = vpop.f32.mrf.mxu0
      %v2875 = vadd.f32 0.0, %v2874
      %v2876 = vpop.f32.mrf.mxu0
      %v2877 = vpop.f32.mrf.mxu0
      %v2878 = vadd.f32 0.0, %v2877
      %v2879 = vpop.f32.mrf.mxu0
      %2880 = vmatprep.mubr.bf16.mxu0 0
      %2881 = vmatmul.mubr.bf16.gmra.mxu0 %v2197
      %v2882 = vpop.f32.mrf.mxu0
      %v2883 = vadd.f32 0.0, %v2882
      %v2884 = vpop.f32.mrf.mxu0
      %v2885 = vpop.f32.mrf.mxu0
      %v2886 = vadd.f32 0.0, %v2885
      %v2887 = vpop.f32.mrf.mxu0
      %2888 = vmatprep.mubr.bf16.mxu0 0
      %2889 = vmatmul.mubr.bf16.gmra.mxu0 %v2200
      %v2890 = vpop.f32.mrf.mxu0
      %v2891 = vadd.f32 0.0, %v2890
      %v2892 = vpop.f32.mrf.mxu0
      %v2893 = vpop.f32.mrf.mxu0
      %v2894 = vadd.f32 0.0, %v2893
      %v2895 = vpop.f32.mrf.mxu0
      %2896 = vmatprep.mubr.bf16.mxu0 0
      %2897 = vmatmul.mubr.bf16.gmra.mxu0 %v2203
      %v2898 = vpop.f32.mrf.mxu0
      %v2899 = vadd.f32 0.0, %v2898
      %v2900 = vpop.f32.mrf.mxu0
      %v2901 = vpop.f32.mrf.mxu0
      %v2902 = vadd.f32 0.0, %v2901
      %v2903 = vpop.f32.mrf.mxu0
      %2904 = vmatprep.mubr.bf16.mxu0 0
      %2905 = vmatmul.mubr.bf16.gmra.mxu0 %v2206
      %v2906 = vpop.f32.mrf.mxu0
      %v2907 = vadd.f32 0.0, %v2906
      %v2908 = vpop.f32.mrf.mxu0
      %v2909 = vpop.f32.mrf.mxu0
      %v2910 = vadd.f32 0.0, %v2909
      %v2911 = vpop.f32.mrf.mxu0
      %2912 = vmatprep.mubr.bf16.mxu0 0
      %2913 = vmatmul.mubr.bf16.gmra.mxu0 %v2209
      %v2914 = vpop.f32.mrf.mxu0
      %v2915 = vadd.f32 0.0, %v2914
      %v2916 = vpop.f32.mrf.mxu0
      %v2917 = vpop.f32.mrf.mxu0
      %v2918 = vadd.f32 0.0, %v2917
      %v2919 = vpop.f32.mrf.mxu0
      %2920 = vmatprep.mubr.bf16.mxu0 0
      %2921 = vmatmul.mubr.bf16.gmra.mxu0 %v2212
      %v2922 = vpop.f32.mrf.mxu0
      %v2923 = vadd.f32 0.0, %v2922
      %v2924 = vpop.f32.mrf.mxu0
      %v2925 = vpop.f32.mrf.mxu0
      %v2926 = vadd.f32 0.0, %v2925
      %v2927 = vpop.f32.mrf.mxu0
      %2928 = vmatprep.mubr.bf16.mxu0 0
      %2929 = vmatmul.mubr.bf16.gmra.mxu0 %v2215
      %v2930 = vpop.f32.mrf.mxu0
      %v2931 = vadd.f32 0.0, %v2930
      %v2932 = vpop.f32.mrf.mxu0
      %v2933 = vpop.f32.mrf.mxu0
      %v2934 = vadd.f32 0.0, %v2933
      %v2935 = vpop.f32.mrf.mxu0
      %2936 = vmatprep.mubr.bf16.mxu0 0
      %2937 = vmatmul.mubr.bf16.gmra.mxu0 %v2218
      %v2938 = vpop.f32.mrf.mxu0
      %v2939 = vadd.f32 0.0, %v2938
      %v2940 = vpop.f32.mrf.mxu0
      %v2941 = vpop.f32.mrf.mxu0
      %v2942 = vadd.f32 0.0, %v2941
      %v2943 = vpop.f32.mrf.mxu0
      %2944 = vmatprep.mubr.bf16.mxu0 0
      %2945 = vmatmul.mubr.bf16.gmra.mxu0 %v2221
      %v2946 = vpop.f32.mrf.mxu0
      %v2947 = vadd.f32 0.0, %v2946
      %v2948 = vpop.f32.mrf.mxu0
      %v2949 = vpop.f32.mrf.mxu0
      %v2950 = vadd.f32 0.0, %v2949
      %v2951 = vpop.f32.mrf.mxu0
      %2952 = vmatprep.mubr.bf16.mxu0 0
      %2953 = vmatmul.mubr.bf16.gmra.mxu0 %v2224
      %v2954 = vpop.f32.mrf.mxu0
      %v2955 = vadd.f32 0.0, %v2954
      %v2956 = vpop.f32.mrf.mxu0
      %v2957 = vpop.f32.mrf.mxu0
      %v2958 = vadd.f32 0.0, %v2957
      %v2959 = vpop.f32.mrf.mxu0
      %2960 = vmatprep.mubr.bf16.mxu0 0
      %2961 = vmatmul.mubr.bf16.gmra.mxu0 %v2227
      %v2962 = vpop.f32.mrf.mxu0
      %v2963 = vadd.f32 0.0, %v2962
      %v2964 = vpop.f32.mrf.mxu0
      %v2965 = vpop.f32.mrf.mxu0
      %v2966 = vadd.f32 0.0, %v2965
      %v2967 = vpop.f32.mrf.mxu0
      %2968 = vmatprep.mubr.bf16.mxu0 0
      %2969 = vmatmul.mubr.bf16.gmra.mxu0 %v2230
      %v2970 = vpop.f32.mrf.mxu0
      %v2971 = vadd.f32 0.0, %v2970
      %v2972 = vpop.f32.mrf.mxu0
      %v2973 = vpop.f32.mrf.mxu0
      %v2974 = vadd.f32 0.0, %v2973
      %v2975 = vpop.f32.mrf.mxu0
      %2976 = vmatprep.mubr.bf16.mxu0 0
      %2977 = vmatmul.mubr.bf16.gmra.mxu0 %v2233
      %v2978 = vpop.f32.mrf.mxu0
      %v2979 = vadd.f32 0.0, %v2978
      %v2980 = vpop.f32.mrf.mxu0
      %v2981 = vpop.f32.mrf.mxu0
      %v2982 = vadd.f32 0.0, %v2981
      %v2983 = vpop.f32.mrf.mxu0
      %2984 = vmatprep.mubr.bf16.mxu0 0
      %2985 = vmatmul.mubr.bf16.gmra.mxu0 %v2236
      %v2986 = vpop.f32.mrf.mxu0
      %v2987 = vadd.f32 0.0, %v2986
      %v2988 = vpop.f32.mrf.mxu0
      %v2989 = vpop.f32.mrf.mxu0
      %v2990 = vadd.f32 0.0, %v2989
      %v2991 = vpop.f32.mrf.mxu0
      %2992 = vmatprep.mubr.bf16.mxu0 0
      %2993 = vmatmul.mubr.bf16.gmra.mxu0 %v2835
      %v2994 = vpop.f32.mrf.mxu0
      %v2995 = vadd.f32 0.0, %v2994
      %v2996 = vpop.f32.mrf.mxu0
      %v2997 = vpop.f32.mrf.mxu0
      %v2998 = vadd.f32 0.0, %v2997
      %v2999 = vpop.f32.mrf.mxu0
      %3000 = vdwg.mxu0
      %v3001 = vadd.f32 %v2795, %v2875
      %v3002 = vadd.f32 %v2796, %v2878
      %v3003 = vadd.f32 %v2797, %v2883
      %v3004 = vadd.f32 %v2798, %v2886
      %v3005 = vadd.f32 %v2799, %v2891
      %v3006 = vadd.f32 %v2800, %v2894
      %v3007 = vadd.f32 %v2801, %v2899
      %v3008 = vadd.f32 %v2802, %v2902
      %v3009 = vadd.f32 %v2803, %v2907
      %v3010 = vadd.f32 %v2804, %v2910
      %v3011 = vadd.f32 %v2805, %v2915
      %v3012 = vadd.f32 %v2806, %v2918
      %v3013 = vadd.f32 %v2807, %v2923
      %v3014 = vadd.f32 %v2808, %v2926
      %v3015 = vadd.f32 %v2809, %v2931
      %v3016 = vadd.f32 %v2810, %v2934
      %v3017 = vadd.f32 %v2811, %v2939
      %v3018 = vadd.f32 %v2812, %v2942
      %v3019 = vadd.f32 %v2813, %v2947
      %v3020 = vadd.f32 %v2814, %v2950
      %v3021 = vadd.f32 %v2815, %v2955
      %v3022 = vadd.f32 %v2816, %v2958
      %v3023 = vadd.f32 %v2817, %v2963
      %v3024 = vadd.f32 %v2818, %v2966
      %v3025 = vadd.f32 %v2819, %v2971
      %v3026 = vadd.f32 %v2820, %v2974
      %v3027 = vadd.f32 %v2821, %v2979
      %v3028 = vadd.f32 %v2822, %v2982
      %v3029 = vadd.f32 %v2823, %v2987
      %v3030 = vadd.f32 %v2824, %v2990
      %v3031 = vadd.f32 %v2825, %v2995
      %v3032 = vadd.f32 %v2826, %v2998
      %v3034 = vshrl.u32 %v1452, 16
      %v3036 = vrot.slane %v3034, 4
      %v3037 = vshll.u32 %v1452, 16
      %v3039 = vrot.slane %v3037, 5
      %v3040 = vor.u32 %v3036, %v3039
      %v3041 = vrot.slane %v3040, 4
      %v3043 = vshll.u32 %v1453, 16
      %v3045 = vrot.slane %v3043, 5
      %v3046 = vsel %vm1461, %v3041, %v3045
      %v3047 = vshrl.u32 %v1453, 16
      %v3049 = vrot.slane %v3047, 4
      %v3050 = vor.u32 %v3049, %v3045
      %v3051 = vrot.slane %v3050, 4
      %v3053 = vshll.u32 %v1454, 16
      %v3055 = vrot.slane %v3053, 5
      %v3056 = vsel %vm1461, %v3051, %v3055
      %s3057 = scalar_lea.vmem %s3, 8
      %v3058 = vld [vmem:[%s3057] sm:$0x3]
      %v3059 = vunpack.c.l.b16 %v3046
      %v3060 = vunpack.c.l.b16 %v3056
      %v3061 = vpack.c.b16 %v3060, %v3059
      %v3063 = vsel %vm1896, %v3061, 0
      %v3066 = vsel %vm1945, %v3058, 0
      %3068 = vmatprep.subr.bf16.mxu0 0
      %3069 = vmatpush1.bf16.msra.mxu0 0
      %3070 = vmatprep.subr.bf16.mxu0 0
      %3071 = vmatpush1.bf16.msra.mxu0 0
      %3072 = vmatprep.subr.bf16.mxu0 0
      %3073 = vmatpush1.bf16.msra.mxu0 0
      %3074 = vmatprep.subr.bf16.mxu0 0
      %3075 = vmatpush1.bf16.msra.mxu0 0
      %3076 = vmatprep.subr.bf16.mxu0 0
      %3077 = vmatpush1.bf16.msra.mxu0 0
      %3078 = vmatprep.subr.bf16.mxu0 0
      %3079 = vmatpush1.bf16.msra.mxu0 0
      %3080 = vmatprep.subr.bf16.mxu0 0
      %3081 = vmatpush1.bf16.msra.mxu0 0
      %3082 = vmatprep.subr.bf16.mxu0 0
      %3083 = vmatpush1.bf16.msra.mxu0 %v3066
      %3084 = vmatprep.subr.bf16.mxu0 0
      %3085 = vmatpush2.bf16.msra.mxu0 0
      %3086 = vmatprep.subr.bf16.mxu0 0
      %3087 = vmatpush2.bf16.msra.mxu0 0
      %3088 = vmatprep.subr.bf16.mxu0 0
      %3089 = vmatpush2.bf16.msra.mxu0 0
      %3090 = vmatprep.subr.bf16.mxu0 0
      %3091 = vmatpush2.bf16.msra.mxu0 0
      %3092 = vmatprep.subr.bf16.mxu0 0
      %3093 = vmatpush2.bf16.msra.mxu0 0
      %3094 = vmatprep.subr.bf16.mxu0 0
      %3095 = vmatpush2.bf16.msra.mxu0 0
      %3096 = vmatprep.subr.bf16.mxu0 0
      %3097 = vmatpush2.bf16.msra.mxu0 0
      %3098 = vmatprep.subr.bf16.mxu0 0
      %3099 = vmatpush2.bf16.msra.mxu0 0
      %3100 = vmatprep.mubr.bf16.mxu0 0
      %3101 = vmatmul.mubr.bf16.gmra.mxu0 %v1901
      %v3102 = vpop.f32.mrf.mxu0
      %v3103 = vadd.f32 0.0, %v3102
      %v3104 = vpop.f32.mrf.mxu0
      %v3105 = vpop.f32.mrf.mxu0
      %v3106 = vadd.f32 0.0, %v3105
      %v3107 = vpop.f32.mrf.mxu0
      %3108 = vmatprep.mubr.bf16.mxu0 0
      %3109 = vmatmul.mubr.bf16.gmra.mxu0 %v1904
      %v3110 = vpop.f32.mrf.mxu0
      %v3111 = vadd.f32 0.0, %v3110
      %v3112 = vpop.f32.mrf.mxu0
      %v3113 = vpop.f32.mrf.mxu0
      %v3114 = vadd.f32 0.0, %v3113
      %v3115 = vpop.f32.mrf.mxu0
      %3116 = vmatprep.mubr.bf16.mxu0 0
      %3117 = vmatmul.mubr.bf16.gmra.mxu0 %v1907
      %v3118 = vpop.f32.mrf.mxu0
      %v3119 = vadd.f32 0.0, %v3118
      %v3120 = vpop.f32.mrf.mxu0
      %v3121 = vpop.f32.mrf.mxu0
      %v3122 = vadd.f32 0.0, %v3121
      %v3123 = vpop.f32.mrf.mxu0
      %3124 = vmatprep.mubr.bf16.mxu0 0
      %3125 = vmatmul.mubr.bf16.gmra.mxu0 %v1910
      %v3126 = vpop.f32.mrf.mxu0
      %v3127 = vadd.f32 0.0, %v3126
      %v3128 = vpop.f32.mrf.mxu0
      %v3129 = vpop.f32.mrf.mxu0
      %v3130 = vadd.f32 0.0, %v3129
      %v3131 = vpop.f32.mrf.mxu0
      %3132 = vmatprep.mubr.bf16.mxu0 0
      %3133 = vmatmul.mubr.bf16.gmra.mxu0 %v1913
      %v3134 = vpop.f32.mrf.mxu0
      %v3135 = vadd.f32 0.0, %v3134
      %v3136 = vpop.f32.mrf.mxu0
      %v3137 = vpop.f32.mrf.mxu0
      %v3138 = vadd.f32 0.0, %v3137
      %v3139 = vpop.f32.mrf.mxu0
      %3140 = vmatprep.mubr.bf16.mxu0 0
      %3141 = vmatmul.mubr.bf16.gmra.mxu0 %v1916
      %v3142 = vpop.f32.mrf.mxu0
      %v3143 = vadd.f32 0.0, %v3142
      %v3144 = vpop.f32.mrf.mxu0
      %v3145 = vpop.f32.mrf.mxu0
      %v3146 = vadd.f32 0.0, %v3145
      %v3147 = vpop.f32.mrf.mxu0
      %3148 = vmatprep.mubr.bf16.mxu0 0
      %3149 = vmatmul.mubr.bf16.gmra.mxu0 %v1919
      %v3150 = vpop.f32.mrf.mxu0
      %v3151 = vadd.f32 0.0, %v3150
      %v3152 = vpop.f32.mrf.mxu0
      %v3153 = vpop.f32.mrf.mxu0
      %v3154 = vadd.f32 0.0, %v3153
      %v3155 = vpop.f32.mrf.mxu0
      %3156 = vmatprep.mubr.bf16.mxu0 0
      %3157 = vmatmul.mubr.bf16.gmra.mxu0 %v1922
      %v3158 = vpop.f32.mrf.mxu0
      %v3159 = vadd.f32 0.0, %v3158
      %v3160 = vpop.f32.mrf.mxu0
      %v3161 = vpop.f32.mrf.mxu0
      %v3162 = vadd.f32 0.0, %v3161
      %v3163 = vpop.f32.mrf.mxu0
      %3164 = vmatprep.mubr.bf16.mxu0 0
      %3165 = vmatmul.mubr.bf16.gmra.mxu0 %v1925
      %v3166 = vpop.f32.mrf.mxu0
      %v3167 = vadd.f32 0.0, %v3166
      %v3168 = vpop.f32.mrf.mxu0
      %v3169 = vpop.f32.mrf.mxu0
      %v3170 = vadd.f32 0.0, %v3169
      %v3171 = vpop.f32.mrf.mxu0
      %3172 = vmatprep.mubr.bf16.mxu0 0
      %3173 = vmatmul.mubr.bf16.gmra.mxu0 %v1928
      %v3174 = vpop.f32.mrf.mxu0
      %v3175 = vadd.f32 0.0, %v3174
      %v3176 = vpop.f32.mrf.mxu0
      %v3177 = vpop.f32.mrf.mxu0
      %v3178 = vadd.f32 0.0, %v3177
      %v3179 = vpop.f32.mrf.mxu0
      %3180 = vmatprep.mubr.bf16.mxu0 0
      %3181 = vmatmul.mubr.bf16.gmra.mxu0 %v1931
      %v3182 = vpop.f32.mrf.mxu0
      %v3183 = vadd.f32 0.0, %v3182
      %v3184 = vpop.f32.mrf.mxu0
      %v3185 = vpop.f32.mrf.mxu0
      %v3186 = vadd.f32 0.0, %v3185
      %v3187 = vpop.f32.mrf.mxu0
      %3188 = vmatprep.mubr.bf16.mxu0 0
      %3189 = vmatmul.mubr.bf16.gmra.mxu0 %v1934
      %v3190 = vpop.f32.mrf.mxu0
      %v3191 = vadd.f32 0.0, %v3190
      %v3192 = vpop.f32.mrf.mxu0
      %v3193 = vpop.f32.mrf.mxu0
      %v3194 = vadd.f32 0.0, %v3193
      %v3195 = vpop.f32.mrf.mxu0
      %3196 = vmatprep.mubr.bf16.mxu0 0
      %3197 = vmatmul.mubr.bf16.gmra.mxu0 %v1937
      %v3198 = vpop.f32.mrf.mxu0
      %v3199 = vadd.f32 0.0, %v3198
      %v3200 = vpop.f32.mrf.mxu0
      %v3201 = vpop.f32.mrf.mxu0
      %v3202 = vadd.f32 0.0, %v3201
      %v3203 = vpop.f32.mrf.mxu0
      %3204 = vmatprep.mubr.bf16.mxu0 0
      %3205 = vmatmul.mubr.bf16.gmra.mxu0 %v1940
      %v3206 = vpop.f32.mrf.mxu0
      %v3207 = vadd.f32 0.0, %v3206
      %v3208 = vpop.f32.mrf.mxu0
      %v3209 = vpop.f32.mrf.mxu0
      %v3210 = vadd.f32 0.0, %v3209
      %v3211 = vpop.f32.mrf.mxu0
      %3212 = vmatprep.mubr.bf16.mxu0 0
      %3213 = vmatmul.mubr.bf16.gmra.mxu0 %v1943
      %v3214 = vpop.f32.mrf.mxu0
      %v3215 = vadd.f32 0.0, %v3214
      %v3216 = vpop.f32.mrf.mxu0
      %v3217 = vpop.f32.mrf.mxu0
      %v3218 = vadd.f32 0.0, %v3217
      %v3219 = vpop.f32.mrf.mxu0
      %3220 = vmatprep.mubr.bf16.mxu0 0
      %3221 = vmatmul.mubr.bf16.gmra.mxu0 %v3063
      %v3222 = vpop.f32.mrf.mxu0
      %v3223 = vadd.f32 0.0, %v3222
      %v3224 = vpop.f32.mrf.mxu0
      %v3225 = vpop.f32.mrf.mxu0
      %v3226 = vadd.f32 0.0, %v3225
      %v3227 = vpop.f32.mrf.mxu0
      %3228 = vdwg.mxu0
      %v3229 = vadd.f32 %v3001, %v3103
      %v3230 = vadd.f32 %v3002, %v3106
      %v3231 = vadd.f32 %v3003, %v3111
      %v3232 = vadd.f32 %v3004, %v3114
      %v3233 = vadd.f32 %v3005, %v3119
      %v3234 = vadd.f32 %v3006, %v3122
      %v3235 = vadd.f32 %v3007, %v3127
      %v3236 = vadd.f32 %v3008, %v3130
      %v3237 = vadd.f32 %v3009, %v3135
      %v3238 = vadd.f32 %v3010, %v3138
      %v3239 = vadd.f32 %v3011, %v3143
      %v3240 = vadd.f32 %v3012, %v3146
      %v3241 = vadd.f32 %v3013, %v3151
      %v3242 = vadd.f32 %v3014, %v3154
      %v3243 = vadd.f32 %v3015, %v3159
      %v3244 = vadd.f32 %v3016, %v3162
      %v3245 = vadd.f32 %v3017, %v3167
      %v3246 = vadd.f32 %v3018, %v3170
      %v3247 = vadd.f32 %v3019, %v3175
      %v3248 = vadd.f32 %v3020, %v3178
      %v3249 = vadd.f32 %v3021, %v3183
      %v3250 = vadd.f32 %v3022, %v3186
      %v3251 = vadd.f32 %v3023, %v3191
      %v3252 = vadd.f32 %v3024, %v3194
      %v3253 = vadd.f32 %v3025, %v3199
      %v3254 = vadd.f32 %v3026, %v3202
      %v3255 = vadd.f32 %v3027, %v3207
      %v3256 = vadd.f32 %v3028, %v3210
      %v3257 = vadd.f32 %v3029, %v3215
      %v3258 = vadd.f32 %v3030, %v3218
      %v3259 = vadd.f32 %v3031, %v3223
      %v3260 = vadd.f32 %v3032, %v3226
      %v3262 = vrot.slane %v1452, 5
      %v3263 = vrot.slane %v3262, 4
      %v3264 = vrot.slane %v1453, 5
      %v3265 = vsel %vm2420, %v3263, %v3264
      %v3266 = vrot.slane %v3264, 4
      %v3267 = vrot.slane %v1454, 5
      %v3268 = vsel %vm2420, %v3266, %v3267
      %s3269 = scalar_lea.vmem %s3, 10
      %v3270 = vld [vmem:[%s3269] sm:$0x3]
      %v3271 = vunpack.c.l.b16 %v3265
      %v3272 = vunpack.c.l.b16 %v3268
      %v3273 = vpack.c.b16 %v3272, %v3271
      %v3275 = vsel %vm1896, %v3273, 0
      %v3278 = vsel %vm1945, %v3270, 0
      %3280 = vmatprep.subr.bf16.mxu0 0
      %3281 = vmatpush1.bf16.msra.mxu0 0
      %3282 = vmatprep.subr.bf16.mxu0 0
      %3283 = vmatpush1.bf16.msra.mxu0 0
      %3284 = vmatprep.subr.bf16.mxu0 0
      %3285 = vmatpush1.bf16.msra.mxu0 0
      %3286 = vmatprep.subr.bf16.mxu0 0
      %3287 = vmatpush1.bf16.msra.mxu0 0
      %3288 = vmatprep.subr.bf16.mxu0 0
      %3289 = vmatpush1.bf16.msra.mxu0 0
      %3290 = vmatprep.subr.bf16.mxu0 0
      %3291 = vmatpush1.bf16.msra.mxu0 0
      %3292 = vmatprep.subr.bf16.mxu0 0
      %3293 = vmatpush1.bf16.msra.mxu0 0
      %3294 = vmatprep.subr.bf16.mxu0 0
      %3295 = vmatpush1.bf16.msra.mxu0 %v3278
      %3296 = vmatprep.subr.bf16.mxu0 0
      %3297 = vmatpush2.bf16.msra.mxu0 0
      %3298 = vmatprep.subr.bf16.mxu0 0
      %3299 = vmatpush2.bf16.msra.mxu0 0
      %3300 = vmatprep.subr.bf16.mxu0 0
      %3301 = vmatpush2.bf16.msra.mxu0 0
      %3302 = vmatprep.subr.bf16.mxu0 0
      %3303 = vmatpush2.bf16.msra.mxu0 0
      %3304 = vmatprep.subr.bf16.mxu0 0
      %3305 = vmatpush2.bf16.msra.mxu0 0
      %3306 = vmatprep.subr.bf16.mxu0 0
      %3307 = vmatpush2.bf16.msra.mxu0 0
      %3308 = vmatprep.subr.bf16.mxu0 0
      %3309 = vmatpush2.bf16.msra.mxu0 0
      %3310 = vmatprep.subr.bf16.mxu0 0
      %3311 = vmatpush2.bf16.msra.mxu0 0
      %3312 = vmatprep.mubr.bf16.mxu0 0
      %3313 = vmatmul.mubr.bf16.gmra.mxu0 %v2587
      %v3314 = vpop.f32.mrf.mxu0
      %v3315 = vadd.f32 0.0, %v3314
      %v3316 = vpop.f32.mrf.mxu0
      %v3317 = vpop.f32.mrf.mxu0
      %v3318 = vadd.f32 0.0, %v3317
      %v3319 = vpop.f32.mrf.mxu0
      %3320 = vmatprep.mubr.bf16.mxu0 0
      %3321 = vmatmul.mubr.bf16.gmra.mxu0 %v2590
      %v3322 = vpop.f32.mrf.mxu0
      %v3323 = vadd.f32 0.0, %v3322
      %v3324 = vpop.f32.mrf.mxu0
      %v3325 = vpop.f32.mrf.mxu0
      %v3326 = vadd.f32 0.0, %v3325
      %v3327 = vpop.f32.mrf.mxu0
      %3328 = vmatprep.mubr.bf16.mxu0 0
      %3329 = vmatmul.mubr.bf16.gmra.mxu0 %v2593
      %v3330 = vpop.f32.mrf.mxu0
      %v3331 = vadd.f32 0.0, %v3330
      %v3332 = vpop.f32.mrf.mxu0
      %v3333 = vpop.f32.mrf.mxu0
      %v3334 = vadd.f32 0.0, %v3333
      %v3335 = vpop.f32.mrf.mxu0
      %3336 = vmatprep.mubr.bf16.mxu0 0
      %3337 = vmatmul.mubr.bf16.gmra.mxu0 %v2596
      %v3338 = vpop.f32.mrf.mxu0
      %v3339 = vadd.f32 0.0, %v3338
      %v3340 = vpop.f32.mrf.mxu0
      %v3341 = vpop.f32.mrf.mxu0
      %v3342 = vadd.f32 0.0, %v3341
      %v3343 = vpop.f32.mrf.mxu0
      %3344 = vmatprep.mubr.bf16.mxu0 0
      %3345 = vmatmul.mubr.bf16.gmra.mxu0 %v2599
      %v3346 = vpop.f32.mrf.mxu0
      %v3347 = vadd.f32 0.0, %v3346
      %v3348 = vpop.f32.mrf.mxu0
      %v3349 = vpop.f32.mrf.mxu0
      %v3350 = vadd.f32 0.0, %v3349
      %v3351 = vpop.f32.mrf.mxu0
      %3352 = vmatprep.mubr.bf16.mxu0 0
      %3353 = vmatmul.mubr.bf16.gmra.mxu0 %v2602
      %v3354 = vpop.f32.mrf.mxu0
      %v3355 = vadd.f32 0.0, %v3354
      %v3356 = vpop.f32.mrf.mxu0
      %v3357 = vpop.f32.mrf.mxu0
      %v3358 = vadd.f32 0.0, %v3357
      %v3359 = vpop.f32.mrf.mxu0
      %3360 = vmatprep.mubr.bf16.mxu0 0
      %3361 = vmatmul.mubr.bf16.gmra.mxu0 %v2605
      %v3362 = vpop.f32.mrf.mxu0
      %v3363 = vadd.f32 0.0, %v3362
      %v3364 = vpop.f32.mrf.mxu0
      %v3365 = vpop.f32.mrf.mxu0
      %v3366 = vadd.f32 0.0, %v3365
      %v3367 = vpop.f32.mrf.mxu0
      %3368 = vmatprep.mubr.bf16.mxu0 0
      %3369 = vmatmul.mubr.bf16.gmra.mxu0 %v2608
      %v3370 = vpop.f32.mrf.mxu0
      %v3371 = vadd.f32 0.0, %v3370
      %v3372 = vpop.f32.mrf.mxu0
      %v3373 = vpop.f32.mrf.mxu0
      %v3374 = vadd.f32 0.0, %v3373
      %v3375 = vpop.f32.mrf.mxu0
      %3376 = vmatprep.mubr.bf16.mxu0 0
      %3377 = vmatmul.mubr.bf16.gmra.mxu0 %v2611
      %v3378 = vpop.f32.mrf.mxu0
      %v3379 = vadd.f32 0.0, %v3378
      %v3380 = vpop.f32.mrf.mxu0
      %v3381 = vpop.f32.mrf.mxu0
      %v3382 = vadd.f32 0.0, %v3381
      %v3383 = vpop.f32.mrf.mxu0
      %3384 = vmatprep.mubr.bf16.mxu0 0
      %3385 = vmatmul.mubr.bf16.gmra.mxu0 %v2614
      %v3386 = vpop.f32.mrf.mxu0
      %v3387 = vadd.f32 0.0, %v3386
      %v3388 = vpop.f32.mrf.mxu0
      %v3389 = vpop.f32.mrf.mxu0
      %v3390 = vadd.f32 0.0, %v3389
      %v3391 = vpop.f32.mrf.mxu0
      %3392 = vmatprep.mubr.bf16.mxu0 0
      %3393 = vmatmul.mubr.bf16.gmra.mxu0 %v2617
      %v3394 = vpop.f32.mrf.mxu0
      %v3395 = vadd.f32 0.0, %v3394
      %v3396 = vpop.f32.mrf.mxu0
      %v3397 = vpop.f32.mrf.mxu0
      %v3398 = vadd.f32 0.0, %v3397
      %v3399 = vpop.f32.mrf.mxu0
      %3400 = vmatprep.mubr.bf16.mxu0 0
      %3401 = vmatmul.mubr.bf16.gmra.mxu0 %v2620
      %v3402 = vpop.f32.mrf.mxu0
      %v3403 = vadd.f32 0.0, %v3402
      %v3404 = vpop.f32.mrf.mxu0
      %v3405 = vpop.f32.mrf.mxu0
      %v3406 = vadd.f32 0.0, %v3405
      %v3407 = vpop.f32.mrf.mxu0
      %3408 = vmatprep.mubr.bf16.mxu0 0
      %3409 = vmatmul.mubr.bf16.gmra.mxu0 %v2623
      %v3410 = vpop.f32.mrf.mxu0
      %v3411 = vadd.f32 0.0, %v3410
      %v3412 = vpop.f32.mrf.mxu0
      %v3413 = vpop.f32.mrf.mxu0
      %v3414 = vadd.f32 0.0, %v3413
      %v3415 = vpop.f32.mrf.mxu0
      %3416 = vmatprep.mubr.bf16.mxu0 0
      %3417 = vmatmul.mubr.bf16.gmra.mxu0 %v2626
      %v3418 = vpop.f32.mrf.mxu0
      %v3419 = vadd.f32 0.0, %v3418
      %v3420 = vpop.f32.mrf.mxu0
      %v3421 = vpop.f32.mrf.mxu0
      %v3422 = vadd.f32 0.0, %v3421
      %v3423 = vpop.f32.mrf.mxu0
      %3424 = vmatprep.mubr.bf16.mxu0 0
      %3425 = vmatmul.mubr.bf16.gmra.mxu0 %v2629
      %v3426 = vpop.f32.mrf.mxu0
      %v3427 = vadd.f32 0.0, %v3426
      %v3428 = vpop.f32.mrf.mxu0
      %v3429 = vpop.f32.mrf.mxu0
      %v3430 = vadd.f32 0.0, %v3429
      %v3431 = vpop.f32.mrf.mxu0
      %3432 = vmatprep.mubr.bf16.mxu0 0
      %3433 = vmatmul.mubr.bf16.gmra.mxu0 %v3275
      %v3434 = vpop.f32.mrf.mxu0
      %v3435 = vadd.f32 0.0, %v3434
      %v3436 = vpop.f32.mrf.mxu0
      %v3437 = vpop.f32.mrf.mxu0
      %v3438 = vadd.f32 0.0, %v3437
      %v3439 = vpop.f32.mrf.mxu0
      %3440 = vdwg.mxu0
      %v3441 = vadd.f32 %v3229, %v3315
      %v3442 = vadd.f32 %v3230, %v3318
      %v3443 = vadd.f32 %v3231, %v3323
      %v3444 = vadd.f32 %v3232, %v3326
      %v3445 = vadd.f32 %v3233, %v3331
      %v3446 = vadd.f32 %v3234, %v3334
      %v3447 = vadd.f32 %v3235, %v3339
      %v3448 = vadd.f32 %v3236, %v3342
      %v3449 = vadd.f32 %v3237, %v3347
      %v3450 = vadd.f32 %v3238, %v3350
      %v3451 = vadd.f32 %v3239, %v3355
      %v3452 = vadd.f32 %v3240, %v3358
      %v3453 = vadd.f32 %v3241, %v3363
      %v3454 = vadd.f32 %v3242, %v3366
      %v3455 = vadd.f32 %v3243, %v3371
      %v3456 = vadd.f32 %v3244, %v3374
      %v3457 = vadd.f32 %v3245, %v3379
      %v3458 = vadd.f32 %v3246, %v3382
      %v3459 = vadd.f32 %v3247, %v3387
      %v3460 = vadd.f32 %v3248, %v3390
      %v3461 = vadd.f32 %v3249, %v3395
      %v3462 = vadd.f32 %v3250, %v3398
      %v3463 = vadd.f32 %v3251, %v3403
      %v3464 = vadd.f32 %v3252, %v3406
      %v3465 = vadd.f32 %v3253, %v3411
      %v3466 = vadd.f32 %v3254, %v3414
      %v3467 = vadd.f32 %v3255, %v3419
      %v3468 = vadd.f32 %v3256, %v3422
      %v3469 = vadd.f32 %v3257, %v3427
      %v3470 = vadd.f32 %v3258, %v3430
      %v3471 = vadd.f32 %v3259, %v3435
      %v3472 = vadd.f32 %v3260, %v3438
      %s3473 = scalar_lea.vmem %s3, 12
      %v3474 = vld [vmem:[%s3473] sm:$0x3]
      %v3477 = vunpack.c.l.b16 %v1455
      %v3478 = vunpack.c.l.b16 %v1456
      %v3479 = vpack.c.b16 %v3478, %v3477
      %v3481 = vsel %vm1896, %v3479, 0
      %v3484 = vsel %vm1945, %v3474, 0
      %3486 = vmatprep.subr.bf16.mxu0 0
      %3487 = vmatpush1.bf16.msra.mxu0 0
      %3488 = vmatprep.subr.bf16.mxu0 0
      %3489 = vmatpush1.bf16.msra.mxu0 0
      %3490 = vmatprep.subr.bf16.mxu0 0
      %3491 = vmatpush1.bf16.msra.mxu0 0
      %3492 = vmatprep.subr.bf16.mxu0 0
      %3493 = vmatpush1.bf16.msra.mxu0 0
      %3494 = vmatprep.subr.bf16.mxu0 0
      %3495 = vmatpush1.bf16.msra.mxu0 0
      %3496 = vmatprep.subr.bf16.mxu0 0
      %3497 = vmatpush1.bf16.msra.mxu0 0
      %3498 = vmatprep.subr.bf16.mxu0 0
      %3499 = vmatpush1.bf16.msra.mxu0 0
      %3500 = vmatprep.subr.bf16.mxu0 0
      %3501 = vmatpush1.bf16.msra.mxu0 %v3484
      %3502 = vmatprep.subr.bf16.mxu0 0
      %3503 = vmatpush2.bf16.msra.mxu0 0
      %3504 = vmatprep.subr.bf16.mxu0 0
      %3505 = vmatpush2.bf16.msra.mxu0 0
      %3506 = vmatprep.subr.bf16.mxu0 0
      %3507 = vmatpush2.bf16.msra.mxu0 0
      %3508 = vmatprep.subr.bf16.mxu0 0
      %3509 = vmatpush2.bf16.msra.mxu0 0
      %3510 = vmatprep.subr.bf16.mxu0 0
      %3511 = vmatpush2.bf16.msra.mxu0 0
      %3512 = vmatprep.subr.bf16.mxu0 0
      %3513 = vmatpush2.bf16.msra.mxu0 0
      %3514 = vmatprep.subr.bf16.mxu0 0
      %3515 = vmatpush2.bf16.msra.mxu0 0
      %3516 = vmatprep.subr.bf16.mxu0 0
      %3517 = vmatpush2.bf16.msra.mxu0 0
      %3518 = vmatprep.mubr.bf16.mxu0 0
      %3519 = vmatmul.mubr.bf16.gmra.mxu0 %v2197
      %v3520 = vpop.f32.mrf.mxu0
      %v3521 = vadd.f32 0.0, %v3520
      %v3522 = vpop.f32.mrf.mxu0
      %v3523 = vpop.f32.mrf.mxu0
      %v3524 = vadd.f32 0.0, %v3523
      %v3525 = vpop.f32.mrf.mxu0
      %3526 = vmatprep.mubr.bf16.mxu0 0
      %3527 = vmatmul.mubr.bf16.gmra.mxu0 %v2200
      %v3528 = vpop.f32.mrf.mxu0
      %v3529 = vadd.f32 0.0, %v3528
      %v3530 = vpop.f32.mrf.mxu0
      %v3531 = vpop.f32.mrf.mxu0
      %v3532 = vadd.f32 0.0, %v3531
      %v3533 = vpop.f32.mrf.mxu0
      %3534 = vmatprep.mubr.bf16.mxu0 0
      %3535 = vmatmul.mubr.bf16.gmra.mxu0 %v2203
      %v3536 = vpop.f32.mrf.mxu0
      %v3537 = vadd.f32 0.0, %v3536
      %v3538 = vpop.f32.mrf.mxu0
      %v3539 = vpop.f32.mrf.mxu0
      %v3540 = vadd.f32 0.0, %v3539
      %v3541 = vpop.f32.mrf.mxu0
      %3542 = vmatprep.mubr.bf16.mxu0 0
      %3543 = vmatmul.mubr.bf16.gmra.mxu0 %v2206
      %v3544 = vpop.f32.mrf.mxu0
      %v3545 = vadd.f32 0.0, %v3544
      %v3546 = vpop.f32.mrf.mxu0
      %v3547 = vpop.f32.mrf.mxu0
      %v3548 = vadd.f32 0.0, %v3547
      %v3549 = vpop.f32.mrf.mxu0
      %3550 = vmatprep.mubr.bf16.mxu0 0
      %3551 = vmatmul.mubr.bf16.gmra.mxu0 %v2209
      %v3552 = vpop.f32.mrf.mxu0
      %v3553 = vadd.f32 0.0, %v3552
      %v3554 = vpop.f32.mrf.mxu0
      %v3555 = vpop.f32.mrf.mxu0
      %v3556 = vadd.f32 0.0, %v3555
      %v3557 = vpop.f32.mrf.mxu0
      %3558 = vmatprep.mubr.bf16.mxu0 0
      %3559 = vmatmul.mubr.bf16.gmra.mxu0 %v2212
      %v3560 = vpop.f32.mrf.mxu0
      %v3561 = vadd.f32 0.0, %v3560
      %v3562 = vpop.f32.mrf.mxu0
      %v3563 = vpop.f32.mrf.mxu0
      %v3564 = vadd.f32 0.0, %v3563
      %v3565 = vpop.f32.mrf.mxu0
      %3566 = vmatprep.mubr.bf16.mxu0 0
      %3567 = vmatmul.mubr.bf16.gmra.mxu0 %v2215
      %v3568 = vpop.f32.mrf.mxu0
      %v3569 = vadd.f32 0.0, %v3568
      %v3570 = vpop.f32.mrf.mxu0
      %v3571 = vpop.f32.mrf.mxu0
      %v3572 = vadd.f32 0.0, %v3571
      %v3573 = vpop.f32.mrf.mxu0
      %3574 = vmatprep.mubr.bf16.mxu0 0
      %3575 = vmatmul.mubr.bf16.gmra.mxu0 %v2218
      %v3576 = vpop.f32.mrf.mxu0
      %v3577 = vadd.f32 0.0, %v3576
      %v3578 = vpop.f32.mrf.mxu0
      %v3579 = vpop.f32.mrf.mxu0
      %v3580 = vadd.f32 0.0, %v3579
      %v3581 = vpop.f32.mrf.mxu0
      %3582 = vmatprep.mubr.bf16.mxu0 0
      %3583 = vmatmul.mubr.bf16.gmra.mxu0 %v2221
      %v3584 = vpop.f32.mrf.mxu0
      %v3585 = vadd.f32 0.0, %v3584
      %v3586 = vpop.f32.mrf.mxu0
      %v3587 = vpop.f32.mrf.mxu0
      %v3588 = vadd.f32 0.0, %v3587
      %v3589 = vpop.f32.mrf.mxu0
      %3590 = vmatprep.mubr.bf16.mxu0 0
      %3591 = vmatmul.mubr.bf16.gmra.mxu0 %v2224
      %v3592 = vpop.f32.mrf.mxu0
      %v3593 = vadd.f32 0.0, %v3592
      %v3594 = vpop.f32.mrf.mxu0
      %v3595 = vpop.f32.mrf.mxu0
      %v3596 = vadd.f32 0.0, %v3595
      %v3597 = vpop.f32.mrf.mxu0
      %3598 = vmatprep.mubr.bf16.mxu0 0
      %3599 = vmatmul.mubr.bf16.gmra.mxu0 %v2227
      %v3600 = vpop.f32.mrf.mxu0
      %v3601 = vadd.f32 0.0, %v3600
      %v3602 = vpop.f32.mrf.mxu0
      %v3603 = vpop.f32.mrf.mxu0
      %v3604 = vadd.f32 0.0, %v3603
      %v3605 = vpop.f32.mrf.mxu0
      %3606 = vmatprep.mubr.bf16.mxu0 0
      %3607 = vmatmul.mubr.bf16.gmra.mxu0 %v2230
      %v3608 = vpop.f32.mrf.mxu0
      %v3609 = vadd.f32 0.0, %v3608
      %v3610 = vpop.f32.mrf.mxu0
      %v3611 = vpop.f32.mrf.mxu0
      %v3612 = vadd.f32 0.0, %v3611
      %v3613 = vpop.f32.mrf.mxu0
      %3614 = vmatprep.mubr.bf16.mxu0 0
      %3615 = vmatmul.mubr.bf16.gmra.mxu0 %v2233
      %v3616 = vpop.f32.mrf.mxu0
      %v3617 = vadd.f32 0.0, %v3616
      %v3618 = vpop.f32.mrf.mxu0
      %v3619 = vpop.f32.mrf.mxu0
      %v3620 = vadd.f32 0.0, %v3619
      %v3621 = vpop.f32.mrf.mxu0
      %3622 = vmatprep.mubr.bf16.mxu0 0
      %3623 = vmatmul.mubr.bf16.gmra.mxu0 %v2236
      %v3624 = vpop.f32.mrf.mxu0
      %v3625 = vadd.f32 0.0, %v3624
      %v3626 = vpop.f32.mrf.mxu0
      %v3627 = vpop.f32.mrf.mxu0
      %v3628 = vadd.f32 0.0, %v3627
      %v3629 = vpop.f32.mrf.mxu0
      %3630 = vmatprep.mubr.bf16.mxu0 0
      %3631 = vmatmul.mubr.bf16.gmra.mxu0 %v2835
      %v3632 = vpop.f32.mrf.mxu0
      %v3633 = vadd.f32 0.0, %v3632
      %v3634 = vpop.f32.mrf.mxu0
      %v3635 = vpop.f32.mrf.mxu0
      %v3636 = vadd.f32 0.0, %v3635
      %v3637 = vpop.f32.mrf.mxu0
      %3638 = vmatprep.mubr.bf16.mxu0 0
      %3639 = vmatmul.mubr.bf16.gmra.mxu0 %v3481
      %v3640 = vpop.f32.mrf.mxu0
      %v3641 = vadd.f32 0.0, %v3640
      %v3642 = vpop.f32.mrf.mxu0
      %v3643 = vpop.f32.mrf.mxu0
      %v3644 = vadd.f32 0.0, %v3643
      %v3645 = vpop.f32.mrf.mxu0
      %3646 = vdwg.mxu0
      %v3647 = vadd.f32 %v3441, %v3521
      %v3648 = vadd.f32 %v3442, %v3524
      %v3649 = vadd.f32 %v3443, %v3529
      %v3650 = vadd.f32 %v3444, %v3532
      %v3651 = vadd.f32 %v3445, %v3537
      %v3652 = vadd.f32 %v3446, %v3540
      %v3653 = vadd.f32 %v3447, %v3545
      %v3654 = vadd.f32 %v3448, %v3548
      %v3655 = vadd.f32 %v3449, %v3553
      %v3656 = vadd.f32 %v3450, %v3556
      %v3657 = vadd.f32 %v3451, %v3561
      %v3658 = vadd.f32 %v3452, %v3564
      %v3659 = vadd.f32 %v3453, %v3569
      %v3660 = vadd.f32 %v3454, %v3572
      %v3661 = vadd.f32 %v3455, %v3577
      %v3662 = vadd.f32 %v3456, %v3580
      %v3663 = vadd.f32 %v3457, %v3585
      %v3664 = vadd.f32 %v3458, %v3588
      %v3665 = vadd.f32 %v3459, %v3593
      %v3666 = vadd.f32 %v3460, %v3596
      %v3667 = vadd.f32 %v3461, %v3601
      %v3668 = vadd.f32 %v3462, %v3604
      %v3669 = vadd.f32 %v3463, %v3609
      %v3670 = vadd.f32 %v3464, %v3612
      %v3671 = vadd.f32 %v3465, %v3617
      %v3672 = vadd.f32 %v3466, %v3620
      %v3673 = vadd.f32 %v3467, %v3625
      %v3674 = vadd.f32 %v3468, %v3628
      %v3675 = vadd.f32 %v3469, %v3633
      %v3676 = vadd.f32 %v3470, %v3636
      %v3677 = vadd.f32 %v3471, %v3641
      %v3678 = vadd.f32 %v3472, %v3644
      %v3680 = vshrl.u32 %v1455, 16
      %v3682 = vrot.slane %v3680, 4
      %v3683 = vshll.u32 %v1455, 16
      %v3685 = vrot.slane %v3683, 5
      %v3686 = vor.u32 %v3682, %v3685
      %v3687 = vrot.slane %v3686, 4
      %v3689 = vshll.u32 %v1456, 16
      %v3691 = vrot.slane %v3689, 5
      %v3692 = vsel %vm1461, %v3687, %v3691
      %v3693 = vshrl.u32 %v1456, 16
      %v3695 = vrot.slane %v3693, 4
      %v3696 = vor.u32 %v3695, %v3691
      %v3697 = vrot.slane %v3696, 4
      %v3699 = vshll.u32 %v1457, 16
      %v3701 = vrot.slane %v3699, 5
      %v3702 = vsel %vm1461, %v3697, %v3701
      %s3703 = scalar_lea.vmem %s3, 14
      %v3704 = vld [vmem:[%s3703] sm:$0x3]
      %v3705 = vunpack.c.l.b16 %v3692
      %v3706 = vunpack.c.l.b16 %v3702
      %v3707 = vpack.c.b16 %v3706, %v3705
      %v3709 = vsel %vm1896, %v3707, 0
      %v3712 = vsel %vm1945, %v3704, 0
      %3714 = vmatprep.subr.bf16.mxu0 0
      %3715 = vmatpush1.bf16.msra.mxu0 0
      %3716 = vmatprep.subr.bf16.mxu0 0
      %3717 = vmatpush1.bf16.msra.mxu0 0
      %3718 = vmatprep.subr.bf16.mxu0 0
      %3719 = vmatpush1.bf16.msra.mxu0 0
      %3720 = vmatprep.subr.bf16.mxu0 0
      %3721 = vmatpush1.bf16.msra.mxu0 0
      %3722 = vmatprep.subr.bf16.mxu0 0
      %3723 = vmatpush1.bf16.msra.mxu0 0
      %3724 = vmatprep.subr.bf16.mxu0 0
      %3725 = vmatpush1.bf16.msra.mxu0 0
      %3726 = vmatprep.subr.bf16.mxu0 0
      %3727 = vmatpush1.bf16.msra.mxu0 0
      %3728 = vmatprep.subr.bf16.mxu0 0
      %3729 = vmatpush1.bf16.msra.mxu0 %v3712
      %3730 = vmatprep.subr.bf16.mxu0 0
      %3731 = vmatpush2.bf16.msra.mxu0 0
      %3732 = vmatprep.subr.bf16.mxu0 0
      %3733 = vmatpush2.bf16.msra.mxu0 0
      %3734 = vmatprep.subr.bf16.mxu0 0
      %3735 = vmatpush2.bf16.msra.mxu0 0
      %3736 = vmatprep.subr.bf16.mxu0 0
      %3737 = vmatpush2.bf16.msra.mxu0 0
      %3738 = vmatprep.subr.bf16.mxu0 0
      %3739 = vmatpush2.bf16.msra.mxu0 0
      %3740 = vmatprep.subr.bf16.mxu0 0
      %3741 = vmatpush2.bf16.msra.mxu0 0
      %3742 = vmatprep.subr.bf16.mxu0 0
      %3743 = vmatpush2.bf16.msra.mxu0 0
      %3744 = vmatprep.subr.bf16.mxu0 0
      %3745 = vmatpush2.bf16.msra.mxu0 0
      %3746 = vmatprep.mubr.bf16.mxu0 0
      %3747 = vmatmul.mubr.bf16.gmra.mxu0 %v1904
      %v3748 = vpop.f32.mrf.mxu0
      %v3749 = vadd.f32 0.0, %v3748
      %v3750 = vpop.f32.mrf.mxu0
      %v3751 = vpop.f32.mrf.mxu0
      %v3752 = vadd.f32 0.0, %v3751
      %v3753 = vpop.f32.mrf.mxu0
      %3754 = vmatprep.mubr.bf16.mxu0 0
      %3755 = vmatmul.mubr.bf16.gmra.mxu0 %v1907
      %v3756 = vpop.f32.mrf.mxu0
      %v3757 = vadd.f32 0.0, %v3756
      %v3758 = vpop.f32.mrf.mxu0
      %v3759 = vpop.f32.mrf.mxu0
      %v3760 = vadd.f32 0.0, %v3759
      %v3761 = vpop.f32.mrf.mxu0
      %3762 = vmatprep.mubr.bf16.mxu0 0
      %3763 = vmatmul.mubr.bf16.gmra.mxu0 %v1910
      %v3764 = vpop.f32.mrf.mxu0
      %v3765 = vadd.f32 0.0, %v3764
      %v3766 = vpop.f32.mrf.mxu0
      %v3767 = vpop.f32.mrf.mxu0
      %v3768 = vadd.f32 0.0, %v3767
      %v3769 = vpop.f32.mrf.mxu0
      %3770 = vmatprep.mubr.bf16.mxu0 0
      %3771 = vmatmul.mubr.bf16.gmra.mxu0 %v1913
      %v3772 = vpop.f32.mrf.mxu0
      %v3773 = vadd.f32 0.0, %v3772
      %v3774 = vpop.f32.mrf.mxu0
      %v3775 = vpop.f32.mrf.mxu0
      %v3776 = vadd.f32 0.0, %v3775
      %v3777 = vpop.f32.mrf.mxu0
      %3778 = vmatprep.mubr.bf16.mxu0 0
      %3779 = vmatmul.mubr.bf16.gmra.mxu0 %v1916
      %v3780 = vpop.f32.mrf.mxu0
      %v3781 = vadd.f32 0.0, %v3780
      %v3782 = vpop.f32.mrf.mxu0
      %v3783 = vpop.f32.mrf.mxu0
      %v3784 = vadd.f32 0.0, %v3783
      %v3785 = vpop.f32.mrf.mxu0
      %3786 = vmatprep.mubr.bf16.mxu0 0
      %3787 = vmatmul.mubr.bf16.gmra.mxu0 %v1919
      %v3788 = vpop.f32.mrf.mxu0
      %v3789 = vadd.f32 0.0, %v3788
      %v3790 = vpop.f32.mrf.mxu0
      %v3791 = vpop.f32.mrf.mxu0
      %v3792 = vadd.f32 0.0, %v3791
      %v3793 = vpop.f32.mrf.mxu0
      %3794 = vmatprep.mubr.bf16.mxu0 0
      %3795 = vmatmul.mubr.bf16.gmra.mxu0 %v1922
      %v3796 = vpop.f32.mrf.mxu0
      %v3797 = vadd.f32 0.0, %v3796
      %v3798 = vpop.f32.mrf.mxu0
      %v3799 = vpop.f32.mrf.mxu0
      %v3800 = vadd.f32 0.0, %v3799
      %v3801 = vpop.f32.mrf.mxu0
      %3802 = vmatprep.mubr.bf16.mxu0 0
      %3803 = vmatmul.mubr.bf16.gmra.mxu0 %v1925
      %v3804 = vpop.f32.mrf.mxu0
      %v3805 = vadd.f32 0.0, %v3804
      %v3806 = vpop.f32.mrf.mxu0
      %v3807 = vpop.f32.mrf.mxu0
      %v3808 = vadd.f32 0.0, %v3807
      %v3809 = vpop.f32.mrf.mxu0
      %3810 = vmatprep.mubr.bf16.mxu0 0
      %3811 = vmatmul.mubr.bf16.gmra.mxu0 %v1928
      %v3812 = vpop.f32.mrf.mxu0
      %v3813 = vadd.f32 0.0, %v3812
      %v3814 = vpop.f32.mrf.mxu0
      %v3815 = vpop.f32.mrf.mxu0
      %v3816 = vadd.f32 0.0, %v3815
      %v3817 = vpop.f32.mrf.mxu0
      %3818 = vmatprep.mubr.bf16.mxu0 0
      %3819 = vmatmul.mubr.bf16.gmra.mxu0 %v1931
      %v3820 = vpop.f32.mrf.mxu0
      %v3821 = vadd.f32 0.0, %v3820
      %v3822 = vpop.f32.mrf.mxu0
      %v3823 = vpop.f32.mrf.mxu0
      %v3824 = vadd.f32 0.0, %v3823
      %v3825 = vpop.f32.mrf.mxu0
      %3826 = vmatprep.mubr.bf16.mxu0 0
      %3827 = vmatmul.mubr.bf16.gmra.mxu0 %v1934
      %v3828 = vpop.f32.mrf.mxu0
      %v3829 = vadd.f32 0.0, %v3828
      %v3830 = vpop.f32.mrf.mxu0
      %v3831 = vpop.f32.mrf.mxu0
      %v3832 = vadd.f32 0.0, %v3831
      %v3833 = vpop.f32.mrf.mxu0
      %3834 = vmatprep.mubr.bf16.mxu0 0
      %3835 = vmatmul.mubr.bf16.gmra.mxu0 %v1937
      %v3836 = vpop.f32.mrf.mxu0
      %v3837 = vadd.f32 0.0, %v3836
      %v3838 = vpop.f32.mrf.mxu0
      %v3839 = vpop.f32.mrf.mxu0
      %v3840 = vadd.f32 0.0, %v3839
      %v3841 = vpop.f32.mrf.mxu0
      %3842 = vmatprep.mubr.bf16.mxu0 0
      %3843 = vmatmul.mubr.bf16.gmra.mxu0 %v1940
      %v3844 = vpop.f32.mrf.mxu0
      %v3845 = vadd.f32 0.0, %v3844
      %v3846 = vpop.f32.mrf.mxu0
      %v3847 = vpop.f32.mrf.mxu0
      %v3848 = vadd.f32 0.0, %v3847
      %v3849 = vpop.f32.mrf.mxu0
      %3850 = vmatprep.mubr.bf16.mxu0 0
      %3851 = vmatmul.mubr.bf16.gmra.mxu0 %v1943
      %v3852 = vpop.f32.mrf.mxu0
      %v3853 = vadd.f32 0.0, %v3852
      %v3854 = vpop.f32.mrf.mxu0
      %v3855 = vpop.f32.mrf.mxu0
      %v3856 = vadd.f32 0.0, %v3855
      %v3857 = vpop.f32.mrf.mxu0
      %3858 = vmatprep.mubr.bf16.mxu0 0
      %3859 = vmatmul.mubr.bf16.gmra.mxu0 %v3063
      %v3860 = vpop.f32.mrf.mxu0
      %v3861 = vadd.f32 0.0, %v3860
      %v3862 = vpop.f32.mrf.mxu0
      %v3863 = vpop.f32.mrf.mxu0
      %v3864 = vadd.f32 0.0, %v3863
      %v3865 = vpop.f32.mrf.mxu0
      %3866 = vmatprep.mubr.bf16.mxu0 0
      %3867 = vmatmul.mubr.bf16.gmra.mxu0 %v3709
      %v3868 = vpop.f32.mrf.mxu0
      %v3869 = vadd.f32 0.0, %v3868
      %v3870 = vpop.f32.mrf.mxu0
      %v3871 = vpop.f32.mrf.mxu0
      %v3872 = vadd.f32 0.0, %v3871
      %v3873 = vpop.f32.mrf.mxu0
      %3874 = vdwg.mxu0
      %v3875 = vadd.f32 %v3647, %v3749
      %v3876 = vadd.f32 %v3648, %v3752
      %v3877 = vadd.f32 %v3649, %v3757
      %v3878 = vadd.f32 %v3650, %v3760
      %v3879 = vadd.f32 %v3651, %v3765
      %v3880 = vadd.f32 %v3652, %v3768
      %v3881 = vadd.f32 %v3653, %v3773
      %v3882 = vadd.f32 %v3654, %v3776
      %v3883 = vadd.f32 %v3655, %v3781
      %v3884 = vadd.f32 %v3656, %v3784
      %v3885 = vadd.f32 %v3657, %v3789
      %v3886 = vadd.f32 %v3658, %v3792
      %v3887 = vadd.f32 %v3659, %v3797
      %v3888 = vadd.f32 %v3660, %v3800
      %v3889 = vadd.f32 %v3661, %v3805
      %v3890 = vadd.f32 %v3662, %v3808
      %v3891 = vadd.f32 %v3663, %v3813
      %v3892 = vadd.f32 %v3664, %v3816
      %v3893 = vadd.f32 %v3665, %v3821
      %v3894 = vadd.f32 %v3666, %v3824
      %v3895 = vadd.f32 %v3667, %v3829
      %v3896 = vadd.f32 %v3668, %v3832
      %v3897 = vadd.f32 %v3669, %v3837
      %v3898 = vadd.f32 %v3670, %v3840
      %v3899 = vadd.f32 %v3671, %v3845
      %v3900 = vadd.f32 %v3672, %v3848
      %v3901 = vadd.f32 %v3673, %v3853
      %v3902 = vadd.f32 %v3674, %v3856
      %v3903 = vadd.f32 %v3675, %v3861
      %v3904 = vadd.f32 %v3676, %v3864
      %v3905 = vadd.f32 %v3677, %v3869
      %v3906 = vadd.f32 %v3678, %v3872
      %v3908 = vrot.slane %v1455, 5
      %v3909 = vrot.slane %v3908, 4
      %v3910 = vrot.slane %v1456, 5
      %v3911 = vsel %vm2420, %v3909, %v3910
      %v3912 = vrot.slane %v3910, 4
      %v3913 = vrot.slane %v1457, 5
      %v3914 = vsel %vm2420, %v3912, %v3913
      %s3915 = scalar_lea.vmem %s3, 16
      %v3916 = vld [vmem:[%s3915] sm:$0x3]
      %v3917 = vunpack.c.l.b16 %v3911
      %v3918 = vunpack.c.l.b16 %v3914
      %v3919 = vpack.c.b16 %v3918, %v3917
      %v3921 = vsel %vm1896, %v3919, 0
      %v3924 = vsel %vm1945, %v3916, 0
      %3926 = vmatprep.subr.bf16.mxu0 0
      %3927 = vmatpush1.bf16.msra.mxu0 0
      %3928 = vmatprep.subr.bf16.mxu0 0
      %3929 = vmatpush1.bf16.msra.mxu0 0
      %3930 = vmatprep.subr.bf16.mxu0 0
      %3931 = vmatpush1.bf16.msra.mxu0 0
      %3932 = vmatprep.subr.bf16.mxu0 0
      %3933 = vmatpush1.bf16.msra.mxu0 0
      %3934 = vmatprep.subr.bf16.mxu0 0
      %3935 = vmatpush1.bf16.msra.mxu0 0
      %3936 = vmatprep.subr.bf16.mxu0 0
      %3937 = vmatpush1.bf16.msra.mxu0 0
      %3938 = vmatprep.subr.bf16.mxu0 0
      %3939 = vmatpush1.bf16.msra.mxu0 0
      %3940 = vmatprep.subr.bf16.mxu0 0
      %3941 = vmatpush1.bf16.msra.mxu0 %v3924
      %3942 = vmatprep.subr.bf16.mxu0 0
      %3943 = vmatpush2.bf16.msra.mxu0 0
      %3944 = vmatprep.subr.bf16.mxu0 0
      %3945 = vmatpush2.bf16.msra.mxu0 0
      %3946 = vmatprep.subr.bf16.mxu0 0
      %3947 = vmatpush2.bf16.msra.mxu0 0
      %3948 = vmatprep.subr.bf16.mxu0 0
      %3949 = vmatpush2.bf16.msra.mxu0 0
      %3950 = vmatprep.subr.bf16.mxu0 0
      %3951 = vmatpush2.bf16.msra.mxu0 0
      %3952 = vmatprep.subr.bf16.mxu0 0
      %3953 = vmatpush2.bf16.msra.mxu0 0
      %3954 = vmatprep.subr.bf16.mxu0 0
      %3955 = vmatpush2.bf16.msra.mxu0 0
      %3956 = vmatprep.subr.bf16.mxu0 0
      %3957 = vmatpush2.bf16.msra.mxu0 0
      %3958 = vmatprep.mubr.bf16.mxu0 0
      %3959 = vmatmul.mubr.bf16.gmra.mxu0 %v2590
      %v3960 = vpop.f32.mrf.mxu0
      %v3961 = vadd.f32 0.0, %v3960
      %v3962 = vpop.f32.mrf.mxu0
      %v3963 = vpop.f32.mrf.mxu0
      %v3964 = vadd.f32 0.0, %v3963
      %v3965 = vpop.f32.mrf.mxu0
      %3966 = vmatprep.mubr.bf16.mxu0 0
      %3967 = vmatmul.mubr.bf16.gmra.mxu0 %v2593
      %v3968 = vpop.f32.mrf.mxu0
      %v3969 = vadd.f32 0.0, %v3968
      %v3970 = vpop.f32.mrf.mxu0
      %v3971 = vpop.f32.mrf.mxu0
      %v3972 = vadd.f32 0.0, %v3971
      %v3973 = vpop.f32.mrf.mxu0
      %3974 = vmatprep.mubr.bf16.mxu0 0
      %3975 = vmatmul.mubr.bf16.gmra.mxu0 %v2596
      %v3976 = vpop.f32.mrf.mxu0
      %v3977 = vadd.f32 0.0, %v3976
      %v3978 = vpop.f32.mrf.mxu0
      %v3979 = vpop.f32.mrf.mxu0
      %v3980 = vadd.f32 0.0, %v3979
      %v3981 = vpop.f32.mrf.mxu0
      %3982 = vmatprep.mubr.bf16.mxu0 0
      %3983 = vmatmul.mubr.bf16.gmra.mxu0 %v2599
      %v3984 = vpop.f32.mrf.mxu0
      %v3985 = vadd.f32 0.0, %v3984
      %v3986 = vpop.f32.mrf.mxu0
      %v3987 = vpop.f32.mrf.mxu0
      %v3988 = vadd.f32 0.0, %v3987
      %v3989 = vpop.f32.mrf.mxu0
      %3990 = vmatprep.mubr.bf16.mxu0 0
      %3991 = vmatmul.mubr.bf16.gmra.mxu0 %v2602
      %v3992 = vpop.f32.mrf.mxu0
      %v3993 = vadd.f32 0.0, %v3992
      %v3994 = vpop.f32.mrf.mxu0
      %v3995 = vpop.f32.mrf.mxu0
      %v3996 = vadd.f32 0.0, %v3995
      %v3997 = vpop.f32.mrf.mxu0
      %3998 = vmatprep.mubr.bf16.mxu0 0
      %3999 = vmatmul.mubr.bf16.gmra.mxu0 %v2605
      %v4000 = vpop.f32.mrf.mxu0
      %v4001 = vadd.f32 0.0, %v4000
      %v4002 = vpop.f32.mrf.mxu0
      %v4003 = vpop.f32.mrf.mxu0
      %v4004 = vadd.f32 0.0, %v4003
      %v4005 = vpop.f32.mrf.mxu0
      %4006 = vmatprep.mubr.bf16.mxu0 0
      %4007 = vmatmul.mubr.bf16.gmra.mxu0 %v2608
      %v4008 = vpop.f32.mrf.mxu0
      %v4009 = vadd.f32 0.0, %v4008
      %v4010 = vpop.f32.mrf.mxu0
      %v4011 = vpop.f32.mrf.mxu0
      %v4012 = vadd.f32 0.0, %v4011
      %v4013 = vpop.f32.mrf.mxu0
      %4014 = vmatprep.mubr.bf16.mxu0 0
      %4015 = vmatmul.mubr.bf16.gmra.mxu0 %v2611
      %v4016 = vpop.f32.mrf.mxu0
      %v4017 = vadd.f32 0.0, %v4016
      %v4018 = vpop.f32.mrf.mxu0
      %v4019 = vpop.f32.mrf.mxu0
      %v4020 = vadd.f32 0.0, %v4019
      %v4021 = vpop.f32.mrf.mxu0
      %4022 = vmatprep.mubr.bf16.mxu0 0
      %4023 = vmatmul.mubr.bf16.gmra.mxu0 %v2614
      %v4024 = vpop.f32.mrf.mxu0
      %v4025 = vadd.f32 0.0, %v4024
      %v4026 = vpop.f32.mrf.mxu0
      %v4027 = vpop.f32.mrf.mxu0
      %v4028 = vadd.f32 0.0, %v4027
      %v4029 = vpop.f32.mrf.mxu0
      %4030 = vmatprep.mubr.bf16.mxu0 0
      %4031 = vmatmul.mubr.bf16.gmra.mxu0 %v2617
      %v4032 = vpop.f32.mrf.mxu0
      %v4033 = vadd.f32 0.0, %v4032
      %v4034 = vpop.f32.mrf.mxu0
      %v4035 = vpop.f32.mrf.mxu0
      %v4036 = vadd.f32 0.0, %v4035
      %v4037 = vpop.f32.mrf.mxu0
      %4038 = vmatprep.mubr.bf16.mxu0 0
      %4039 = vmatmul.mubr.bf16.gmra.mxu0 %v2620
      %v4040 = vpop.f32.mrf.mxu0
      %v4041 = vadd.f32 0.0, %v4040
      %v4042 = vpop.f32.mrf.mxu0
      %v4043 = vpop.f32.mrf.mxu0
      %v4044 = vadd.f32 0.0, %v4043
      %v4045 = vpop.f32.mrf.mxu0
      %4046 = vmatprep.mubr.bf16.mxu0 0
      %4047 = vmatmul.mubr.bf16.gmra.mxu0 %v2623
      %v4048 = vpop.f32.mrf.mxu0
      %v4049 = vadd.f32 0.0, %v4048
      %v4050 = vpop.f32.mrf.mxu0
      %v4051 = vpop.f32.mrf.mxu0
      %v4052 = vadd.f32 0.0, %v4051
      %v4053 = vpop.f32.mrf.mxu0
      %4054 = vmatprep.mubr.bf16.mxu0 0
      %4055 = vmatmul.mubr.bf16.gmra.mxu0 %v2626
      %v4056 = vpop.f32.mrf.mxu0
      %v4057 = vadd.f32 0.0, %v4056
      %v4058 = vpop.f32.mrf.mxu0
      %v4059 = vpop.f32.mrf.mxu0
      %v4060 = vadd.f32 0.0, %v4059
      %v4061 = vpop.f32.mrf.mxu0
      %4062 = vmatprep.mubr.bf16.mxu0 0
      %4063 = vmatmul.mubr.bf16.gmra.mxu0 %v2629
      %v4064 = vpop.f32.mrf.mxu0
      %v4065 = vadd.f32 0.0, %v4064
      %v4066 = vpop.f32.mrf.mxu0
      %v4067 = vpop.f32.mrf.mxu0
      %v4068 = vadd.f32 0.0, %v4067
      %v4069 = vpop.f32.mrf.mxu0
      %4070 = vmatprep.mubr.bf16.mxu0 0
      %4071 = vmatmul.mubr.bf16.gmra.mxu0 %v3275
      %v4072 = vpop.f32.mrf.mxu0
      %v4073 = vadd.f32 0.0, %v4072
      %v4074 = vpop.f32.mrf.mxu0
      %v4075 = vpop.f32.mrf.mxu0
      %v4076 = vadd.f32 0.0, %v4075
      %v4077 = vpop.f32.mrf.mxu0
      %4078 = vmatprep.mubr.bf16.mxu0 0
      %4079 = vmatmul.mubr.bf16.gmra.mxu0 %v3921
      %v4080 = vpop.f32.mrf.mxu0
      %v4081 = vadd.f32 0.0, %v4080
      %v4082 = vpop.f32.mrf.mxu0
      %v4083 = vpop.f32.mrf.mxu0
      %v4084 = vadd.f32 0.0, %v4083
      %v4085 = vpop.f32.mrf.mxu0
      %4086 = vdwg.mxu0
      %v4087 = vadd.f32 %v3875, %v3961
      %v4088 = vadd.f32 %v3876, %v3964
      %v4089 = vadd.f32 %v3877, %v3969
      %v4090 = vadd.f32 %v3878, %v3972
      %v4091 = vadd.f32 %v3879, %v3977
      %v4092 = vadd.f32 %v3880, %v3980
      %v4093 = vadd.f32 %v3881, %v3985
      %v4094 = vadd.f32 %v3882, %v3988
      %v4095 = vadd.f32 %v3883, %v3993
      %v4096 = vadd.f32 %v3884, %v3996
      %v4097 = vadd.f32 %v3885, %v4001
      %v4098 = vadd.f32 %v3886, %v4004
      %v4099 = vadd.f32 %v3887, %v4009
      %v4100 = vadd.f32 %v3888, %v4012
      %v4101 = vadd.f32 %v3889, %v4017
      %v4102 = vadd.f32 %v3890, %v4020
      %v4103 = vadd.f32 %v3891, %v4025
      %v4104 = vadd.f32 %v3892, %v4028
      %v4105 = vadd.f32 %v3893, %v4033
      %v4106 = vadd.f32 %v3894, %v4036
      %v4107 = vadd.f32 %v3895, %v4041
      %v4108 = vadd.f32 %v3896, %v4044
      %v4109 = vadd.f32 %v3897, %v4049
      %v4110 = vadd.f32 %v3898, %v4052
      %v4111 = vadd.f32 %v3899, %v4057
      %v4112 = vadd.f32 %v3900, %v4060
      %v4113 = vadd.f32 %v3901, %v4065
      %v4114 = vadd.f32 %v3902, %v4068
      %v4115 = vadd.f32 %v3903, %v4073
      %v4116 = vadd.f32 %v3904, %v4076
      %v4117 = vadd.f32 %v3905, %v4081
      %v4118 = vadd.f32 %v3906, %v4084
      %v4119 = vpack.c.bf16 %v4088, %v4087
      %v4120 = vpack.c.bf16 %v4090, %v4089
      %v4121 = vpack.c.bf16 %v4092, %v4091
      %v4122 = vpack.c.bf16 %v4094, %v4093
      %v4123 = vpack.c.bf16 %v4096, %v4095
      %v4124 = vpack.c.bf16 %v4098, %v4097
      %v4125 = vpack.c.bf16 %v4100, %v4099
      %v4126 = vpack.c.bf16 %v4102, %v4101
      %v4127 = vpack.c.bf16 %v4104, %v4103
      %v4128 = vpack.c.bf16 %v4106, %v4105
      %v4129 = vpack.c.bf16 %v4108, %v4107
      %v4130 = vpack.c.bf16 %v4110, %v4109
      %v4131 = vpack.c.bf16 %v4112, %v4111
      %v4132 = vpack.c.bf16 %v4114, %v4113
      %v4133 = vpack.c.bf16 %v4116, %v4115
      %v4134 = vpack.c.bf16 %v4118, %v4117
      %v4151 = vunpack.c.l.b16 %v4119
      %v4152 = vunpack.c.h.b16 %v4119
      %v4153 = vunpack.c.l.b16 %v4120
      %v4154 = vunpack.c.h.b16 %v4120
      %v4155 = vunpack.c.l.b16 %v4121
      %v4156 = vunpack.c.h.b16 %v4121
      %v4157 = vunpack.c.l.b16 %v4122
      %v4158 = vunpack.c.h.b16 %v4122
      %v4159 = vunpack.c.l.b16 %v4123
      %v4160 = vunpack.c.h.b16 %v4123
      %v4161 = vunpack.c.l.b16 %v4124
      %v4162 = vunpack.c.h.b16 %v4124
      %v4163 = vunpack.c.l.b16 %v4125
      %v4164 = vunpack.c.h.b16 %v4125
      %v4165 = vunpack.c.l.b16 %v4126
      %v4166 = vunpack.c.h.b16 %v4126
      %v4167 = vunpack.c.l.b16 %v4127
      %v4168 = vunpack.c.h.b16 %v4127
      %v4169 = vunpack.c.l.b16 %v4128
      %v4170 = vunpack.c.h.b16 %v4128
      %v4171 = vunpack.c.l.b16 %v4129
      %v4172 = vunpack.c.h.b16 %v4129
      %v4173 = vunpack.c.l.b16 %v4130
      %v4174 = vunpack.c.h.b16 %v4130
      %v4175 = vunpack.c.l.b16 %v4131
      %v4176 = vunpack.c.h.b16 %v4131
      %v4177 = vunpack.c.l.b16 %v4132
      %v4178 = vunpack.c.h.b16 %v4132
      %v4179 = vunpack.c.l.b16 %v4133
      %v4180 = vunpack.c.h.b16 %v4133
      %v4181 = vunpack.c.l.b16 %v4134
      %v4182 = vunpack.c.h.b16 %v4134
      %v4183 = vpack.c.b16 %v4151, %v4151
      %v4184 = vpack.c.b16 %v4152, %v4152
      %v4185 = vpack.c.b16 %v4153, %v4153
      %v4186 = vpack.c.b16 %v4154, %v4154
      %v4187 = vpack.c.b16 %v4155, %v4155
      %v4188 = vpack.c.b16 %v4156, %v4156
      %v4189 = vpack.c.b16 %v4157, %v4157
      %v4190 = vpack.c.b16 %v4158, %v4158
      %v4191 = vpack.c.b16 %v4159, %v4159
      %v4192 = vpack.c.b16 %v4160, %v4160
      %v4193 = vpack.c.b16 %v4161, %v4161
      %v4194 = vpack.c.b16 %v4162, %v4162
      %v4195 = vpack.c.b16 %v4163, %v4163
      %v4196 = vpack.c.b16 %v4164, %v4164
      %v4197 = vpack.c.b16 %v4165, %v4165
      %v4198 = vpack.c.b16 %v4166, %v4166
      %v4199 = vpack.c.b16 %v4167, %v4167
      %v4200 = vpack.c.b16 %v4168, %v4168
      %v4201 = vpack.c.b16 %v4169, %v4169
      %v4202 = vpack.c.b16 %v4170, %v4170
      %v4203 = vpack.c.b16 %v4171, %v4171
      %v4204 = vpack.c.b16 %v4172, %v4172
      %v4205 = vpack.c.b16 %v4173, %v4173
      %v4206 = vpack.c.b16 %v4174, %v4174
      %v4207 = vpack.c.b16 %v4175, %v4175
      %v4208 = vpack.c.b16 %v4176, %v4176
      %v4209 = vpack.c.b16 %v4177, %v4177
      %v4210 = vpack.c.b16 %v4178, %v4178
      %v4211 = vpack.c.b16 %v4179, %v4179
      %v4212 = vpack.c.b16 %v4180, %v4180
      %v4213 = vpack.c.b16 %v4181, %v4181
      %v4214 = vpack.c.b16 %v4182, %v4182
      %4247 = vst.msk [vmem:[%s231] sm:$0xf] %vm731, %v4183
      %4248 = vst.msk [vmem:[%s231 + $0x4] sm:$0xf] %vm731, %v4184
      %4249 = vst.msk [vmem:[%s231 + $0x8] sm:$0xf] %vm731, %v4185
      %4250 = vst.msk [vmem:[%s231 + $0xc] sm:$0xf] %vm731, %v4186
      %4251 = vst.msk [vmem:[%s231 + $0x10] sm:$0xf] %vm731, %v4187
      %4252 = vst.msk [vmem:[%s231 + $0x14] sm:$0xf] %vm731, %v4188
      %4253 = vst.msk [vmem:[%s231 + $0x18] sm:$0xf] %vm731, %v4189
      %4254 = vst.msk [vmem:[%s231 + $0x1c] sm:$0xf] %vm731, %v4190
      %4255 = vst.msk [vmem:[%s231 + $0x20] sm:$0xf] %vm731, %v4191
      %4256 = vst.msk [vmem:[%s231 + $0x24] sm:$0xf] %vm731, %v4192
      %4257 = vst.msk [vmem:[%s231 + $0x28] sm:$0xf] %vm731, %v4193
      %4258 = vst.msk [vmem:[%s231 + $0x2c] sm:$0xf] %vm731, %v4194
      %4259 = vst.msk [vmem:[%s231 + $0x30] sm:$0xf] %vm731, %v4195
      %4260 = vst.msk [vmem:[%s231 + $0x34] sm:$0xf] %vm731, %v4196
      %4261 = vst.msk [vmem:[%s231 + $0x38] sm:$0xf] %vm731, %v4197
      %4262 = vst.msk [vmem:[%s231 + $0x3c] sm:$0xf] %vm731, %v4198
      %4263 = vst.msk [vmem:[%s231 + $0x40] sm:$0xf] %vm731, %v4199
      %4264 = vst.msk [vmem:[%s231 + $0x44] sm:$0xf] %vm731, %v4200
      %4265 = vst.msk [vmem:[%s231 + $0x48] sm:$0xf] %vm731, %v4201
      %4266 = vst.msk [vmem:[%s231 + $0x4c] sm:$0xf] %vm731, %v4202
      %4267 = vst.msk [vmem:[%s231 + $0x50] sm:$0xf] %vm731, %v4203
      %4268 = vst.msk [vmem:[%s231 + $0x54] sm:$0xf] %vm731, %v4204
      %4269 = vst.msk [vmem:[%s231 + $0x58] sm:$0xf] %vm731, %v4205
      %4270 = vst.msk [vmem:[%s231 + $0x5c] sm:$0xf] %vm731, %v4206
      %4271 = vst.msk [vmem:[%s231 + $0x60] sm:$0xf] %vm731, %v4207
      %4272 = vst.msk [vmem:[%s231 + $0x64] sm:$0xf] %vm731, %v4208
      %4273 = vst.msk [vmem:[%s231 + $0x68] sm:$0xf] %vm731, %v4209
      %4274 = vst.msk [vmem:[%s231 + $0x6c] sm:$0xf] %vm731, %v4210
      %4275 = vst.msk [vmem:[%s231 + $0x70] sm:$0xf] %vm731, %v4211
      %4276 = vst.msk [vmem:[%s231 + $0x74] sm:$0xf] %vm731, %v4212
      %4277 = vst.msk [vmem:[%s231 + $0x78] sm:$0xf] %vm731, %v4213
      %4278 = vst.msk [vmem:[%s231 + $0x7c] sm:$0xf] %vm731, %v4214
      %v4279 = vsel %vm1896, %v4087, 0.0
      %v4280 = vsel %vm1896, %v4088, 0.0
      %v4281 = vadd.f32 %v4279, %v4280
      %v4282 = vsel %vm1896, %v4089, 0.0
      %v4283 = vadd.f32 %v4281, %v4282
      %v4284 = vsel %vm1896, %v4090, 0.0
      %v4285 = vadd.f32 %v4283, %v4284
      %v4286 = vsel %vm1896, %v4091, 0.0
      %v4287 = vadd.f32 %v4285, %v4286
      %v4288 = vsel %vm1896, %v4092, 0.0
      %v4289 = vadd.f32 %v4287, %v4288
      %v4290 = vsel %vm1896, %v4093, 0.0
      %v4291 = vadd.f32 %v4289, %v4290
      %v4292 = vsel %vm1896, %v4094, 0.0
      %v4293 = vadd.f32 %v4291, %v4292
      %v4294 = vsel %vm1896, %v4095, 0.0
      %v4295 = vadd.f32 %v4293, %v4294
      %v4296 = vsel %vm1896, %v4096, 0.0
      %v4297 = vadd.f32 %v4295, %v4296
      %v4298 = vsel %vm1896, %v4097, 0.0
      %v4299 = vadd.f32 %v4297, %v4298
      %v4300 = vsel %vm1896, %v4098, 0.0
      %v4301 = vadd.f32 %v4299, %v4300
      %v4302 = vsel %vm1896, %v4099, 0.0
      %v4303 = vadd.f32 %v4301, %v4302
      %v4304 = vsel %vm1896, %v4100, 0.0
      %v4305 = vadd.f32 %v4303, %v4304
      %v4306 = vsel %vm1896, %v4101, 0.0
      %v4307 = vadd.f32 %v4305, %v4306
      %v4308 = vsel %vm1896, %v4102, 0.0
      %v4309 = vadd.f32 %v4307, %v4308
      %v4310 = vsel %vm1896, %v4103, 0.0
      %v4311 = vadd.f32 %v4309, %v4310
      %v4312 = vsel %vm1896, %v4104, 0.0
      %v4313 = vadd.f32 %v4311, %v4312
      %v4314 = vsel %vm1896, %v4105, 0.0
      %v4315 = vadd.f32 %v4313, %v4314
      %v4316 = vsel %vm1896, %v4106, 0.0
      %v4317 = vadd.f32 %v4315, %v4316
      %v4318 = vsel %vm1896, %v4107, 0.0
      %v4319 = vadd.f32 %v4317, %v4318
      %v4320 = vsel %vm1896, %v4108, 0.0
      %v4321 = vadd.f32 %v4319, %v4320
      %v4322 = vsel %vm1896, %v4109, 0.0
      %v4323 = vadd.f32 %v4321, %v4322
      %v4324 = vsel %vm1896, %v4110, 0.0
      %v4325 = vadd.f32 %v4323, %v4324
      %v4326 = vsel %vm1896, %v4111, 0.0
      %v4327 = vadd.f32 %v4325, %v4326
      %v4328 = vsel %vm1896, %v4112, 0.0
      %v4329 = vadd.f32 %v4327, %v4328
      %v4330 = vsel %vm1896, %v4113, 0.0
      %v4331 = vadd.f32 %v4329, %v4330
      %v4332 = vsel %vm1896, %v4114, 0.0
      %v4333 = vadd.f32 %v4331, %v4332
      %v4334 = vsel %vm1896, %v4115, 0.0
      %v4335 = vadd.f32 %v4333, %v4334
      %v4336 = vsel %vm1896, %v4116, 0.0
      %v4337 = vadd.f32 %v4335, %v4336
      %v4338 = vsel %vm1896, %v4117, 0.0
      %v4339 = vadd.f32 %v4337, %v4338
      %v4340 = vsel %vm1896, %v4118, 0.0
      %v4341 = vadd.f32 %v4339, %v4340
      %v4342 = vrot.slane %v4341, 4
      %v4343 = vadd.f32 %v4341, %v4342
      %v4344 = vrot.slane %v4343, 2
      %v4345 = vadd.f32 %v4343, %v4344
      %v4346 = vrot.slane %v4345, 1
      %v4347 = vadd.f32 %v4345, %v4346
      %vm4348 = vcmask 24576
      %4349 = vst.msk [vmem:[%s235] sm:$0x1] %vm4348, %v4347
      %v4350 = vmul.f32 %v4087, %v4087
      %v4351 = vmul.f32 %v4088, %v4088
      %v4352 = vmul.f32 %v4089, %v4089
      %v4353 = vmul.f32 %v4090, %v4090
      %v4354 = vmul.f32 %v4091, %v4091
      %v4355 = vmul.f32 %v4092, %v4092
      %v4356 = vmul.f32 %v4093, %v4093
      %v4357 = vmul.f32 %v4094, %v4094
      %v4358 = vmul.f32 %v4095, %v4095
      %v4359 = vmul.f32 %v4096, %v4096
      %v4360 = vmul.f32 %v4097, %v4097
      %v4361 = vmul.f32 %v4098, %v4098
      %v4362 = vmul.f32 %v4099, %v4099
      %v4363 = vmul.f32 %v4100, %v4100
      %v4364 = vmul.f32 %v4101, %v4101
      %v4365 = vmul.f32 %v4102, %v4102
      %v4366 = vmul.f32 %v4103, %v4103
      %v4367 = vmul.f32 %v4104, %v4104
      %v4368 = vmul.f32 %v4105, %v4105
      %v4369 = vmul.f32 %v4106, %v4106
      %v4370 = vmul.f32 %v4107, %v4107
      %v4371 = vmul.f32 %v4108, %v4108
      %v4372 = vmul.f32 %v4109, %v4109
      %v4373 = vmul.f32 %v4110, %v4110
      %v4374 = vmul.f32 %v4111, %v4111
      %v4375 = vmul.f32 %v4112, %v4112
      %v4376 = vmul.f32 %v4113, %v4113
      %v4377 = vmul.f32 %v4114, %v4114
      %v4378 = vmul.f32 %v4115, %v4115
      %v4379 = vmul.f32 %v4116, %v4116
      %v4380 = vmul.f32 %v4117, %v4117
      %v4381 = vmul.f32 %v4118, %v4118
      %v4382 = vsel %vm1896, %v4350, 0.0
      %v4383 = vsel %vm1896, %v4351, 0.0
      %v4384 = vadd.f32 %v4382, %v4383
      %v4385 = vsel %vm1896, %v4352, 0.0
      %v4386 = vadd.f32 %v4384, %v4385
      %v4387 = vsel %vm1896, %v4353, 0.0
      %v4388 = vadd.f32 %v4386, %v4387
      %v4389 = vsel %vm1896, %v4354, 0.0
      %v4390 = vadd.f32 %v4388, %v4389
      %v4391 = vsel %vm1896, %v4355, 0.0
      %v4392 = vadd.f32 %v4390, %v4391
      %v4393 = vsel %vm1896, %v4356, 0.0
      %v4394 = vadd.f32 %v4392, %v4393
      %v4395 = vsel %vm1896, %v4357, 0.0
      %v4396 = vadd.f32 %v4394, %v4395
      %v4397 = vsel %vm1896, %v4358, 0.0
      %v4398 = vadd.f32 %v4396, %v4397
      %v4399 = vsel %vm1896, %v4359, 0.0
      %v4400 = vadd.f32 %v4398, %v4399
      %v4401 = vsel %vm1896, %v4360, 0.0
      %v4402 = vadd.f32 %v4400, %v4401
      %v4403 = vsel %vm1896, %v4361, 0.0
      %v4404 = vadd.f32 %v4402, %v4403
      %v4405 = vsel %vm1896, %v4362, 0.0
      %v4406 = vadd.f32 %v4404, %v4405
      %v4407 = vsel %vm1896, %v4363, 0.0
      %v4408 = vadd.f32 %v4406, %v4407
      %v4409 = vsel %vm1896, %v4364, 0.0
      %v4410 = vadd.f32 %v4408, %v4409
      %v4411 = vsel %vm1896, %v4365, 0.0
      %v4412 = vadd.f32 %v4410, %v4411
      %v4413 = vsel %vm1896, %v4366, 0.0
      %v4414 = vadd.f32 %v4412, %v4413
      %v4415 = vsel %vm1896, %v4367, 0.0
      %v4416 = vadd.f32 %v4414, %v4415
      %v4417 = vsel %vm1896, %v4368, 0.0
      %v4418 = vadd.f32 %v4416, %v4417
      %v4419 = vsel %vm1896, %v4369, 0.0
      %v4420 = vadd.f32 %v4418, %v4419
      %v4421 = vsel %vm1896, %v4370, 0.0
      %v4422 = vadd.f32 %v4420, %v4421
      %v4423 = vsel %vm1896, %v4371, 0.0
      %v4424 = vadd.f32 %v4422, %v4423
      %v4425 = vsel %vm1896, %v4372, 0.0
      %v4426 = vadd.f32 %v4424, %v4425
      %v4427 = vsel %vm1896, %v4373, 0.0
      %v4428 = vadd.f32 %v4426, %v4427
      %v4429 = vsel %vm1896, %v4374, 0.0
      %v4430 = vadd.f32 %v4428, %v4429
      %v4431 = vsel %vm1896, %v4375, 0.0
      %v4432 = vadd.f32 %v4430, %v4431
      %v4433 = vsel %vm1896, %v4376, 0.0
      %v4434 = vadd.f32 %v4432, %v4433
      %v4435 = vsel %vm1896, %v4377, 0.0
      %v4436 = vadd.f32 %v4434, %v4435
      %v4437 = vsel %vm1896, %v4378, 0.0
      %v4438 = vadd.f32 %v4436, %v4437
      %v4439 = vsel %vm1896, %v4379, 0.0
      %v4440 = vadd.f32 %v4438, %v4439
      %v4441 = vsel %vm1896, %v4380, 0.0
      %v4442 = vadd.f32 %v4440, %v4441
      %v4443 = vsel %vm1896, %v4381, 0.0
      %v4444 = vadd.f32 %v4442, %v4443
      %v4445 = vrot.slane %v4444, 4
      %v4446 = vadd.f32 %v4444, %v4445
      %v4447 = vrot.slane %v4446, 2
      %v4448 = vadd.f32 %v4446, %v4447
      %v4449 = vrot.slane %v4448, 1
      %v4450 = vadd.f32 %v4448, %v4449
      %4451 = vst.msk [vmem:[%s235 + $0x1] sm:$0x1] %vm4348, %v4450
      %p4452 = scmp.lt.s32.totalorder %s17, 1
      %s4453 = scalar_select %p4452, %s17, 1
      %s4454 = smul.addr %s4453, 32
      %s4455 = smul.addr %s4454, 4
      %s4456 = scalar_lea.vmem %s4, %s4455
      %p4457 = scmp.lt.s32.totalorder %s17, 1
      %s4458 = scalar_select %p4457, %s17, 1
      %s4459 = smul.addr %s4458, 2
      %s4460 = scalar_lea.vmem %s5, %s4459
      // Predicated region
      $region37: #{resblock_forward_nchw.4} parent=35 // pred_check
        %p4461 = pneg %p124
      $region38: #{resblock_forward_nchw.4} parent=35 // pred_check_branch
        %4463 = sbr.rel (%p4461) target = $region40
      $region39: #{resblock_forward_nchw.4} parent=35 // pred_region
        _
      $region40: #{resblock_forward_nchw.4} parent=35 // pred_fallthru
        _
      // Predicated region
      $region41: #{resblock_forward_nchw.4} parent=35 // pred_check
        %p4464 = pneg %p150
      $region42: #{resblock_forward_nchw.4} parent=35 // pred_check_branch
        %4466 = sbr.rel (%p4464) target = $region44
      $region43: #{resblock_forward_nchw.4} parent=35 // pred_region
        _
      $region44: #{resblock_forward_nchw.4} parent=35 // pred_fallthru
        _
    $region36: #{resblock_forward_nchw.4} parent=5 // pred_fallthru
      _
    %p4467 = scmp.le.s32.totalorder 2, %s12
    // Predicated region
    $region45: #{resblock_forward_nchw.4} parent=5 // pred_check
      %p4468 = pneg %p4467
    $region46: #{resblock_forward_nchw.4} parent=5 // pred_check_branch
      %4470 = sbr.rel (%p4468) target = $region48
    $region47: #{resblock_forward_nchw.4} parent=5 // pred_region
      %s4471 = ssub.s32 %s12, 2
      // Predicated region
      $region49: #{resblock_forward_nchw.4} parent=47 // pred_check
        %p4472 = pneg %p130
      $region50: #{resblock_forward_nchw.4} parent=47 // pred_check_branch
        %4474 = sbr.rel (%p4472) target = $region52
      $region51: #{resblock_forward_nchw.4} parent=47 // pred_region
        %p4475 = scmp.lt.s32.totalorder %s18, 1
        %s4476 = scalar_select %p4475, %s18, 1
        %s4477 = smul.addr %s4476, 32
        %s4478 = smul.addr %s4477, 4
        %s4479 = scalar_lea.vmem %s4, %s4478
      $region52: #{resblock_forward_nchw.4} parent=47 // pred_fallthru
        _
      // Predicated region
      $region53: #{resblock_forward_nchw.4} parent=47 // pred_check
        %p4480 = pneg %p156
      $region54: #{resblock_forward_nchw.4} parent=47 // pred_check_branch
        %4482 = sbr.rel (%p4480) target = $region56
      $region55: #{resblock_forward_nchw.4} parent=47 // pred_region
        %p4483 = scmp.lt.s32.totalorder %s18, 1
        %s4484 = scalar_select %p4483, %s18, 1
        %s4485 = smul.addr %s4484, 2
        %s4486 = scalar_lea.vmem %s5, %s4485
      $region56: #{resblock_forward_nchw.4} parent=47 // pred_fallthru
        _
    $region48: #{resblock_forward_nchw.4} parent=5 // pred_fallthru
      _
  $region6: #{resblock_forward_nchw.4} parent=0 // loop_footer
    %s16 = sadd.s32 1, %s12
  $region7: #{resblock_forward_nchw.4} parent=0 // loop_footer_branch
    %11 = sbr.rel target = $region3
  $region8: #{resblock_forward_nchw.4} parent=0 // loop_exit
    _

// kernel: resblock_forward_nchw.5
$region0: #{resblock_forward_nchw.5}
  #allocation0 [shape = 'u32[]', space=smem, size = 0x4, offset = 0x4, fixed_abs, tag = 'smem constant byte address 0x4 - core index']
  #allocation1 [shape = 'u32[144,128]{1,0:T(1,128)}', space=vmem, size = 0x12000, scoped, tag = 'internal scratch']
  %s0 = inlined_call_operand.vmem [shape: bf16[2,1024], index: 0, kind: input, shape index: {}]
  %s1 = inlined_call_operand.vmem [shape: f32[2,1024], index: 1, kind: input, shape index: {}]
  %s2 = inlined_call_operand.vmem [shape: f32[1,1024], index: 2, kind: input, shape index: {}]
  %s3 = inlined_call_operand.vmem [shape: f32[1,1024], index: 3, kind: input, shape index: {}]
  %s4 = inlined_call_operand.vmem [shape: f32[2,1024], index: 4, kind: output, shape index: {}]
  %s5 = sld [smem:[#allocation0]]
  $region26: #{resblock_forward_nchw.5} parent=0
    _
  %s7 = ssub.s32 1, %s5
  %s8 = scalar_select 0, %s7, %s5
  // Predicated region
  $region2: #{resblock_forward_nchw.5} parent=0 // pred_check
    _
  $region3: #{resblock_forward_nchw.5} parent=0 // pred_check_branch
    %10 = sbr.rel (0) target = $region5
  $region4: #{resblock_forward_nchw.5} parent=0 // pred_region
    _
  $region5: #{resblock_forward_nchw.5} parent=0 // pred_fallthru
    _
  // Predicated region
  $region6: #{resblock_forward_nchw.5} parent=0 // pred_check
    _
  $region7: #{resblock_forward_nchw.5} parent=0 // pred_check_branch
    %12 = sbr.rel (0) target = $region9
  $region8: #{resblock_forward_nchw.5} parent=0 // pred_region
    _
  $region9: #{resblock_forward_nchw.5} parent=0 // pred_fallthru
    _
  // Predicated region
  $region10: #{resblock_forward_nchw.5} parent=0 // pred_check
    _
  $region11: #{resblock_forward_nchw.5} parent=0 // pred_check_branch
    %14 = sbr.rel (0) target = $region13
  $region12: #{resblock_forward_nchw.5} parent=0 // pred_region
    _
  $region13: #{resblock_forward_nchw.5} parent=0 // pred_fallthru
    _
  // Predicated region
  $region14: #{resblock_forward_nchw.5} parent=0 // pred_check
    _
  $region15: #{resblock_forward_nchw.5} parent=0 // pred_check_branch
    %16 = sbr.rel (0) target = $region17
  $region16: #{resblock_forward_nchw.5} parent=0 // pred_region
    _
  $region17: #{resblock_forward_nchw.5} parent=0 // pred_fallthru
    _
  %v17 = vld [vmem:[%s0] sm:$0xff]
  %v18 = vunpack.c.l.bf16 %v17
  %v19 = vunpack.c.h.bf16 %v17
  %v20 = vld [vmem:[%s2] sm:$0xff]
  %v22 = vlaneseq
  %v23 = vshrl.u32 %v22, 7
  %v24 = vsub.s32 0, %v23
  %v25 = vrot.slane %v20, %v24
  %v26 = vlaneseq
  %v27 = vshrl.u32 %v26, 7
  %v28 = vsub.s32 1, %v27
  %v29 = vrot.slane %v20, %v28
  %v30 = vlaneseq
  %v31 = vshrl.u32 %v30, 7
  %v32 = vsub.s32 2, %v31
  %v33 = vrot.slane %v20, %v32
  %v34 = vlaneseq
  %v35 = vshrl.u32 %v34, 7
  %v36 = vsub.s32 3, %v35
  %v37 = vrot.slane %v20, %v36
  %v38 = vlaneseq
  %v39 = vshrl.u32 %v38, 7
  %v40 = vsub.s32 4, %v39
  %v41 = vrot.slane %v20, %v40
  %v42 = vlaneseq
  %v43 = vshrl.u32 %v42, 7
  %v44 = vsub.s32 5, %v43
  %v45 = vrot.slane %v20, %v44
  %v46 = vlaneseq
  %v47 = vshrl.u32 %v46, 7
  %v48 = vsub.s32 6, %v47
  %v49 = vrot.slane %v20, %v48
  %v50 = vlaneseq
  %v51 = vshrl.u32 %v50, 7
  %v52 = vsub.s32 7, %v51
  %v53 = vrot.slane %v20, %v52
  %v54 = vcombine.low %v25, %v29
  %v55 = vcombine.low %v33, %v37
  %v57 = vunpack.c.l.s4 1983009808
  %v58 = vunpack.c.0.s8 %v57
  %v59 = vlaneseq
  %v60 = vshrl.u32 %v59, 7
  %v61 = vsub.s32 %v58, %v60
  %v62 = vrot.slane %v54, %v61
  %v64 = vunpack.c.l.s4 1983009808
  %v65 = vunpack.c.0.s8 %v64
  %v66 = vlaneseq
  %v67 = vshrl.u32 %v66, 7
  %v68 = vsub.s32 %v65, %v67
  %v69 = vrot.slane %v55, %v68
  %v70 = vcombine.low %v62, %v69
  %v71 = vcombine.low %v41, %v45
  %v72 = vcombine.low %v49, %v53
  %v74 = vunpack.c.l.s4 1983009808
  %v75 = vunpack.c.0.s8 %v74
  %v76 = vlaneseq
  %v77 = vshrl.u32 %v76, 7
  %v78 = vsub.s32 %v75, %v77
  %v79 = vrot.slane %v71, %v78
  %v81 = vunpack.c.l.s4 1983009808
  %v82 = vunpack.c.0.s8 %v81
  %v83 = vlaneseq
  %v84 = vshrl.u32 %v83, 7
  %v85 = vsub.s32 %v82, %v84
  %v86 = vrot.slane %v72, %v85
  %v87 = vcombine.low %v79, %v86
  %v90 = vmul.f32 %v18, %v70
  %v91 = vmul.f32 %v19, %v87
  %v92 = vld [vmem:[%s3] sm:$0xff]
  %v94 = vlaneseq
  %v95 = vshrl.u32 %v94, 7
  %v96 = vsub.s32 0, %v95
  %v97 = vrot.slane %v92, %v96
  %v98 = vlaneseq
  %v99 = vshrl.u32 %v98, 7
  %v100 = vsub.s32 1, %v99
  %v101 = vrot.slane %v92, %v100
  %v102 = vlaneseq
  %v103 = vshrl.u32 %v102, 7
  %v104 = vsub.s32 2, %v103
  %v105 = vrot.slane %v92, %v104
  %v106 = vlaneseq
  %v107 = vshrl.u32 %v106, 7
  %v108 = vsub.s32 3, %v107
  %v109 = vrot.slane %v92, %v108
  %v110 = vlaneseq
  %v111 = vshrl.u32 %v110, 7
  %v112 = vsub.s32 4, %v111
  %v113 = vrot.slane %v92, %v112
  %v114 = vlaneseq
  %v115 = vshrl.u32 %v114, 7
  %v116 = vsub.s32 5, %v115
  %v117 = vrot.slane %v92, %v116
  %v118 = vlaneseq
  %v119 = vshrl.u32 %v118, 7
  %v120 = vsub.s32 6, %v119
  %v121 = vrot.slane %v92, %v120
  %v122 = vlaneseq
  %v123 = vshrl.u32 %v122, 7
  %v124 = vsub.s32 7, %v123
  %v125 = vrot.slane %v92, %v124
  %v126 = vcombine.low %v97, %v101
  %v127 = vcombine.low %v105, %v109
  %v129 = vunpack.c.l.s4 1983009808
  %v130 = vunpack.c.0.s8 %v129
  %v131 = vlaneseq
  %v132 = vshrl.u32 %v131, 7
  %v133 = vsub.s32 %v130, %v132
  %v134 = vrot.slane %v126, %v133
  %v136 = vunpack.c.l.s4 1983009808
  %v137 = vunpack.c.0.s8 %v136
  %v138 = vlaneseq
  %v139 = vshrl.u32 %v138, 7
  %v140 = vsub.s32 %v137, %v139
  %v141 = vrot.slane %v127, %v140
  %v142 = vcombine.low %v134, %v141
  %v143 = vcombine.low %v113, %v117
  %v144 = vcombine.low %v121, %v125
  %v146 = vunpack.c.l.s4 1983009808
  %v147 = vunpack.c.0.s8 %v146
  %v148 = vlaneseq
  %v149 = vshrl.u32 %v148, 7
  %v150 = vsub.s32 %v147, %v149
  %v151 = vrot.slane %v143, %v150
  %v153 = vunpack.c.l.s4 1983009808
  %v154 = vunpack.c.0.s8 %v153
  %v155 = vlaneseq
  %v156 = vshrl.u32 %v155, 7
  %v157 = vsub.s32 %v154, %v156
  %v158 = vrot.slane %v144, %v157
  %v159 = vcombine.low %v151, %v158
  %v162 = vadd.f32 %v90, %v142
  %v163 = vadd.f32 %v91, %v159
  %v164 = vld [vmem:[%s1] sm:$0xff]
  %v165 = vld [vmem:[%s1 + $0x8] sm:$0xff]
  %v166 = vadd.f32 %v162, %v164
  %v167 = vadd.f32 %v163, %v165
  %168 = vst [vmem:[%s4] sm:$0xff] %v166
  %169 = vst [vmem:[%s4 + $0x8] sm:$0xff] %v167
  // Predicated region
  $region18: #{resblock_forward_nchw.5} parent=0 // pred_check
    _
  $region19: #{resblock_forward_nchw.5} parent=0 // pred_check_branch
    %171 = sbr.rel (0) target = $region21
  $region20: #{resblock_forward_nchw.5} parent=0 // pred_region
    _
  $region21: #{resblock_forward_nchw.5} parent=0 // pred_fallthru
    _
  // Predicated region
  $region22: #{resblock_forward_nchw.5} parent=0 // pred_check
    _
  $region23: #{resblock_forward_nchw.5} parent=0 // pred_check_branch
    %173 = sbr.rel (0) target = $region25
  $region24: #{resblock_forward_nchw.5} parent=0 // pred_region
    _
  $region25: #{resblock_forward_nchw.5} parent=0 // pred_fallthru
    _

</llo_original>
